<compile_context>
chip_gen: v5e
topology: v5e:2x2
jax: 0.10.0
libtpu: 0.0.40
codegen_flags: <defaults>
</compile_context>

<pallas_src>
import jax
import jax.numpy as jnp
from jax.experimental import pallas as pl
from jax.experimental.pallas import tpu as pltpu

IN_DIM = 3679
H1 = 512
H2 = 512
H3 = 128
OUT_DIM = 21

K_PAD = pl.cdiv(IN_DIM, 128) * 128      # 3712: zero-padded K (exact math)
OUT_PAD = 128                           # lane-dense output width


def mlp_kernel(x_ref, w1_ref, b1_ref, w2_ref, b2_ref, w3_ref, b3_ref,
               w4_ref, b4_ref, o_ref):
    # Layer 1: (tb, K_PAD) bf16 @ (K_PAD, 512) bf16 -> f32, bias + ReLU.
    h = jnp.dot(x_ref[...], w1_ref[...], preferred_element_type=jnp.float32)
    h = jnp.maximum(h + b1_ref[...], 0.0)

    # Layer 2: 512 -> 512, ReLU.
    h = jnp.maximum(
        jnp.dot(h.astype(jnp.bfloat16), w2_ref[...],
                preferred_element_type=jnp.float32) + b2_ref[...], 0.0)

    # Layer 3: 512 -> 128, ReLU.
    h = jnp.maximum(
        jnp.dot(h.astype(jnp.bfloat16), w3_ref[...],
                preferred_element_type=jnp.float32) + b3_ref[...], 0.0)

    # Layer 4: 128 -> 128 (only first 21 output lanes are real; pad lanes have
    # zero weights/bias -> logit 0 -> thresholded to 0).
    logits = jnp.dot(h.astype(jnp.bfloat16), w4_ref[...],
                     preferred_element_type=jnp.float32) + b4_ref[...]

    # round(sigmoid(z)) == (z > 0) exactly: sigmoid(0)=0.5 rounds to 0 under
    # round-half-to-even; sigmoid(z) > 0.5 iff z > 0.
    o_ref[...] = (logits > 0.0).astype(o_ref.dtype)


def prepare_params(params):
    """One-time: cast weights to bf16 and zero-pad w1 (K) and w4/b4 (out lanes).

    Call once and reuse the result across forward calls so the per-call
    weight cast/pad HBM pass is eliminated.
    """
    w1, b1 = params["w1"], params["b1"]
    w2, b2 = params["w2"], params["b2"]
    w3, b3 = params["w3"], params["b3"]
    w4, b4 = params["w4"], params["b4"]
    return {
        "w1": jnp.pad(w1.astype(jnp.bfloat16), ((0, K_PAD - IN_DIM), (0, 0))),
        "b1": b1.astype(jnp.float32),
        "w2": w2.astype(jnp.bfloat16),
        "b2": b2.astype(jnp.float32),
        "w3": w3.astype(jnp.bfloat16),
        "b3": b3.astype(jnp.float32),
        "w4": jnp.pad(w4.astype(jnp.bfloat16), ((0, 0), (0, OUT_PAD - OUT_DIM))),
        "b4": jnp.pad(b4.astype(jnp.float32), ((0, 0), (0, OUT_PAD - OUT_DIM))),
    }


def neural_network_forward(x, prepped, *, tb=None):
    """x: (B, 3679) float32. prepped: output of prepare_params. Returns (B, 21) f32."""
    B = x.shape[0]

    # Batch tile: multiple of 8 (sublane); 256 rows per step for large batches
    # (fills the 256-wide MXU on v6e/v7x, amortizes per-step overhead).
    if tb is None:
        tb = 256 if B >= 256 else max(8, pl.cdiv(B, 8) * 8)
    B_pad = pl.cdiv(B, tb) * tb

    # Pad batch and K (pad columns hit zero w1 rows -> exact).
    xp = jnp.pad(x.astype(jnp.bfloat16),
                 ((0, B_pad - B), (0, K_PAD - IN_DIM)))

    w1, b1 = prepped["w1"], prepped["b1"]
    w2, b2 = prepped["w2"], prepped["b2"]
    w3, b3 = prepped["w3"], prepped["b3"]
    w4, b4 = prepped["w4"], prepped["b4"]

    # All weights/biases VMEM-resident across the whole grid (constant index map).
    resident = lambda a: pl.BlockSpec(a.shape, lambda b: (0,) * a.ndim)

    out = pl.pallas_call(
        mlp_kernel,
        out_shape=jax.ShapeDtypeStruct((B_pad, OUT_PAD), jnp.float32),
        grid_spec=pltpu.PrefetchScalarGridSpec(
            num_scalar_prefetch=0,
            grid=(B_pad // tb,),
            in_specs=[
                pl.BlockSpec((tb, K_PAD), lambda b: (b, 0)),   # x: only streamed input
                resident(w1), resident(b1),
                resident(w2), resident(b2),
                resident(w3), resident(b3),
                resident(w4), resident(b4),
            ],
            out_specs=pl.BlockSpec((tb, OUT_PAD), lambda b: (b, 0)),
        ),
        compiler_params=pltpu.CompilerParams(
            dimension_semantics=("parallel",),
            vmem_limit_bytes=32 << 20,
        ),
    )(xp, w1, b1, w2, b2, w3, b3, w4, b4)

    return out[:B, :OUT_DIM]


def init_params(key):
    """Deterministic init mimicking nn.Linear default (uniform +/- 1/sqrt(fan_in))."""
    dims = [(IN_DIM, H1), (H1, H2), (H2, H3), (H3, OUT_DIM)]
    params = {}
    keys = jax.random.split(key, 2 * len(dims))
    for i, (fan_in, fan_out) in enumerate(dims):
        bound = 1.0 / jnp.sqrt(fan_in)
        w = jax.random.uniform(keys[2 * i], (fan_in, fan_out),
                               minval=-bound, maxval=bound, dtype=jnp.float32)
        b = jax.random.uniform(keys[2 * i + 1], (1, fan_out),
                               minval=-bound, maxval=bound, dtype=jnp.float32)
        params[f"w{i + 1}"] = w
        params[f"b{i + 1}"] = b
    return params


if __name__ == "__main__":
    key = jax.random.PRNGKey(0)
    pkey, xkey = jax.random.split(key)

    params = init_params(pkey)
    prepped = prepare_params(params)          # one-time cast/pad, reused per call
    batch = 2
    x = jax.random.normal(xkey, (batch, IN_DIM), dtype=jnp.float32)

    out = neural_network_forward(x, prepped)
    jax.block_until_ready(out)

    assert out.shape == (batch, OUT_DIM), out.shape
    assert out.dtype == jnp.float32
    # Post-sigmoid-and-round values must be exactly 0.0 or 1.0.
    assert bool(jnp.all((out == 0.0) | (out == 1.0)))

    print("KERNEL_OK")
</pallas_src>

<mosaic_0001>
module attributes {stable_mosaic.version = 11 : i64} {
  func.func @mlp_kernel(%arg0: i32, %arg1: memref<8x3712xbf16, #tpu.memory_space<vmem>>, %arg2: memref<3712x512xbf16, #tpu.memory_space<vmem>>, %arg3: memref<1x512xf32, #tpu.memory_space<vmem>>, %arg4: memref<512x512xbf16, #tpu.memory_space<vmem>>, %arg5: memref<1x512xf32, #tpu.memory_space<vmem>>, %arg6: memref<512x128xbf16, #tpu.memory_space<vmem>>, %arg7: memref<1x128xf32, #tpu.memory_space<vmem>>, %arg8: memref<128x128xbf16, #tpu.memory_space<vmem>>, %arg9: memref<1x128xf32, #tpu.memory_space<vmem>>, %arg10: memref<8x128xf32, #tpu.memory_space<vmem>>) attributes {dimension_semantics = [#tpu.dimension_semantics<parallel>], iteration_bounds = array<i64: 1>, scalar_prefetch = 0 : i64, scratch_operands = 0 : i64, tpu.core_type = #tpu.core_type<tc>, window_params = [{transform_indices = @transform_0, window_bounds = array<i64: 8, 3712>}, {pipeline_mode = #tpu.pipeline_mode<synchronous>, transform_indices = @transform_1, window_bounds = array<i64: 3712, 512>}, {pipeline_mode = #tpu.pipeline_mode<synchronous>, transform_indices = @transform_2, window_bounds = array<i64: 1, 512>}, {pipeline_mode = #tpu.pipeline_mode<synchronous>, transform_indices = @transform_3, window_bounds = array<i64: 512, 512>}, {pipeline_mode = #tpu.pipeline_mode<synchronous>, transform_indices = @transform_4, window_bounds = array<i64: 1, 512>}, {pipeline_mode = #tpu.pipeline_mode<synchronous>, transform_indices = @transform_5, window_bounds = array<i64: 512, 128>}, {pipeline_mode = #tpu.pipeline_mode<synchronous>, transform_indices = @transform_6, window_bounds = array<i64: 1, 128>}, {pipeline_mode = #tpu.pipeline_mode<synchronous>, transform_indices = @transform_7, window_bounds = array<i64: 128, 128>}, {pipeline_mode = #tpu.pipeline_mode<synchronous>, transform_indices = @transform_8, window_bounds = array<i64: 1, 128>}, {transform_indices = @transform_9, window_bounds = array<i64: 8, 128>}]} {
    %c0 = arith.constant 0 : index
    %c0_0 = arith.constant 0 : index
    %0 = vector.load %arg1[%c0, %c0_0] : memref<8x3712xbf16, #tpu.memory_space<vmem>>, vector<8x3712xbf16>
    %c0_1 = arith.constant 0 : index
    %c0_2 = arith.constant 0 : index
    %1 = vector.load %arg2[%c0_1, %c0_2] : memref<3712x512xbf16, #tpu.memory_space<vmem>>, vector<3712x512xbf16>
    %cst = arith.constant dense<0.000000e+00> : vector<8x512xf32>
    %2 = tpu.matmul %0, %1, %cst {dimension_numbers = #tpu.dot_dimension_numbers<[1], [0], [0], [1], [0, 0, 1, 1], [], []>} : vector<8x3712xbf16>, vector<3712x512xbf16>, vector<8x512xf32> -> vector<8x512xf32>
    %c0_3 = arith.constant 0 : index
    %c0_4 = arith.constant 0 : index
    %3 = vector.load %arg3[%c0_3, %c0_4] : memref<1x512xf32, #tpu.memory_space<vmem>>, vector<1x512xf32>
    %4 = vector.broadcast %3 : vector<1x512xf32> to vector<8x512xf32>
    %5 = arith.addf %2, %4 : vector<8x512xf32>
    %cst_5 = arith.constant 0.000000e+00 : f32
    %6 = vector.broadcast %cst_5 : f32 to vector<8x512xf32>
    %7 = arith.maximumf %5, %6 : vector<8x512xf32>
    %8 = arith.truncf %7 : vector<8x512xf32> to vector<8x512xbf16>
    %c0_6 = arith.constant 0 : index
    %c0_7 = arith.constant 0 : index
    %9 = vector.load %arg4[%c0_6, %c0_7] : memref<512x512xbf16, #tpu.memory_space<vmem>>, vector<512x512xbf16>
    %cst_8 = arith.constant dense<0.000000e+00> : vector<8x512xf32>
    %10 = tpu.matmul %8, %9, %cst_8 {dimension_numbers = #tpu.dot_dimension_numbers<[1], [0], [0], [1], [0, 0, 1, 1], [], []>} : vector<8x512xbf16>, vector<512x512xbf16>, vector<8x512xf32> -> vector<8x512xf32>
    %c0_9 = arith.constant 0 : index
    %c0_10 = arith.constant 0 : index
    %11 = vector.load %arg5[%c0_9, %c0_10] : memref<1x512xf32, #tpu.memory_space<vmem>>, vector<1x512xf32>
    %12 = vector.broadcast %11 : vector<1x512xf32> to vector<8x512xf32>
    %13 = arith.addf %10, %12 : vector<8x512xf32>
    %cst_11 = arith.constant 0.000000e+00 : f32
    %14 = vector.broadcast %cst_11 : f32 to vector<8x512xf32>
    %15 = arith.maximumf %13, %14 : vector<8x512xf32>
    %16 = arith.truncf %15 : vector<8x512xf32> to vector<8x512xbf16>
    %c0_12 = arith.constant 0 : index
    %c0_13 = arith.constant 0 : index
    %17 = vector.load %arg6[%c0_12, %c0_13] : memref<512x128xbf16, #tpu.memory_space<vmem>>, vector<512x128xbf16>
    %cst_14 = arith.constant dense<0.000000e+00> : vector<8x128xf32>
    %18 = tpu.matmul %16, %17, %cst_14 {dimension_numbers = #tpu.dot_dimension_numbers<[1], [0], [0], [1], [0, 0, 1, 1], [], []>} : vector<8x512xbf16>, vector<512x128xbf16>, vector<8x128xf32> -> vector<8x128xf32>
    %c0_15 = arith.constant 0 : index
    %c0_16 = arith.constant 0 : index
    %19 = vector.load %arg7[%c0_15, %c0_16] : memref<1x128xf32, #tpu.memory_space<vmem>>, vector<1x128xf32>
    %20 = vector.broadcast %19 : vector<1x128xf32> to vector<8x128xf32>
    %21 = arith.addf %18, %20 : vector<8x128xf32>
    %cst_17 = arith.constant 0.000000e+00 : f32
    %22 = vector.broadcast %cst_17 : f32 to vector<8x128xf32>
    %23 = arith.maximumf %21, %22 : vector<8x128xf32>
    %24 = arith.truncf %23 : vector<8x128xf32> to vector<8x128xbf16>
    %c0_18 = arith.constant 0 : index
    %c0_19 = arith.constant 0 : index
    %25 = vector.load %arg8[%c0_18, %c0_19] : memref<128x128xbf16, #tpu.memory_space<vmem>>, vector<128x128xbf16>
    %cst_20 = arith.constant dense<0.000000e+00> : vector<8x128xf32>
    %26 = tpu.matmul %24, %25, %cst_20 {dimension_numbers = #tpu.dot_dimension_numbers<[1], [0], [0], [1], [0, 0, 1, 1], [], []>} : vector<8x128xbf16>, vector<128x128xbf16>, vector<8x128xf32> -> vector<8x128xf32>
    %c0_21 = arith.constant 0 : index
    %c0_22 = arith.constant 0 : index
    %27 = vector.load %arg9[%c0_21, %c0_22] : memref<1x128xf32, #tpu.memory_space<vmem>>, vector<1x128xf32>
    %28 = vector.broadcast %27 : vector<1x128xf32> to vector<8x128xf32>
    %29 = arith.addf %26, %28 : vector<8x128xf32>
    %cst_23 = arith.constant 0.000000e+00 : f32
    %30 = vector.broadcast %cst_23 : f32 to vector<8x128xf32>
    %31 = arith.cmpf ogt, %29, %30 : vector<8x128xf32>
    %32 = arith.extui %31 : vector<8x128xi1> to vector<8x128xi32>
    %33 = arith.sitofp %32 : vector<8x128xi32> to vector<8x128xf32>
    %c0_24 = arith.constant 0 : index
    %c0_25 = arith.constant 0 : index
    %34 = vector.load %arg10[%c0_24, %c0_25] : memref<8x128xf32, #tpu.memory_space<vmem>>, vector<8x128xf32>
    tpu.vector_store %arg10[%c0_24, %c0_25], %33 {strides = array<i32>} : memref<8x128xf32, #tpu.memory_space<vmem>>, vector<8x128xf32>,
    return
  }
  func.func @transform_0(%arg0: i32) -> (i32, i32) {
    %c0_i32 = arith.constant 0 : i32
    %c0_i32_0 = arith.constant 0 : i32
    return %arg0, %c0_i32 : i32, i32
  }
  func.func @transform_1(%arg0: i32) -> (i32, i32) {
    %c0_i32 = arith.constant 0 : i32
    %c0_i32_0 = arith.constant 0 : i32
    %c0_i32_1 = arith.constant 0 : i32
    return %c0_i32, %c0_i32_0 : i32, i32
  }
  func.func @transform_2(%arg0: i32) -> (i32, i32) {
    %c0_i32 = arith.constant 0 : i32
    %c0_i32_0 = arith.constant 0 : i32
    %c0_i32_1 = arith.constant 0 : i32
    return %c0_i32, %c0_i32_0 : i32, i32
  }
  func.func @transform_3(%arg0: i32) -> (i32, i32) {
    %c0_i32 = arith.constant 0 : i32
    %c0_i32_0 = arith.constant 0 : i32
    %c0_i32_1 = arith.constant 0 : i32
    return %c0_i32, %c0_i32_0 : i32, i32
  }
  func.func @transform_4(%arg0: i32) -> (i32, i32) {
    %c0_i32 = arith.constant 0 : i32
    %c0_i32_0 = arith.constant 0 : i32
    %c0_i32_1 = arith.constant 0 : i32
    return %c0_i32, %c0_i32_0 : i32, i32
  }
  func.func @transform_5(%arg0: i32) -> (i32, i32) {
    %c0_i32 = arith.constant 0 : i32
    %c0_i32_0 = arith.constant 0 : i32
    %c0_i32_1 = arith.constant 0 : i32
    return %c0_i32, %c0_i32_0 : i32, i32
  }
  func.func @transform_6(%arg0: i32) -> (i32, i32) {
    %c0_i32 = arith.constant 0 : i32
    %c0_i32_0 = arith.constant 0 : i32
    %c0_i32_1 = arith.constant 0 : i32
    return %c0_i32, %c0_i32_0 : i32, i32
  }
  func.func @transform_7(%arg0: i32) -> (i32, i32) {
    %c0_i32 = arith.constant 0 : i32
    %c0_i32_0 = arith.constant 0 : i32
    %c0_i32_1 = arith.constant 0 : i32
    return %c0_i32, %c0_i32_0 : i32, i32
  }
  func.func @transform_8(%arg0: i32) -> (i32, i32) {
    %c0_i32 = arith.constant 0 : i32
    %c0_i32_0 = arith.constant 0 : i32
    %c0_i32_1 = arith.constant 0 : i32
    return %c0_i32, %c0_i32_0 : i32, i32
  }
  func.func @transform_9(%arg0: i32) -> (i32, i32) {
    %c0_i32 = arith.constant 0 : i32
    %c0_i32_0 = arith.constant 0 : i32
    return %arg0, %c0_i32 : i32, i32
  }
}

</mosaic_0001>

<llo_original>
// kernel: tpu_custom_call.1
$region0: #{tpu_custom_call.1}
  #allocation0 [shape = 'u32[]', space=smem, size = 0x4, offset = 0x4, fixed_abs, tag = 'smem constant byte address 0x4 - core index']
  #allocation1 [shape = 'u32[72,128]{1,0:T(1,128)}', space=vmem, size = 0x9000, scoped, tag = 'internal scratch']
  %s0 = inlined_call_operand.hbm [shape: bf16[8,3712], index: 0, kind: input, shape index: {}]
  %s1 = inlined_call_operand.hbm [shape: bf16[3712,512], index: 1, kind: input, shape index: {}]
  %s2 = inlined_call_operand.hbm [shape: f32[1,512], index: 2, kind: input, shape index: {}]
  %s3 = inlined_call_operand.hbm [shape: bf16[512,512], index: 3, kind: input, shape index: {}]
  %s4 = inlined_call_operand.hbm [shape: f32[1,512], index: 4, kind: input, shape index: {}]
  %s5 = inlined_call_operand.hbm [shape: bf16[512,128], index: 5, kind: input, shape index: {}]
  %s6 = inlined_call_operand.hbm [shape: f32[1,128], index: 6, kind: input, shape index: {}]
  %s7 = inlined_call_operand.hbm [shape: bf16[128,128], index: 7, kind: input, shape index: {}]
  %s8 = inlined_call_operand.hbm [shape: f32[1,128], index: 8, kind: input, shape index: {}]
  %s9 = inlined_call_operand.hbm [shape: f32[8,128], index: 9, kind: output, shape index: {}]
  %s10 = sld [smem:[#allocation0]]
  $region82: #{tpu_custom_call.1} parent=0
    _
  %s12 = ssub.s32 1, %s10
  %s13 = scalar_select 0, %s12, %s10
  $region1: #{tpu_custom_call.1} parent=0
    #allocation2 [shape = 'u8[59392]{0}', space=vmem, size = 0xe800, scoped, tag = 'input window, operand 0, single buffered']
    #allocation3 [shape = 's32[1]{0}', space=sflag, size = 0x4, scoped, tag = 'scoped memory for tpu_custom_call.1']
    #allocation4 [shape = 's32[1]{0}', space=sflag, size = 0x4, scoped, tag = 'scoped memory for tpu_custom_call.1']
    #allocation5 [shape = 'u8[3801088]{0}', space=vmem, size = 0x3a0000, scoped, tag = 'input window, operand 1, single buffered']
    #allocation6 [shape = 's32[1]{0}', space=sflag, size = 0x4, scoped, tag = 'scoped memory for tpu_custom_call.1']
    #allocation7 [shape = 'u8[2048]{0}', space=vmem, size = 0x800, scoped, tag = 'input window, operand 2, single buffered']
    #allocation8 [shape = 'u8[524288]{0}', space=vmem, size = 0x80000, scoped, tag = 'input window, operand 3, single buffered']
    #allocation9 [shape = 's32[1]{0}', space=sflag, size = 0x4, scoped, tag = 'scoped memory for tpu_custom_call.1']
    #allocation10 [shape = 'u8[2048]{0}', space=vmem, size = 0x800, scoped, tag = 'input window, operand 4, single buffered']
    #allocation11 [shape = 'u8[131072]{0}', space=vmem, size = 0x20000, scoped, tag = 'input window, operand 5, single buffered']
    #allocation12 [shape = 's32[1]{0}', space=sflag, size = 0x4, scoped, tag = 'scoped memory for tpu_custom_call.1']
    #allocation13 [shape = 'u8[512]{0}', space=vmem, size = 0x400, scoped, tag = 'input window, operand 6, single buffered']
    #allocation14 [shape = 'u8[32768]{0}', space=vmem, size = 0x8000, scoped, tag = 'input window, operand 7, single buffered']
    #allocation15 [shape = 's32[1]{0}', space=sflag, size = 0x4, scoped, tag = 'scoped memory for tpu_custom_call.1']
    #allocation16 [shape = 'u8[512]{0}', space=vmem, size = 0x400, scoped, tag = 'input window, operand 8, single buffered']
    #allocation17 [shape = 'u8[4096]{0}', space=vmem, size = 0x1000, scoped, tag = 'output window, operand 0, single buffered']
    %14 = vsyncpa [#allocation3], 0
    %15 = vsyncpa [#allocation6], 0
    %16 = vsyncpa [#allocation9], 0
    %17 = vsyncpa [#allocation12], 0
    %18 = vsyncpa [#allocation15], 0
    %19 = vsyncpa [#allocation4], 0
    // Predicated region
    $region2: #{tpu_custom_call.1} parent=1 // pred_check
      _
    $region3: #{tpu_custom_call.1} parent=1 // pred_check_branch
      %21 = sbr.rel (0) target = $region5
    $region4: #{tpu_custom_call.1} parent=1 // pred_region
      %23 = vsyncadd [#allocation3], 0
      %s25 = sshll.u32 %s0, 4
      %s26 = int_to_ptr.hbm [resolvable:$true] %s25
      %s27 = sshll.u32 [#allocation2], 4
      %s28 = int_to_ptr.vmem [resolvable:$true] %s27
      %30 = dma.hbm_to_vmem [thread:$0]  %s26, 1856, %s28, [#allocation3]
    $region5: #{tpu_custom_call.1} parent=1 // pred_fallthru
      _
    // Predicated region
    $region6: #{tpu_custom_call.1} parent=1 // pred_check
      _
    $region7: #{tpu_custom_call.1} parent=1 // pred_check_branch
      %32 = sbr.rel (0) target = $region9
    $region8: #{tpu_custom_call.1} parent=1 // pred_region
      %34 = vsyncadd [#allocation6], 0
      %s35 = sshll.u32 %s1, 4
      %s36 = int_to_ptr.hbm [resolvable:$true] %s35
      %s37 = sshll.u32 [#allocation5], 4
      %s38 = int_to_ptr.vmem [resolvable:$true] %s37
      %43 = dma.hbm_to_vmem [thread:$0]  %s36, 118784, %s38, [#allocation6], 256, 256, 16
    $region9: #{tpu_custom_call.1} parent=1 // pred_fallthru
      _
    // Predicated region
    $region10: #{tpu_custom_call.1} parent=1 // pred_check
      _
    $region11: #{tpu_custom_call.1} parent=1 // pred_check_branch
      %45 = sbr.rel (0) target = $region13
    $region12: #{tpu_custom_call.1} parent=1 // pred_region
      %47 = vsyncadd [#allocation6], 0
      %s49 = sshll.u32 %s2, 4
      %s50 = int_to_ptr.hbm [resolvable:$true] %s49
      %s51 = sshll.u32 [#allocation7], 4
      %s52 = int_to_ptr.vmem [resolvable:$true] %s51
      %54 = dma.hbm_to_vmem [thread:$0]  %s50, 64, %s52, [#allocation6]
    $region13: #{tpu_custom_call.1} parent=1 // pred_fallthru
      _
    // Predicated region
    $region14: #{tpu_custom_call.1} parent=1 // pred_check
      _
    $region15: #{tpu_custom_call.1} parent=1 // pred_check_branch
      %56 = sbr.rel (0) target = $region17
    $region16: #{tpu_custom_call.1} parent=1 // pred_region
      %58 = vsyncadd [#allocation9], 0
      %s59 = sshll.u32 %s3, 4
      %s60 = int_to_ptr.hbm [resolvable:$true] %s59
      %s61 = sshll.u32 [#allocation8], 4
      %s62 = int_to_ptr.vmem [resolvable:$true] %s61
      %67 = dma.hbm_to_vmem [thread:$0]  %s60, 16384, %s62, [#allocation9], 256, 256, 16
    $region17: #{tpu_custom_call.1} parent=1 // pred_fallthru
      _
    // Predicated region
    $region18: #{tpu_custom_call.1} parent=1 // pred_check
      _
    $region19: #{tpu_custom_call.1} parent=1 // pred_check_branch
      %69 = sbr.rel (0) target = $region21
    $region20: #{tpu_custom_call.1} parent=1 // pred_region
      %71 = vsyncadd [#allocation9], 0
      %s73 = sshll.u32 %s4, 4
      %s74 = int_to_ptr.hbm [resolvable:$true] %s73
      %s75 = sshll.u32 [#allocation10], 4
      %s76 = int_to_ptr.vmem [resolvable:$true] %s75
      %78 = dma.hbm_to_vmem [thread:$0]  %s74, 64, %s76, [#allocation9]
    $region21: #{tpu_custom_call.1} parent=1 // pred_fallthru
      _
    // Predicated region
    $region22: #{tpu_custom_call.1} parent=1 // pred_check
      _
    $region23: #{tpu_custom_call.1} parent=1 // pred_check_branch
      %80 = sbr.rel (0) target = $region25
    $region24: #{tpu_custom_call.1} parent=1 // pred_region
      %82 = vsyncadd [#allocation12], 0
      %s83 = sshll.u32 %s5, 4
      %s84 = int_to_ptr.hbm [resolvable:$true] %s83
      %s85 = sshll.u32 [#allocation11], 4
      %s86 = int_to_ptr.vmem [resolvable:$true] %s85
      %91 = dma.hbm_to_vmem [thread:$0]  %s84, 4096, %s86, [#allocation12], 64, 64, 4
    $region25: #{tpu_custom_call.1} parent=1 // pred_fallthru
      _
    // Predicated region
    $region26: #{tpu_custom_call.1} parent=1 // pred_check
      _
    $region27: #{tpu_custom_call.1} parent=1 // pred_check_branch
      %93 = sbr.rel (0) target = $region29
    $region28: #{tpu_custom_call.1} parent=1 // pred_region
      %95 = vsyncadd [#allocation12], 0
      %s97 = sshll.u32 %s6, 4
      %s98 = int_to_ptr.hbm [resolvable:$true] %s97
      %s99 = sshll.u32 [#allocation13], 4
      %s100 = int_to_ptr.vmem [resolvable:$true] %s99
      %102 = dma.hbm_to_vmem [thread:$0]  %s98, 16, %s100, [#allocation12]
    $region29: #{tpu_custom_call.1} parent=1 // pred_fallthru
      _
    // Predicated region
    $region30: #{tpu_custom_call.1} parent=1 // pred_check
      _
    $region31: #{tpu_custom_call.1} parent=1 // pred_check_branch
      %104 = sbr.rel (0) target = $region33
    $region32: #{tpu_custom_call.1} parent=1 // pred_region
      %106 = vsyncadd [#allocation15], 0
      %s107 = sshll.u32 %s7, 4
      %s108 = int_to_ptr.hbm [resolvable:$true] %s107
      %s109 = sshll.u32 [#allocation14], 4
      %s110 = int_to_ptr.vmem [resolvable:$true] %s109
      %115 = dma.hbm_to_vmem [thread:$0]  %s108, 1024, %s110, [#allocation15], 64, 64, 4
    $region33: #{tpu_custom_call.1} parent=1 // pred_fallthru
      _
    // Predicated region
    $region34: #{tpu_custom_call.1} parent=1 // pred_check
      _
    $region35: #{tpu_custom_call.1} parent=1 // pred_check_branch
      %117 = sbr.rel (0) target = $region37
    $region36: #{tpu_custom_call.1} parent=1 // pred_region
      %119 = vsyncadd [#allocation15], 0
      %s121 = sshll.u32 %s8, 4
      %s122 = int_to_ptr.hbm [resolvable:$true] %s121
      %s123 = sshll.u32 [#allocation16], 4
      %s124 = int_to_ptr.vmem [resolvable:$true] %s123
      %126 = dma.hbm_to_vmem [thread:$0]  %s122, 16, %s124, [#allocation15]
    $region37: #{tpu_custom_call.1} parent=1 // pred_fallthru
      _
    // Predicated region
    $region38: #{tpu_custom_call.1} parent=1 // pred_check
      _
    $region39: #{tpu_custom_call.1} parent=1 // pred_check_branch
      %128 = sbr.rel (0) target = $region41
    $region40: #{tpu_custom_call.1} parent=1 // pred_region
      %130 = dma.done [#allocation3], 1856
    $region41: #{tpu_custom_call.1} parent=1 // pred_fallthru
      _
    // Predicated region
    $region42: #{tpu_custom_call.1} parent=1 // pred_check
      _
    $region43: #{tpu_custom_call.1} parent=1 // pred_check_branch
      %132 = sbr.rel (0) target = $region45
    $region44: #{tpu_custom_call.1} parent=1 // pred_region
      %134 = dma.done [#allocation6], 118784
    $region45: #{tpu_custom_call.1} parent=1 // pred_fallthru
      _
    // Predicated region
    $region46: #{tpu_custom_call.1} parent=1 // pred_check
      _
    $region47: #{tpu_custom_call.1} parent=1 // pred_check_branch
      %136 = sbr.rel (0) target = $region49
    $region48: #{tpu_custom_call.1} parent=1 // pred_region
      %138 = dma.done [#allocation6], 64
    $region49: #{tpu_custom_call.1} parent=1 // pred_fallthru
      _
    // Predicated region
    $region50: #{tpu_custom_call.1} parent=1 // pred_check
      _
    $region51: #{tpu_custom_call.1} parent=1 // pred_check_branch
      %140 = sbr.rel (0) target = $region53
    $region52: #{tpu_custom_call.1} parent=1 // pred_region
      %142 = dma.done [#allocation9], 16384
    $region53: #{tpu_custom_call.1} parent=1 // pred_fallthru
      _
    // Predicated region
    $region54: #{tpu_custom_call.1} parent=1 // pred_check
      _
    $region55: #{tpu_custom_call.1} parent=1 // pred_check_branch
      %144 = sbr.rel (0) target = $region57
    $region56: #{tpu_custom_call.1} parent=1 // pred_region
      %146 = dma.done [#allocation9], 64
    $region57: #{tpu_custom_call.1} parent=1 // pred_fallthru
      _
    // Predicated region
    $region58: #{tpu_custom_call.1} parent=1 // pred_check
      _
    $region59: #{tpu_custom_call.1} parent=1 // pred_check_branch
      %148 = sbr.rel (0) target = $region61
    $region60: #{tpu_custom_call.1} parent=1 // pred_region
      %150 = dma.done [#allocation12], 4096
    $region61: #{tpu_custom_call.1} parent=1 // pred_fallthru
      _
    // Predicated region
    $region62: #{tpu_custom_call.1} parent=1 // pred_check
      _
    $region63: #{tpu_custom_call.1} parent=1 // pred_check_branch
      %152 = sbr.rel (0) target = $region65
    $region64: #{tpu_custom_call.1} parent=1 // pred_region
      %154 = dma.done [#allocation12], 16
    $region65: #{tpu_custom_call.1} parent=1 // pred_fallthru
      _
    // Predicated region
    $region66: #{tpu_custom_call.1} parent=1 // pred_check
      _
    $region67: #{tpu_custom_call.1} parent=1 // pred_check_branch
      %156 = sbr.rel (0) target = $region69
    $region68: #{tpu_custom_call.1} parent=1 // pred_region
      %158 = dma.done [#allocation15], 1024
    $region69: #{tpu_custom_call.1} parent=1 // pred_fallthru
      _
    // Predicated region
    $region70: #{tpu_custom_call.1} parent=1 // pred_check
      _
    $region71: #{tpu_custom_call.1} parent=1 // pred_check_branch
      %160 = sbr.rel (0) target = $region73
    $region72: #{tpu_custom_call.1} parent=1 // pred_region
      %162 = dma.done [#allocation15], 16
    $region73: #{tpu_custom_call.1} parent=1 // pred_fallthru
      _
    %v163 = vld [vmem:[#allocation2] sm:$0xff]
    %v164 = vld [vmem:[#allocation2 + $0x8] sm:$0xff]
    %v165 = vld [vmem:[#allocation2 + $0x10] sm:$0xff]
    %v166 = vld [vmem:[#allocation2 + $0x18] sm:$0xff]
    %v167 = vld [vmem:[#allocation2 + $0x20] sm:$0xff]
    %v168 = vld [vmem:[#allocation2 + $0x28] sm:$0xff]
    %v169 = vld [vmem:[#allocation2 + $0x30] sm:$0xff]
    %v170 = vld [vmem:[#allocation2 + $0x38] sm:$0xff]
    %v171 = vld [vmem:[#allocation2 + $0x40] sm:$0xff]
    %v172 = vld [vmem:[#allocation2 + $0x48] sm:$0xff]
    %v173 = vld [vmem:[#allocation2 + $0x50] sm:$0xff]
    %v174 = vld [vmem:[#allocation2 + $0x58] sm:$0xff]
    %v175 = vld [vmem:[#allocation2 + $0x60] sm:$0xff]
    %v176 = vld [vmem:[#allocation2 + $0x68] sm:$0xff]
    %v177 = vld [vmem:[#allocation2 + $0x70] sm:$0xf]
    %v178 = vld [vmem:[#allocation5] sm:$0xff]
    %v179 = vld [vmem:[#allocation5 + $0x8] sm:$0xff]
    %v180 = vld [vmem:[#allocation5 + $0x10] sm:$0xff]
    %v181 = vld [vmem:[#allocation5 + $0x18] sm:$0xff]
    %v182 = vld [vmem:[#allocation5 + $0x20] sm:$0xff]
    %v183 = vld [vmem:[#allocation5 + $0x28] sm:$0xff]
    %v184 = vld [vmem:[#allocation5 + $0x30] sm:$0xff]
    %v185 = vld [vmem:[#allocation5 + $0x38] sm:$0xff]
    %v186 = vld [vmem:[#allocation5 + $0x40] sm:$0xff]
    %v187 = vld [vmem:[#allocation5 + $0x48] sm:$0xff]
    %v188 = vld [vmem:[#allocation5 + $0x50] sm:$0xff]
    %v189 = vld [vmem:[#allocation5 + $0x58] sm:$0xff]
    %v190 = vld [vmem:[#allocation5 + $0x60] sm:$0xff]
    %v191 = vld [vmem:[#allocation5 + $0x68] sm:$0xff]
    %v192 = vld [vmem:[#allocation5 + $0x70] sm:$0xff]
    %v193 = vld [vmem:[#allocation5 + $0x78] sm:$0xff]
    %v194 = vld [vmem:[#allocation5 + $0x80] sm:$0xff]
    %v195 = vld [vmem:[#allocation5 + $0x88] sm:$0xff]
    %v196 = vld [vmem:[#allocation5 + $0x90] sm:$0xff]
    %v197 = vld [vmem:[#allocation5 + $0x98] sm:$0xff]
    %v198 = vld [vmem:[#allocation5 + $0xa0] sm:$0xff]
    %v199 = vld [vmem:[#allocation5 + $0xa8] sm:$0xff]
    %v200 = vld [vmem:[#allocation5 + $0xb0] sm:$0xff]
    %v201 = vld [vmem:[#allocation5 + $0xb8] sm:$0xff]
    %v202 = vld [vmem:[#allocation5 + $0xc0] sm:$0xff]
    %v203 = vld [vmem:[#allocation5 + $0xc8] sm:$0xff]
    %v204 = vld [vmem:[#allocation5 + $0xd0] sm:$0xff]
    %v205 = vld [vmem:[#allocation5 + $0xd8] sm:$0xff]
    %v206 = vld [vmem:[#allocation5 + $0xe0] sm:$0xff]
    %v207 = vld [vmem:[#allocation5 + $0xe8] sm:$0xff]
    %v208 = vld [vmem:[#allocation5 + $0xf0] sm:$0xff]
    %v209 = vld [vmem:[#allocation5 + $0xf8] sm:$0xff]
    %v210 = vld [vmem:[#allocation5 + $0x100] sm:$0xff]
    %v211 = vld [vmem:[#allocation5 + $0x108] sm:$0xff]
    %v212 = vld [vmem:[#allocation5 + $0x110] sm:$0xff]
    %v213 = vld [vmem:[#allocation5 + $0x118] sm:$0xff]
    %v214 = vld [vmem:[#allocation5 + $0x120] sm:$0xff]
    %v215 = vld [vmem:[#allocation5 + $0x128] sm:$0xff]
    %v216 = vld [vmem:[#allocation5 + $0x130] sm:$0xff]
    %v217 = vld [vmem:[#allocation5 + $0x138] sm:$0xff]
    %v218 = vld [vmem:[#allocation5 + $0x140] sm:$0xff]
    %v219 = vld [vmem:[#allocation5 + $0x148] sm:$0xff]
    %v220 = vld [vmem:[#allocation5 + $0x150] sm:$0xff]
    %v221 = vld [vmem:[#allocation5 + $0x158] sm:$0xff]
    %v222 = vld [vmem:[#allocation5 + $0x160] sm:$0xff]
    %v223 = vld [vmem:[#allocation5 + $0x168] sm:$0xff]
    %v224 = vld [vmem:[#allocation5 + $0x170] sm:$0xff]
    %v225 = vld [vmem:[#allocation5 + $0x178] sm:$0xff]
    %v226 = vld [vmem:[#allocation5 + $0x180] sm:$0xff]
    %v227 = vld [vmem:[#allocation5 + $0x188] sm:$0xff]
    %v228 = vld [vmem:[#allocation5 + $0x190] sm:$0xff]
    %v229 = vld [vmem:[#allocation5 + $0x198] sm:$0xff]
    %v230 = vld [vmem:[#allocation5 + $0x1a0] sm:$0xff]
    %v231 = vld [vmem:[#allocation5 + $0x1a8] sm:$0xff]
    %v232 = vld [vmem:[#allocation5 + $0x1b0] sm:$0xff]
    %v233 = vld [vmem:[#allocation5 + $0x1b8] sm:$0xff]
    %v234 = vld [vmem:[#allocation5 + $0x1c0] sm:$0xff]
    %v235 = vld [vmem:[#allocation5 + $0x1c8] sm:$0xff]
    %v236 = vld [vmem:[#allocation5 + $0x1d0] sm:$0xff]
    %v237 = vld [vmem:[#allocation5 + $0x1d8] sm:$0xff]
    %v238 = vld [vmem:[#allocation5 + $0x1e0] sm:$0xff]
    %v239 = vld [vmem:[#allocation5 + $0x1e8] sm:$0xff]
    %v240 = vld [vmem:[#allocation5 + $0x1f0] sm:$0xff]
    %v241 = vld [vmem:[#allocation5 + $0x1f8] sm:$0xff]
    %v242 = vld [vmem:[#allocation5 + $0x200] sm:$0xff]
    %v243 = vld [vmem:[#allocation5 + $0x208] sm:$0xff]
    %v244 = vld [vmem:[#allocation5 + $0x210] sm:$0xff]
    %v245 = vld [vmem:[#allocation5 + $0x218] sm:$0xff]
    %v246 = vld [vmem:[#allocation5 + $0x220] sm:$0xff]
    %v247 = vld [vmem:[#allocation5 + $0x228] sm:$0xff]
    %v248 = vld [vmem:[#allocation5 + $0x230] sm:$0xff]
    %v249 = vld [vmem:[#allocation5 + $0x238] sm:$0xff]
    %v250 = vld [vmem:[#allocation5 + $0x240] sm:$0xff]
    %v251 = vld [vmem:[#allocation5 + $0x248] sm:$0xff]
    %v252 = vld [vmem:[#allocation5 + $0x250] sm:$0xff]
    %v253 = vld [vmem:[#allocation5 + $0x258] sm:$0xff]
    %v254 = vld [vmem:[#allocation5 + $0x260] sm:$0xff]
    %v255 = vld [vmem:[#allocation5 + $0x268] sm:$0xff]
    %v256 = vld [vmem:[#allocation5 + $0x270] sm:$0xff]
    %v257 = vld [vmem:[#allocation5 + $0x278] sm:$0xff]
    %v258 = vld [vmem:[#allocation5 + $0x280] sm:$0xff]
    %v259 = vld [vmem:[#allocation5 + $0x288] sm:$0xff]
    %v260 = vld [vmem:[#allocation5 + $0x290] sm:$0xff]
    %v261 = vld [vmem:[#allocation5 + $0x298] sm:$0xff]
    %v262 = vld [vmem:[#allocation5 + $0x2a0] sm:$0xff]
    %v263 = vld [vmem:[#allocation5 + $0x2a8] sm:$0xff]
    %v264 = vld [vmem:[#allocation5 + $0x2b0] sm:$0xff]
    %v265 = vld [vmem:[#allocation5 + $0x2b8] sm:$0xff]
    %v266 = vld [vmem:[#allocation5 + $0x2c0] sm:$0xff]
    %v267 = vld [vmem:[#allocation5 + $0x2c8] sm:$0xff]
    %v268 = vld [vmem:[#allocation5 + $0x2d0] sm:$0xff]
    %v269 = vld [vmem:[#allocation5 + $0x2d8] sm:$0xff]
    %v270 = vld [vmem:[#allocation5 + $0x2e0] sm:$0xff]
    %v271 = vld [vmem:[#allocation5 + $0x2e8] sm:$0xff]
    %v272 = vld [vmem:[#allocation5 + $0x2f0] sm:$0xff]
    %v273 = vld [vmem:[#allocation5 + $0x2f8] sm:$0xff]
    %v274 = vld [vmem:[#allocation5 + $0x300] sm:$0xff]
    %v275 = vld [vmem:[#allocation5 + $0x308] sm:$0xff]
    %v276 = vld [vmem:[#allocation5 + $0x310] sm:$0xff]
    %v277 = vld [vmem:[#allocation5 + $0x318] sm:$0xff]
    %v278 = vld [vmem:[#allocation5 + $0x320] sm:$0xff]
    %v279 = vld [vmem:[#allocation5 + $0x328] sm:$0xff]
    %v280 = vld [vmem:[#allocation5 + $0x330] sm:$0xff]
    %v281 = vld [vmem:[#allocation5 + $0x338] sm:$0xff]
    %v282 = vld [vmem:[#allocation5 + $0x340] sm:$0xff]
    %v283 = vld [vmem:[#allocation5 + $0x348] sm:$0xff]
    %v284 = vld [vmem:[#allocation5 + $0x350] sm:$0xff]
    %v285 = vld [vmem:[#allocation5 + $0x358] sm:$0xff]
    %v286 = vld [vmem:[#allocation5 + $0x360] sm:$0xff]
    %v287 = vld [vmem:[#allocation5 + $0x368] sm:$0xff]
    %v288 = vld [vmem:[#allocation5 + $0x370] sm:$0xff]
    %v289 = vld [vmem:[#allocation5 + $0x378] sm:$0xff]
    %v290 = vld [vmem:[#allocation5 + $0x380] sm:$0xff]
    %v291 = vld [vmem:[#allocation5 + $0x388] sm:$0xff]
    %v292 = vld [vmem:[#allocation5 + $0x390] sm:$0xff]
    %v293 = vld [vmem:[#allocation5 + $0x398] sm:$0xff]
    %v294 = vld [vmem:[#allocation5 + $0x3a0] sm:$0xff]
    %v295 = vld [vmem:[#allocation5 + $0x3a8] sm:$0xff]
    %v296 = vld [vmem:[#allocation5 + $0x3b0] sm:$0xff]
    %v297 = vld [vmem:[#allocation5 + $0x3b8] sm:$0xff]
    %v298 = vld [vmem:[#allocation5 + $0x3c0] sm:$0xff]
    %v299 = vld [vmem:[#allocation5 + $0x3c8] sm:$0xff]
    %v300 = vld [vmem:[#allocation5 + $0x3d0] sm:$0xff]
    %v301 = vld [vmem:[#allocation5 + $0x3d8] sm:$0xff]
    %v302 = vld [vmem:[#allocation5 + $0x3e0] sm:$0xff]
    %v303 = vld [vmem:[#allocation5 + $0x3e8] sm:$0xff]
    %v304 = vld [vmem:[#allocation5 + $0x3f0] sm:$0xff]
    %v305 = vld [vmem:[#allocation5 + $0x3f8] sm:$0xff]
    %v306 = vld [vmem:[#allocation5 + $0x400] sm:$0xff]
    %v307 = vld [vmem:[#allocation5 + $0x408] sm:$0xff]
    %v308 = vld [vmem:[#allocation5 + $0x410] sm:$0xff]
    %v309 = vld [vmem:[#allocation5 + $0x418] sm:$0xff]
    %v310 = vld [vmem:[#allocation5 + $0x420] sm:$0xff]
    %v311 = vld [vmem:[#allocation5 + $0x428] sm:$0xff]
    %v312 = vld [vmem:[#allocation5 + $0x430] sm:$0xff]
    %v313 = vld [vmem:[#allocation5 + $0x438] sm:$0xff]
    %v314 = vld [vmem:[#allocation5 + $0x440] sm:$0xff]
    %v315 = vld [vmem:[#allocation5 + $0x448] sm:$0xff]
    %v316 = vld [vmem:[#allocation5 + $0x450] sm:$0xff]
    %v317 = vld [vmem:[#allocation5 + $0x458] sm:$0xff]
    %v318 = vld [vmem:[#allocation5 + $0x460] sm:$0xff]
    %v319 = vld [vmem:[#allocation5 + $0x468] sm:$0xff]
    %v320 = vld [vmem:[#allocation5 + $0x470] sm:$0xff]
    %v321 = vld [vmem:[#allocation5 + $0x478] sm:$0xff]
    %v322 = vld [vmem:[#allocation5 + $0x480] sm:$0xff]
    %v323 = vld [vmem:[#allocation5 + $0x488] sm:$0xff]
    %v324 = vld [vmem:[#allocation5 + $0x490] sm:$0xff]
    %v325 = vld [vmem:[#allocation5 + $0x498] sm:$0xff]
    %v326 = vld [vmem:[#allocation5 + $0x4a0] sm:$0xff]
    %v327 = vld [vmem:[#allocation5 + $0x4a8] sm:$0xff]
    %v328 = vld [vmem:[#allocation5 + $0x4b0] sm:$0xff]
    %v329 = vld [vmem:[#allocation5 + $0x4b8] sm:$0xff]
    %v330 = vld [vmem:[#allocation5 + $0x4c0] sm:$0xff]
    %v331 = vld [vmem:[#allocation5 + $0x4c8] sm:$0xff]
    %v332 = vld [vmem:[#allocation5 + $0x4d0] sm:$0xff]
    %v333 = vld [vmem:[#allocation5 + $0x4d8] sm:$0xff]
    %v334 = vld [vmem:[#allocation5 + $0x4e0] sm:$0xff]
    %v335 = vld [vmem:[#allocation5 + $0x4e8] sm:$0xff]
    %v336 = vld [vmem:[#allocation5 + $0x4f0] sm:$0xff]
    %v337 = vld [vmem:[#allocation5 + $0x4f8] sm:$0xff]
    %v338 = vld [vmem:[#allocation5 + $0x500] sm:$0xff]
    %v339 = vld [vmem:[#allocation5 + $0x508] sm:$0xff]
    %v340 = vld [vmem:[#allocation5 + $0x510] sm:$0xff]
    %v341 = vld [vmem:[#allocation5 + $0x518] sm:$0xff]
    %v342 = vld [vmem:[#allocation5 + $0x520] sm:$0xff]
    %v343 = vld [vmem:[#allocation5 + $0x528] sm:$0xff]
    %v344 = vld [vmem:[#allocation5 + $0x530] sm:$0xff]
    %v345 = vld [vmem:[#allocation5 + $0x538] sm:$0xff]
    %v346 = vld [vmem:[#allocation5 + $0x540] sm:$0xff]
    %v347 = vld [vmem:[#allocation5 + $0x548] sm:$0xff]
    %v348 = vld [vmem:[#allocation5 + $0x550] sm:$0xff]
    %v349 = vld [vmem:[#allocation5 + $0x558] sm:$0xff]
    %v350 = vld [vmem:[#allocation5 + $0x560] sm:$0xff]
    %v351 = vld [vmem:[#allocation5 + $0x568] sm:$0xff]
    %v352 = vld [vmem:[#allocation5 + $0x570] sm:$0xff]
    %v353 = vld [vmem:[#allocation5 + $0x578] sm:$0xff]
    %v354 = vld [vmem:[#allocation5 + $0x580] sm:$0xff]
    %v355 = vld [vmem:[#allocation5 + $0x588] sm:$0xff]
    %v356 = vld [vmem:[#allocation5 + $0x590] sm:$0xff]
    %v357 = vld [vmem:[#allocation5 + $0x598] sm:$0xff]
    %v358 = vld [vmem:[#allocation5 + $0x5a0] sm:$0xff]
    %v359 = vld [vmem:[#allocation5 + $0x5a8] sm:$0xff]
    %v360 = vld [vmem:[#allocation5 + $0x5b0] sm:$0xff]
    %v361 = vld [vmem:[#allocation5 + $0x5b8] sm:$0xff]
    %v362 = vld [vmem:[#allocation5 + $0x5c0] sm:$0xff]
    %v363 = vld [vmem:[#allocation5 + $0x5c8] sm:$0xff]
    %v364 = vld [vmem:[#allocation5 + $0x5d0] sm:$0xff]
    %v365 = vld [vmem:[#allocation5 + $0x5d8] sm:$0xff]
    %v366 = vld [vmem:[#allocation5 + $0x5e0] sm:$0xff]
    %v367 = vld [vmem:[#allocation5 + $0x5e8] sm:$0xff]
    %v368 = vld [vmem:[#allocation5 + $0x5f0] sm:$0xff]
    %v369 = vld [vmem:[#allocation5 + $0x5f8] sm:$0xff]
    %v370 = vld [vmem:[#allocation5 + $0x600] sm:$0xff]
    %v371 = vld [vmem:[#allocation5 + $0x608] sm:$0xff]
    %v372 = vld [vmem:[#allocation5 + $0x610] sm:$0xff]
    %v373 = vld [vmem:[#allocation5 + $0x618] sm:$0xff]
    %v374 = vld [vmem:[#allocation5 + $0x620] sm:$0xff]
    %v375 = vld [vmem:[#allocation5 + $0x628] sm:$0xff]
    %v376 = vld [vmem:[#allocation5 + $0x630] sm:$0xff]
    %v377 = vld [vmem:[#allocation5 + $0x638] sm:$0xff]
    %v378 = vld [vmem:[#allocation5 + $0x640] sm:$0xff]
    %v379 = vld [vmem:[#allocation5 + $0x648] sm:$0xff]
    %v380 = vld [vmem:[#allocation5 + $0x650] sm:$0xff]
    %v381 = vld [vmem:[#allocation5 + $0x658] sm:$0xff]
    %v382 = vld [vmem:[#allocation5 + $0x660] sm:$0xff]
    %v383 = vld [vmem:[#allocation5 + $0x668] sm:$0xff]
    %v384 = vld [vmem:[#allocation5 + $0x670] sm:$0xff]
    %v385 = vld [vmem:[#allocation5 + $0x678] sm:$0xff]
    %v386 = vld [vmem:[#allocation5 + $0x680] sm:$0xff]
    %v387 = vld [vmem:[#allocation5 + $0x688] sm:$0xff]
    %v388 = vld [vmem:[#allocation5 + $0x690] sm:$0xff]
    %v389 = vld [vmem:[#allocation5 + $0x698] sm:$0xff]
    %v390 = vld [vmem:[#allocation5 + $0x6a0] sm:$0xff]
    %v391 = vld [vmem:[#allocation5 + $0x6a8] sm:$0xff]
    %v392 = vld [vmem:[#allocation5 + $0x6b0] sm:$0xff]
    %v393 = vld [vmem:[#allocation5 + $0x6b8] sm:$0xff]
    %v394 = vld [vmem:[#allocation5 + $0x6c0] sm:$0xff]
    %v395 = vld [vmem:[#allocation5 + $0x6c8] sm:$0xff]
    %v396 = vld [vmem:[#allocation5 + $0x6d0] sm:$0xff]
    %v397 = vld [vmem:[#allocation5 + $0x6d8] sm:$0xff]
    %v398 = vld [vmem:[#allocation5 + $0x6e0] sm:$0xff]
    %v399 = vld [vmem:[#allocation5 + $0x6e8] sm:$0xff]
    %v400 = vld [vmem:[#allocation5 + $0x6f0] sm:$0xff]
    %v401 = vld [vmem:[#allocation5 + $0x6f8] sm:$0xff]
    %v402 = vld [vmem:[#allocation5 + $0x700] sm:$0xff]
    %v403 = vld [vmem:[#allocation5 + $0x708] sm:$0xff]
    %v404 = vld [vmem:[#allocation5 + $0x710] sm:$0xff]
    %v405 = vld [vmem:[#allocation5 + $0x718] sm:$0xff]
    %v406 = vld [vmem:[#allocation5 + $0x720] sm:$0xff]
    %v407 = vld [vmem:[#allocation5 + $0x728] sm:$0xff]
    %v408 = vld [vmem:[#allocation5 + $0x730] sm:$0xff]
    %v409 = vld [vmem:[#allocation5 + $0x738] sm:$0xff]
    %v410 = vld [vmem:[#allocation5 + $0x740] sm:$0xff]
    %v411 = vld [vmem:[#allocation5 + $0x748] sm:$0xff]
    %v412 = vld [vmem:[#allocation5 + $0x750] sm:$0xff]
    %v413 = vld [vmem:[#allocation5 + $0x758] sm:$0xff]
    %v414 = vld [vmem:[#allocation5 + $0x760] sm:$0xff]
    %v415 = vld [vmem:[#allocation5 + $0x768] sm:$0xff]
    %v416 = vld [vmem:[#allocation5 + $0x770] sm:$0xff]
    %v417 = vld [vmem:[#allocation5 + $0x778] sm:$0xff]
    %v418 = vld [vmem:[#allocation5 + $0x780] sm:$0xff]
    %v419 = vld [vmem:[#allocation5 + $0x788] sm:$0xff]
    %v420 = vld [vmem:[#allocation5 + $0x790] sm:$0xff]
    %v421 = vld [vmem:[#allocation5 + $0x798] sm:$0xff]
    %v422 = vld [vmem:[#allocation5 + $0x7a0] sm:$0xff]
    %v423 = vld [vmem:[#allocation5 + $0x7a8] sm:$0xff]
    %v424 = vld [vmem:[#allocation5 + $0x7b0] sm:$0xff]
    %v425 = vld [vmem:[#allocation5 + $0x7b8] sm:$0xff]
    %v426 = vld [vmem:[#allocation5 + $0x7c0] sm:$0xff]
    %v427 = vld [vmem:[#allocation5 + $0x7c8] sm:$0xff]
    %v428 = vld [vmem:[#allocation5 + $0x7d0] sm:$0xff]
    %v429 = vld [vmem:[#allocation5 + $0x7d8] sm:$0xff]
    %v430 = vld [vmem:[#allocation5 + $0x7e0] sm:$0xff]
    %v431 = vld [vmem:[#allocation5 + $0x7e8] sm:$0xff]
    %v432 = vld [vmem:[#allocation5 + $0x7f0] sm:$0xff]
    %v433 = vld [vmem:[#allocation5 + $0x7f8] sm:$0xff]
    %v434 = vld [vmem:[#allocation5 + $0x800] sm:$0xff]
    %v435 = vld [vmem:[#allocation5 + $0x808] sm:$0xff]
    %v436 = vld [vmem:[#allocation5 + $0x810] sm:$0xff]
    %v437 = vld [vmem:[#allocation5 + $0x818] sm:$0xff]
    %v438 = vld [vmem:[#allocation5 + $0x820] sm:$0xff]
    %v439 = vld [vmem:[#allocation5 + $0x828] sm:$0xff]
    %v440 = vld [vmem:[#allocation5 + $0x830] sm:$0xff]
    %v441 = vld [vmem:[#allocation5 + $0x838] sm:$0xff]
    %v442 = vld [vmem:[#allocation5 + $0x840] sm:$0xff]
    %v443 = vld [vmem:[#allocation5 + $0x848] sm:$0xff]
    %v444 = vld [vmem:[#allocation5 + $0x850] sm:$0xff]
    %v445 = vld [vmem:[#allocation5 + $0x858] sm:$0xff]
    %v446 = vld [vmem:[#allocation5 + $0x860] sm:$0xff]
    %v447 = vld [vmem:[#allocation5 + $0x868] sm:$0xff]
    %v448 = vld [vmem:[#allocation5 + $0x870] sm:$0xff]
    %v449 = vld [vmem:[#allocation5 + $0x878] sm:$0xff]
    %v450 = vld [vmem:[#allocation5 + $0x880] sm:$0xff]
    %v451 = vld [vmem:[#allocation5 + $0x888] sm:$0xff]
    %v452 = vld [vmem:[#allocation5 + $0x890] sm:$0xff]
    %v453 = vld [vmem:[#allocation5 + $0x898] sm:$0xff]
    %v454 = vld [vmem:[#allocation5 + $0x8a0] sm:$0xff]
    %v455 = vld [vmem:[#allocation5 + $0x8a8] sm:$0xff]
    %v456 = vld [vmem:[#allocation5 + $0x8b0] sm:$0xff]
    %v457 = vld [vmem:[#allocation5 + $0x8b8] sm:$0xff]
    %v458 = vld [vmem:[#allocation5 + $0x8c0] sm:$0xff]
    %v459 = vld [vmem:[#allocation5 + $0x8c8] sm:$0xff]
    %v460 = vld [vmem:[#allocation5 + $0x8d0] sm:$0xff]
    %v461 = vld [vmem:[#allocation5 + $0x8d8] sm:$0xff]
    %v462 = vld [vmem:[#allocation5 + $0x8e0] sm:$0xff]
    %v463 = vld [vmem:[#allocation5 + $0x8e8] sm:$0xff]
    %v464 = vld [vmem:[#allocation5 + $0x8f0] sm:$0xff]
    %v465 = vld [vmem:[#allocation5 + $0x8f8] sm:$0xff]
    %v466 = vld [vmem:[#allocation5 + $0x900] sm:$0xff]
    %v467 = vld [vmem:[#allocation5 + $0x908] sm:$0xff]
    %v468 = vld [vmem:[#allocation5 + $0x910] sm:$0xff]
    %v469 = vld [vmem:[#allocation5 + $0x918] sm:$0xff]
    %v470 = vld [vmem:[#allocation5 + $0x920] sm:$0xff]
    %v471 = vld [vmem:[#allocation5 + $0x928] sm:$0xff]
    %v472 = vld [vmem:[#allocation5 + $0x930] sm:$0xff]
    %v473 = vld [vmem:[#allocation5 + $0x938] sm:$0xff]
    %v474 = vld [vmem:[#allocation5 + $0x940] sm:$0xff]
    %v475 = vld [vmem:[#allocation5 + $0x948] sm:$0xff]
    %v476 = vld [vmem:[#allocation5 + $0x950] sm:$0xff]
    %v477 = vld [vmem:[#allocation5 + $0x958] sm:$0xff]
    %v478 = vld [vmem:[#allocation5 + $0x960] sm:$0xff]
    %v479 = vld [vmem:[#allocation5 + $0x968] sm:$0xff]
    %v480 = vld [vmem:[#allocation5 + $0x970] sm:$0xff]
    %v481 = vld [vmem:[#allocation5 + $0x978] sm:$0xff]
    %v482 = vld [vmem:[#allocation5 + $0x980] sm:$0xff]
    %v483 = vld [vmem:[#allocation5 + $0x988] sm:$0xff]
    %v484 = vld [vmem:[#allocation5 + $0x990] sm:$0xff]
    %v485 = vld [vmem:[#allocation5 + $0x998] sm:$0xff]
    %v486 = vld [vmem:[#allocation5 + $0x9a0] sm:$0xff]
    %v487 = vld [vmem:[#allocation5 + $0x9a8] sm:$0xff]
    %v488 = vld [vmem:[#allocation5 + $0x9b0] sm:$0xff]
    %v489 = vld [vmem:[#allocation5 + $0x9b8] sm:$0xff]
    %v490 = vld [vmem:[#allocation5 + $0x9c0] sm:$0xff]
    %v491 = vld [vmem:[#allocation5 + $0x9c8] sm:$0xff]
    %v492 = vld [vmem:[#allocation5 + $0x9d0] sm:$0xff]
    %v493 = vld [vmem:[#allocation5 + $0x9d8] sm:$0xff]
    %v494 = vld [vmem:[#allocation5 + $0x9e0] sm:$0xff]
    %v495 = vld [vmem:[#allocation5 + $0x9e8] sm:$0xff]
    %v496 = vld [vmem:[#allocation5 + $0x9f0] sm:$0xff]
    %v497 = vld [vmem:[#allocation5 + $0x9f8] sm:$0xff]
    %v498 = vld [vmem:[#allocation5 + $0xa00] sm:$0xff]
    %v499 = vld [vmem:[#allocation5 + $0xa08] sm:$0xff]
    %v500 = vld [vmem:[#allocation5 + $0xa10] sm:$0xff]
    %v501 = vld [vmem:[#allocation5 + $0xa18] sm:$0xff]
    %v502 = vld [vmem:[#allocation5 + $0xa20] sm:$0xff]
    %v503 = vld [vmem:[#allocation5 + $0xa28] sm:$0xff]
    %v504 = vld [vmem:[#allocation5 + $0xa30] sm:$0xff]
    %v505 = vld [vmem:[#allocation5 + $0xa38] sm:$0xff]
    %v506 = vld [vmem:[#allocation5 + $0xa40] sm:$0xff]
    %v507 = vld [vmem:[#allocation5 + $0xa48] sm:$0xff]
    %v508 = vld [vmem:[#allocation5 + $0xa50] sm:$0xff]
    %v509 = vld [vmem:[#allocation5 + $0xa58] sm:$0xff]
    %v510 = vld [vmem:[#allocation5 + $0xa60] sm:$0xff]
    %v511 = vld [vmem:[#allocation5 + $0xa68] sm:$0xff]
    %v512 = vld [vmem:[#allocation5 + $0xa70] sm:$0xff]
    %v513 = vld [vmem:[#allocation5 + $0xa78] sm:$0xff]
    %v514 = vld [vmem:[#allocation5 + $0xa80] sm:$0xff]
    %v515 = vld [vmem:[#allocation5 + $0xa88] sm:$0xff]
    %v516 = vld [vmem:[#allocation5 + $0xa90] sm:$0xff]
    %v517 = vld [vmem:[#allocation5 + $0xa98] sm:$0xff]
    %v518 = vld [vmem:[#allocation5 + $0xaa0] sm:$0xff]
    %v519 = vld [vmem:[#allocation5 + $0xaa8] sm:$0xff]
    %v520 = vld [vmem:[#allocation5 + $0xab0] sm:$0xff]
    %v521 = vld [vmem:[#allocation5 + $0xab8] sm:$0xff]
    %v522 = vld [vmem:[#allocation5 + $0xac0] sm:$0xff]
    %v523 = vld [vmem:[#allocation5 + $0xac8] sm:$0xff]
    %v524 = vld [vmem:[#allocation5 + $0xad0] sm:$0xff]
    %v525 = vld [vmem:[#allocation5 + $0xad8] sm:$0xff]
    %v526 = vld [vmem:[#allocation5 + $0xae0] sm:$0xff]
    %v527 = vld [vmem:[#allocation5 + $0xae8] sm:$0xff]
    %v528 = vld [vmem:[#allocation5 + $0xaf0] sm:$0xff]
    %v529 = vld [vmem:[#allocation5 + $0xaf8] sm:$0xff]
    %v530 = vld [vmem:[#allocation5 + $0xb00] sm:$0xff]
    %v531 = vld [vmem:[#allocation5 + $0xb08] sm:$0xff]
    %v532 = vld [vmem:[#allocation5 + $0xb10] sm:$0xff]
    %v533 = vld [vmem:[#allocation5 + $0xb18] sm:$0xff]
    %v534 = vld [vmem:[#allocation5 + $0xb20] sm:$0xff]
    %v535 = vld [vmem:[#allocation5 + $0xb28] sm:$0xff]
    %v536 = vld [vmem:[#allocation5 + $0xb30] sm:$0xff]
    %v537 = vld [vmem:[#allocation5 + $0xb38] sm:$0xff]
    %v538 = vld [vmem:[#allocation5 + $0xb40] sm:$0xff]
    %v539 = vld [vmem:[#allocation5 + $0xb48] sm:$0xff]
    %v540 = vld [vmem:[#allocation5 + $0xb50] sm:$0xff]
    %v541 = vld [vmem:[#allocation5 + $0xb58] sm:$0xff]
    %v542 = vld [vmem:[#allocation5 + $0xb60] sm:$0xff]
    %v543 = vld [vmem:[#allocation5 + $0xb68] sm:$0xff]
    %v544 = vld [vmem:[#allocation5 + $0xb70] sm:$0xff]
    %v545 = vld [vmem:[#allocation5 + $0xb78] sm:$0xff]
    %v546 = vld [vmem:[#allocation5 + $0xb80] sm:$0xff]
    %v547 = vld [vmem:[#allocation5 + $0xb88] sm:$0xff]
    %v548 = vld [vmem:[#allocation5 + $0xb90] sm:$0xff]
    %v549 = vld [vmem:[#allocation5 + $0xb98] sm:$0xff]
    %v550 = vld [vmem:[#allocation5 + $0xba0] sm:$0xff]
    %v551 = vld [vmem:[#allocation5 + $0xba8] sm:$0xff]
    %v552 = vld [vmem:[#allocation5 + $0xbb0] sm:$0xff]
    %v553 = vld [vmem:[#allocation5 + $0xbb8] sm:$0xff]
    %v554 = vld [vmem:[#allocation5 + $0xbc0] sm:$0xff]
    %v555 = vld [vmem:[#allocation5 + $0xbc8] sm:$0xff]
    %v556 = vld [vmem:[#allocation5 + $0xbd0] sm:$0xff]
    %v557 = vld [vmem:[#allocation5 + $0xbd8] sm:$0xff]
    %v558 = vld [vmem:[#allocation5 + $0xbe0] sm:$0xff]
    %v559 = vld [vmem:[#allocation5 + $0xbe8] sm:$0xff]
    %v560 = vld [vmem:[#allocation5 + $0xbf0] sm:$0xff]
    %v561 = vld [vmem:[#allocation5 + $0xbf8] sm:$0xff]
    %v562 = vld [vmem:[#allocation5 + $0xc00] sm:$0xff]
    %v563 = vld [vmem:[#allocation5 + $0xc08] sm:$0xff]
    %v564 = vld [vmem:[#allocation5 + $0xc10] sm:$0xff]
    %v565 = vld [vmem:[#allocation5 + $0xc18] sm:$0xff]
    %v566 = vld [vmem:[#allocation5 + $0xc20] sm:$0xff]
    %v567 = vld [vmem:[#allocation5 + $0xc28] sm:$0xff]
    %v568 = vld [vmem:[#allocation5 + $0xc30] sm:$0xff]
    %v569 = vld [vmem:[#allocation5 + $0xc38] sm:$0xff]
    %v570 = vld [vmem:[#allocation5 + $0xc40] sm:$0xff]
    %v571 = vld [vmem:[#allocation5 + $0xc48] sm:$0xff]
    %v572 = vld [vmem:[#allocation5 + $0xc50] sm:$0xff]
    %v573 = vld [vmem:[#allocation5 + $0xc58] sm:$0xff]
    %v574 = vld [vmem:[#allocation5 + $0xc60] sm:$0xff]
    %v575 = vld [vmem:[#allocation5 + $0xc68] sm:$0xff]
    %v576 = vld [vmem:[#allocation5 + $0xc70] sm:$0xff]
    %v577 = vld [vmem:[#allocation5 + $0xc78] sm:$0xff]
    %v578 = vld [vmem:[#allocation5 + $0xc80] sm:$0xff]
    %v579 = vld [vmem:[#allocation5 + $0xc88] sm:$0xff]
    %v580 = vld [vmem:[#allocation5 + $0xc90] sm:$0xff]
    %v581 = vld [vmem:[#allocation5 + $0xc98] sm:$0xff]
    %v582 = vld [vmem:[#allocation5 + $0xca0] sm:$0xff]
    %v583 = vld [vmem:[#allocation5 + $0xca8] sm:$0xff]
    %v584 = vld [vmem:[#allocation5 + $0xcb0] sm:$0xff]
    %v585 = vld [vmem:[#allocation5 + $0xcb8] sm:$0xff]
    %v586 = vld [vmem:[#allocation5 + $0xcc0] sm:$0xff]
    %v587 = vld [vmem:[#allocation5 + $0xcc8] sm:$0xff]
    %v588 = vld [vmem:[#allocation5 + $0xcd0] sm:$0xff]
    %v589 = vld [vmem:[#allocation5 + $0xcd8] sm:$0xff]
    %v590 = vld [vmem:[#allocation5 + $0xce0] sm:$0xff]
    %v591 = vld [vmem:[#allocation5 + $0xce8] sm:$0xff]
    %v592 = vld [vmem:[#allocation5 + $0xcf0] sm:$0xff]
    %v593 = vld [vmem:[#allocation5 + $0xcf8] sm:$0xff]
    %v594 = vld [vmem:[#allocation5 + $0xd00] sm:$0xff]
    %v595 = vld [vmem:[#allocation5 + $0xd08] sm:$0xff]
    %v596 = vld [vmem:[#allocation5 + $0xd10] sm:$0xff]
    %v597 = vld [vmem:[#allocation5 + $0xd18] sm:$0xff]
    %v598 = vld [vmem:[#allocation5 + $0xd20] sm:$0xff]
    %v599 = vld [vmem:[#allocation5 + $0xd28] sm:$0xff]
    %v600 = vld [vmem:[#allocation5 + $0xd30] sm:$0xff]
    %v601 = vld [vmem:[#allocation5 + $0xd38] sm:$0xff]
    %v602 = vld [vmem:[#allocation5 + $0xd40] sm:$0xff]
    %v603 = vld [vmem:[#allocation5 + $0xd48] sm:$0xff]
    %v604 = vld [vmem:[#allocation5 + $0xd50] sm:$0xff]
    %v605 = vld [vmem:[#allocation5 + $0xd58] sm:$0xff]
    %v606 = vld [vmem:[#allocation5 + $0xd60] sm:$0xff]
    %v607 = vld [vmem:[#allocation5 + $0xd68] sm:$0xff]
    %v608 = vld [vmem:[#allocation5 + $0xd70] sm:$0xff]
    %v609 = vld [vmem:[#allocation5 + $0xd78] sm:$0xff]
    %v610 = vld [vmem:[#allocation5 + $0xd80] sm:$0xff]
    %v611 = vld [vmem:[#allocation5 + $0xd88] sm:$0xff]
    %v612 = vld [vmem:[#allocation5 + $0xd90] sm:$0xff]
    %v613 = vld [vmem:[#allocation5 + $0xd98] sm:$0xff]
    %v614 = vld [vmem:[#allocation5 + $0xda0] sm:$0xff]
    %v615 = vld [vmem:[#allocation5 + $0xda8] sm:$0xff]
    %v616 = vld [vmem:[#allocation5 + $0xdb0] sm:$0xff]
    %v617 = vld [vmem:[#allocation5 + $0xdb8] sm:$0xff]
    %v618 = vld [vmem:[#allocation5 + $0xdc0] sm:$0xff]
    %v619 = vld [vmem:[#allocation5 + $0xdc8] sm:$0xff]
    %v620 = vld [vmem:[#allocation5 + $0xdd0] sm:$0xff]
    %v621 = vld [vmem:[#allocation5 + $0xdd8] sm:$0xff]
    %v622 = vld [vmem:[#allocation5 + $0xde0] sm:$0xff]
    %v623 = vld [vmem:[#allocation5 + $0xde8] sm:$0xff]
    %v624 = vld [vmem:[#allocation5 + $0xdf0] sm:$0xff]
    %v625 = vld [vmem:[#allocation5 + $0xdf8] sm:$0xff]
    %v626 = vld [vmem:[#allocation5 + $0xe00] sm:$0xff]
    %v627 = vld [vmem:[#allocation5 + $0xe08] sm:$0xff]
    %v628 = vld [vmem:[#allocation5 + $0xe10] sm:$0xff]
    %v629 = vld [vmem:[#allocation5 + $0xe18] sm:$0xff]
    %v630 = vld [vmem:[#allocation5 + $0xe20] sm:$0xff]
    %v631 = vld [vmem:[#allocation5 + $0xe28] sm:$0xff]
    %v632 = vld [vmem:[#allocation5 + $0xe30] sm:$0xff]
    %v633 = vld [vmem:[#allocation5 + $0xe38] sm:$0xff]
    %v634 = vld [vmem:[#allocation5 + $0xe40] sm:$0xff]
    %v635 = vld [vmem:[#allocation5 + $0xe48] sm:$0xff]
    %v636 = vld [vmem:[#allocation5 + $0xe50] sm:$0xff]
    %v637 = vld [vmem:[#allocation5 + $0xe58] sm:$0xff]
    %v638 = vld [vmem:[#allocation5 + $0xe60] sm:$0xff]
    %v639 = vld [vmem:[#allocation5 + $0xe68] sm:$0xff]
    %v640 = vld [vmem:[#allocation5 + $0xe70] sm:$0xff]
    %v641 = vld [vmem:[#allocation5 + $0xe78] sm:$0xff]
    %v642 = vld [vmem:[#allocation5 + $0xe80] sm:$0xff]
    %v643 = vld [vmem:[#allocation5 + $0xe88] sm:$0xff]
    %v644 = vld [vmem:[#allocation5 + $0xe90] sm:$0xff]
    %v645 = vld [vmem:[#allocation5 + $0xe98] sm:$0xff]
    %v646 = vld [vmem:[#allocation5 + $0xea0] sm:$0xff]
    %v647 = vld [vmem:[#allocation5 + $0xea8] sm:$0xff]
    %v648 = vld [vmem:[#allocation5 + $0xeb0] sm:$0xff]
    %v649 = vld [vmem:[#allocation5 + $0xeb8] sm:$0xff]
    %v650 = vld [vmem:[#allocation5 + $0xec0] sm:$0xff]
    %v651 = vld [vmem:[#allocation5 + $0xec8] sm:$0xff]
    %v652 = vld [vmem:[#allocation5 + $0xed0] sm:$0xff]
    %v653 = vld [vmem:[#allocation5 + $0xed8] sm:$0xff]
    %v654 = vld [vmem:[#allocation5 + $0xee0] sm:$0xff]
    %v655 = vld [vmem:[#allocation5 + $0xee8] sm:$0xff]
    %v656 = vld [vmem:[#allocation5 + $0xef0] sm:$0xff]
    %v657 = vld [vmem:[#allocation5 + $0xef8] sm:$0xff]
    %v658 = vld [vmem:[#allocation5 + $0xf00] sm:$0xff]
    %v659 = vld [vmem:[#allocation5 + $0xf08] sm:$0xff]
    %v660 = vld [vmem:[#allocation5 + $0xf10] sm:$0xff]
    %v661 = vld [vmem:[#allocation5 + $0xf18] sm:$0xff]
    %v662 = vld [vmem:[#allocation5 + $0xf20] sm:$0xff]
    %v663 = vld [vmem:[#allocation5 + $0xf28] sm:$0xff]
    %v664 = vld [vmem:[#allocation5 + $0xf30] sm:$0xff]
    %v665 = vld [vmem:[#allocation5 + $0xf38] sm:$0xff]
    %v666 = vld [vmem:[#allocation5 + $0xf40] sm:$0xff]
    %v667 = vld [vmem:[#allocation5 + $0xf48] sm:$0xff]
    %v668 = vld [vmem:[#allocation5 + $0xf50] sm:$0xff]
    %v669 = vld [vmem:[#allocation5 + $0xf58] sm:$0xff]
    %v670 = vld [vmem:[#allocation5 + $0xf60] sm:$0xff]
    %v671 = vld [vmem:[#allocation5 + $0xf68] sm:$0xff]
    %v672 = vld [vmem:[#allocation5 + $0xf70] sm:$0xff]
    %v673 = vld [vmem:[#allocation5 + $0xf78] sm:$0xff]
    %v674 = vld [vmem:[#allocation5 + $0xf80] sm:$0xff]
    %v675 = vld [vmem:[#allocation5 + $0xf88] sm:$0xff]
    %v676 = vld [vmem:[#allocation5 + $0xf90] sm:$0xff]
    %v677 = vld [vmem:[#allocation5 + $0xf98] sm:$0xff]
    %v678 = vld [vmem:[#allocation5 + $0xfa0] sm:$0xff]
    %v679 = vld [vmem:[#allocation5 + $0xfa8] sm:$0xff]
    %v680 = vld [vmem:[#allocation5 + $0xfb0] sm:$0xff]
    %v681 = vld [vmem:[#allocation5 + $0xfb8] sm:$0xff]
    %v682 = vld [vmem:[#allocation5 + $0xfc0] sm:$0xff]
    %v683 = vld [vmem:[#allocation5 + $0xfc8] sm:$0xff]
    %v684 = vld [vmem:[#allocation5 + $0xfd0] sm:$0xff]
    %v685 = vld [vmem:[#allocation5 + $0xfd8] sm:$0xff]
    %v686 = vld [vmem:[#allocation5 + $0xfe0] sm:$0xff]
    %v687 = vld [vmem:[#allocation5 + $0xfe8] sm:$0xff]
    %v688 = vld [vmem:[#allocation5 + $0xff0] sm:$0xff]
    %v689 = vld [vmem:[#allocation5 + $0xff8] sm:$0xff]
    %v690 = vld [vmem:[#allocation5 + $0x1000] sm:$0xff]
    %v691 = vld [vmem:[#allocation5 + $0x1008] sm:$0xff]
    %v692 = vld [vmem:[#allocation5 + $0x1010] sm:$0xff]
    %v693 = vld [vmem:[#allocation5 + $0x1018] sm:$0xff]
    %v694 = vld [vmem:[#allocation5 + $0x1020] sm:$0xff]
    %v695 = vld [vmem:[#allocation5 + $0x1028] sm:$0xff]
    %v696 = vld [vmem:[#allocation5 + $0x1030] sm:$0xff]
    %v697 = vld [vmem:[#allocation5 + $0x1038] sm:$0xff]
    %v698 = vld [vmem:[#allocation5 + $0x1040] sm:$0xff]
    %v699 = vld [vmem:[#allocation5 + $0x1048] sm:$0xff]
    %v700 = vld [vmem:[#allocation5 + $0x1050] sm:$0xff]
    %v701 = vld [vmem:[#allocation5 + $0x1058] sm:$0xff]
    %v702 = vld [vmem:[#allocation5 + $0x1060] sm:$0xff]
    %v703 = vld [vmem:[#allocation5 + $0x1068] sm:$0xff]
    %v704 = vld [vmem:[#allocation5 + $0x1070] sm:$0xff]
    %v705 = vld [vmem:[#allocation5 + $0x1078] sm:$0xff]
    %v706 = vld [vmem:[#allocation5 + $0x1080] sm:$0xff]
    %v707 = vld [vmem:[#allocation5 + $0x1088] sm:$0xff]
    %v708 = vld [vmem:[#allocation5 + $0x1090] sm:$0xff]
    %v709 = vld [vmem:[#allocation5 + $0x1098] sm:$0xff]
    %v710 = vld [vmem:[#allocation5 + $0x10a0] sm:$0xff]
    %v711 = vld [vmem:[#allocation5 + $0x10a8] sm:$0xff]
    %v712 = vld [vmem:[#allocation5 + $0x10b0] sm:$0xff]
    %v713 = vld [vmem:[#allocation5 + $0x10b8] sm:$0xff]
    %v714 = vld [vmem:[#allocation5 + $0x10c0] sm:$0xff]
    %v715 = vld [vmem:[#allocation5 + $0x10c8] sm:$0xff]
    %v716 = vld [vmem:[#allocation5 + $0x10d0] sm:$0xff]
    %v717 = vld [vmem:[#allocation5 + $0x10d8] sm:$0xff]
    %v718 = vld [vmem:[#allocation5 + $0x10e0] sm:$0xff]
    %v719 = vld [vmem:[#allocation5 + $0x10e8] sm:$0xff]
    %v720 = vld [vmem:[#allocation5 + $0x10f0] sm:$0xff]
    %v721 = vld [vmem:[#allocation5 + $0x10f8] sm:$0xff]
    %v722 = vld [vmem:[#allocation5 + $0x1100] sm:$0xff]
    %v723 = vld [vmem:[#allocation5 + $0x1108] sm:$0xff]
    %v724 = vld [vmem:[#allocation5 + $0x1110] sm:$0xff]
    %v725 = vld [vmem:[#allocation5 + $0x1118] sm:$0xff]
    %v726 = vld [vmem:[#allocation5 + $0x1120] sm:$0xff]
    %v727 = vld [vmem:[#allocation5 + $0x1128] sm:$0xff]
    %v728 = vld [vmem:[#allocation5 + $0x1130] sm:$0xff]
    %v729 = vld [vmem:[#allocation5 + $0x1138] sm:$0xff]
    %v730 = vld [vmem:[#allocation5 + $0x1140] sm:$0xff]
    %v731 = vld [vmem:[#allocation5 + $0x1148] sm:$0xff]
    %v732 = vld [vmem:[#allocation5 + $0x1150] sm:$0xff]
    %v733 = vld [vmem:[#allocation5 + $0x1158] sm:$0xff]
    %v734 = vld [vmem:[#allocation5 + $0x1160] sm:$0xff]
    %v735 = vld [vmem:[#allocation5 + $0x1168] sm:$0xff]
    %v736 = vld [vmem:[#allocation5 + $0x1170] sm:$0xff]
    %v737 = vld [vmem:[#allocation5 + $0x1178] sm:$0xff]
    %v738 = vld [vmem:[#allocation5 + $0x1180] sm:$0xff]
    %v739 = vld [vmem:[#allocation5 + $0x1188] sm:$0xff]
    %v740 = vld [vmem:[#allocation5 + $0x1190] sm:$0xff]
    %v741 = vld [vmem:[#allocation5 + $0x1198] sm:$0xff]
    %v742 = vld [vmem:[#allocation5 + $0x11a0] sm:$0xff]
    %v743 = vld [vmem:[#allocation5 + $0x11a8] sm:$0xff]
    %v744 = vld [vmem:[#allocation5 + $0x11b0] sm:$0xff]
    %v745 = vld [vmem:[#allocation5 + $0x11b8] sm:$0xff]
    %v746 = vld [vmem:[#allocation5 + $0x11c0] sm:$0xff]
    %v747 = vld [vmem:[#allocation5 + $0x11c8] sm:$0xff]
    %v748 = vld [vmem:[#allocation5 + $0x11d0] sm:$0xff]
    %v749 = vld [vmem:[#allocation5 + $0x11d8] sm:$0xff]
    %v750 = vld [vmem:[#allocation5 + $0x11e0] sm:$0xff]
    %v751 = vld [vmem:[#allocation5 + $0x11e8] sm:$0xff]
    %v752 = vld [vmem:[#allocation5 + $0x11f0] sm:$0xff]
    %v753 = vld [vmem:[#allocation5 + $0x11f8] sm:$0xff]
    %v754 = vld [vmem:[#allocation5 + $0x1200] sm:$0xff]
    %v755 = vld [vmem:[#allocation5 + $0x1208] sm:$0xff]
    %v756 = vld [vmem:[#allocation5 + $0x1210] sm:$0xff]
    %v757 = vld [vmem:[#allocation5 + $0x1218] sm:$0xff]
    %v758 = vld [vmem:[#allocation5 + $0x1220] sm:$0xff]
    %v759 = vld [vmem:[#allocation5 + $0x1228] sm:$0xff]
    %v760 = vld [vmem:[#allocation5 + $0x1230] sm:$0xff]
    %v761 = vld [vmem:[#allocation5 + $0x1238] sm:$0xff]
    %v762 = vld [vmem:[#allocation5 + $0x1240] sm:$0xff]
    %v763 = vld [vmem:[#allocation5 + $0x1248] sm:$0xff]
    %v764 = vld [vmem:[#allocation5 + $0x1250] sm:$0xff]
    %v765 = vld [vmem:[#allocation5 + $0x1258] sm:$0xff]
    %v766 = vld [vmem:[#allocation5 + $0x1260] sm:$0xff]
    %v767 = vld [vmem:[#allocation5 + $0x1268] sm:$0xff]
    %v768 = vld [vmem:[#allocation5 + $0x1270] sm:$0xff]
    %v769 = vld [vmem:[#allocation5 + $0x1278] sm:$0xff]
    %v770 = vld [vmem:[#allocation5 + $0x1280] sm:$0xff]
    %v771 = vld [vmem:[#allocation5 + $0x1288] sm:$0xff]
    %v772 = vld [vmem:[#allocation5 + $0x1290] sm:$0xff]
    %v773 = vld [vmem:[#allocation5 + $0x1298] sm:$0xff]
    %v774 = vld [vmem:[#allocation5 + $0x12a0] sm:$0xff]
    %v775 = vld [vmem:[#allocation5 + $0x12a8] sm:$0xff]
    %v776 = vld [vmem:[#allocation5 + $0x12b0] sm:$0xff]
    %v777 = vld [vmem:[#allocation5 + $0x12b8] sm:$0xff]
    %v778 = vld [vmem:[#allocation5 + $0x12c0] sm:$0xff]
    %v779 = vld [vmem:[#allocation5 + $0x12c8] sm:$0xff]
    %v780 = vld [vmem:[#allocation5 + $0x12d0] sm:$0xff]
    %v781 = vld [vmem:[#allocation5 + $0x12d8] sm:$0xff]
    %v782 = vld [vmem:[#allocation5 + $0x12e0] sm:$0xff]
    %v783 = vld [vmem:[#allocation5 + $0x12e8] sm:$0xff]
    %v784 = vld [vmem:[#allocation5 + $0x12f0] sm:$0xff]
    %v785 = vld [vmem:[#allocation5 + $0x12f8] sm:$0xff]
    %v786 = vld [vmem:[#allocation5 + $0x1300] sm:$0xff]
    %v787 = vld [vmem:[#allocation5 + $0x1308] sm:$0xff]
    %v788 = vld [vmem:[#allocation5 + $0x1310] sm:$0xff]
    %v789 = vld [vmem:[#allocation5 + $0x1318] sm:$0xff]
    %v790 = vld [vmem:[#allocation5 + $0x1320] sm:$0xff]
    %v791 = vld [vmem:[#allocation5 + $0x1328] sm:$0xff]
    %v792 = vld [vmem:[#allocation5 + $0x1330] sm:$0xff]
    %v793 = vld [vmem:[#allocation5 + $0x1338] sm:$0xff]
    %v794 = vld [vmem:[#allocation5 + $0x1340] sm:$0xff]
    %v795 = vld [vmem:[#allocation5 + $0x1348] sm:$0xff]
    %v796 = vld [vmem:[#allocation5 + $0x1350] sm:$0xff]
    %v797 = vld [vmem:[#allocation5 + $0x1358] sm:$0xff]
    %v798 = vld [vmem:[#allocation5 + $0x1360] sm:$0xff]
    %v799 = vld [vmem:[#allocation5 + $0x1368] sm:$0xff]
    %v800 = vld [vmem:[#allocation5 + $0x1370] sm:$0xff]
    %v801 = vld [vmem:[#allocation5 + $0x1378] sm:$0xff]
    %v802 = vld [vmem:[#allocation5 + $0x1380] sm:$0xff]
    %v803 = vld [vmem:[#allocation5 + $0x1388] sm:$0xff]
    %v804 = vld [vmem:[#allocation5 + $0x1390] sm:$0xff]
    %v805 = vld [vmem:[#allocation5 + $0x1398] sm:$0xff]
    %v806 = vld [vmem:[#allocation5 + $0x13a0] sm:$0xff]
    %v807 = vld [vmem:[#allocation5 + $0x13a8] sm:$0xff]
    %v808 = vld [vmem:[#allocation5 + $0x13b0] sm:$0xff]
    %v809 = vld [vmem:[#allocation5 + $0x13b8] sm:$0xff]
    %v810 = vld [vmem:[#allocation5 + $0x13c0] sm:$0xff]
    %v811 = vld [vmem:[#allocation5 + $0x13c8] sm:$0xff]
    %v812 = vld [vmem:[#allocation5 + $0x13d0] sm:$0xff]
    %v813 = vld [vmem:[#allocation5 + $0x13d8] sm:$0xff]
    %v814 = vld [vmem:[#allocation5 + $0x13e0] sm:$0xff]
    %v815 = vld [vmem:[#allocation5 + $0x13e8] sm:$0xff]
    %v816 = vld [vmem:[#allocation5 + $0x13f0] sm:$0xff]
    %v817 = vld [vmem:[#allocation5 + $0x13f8] sm:$0xff]
    %v818 = vld [vmem:[#allocation5 + $0x1400] sm:$0xff]
    %v819 = vld [vmem:[#allocation5 + $0x1408] sm:$0xff]
    %v820 = vld [vmem:[#allocation5 + $0x1410] sm:$0xff]
    %v821 = vld [vmem:[#allocation5 + $0x1418] sm:$0xff]
    %v822 = vld [vmem:[#allocation5 + $0x1420] sm:$0xff]
    %v823 = vld [vmem:[#allocation5 + $0x1428] sm:$0xff]
    %v824 = vld [vmem:[#allocation5 + $0x1430] sm:$0xff]
    %v825 = vld [vmem:[#allocation5 + $0x1438] sm:$0xff]
    %v826 = vld [vmem:[#allocation5 + $0x1440] sm:$0xff]
    %v827 = vld [vmem:[#allocation5 + $0x1448] sm:$0xff]
    %v828 = vld [vmem:[#allocation5 + $0x1450] sm:$0xff]
    %v829 = vld [vmem:[#allocation5 + $0x1458] sm:$0xff]
    %v830 = vld [vmem:[#allocation5 + $0x1460] sm:$0xff]
    %v831 = vld [vmem:[#allocation5 + $0x1468] sm:$0xff]
    %v832 = vld [vmem:[#allocation5 + $0x1470] sm:$0xff]
    %v833 = vld [vmem:[#allocation5 + $0x1478] sm:$0xff]
    %v834 = vld [vmem:[#allocation5 + $0x1480] sm:$0xff]
    %v835 = vld [vmem:[#allocation5 + $0x1488] sm:$0xff]
    %v836 = vld [vmem:[#allocation5 + $0x1490] sm:$0xff]
    %v837 = vld [vmem:[#allocation5 + $0x1498] sm:$0xff]
    %v838 = vld [vmem:[#allocation5 + $0x14a0] sm:$0xff]
    %v839 = vld [vmem:[#allocation5 + $0x14a8] sm:$0xff]
    %v840 = vld [vmem:[#allocation5 + $0x14b0] sm:$0xff]
    %v841 = vld [vmem:[#allocation5 + $0x14b8] sm:$0xff]
    %v842 = vld [vmem:[#allocation5 + $0x14c0] sm:$0xff]
    %v843 = vld [vmem:[#allocation5 + $0x14c8] sm:$0xff]
    %v844 = vld [vmem:[#allocation5 + $0x14d0] sm:$0xff]
    %v845 = vld [vmem:[#allocation5 + $0x14d8] sm:$0xff]
    %v846 = vld [vmem:[#allocation5 + $0x14e0] sm:$0xff]
    %v847 = vld [vmem:[#allocation5 + $0x14e8] sm:$0xff]
    %v848 = vld [vmem:[#allocation5 + $0x14f0] sm:$0xff]
    %v849 = vld [vmem:[#allocation5 + $0x14f8] sm:$0xff]
    %v850 = vld [vmem:[#allocation5 + $0x1500] sm:$0xff]
    %v851 = vld [vmem:[#allocation5 + $0x1508] sm:$0xff]
    %v852 = vld [vmem:[#allocation5 + $0x1510] sm:$0xff]
    %v853 = vld [vmem:[#allocation5 + $0x1518] sm:$0xff]
    %v854 = vld [vmem:[#allocation5 + $0x1520] sm:$0xff]
    %v855 = vld [vmem:[#allocation5 + $0x1528] sm:$0xff]
    %v856 = vld [vmem:[#allocation5 + $0x1530] sm:$0xff]
    %v857 = vld [vmem:[#allocation5 + $0x1538] sm:$0xff]
    %v858 = vld [vmem:[#allocation5 + $0x1540] sm:$0xff]
    %v859 = vld [vmem:[#allocation5 + $0x1548] sm:$0xff]
    %v860 = vld [vmem:[#allocation5 + $0x1550] sm:$0xff]
    %v861 = vld [vmem:[#allocation5 + $0x1558] sm:$0xff]
    %v862 = vld [vmem:[#allocation5 + $0x1560] sm:$0xff]
    %v863 = vld [vmem:[#allocation5 + $0x1568] sm:$0xff]
    %v864 = vld [vmem:[#allocation5 + $0x1570] sm:$0xff]
    %v865 = vld [vmem:[#allocation5 + $0x1578] sm:$0xff]
    %v866 = vld [vmem:[#allocation5 + $0x1580] sm:$0xff]
    %v867 = vld [vmem:[#allocation5 + $0x1588] sm:$0xff]
    %v868 = vld [vmem:[#allocation5 + $0x1590] sm:$0xff]
    %v869 = vld [vmem:[#allocation5 + $0x1598] sm:$0xff]
    %v870 = vld [vmem:[#allocation5 + $0x15a0] sm:$0xff]
    %v871 = vld [vmem:[#allocation5 + $0x15a8] sm:$0xff]
    %v872 = vld [vmem:[#allocation5 + $0x15b0] sm:$0xff]
    %v873 = vld [vmem:[#allocation5 + $0x15b8] sm:$0xff]
    %v874 = vld [vmem:[#allocation5 + $0x15c0] sm:$0xff]
    %v875 = vld [vmem:[#allocation5 + $0x15c8] sm:$0xff]
    %v876 = vld [vmem:[#allocation5 + $0x15d0] sm:$0xff]
    %v877 = vld [vmem:[#allocation5 + $0x15d8] sm:$0xff]
    %v878 = vld [vmem:[#allocation5 + $0x15e0] sm:$0xff]
    %v879 = vld [vmem:[#allocation5 + $0x15e8] sm:$0xff]
    %v880 = vld [vmem:[#allocation5 + $0x15f0] sm:$0xff]
    %v881 = vld [vmem:[#allocation5 + $0x15f8] sm:$0xff]
    %v882 = vld [vmem:[#allocation5 + $0x1600] sm:$0xff]
    %v883 = vld [vmem:[#allocation5 + $0x1608] sm:$0xff]
    %v884 = vld [vmem:[#allocation5 + $0x1610] sm:$0xff]
    %v885 = vld [vmem:[#allocation5 + $0x1618] sm:$0xff]
    %v886 = vld [vmem:[#allocation5 + $0x1620] sm:$0xff]
    %v887 = vld [vmem:[#allocation5 + $0x1628] sm:$0xff]
    %v888 = vld [vmem:[#allocation5 + $0x1630] sm:$0xff]
    %v889 = vld [vmem:[#allocation5 + $0x1638] sm:$0xff]
    %v890 = vld [vmem:[#allocation5 + $0x1640] sm:$0xff]
    %v891 = vld [vmem:[#allocation5 + $0x1648] sm:$0xff]
    %v892 = vld [vmem:[#allocation5 + $0x1650] sm:$0xff]
    %v893 = vld [vmem:[#allocation5 + $0x1658] sm:$0xff]
    %v894 = vld [vmem:[#allocation5 + $0x1660] sm:$0xff]
    %v895 = vld [vmem:[#allocation5 + $0x1668] sm:$0xff]
    %v896 = vld [vmem:[#allocation5 + $0x1670] sm:$0xff]
    %v897 = vld [vmem:[#allocation5 + $0x1678] sm:$0xff]
    %v898 = vld [vmem:[#allocation5 + $0x1680] sm:$0xff]
    %v899 = vld [vmem:[#allocation5 + $0x1688] sm:$0xff]
    %v900 = vld [vmem:[#allocation5 + $0x1690] sm:$0xff]
    %v901 = vld [vmem:[#allocation5 + $0x1698] sm:$0xff]
    %v902 = vld [vmem:[#allocation5 + $0x16a0] sm:$0xff]
    %v903 = vld [vmem:[#allocation5 + $0x16a8] sm:$0xff]
    %v904 = vld [vmem:[#allocation5 + $0x16b0] sm:$0xff]
    %v905 = vld [vmem:[#allocation5 + $0x16b8] sm:$0xff]
    %v906 = vld [vmem:[#allocation5 + $0x16c0] sm:$0xff]
    %v907 = vld [vmem:[#allocation5 + $0x16c8] sm:$0xff]
    %v908 = vld [vmem:[#allocation5 + $0x16d0] sm:$0xff]
    %v909 = vld [vmem:[#allocation5 + $0x16d8] sm:$0xff]
    %v910 = vld [vmem:[#allocation5 + $0x16e0] sm:$0xff]
    %v911 = vld [vmem:[#allocation5 + $0x16e8] sm:$0xff]
    %v912 = vld [vmem:[#allocation5 + $0x16f0] sm:$0xff]
    %v913 = vld [vmem:[#allocation5 + $0x16f8] sm:$0xff]
    %v914 = vld [vmem:[#allocation5 + $0x1700] sm:$0xff]
    %v915 = vld [vmem:[#allocation5 + $0x1708] sm:$0xff]
    %v916 = vld [vmem:[#allocation5 + $0x1710] sm:$0xff]
    %v917 = vld [vmem:[#allocation5 + $0x1718] sm:$0xff]
    %v918 = vld [vmem:[#allocation5 + $0x1720] sm:$0xff]
    %v919 = vld [vmem:[#allocation5 + $0x1728] sm:$0xff]
    %v920 = vld [vmem:[#allocation5 + $0x1730] sm:$0xff]
    %v921 = vld [vmem:[#allocation5 + $0x1738] sm:$0xff]
    %v922 = vld [vmem:[#allocation5 + $0x1740] sm:$0xff]
    %v923 = vld [vmem:[#allocation5 + $0x1748] sm:$0xff]
    %v924 = vld [vmem:[#allocation5 + $0x1750] sm:$0xff]
    %v925 = vld [vmem:[#allocation5 + $0x1758] sm:$0xff]
    %v926 = vld [vmem:[#allocation5 + $0x1760] sm:$0xff]
    %v927 = vld [vmem:[#allocation5 + $0x1768] sm:$0xff]
    %v928 = vld [vmem:[#allocation5 + $0x1770] sm:$0xff]
    %v929 = vld [vmem:[#allocation5 + $0x1778] sm:$0xff]
    %v930 = vld [vmem:[#allocation5 + $0x1780] sm:$0xff]
    %v931 = vld [vmem:[#allocation5 + $0x1788] sm:$0xff]
    %v932 = vld [vmem:[#allocation5 + $0x1790] sm:$0xff]
    %v933 = vld [vmem:[#allocation5 + $0x1798] sm:$0xff]
    %v934 = vld [vmem:[#allocation5 + $0x17a0] sm:$0xff]
    %v935 = vld [vmem:[#allocation5 + $0x17a8] sm:$0xff]
    %v936 = vld [vmem:[#allocation5 + $0x17b0] sm:$0xff]
    %v937 = vld [vmem:[#allocation5 + $0x17b8] sm:$0xff]
    %v938 = vld [vmem:[#allocation5 + $0x17c0] sm:$0xff]
    %v939 = vld [vmem:[#allocation5 + $0x17c8] sm:$0xff]
    %v940 = vld [vmem:[#allocation5 + $0x17d0] sm:$0xff]
    %v941 = vld [vmem:[#allocation5 + $0x17d8] sm:$0xff]
    %v942 = vld [vmem:[#allocation5 + $0x17e0] sm:$0xff]
    %v943 = vld [vmem:[#allocation5 + $0x17e8] sm:$0xff]
    %v944 = vld [vmem:[#allocation5 + $0x17f0] sm:$0xff]
    %v945 = vld [vmem:[#allocation5 + $0x17f8] sm:$0xff]
    %v946 = vld [vmem:[#allocation5 + $0x1800] sm:$0xff]
    %v947 = vld [vmem:[#allocation5 + $0x1808] sm:$0xff]
    %v948 = vld [vmem:[#allocation5 + $0x1810] sm:$0xff]
    %v949 = vld [vmem:[#allocation5 + $0x1818] sm:$0xff]
    %v950 = vld [vmem:[#allocation5 + $0x1820] sm:$0xff]
    %v951 = vld [vmem:[#allocation5 + $0x1828] sm:$0xff]
    %v952 = vld [vmem:[#allocation5 + $0x1830] sm:$0xff]
    %v953 = vld [vmem:[#allocation5 + $0x1838] sm:$0xff]
    %v954 = vld [vmem:[#allocation5 + $0x1840] sm:$0xff]
    %v955 = vld [vmem:[#allocation5 + $0x1848] sm:$0xff]
    %v956 = vld [vmem:[#allocation5 + $0x1850] sm:$0xff]
    %v957 = vld [vmem:[#allocation5 + $0x1858] sm:$0xff]
    %v958 = vld [vmem:[#allocation5 + $0x1860] sm:$0xff]
    %v959 = vld [vmem:[#allocation5 + $0x1868] sm:$0xff]
    %v960 = vld [vmem:[#allocation5 + $0x1870] sm:$0xff]
    %v961 = vld [vmem:[#allocation5 + $0x1878] sm:$0xff]
    %v962 = vld [vmem:[#allocation5 + $0x1880] sm:$0xff]
    %v963 = vld [vmem:[#allocation5 + $0x1888] sm:$0xff]
    %v964 = vld [vmem:[#allocation5 + $0x1890] sm:$0xff]
    %v965 = vld [vmem:[#allocation5 + $0x1898] sm:$0xff]
    %v966 = vld [vmem:[#allocation5 + $0x18a0] sm:$0xff]
    %v967 = vld [vmem:[#allocation5 + $0x18a8] sm:$0xff]
    %v968 = vld [vmem:[#allocation5 + $0x18b0] sm:$0xff]
    %v969 = vld [vmem:[#allocation5 + $0x18b8] sm:$0xff]
    %v970 = vld [vmem:[#allocation5 + $0x18c0] sm:$0xff]
    %v971 = vld [vmem:[#allocation5 + $0x18c8] sm:$0xff]
    %v972 = vld [vmem:[#allocation5 + $0x18d0] sm:$0xff]
    %v973 = vld [vmem:[#allocation5 + $0x18d8] sm:$0xff]
    %v974 = vld [vmem:[#allocation5 + $0x18e0] sm:$0xff]
    %v975 = vld [vmem:[#allocation5 + $0x18e8] sm:$0xff]
    %v976 = vld [vmem:[#allocation5 + $0x18f0] sm:$0xff]
    %v977 = vld [vmem:[#allocation5 + $0x18f8] sm:$0xff]
    %v978 = vld [vmem:[#allocation5 + $0x1900] sm:$0xff]
    %v979 = vld [vmem:[#allocation5 + $0x1908] sm:$0xff]
    %v980 = vld [vmem:[#allocation5 + $0x1910] sm:$0xff]
    %v981 = vld [vmem:[#allocation5 + $0x1918] sm:$0xff]
    %v982 = vld [vmem:[#allocation5 + $0x1920] sm:$0xff]
    %v983 = vld [vmem:[#allocation5 + $0x1928] sm:$0xff]
    %v984 = vld [vmem:[#allocation5 + $0x1930] sm:$0xff]
    %v985 = vld [vmem:[#allocation5 + $0x1938] sm:$0xff]
    %v986 = vld [vmem:[#allocation5 + $0x1940] sm:$0xff]
    %v987 = vld [vmem:[#allocation5 + $0x1948] sm:$0xff]
    %v988 = vld [vmem:[#allocation5 + $0x1950] sm:$0xff]
    %v989 = vld [vmem:[#allocation5 + $0x1958] sm:$0xff]
    %v990 = vld [vmem:[#allocation5 + $0x1960] sm:$0xff]
    %v991 = vld [vmem:[#allocation5 + $0x1968] sm:$0xff]
    %v992 = vld [vmem:[#allocation5 + $0x1970] sm:$0xff]
    %v993 = vld [vmem:[#allocation5 + $0x1978] sm:$0xff]
    %v994 = vld [vmem:[#allocation5 + $0x1980] sm:$0xff]
    %v995 = vld [vmem:[#allocation5 + $0x1988] sm:$0xff]
    %v996 = vld [vmem:[#allocation5 + $0x1990] sm:$0xff]
    %v997 = vld [vmem:[#allocation5 + $0x1998] sm:$0xff]
    %v998 = vld [vmem:[#allocation5 + $0x19a0] sm:$0xff]
    %v999 = vld [vmem:[#allocation5 + $0x19a8] sm:$0xff]
    %v1000 = vld [vmem:[#allocation5 + $0x19b0] sm:$0xff]
    %v1001 = vld [vmem:[#allocation5 + $0x19b8] sm:$0xff]
    %v1002 = vld [vmem:[#allocation5 + $0x19c0] sm:$0xff]
    %v1003 = vld [vmem:[#allocation5 + $0x19c8] sm:$0xff]
    %v1004 = vld [vmem:[#allocation5 + $0x19d0] sm:$0xff]
    %v1005 = vld [vmem:[#allocation5 + $0x19d8] sm:$0xff]
    %v1006 = vld [vmem:[#allocation5 + $0x19e0] sm:$0xff]
    %v1007 = vld [vmem:[#allocation5 + $0x19e8] sm:$0xff]
    %v1008 = vld [vmem:[#allocation5 + $0x19f0] sm:$0xff]
    %v1009 = vld [vmem:[#allocation5 + $0x19f8] sm:$0xff]
    %v1010 = vld [vmem:[#allocation5 + $0x1a00] sm:$0xff]
    %v1011 = vld [vmem:[#allocation5 + $0x1a08] sm:$0xff]
    %v1012 = vld [vmem:[#allocation5 + $0x1a10] sm:$0xff]
    %v1013 = vld [vmem:[#allocation5 + $0x1a18] sm:$0xff]
    %v1014 = vld [vmem:[#allocation5 + $0x1a20] sm:$0xff]
    %v1015 = vld [vmem:[#allocation5 + $0x1a28] sm:$0xff]
    %v1016 = vld [vmem:[#allocation5 + $0x1a30] sm:$0xff]
    %v1017 = vld [vmem:[#allocation5 + $0x1a38] sm:$0xff]
    %v1018 = vld [vmem:[#allocation5 + $0x1a40] sm:$0xff]
    %v1019 = vld [vmem:[#allocation5 + $0x1a48] sm:$0xff]
    %v1020 = vld [vmem:[#allocation5 + $0x1a50] sm:$0xff]
    %v1021 = vld [vmem:[#allocation5 + $0x1a58] sm:$0xff]
    %v1022 = vld [vmem:[#allocation5 + $0x1a60] sm:$0xff]
    %v1023 = vld [vmem:[#allocation5 + $0x1a68] sm:$0xff]
    %v1024 = vld [vmem:[#allocation5 + $0x1a70] sm:$0xff]
    %v1025 = vld [vmem:[#allocation5 + $0x1a78] sm:$0xff]
    %v1026 = vld [vmem:[#allocation5 + $0x1a80] sm:$0xff]
    %v1027 = vld [vmem:[#allocation5 + $0x1a88] sm:$0xff]
    %v1028 = vld [vmem:[#allocation5 + $0x1a90] sm:$0xff]
    %v1029 = vld [vmem:[#allocation5 + $0x1a98] sm:$0xff]
    %v1030 = vld [vmem:[#allocation5 + $0x1aa0] sm:$0xff]
    %v1031 = vld [vmem:[#allocation5 + $0x1aa8] sm:$0xff]
    %v1032 = vld [vmem:[#allocation5 + $0x1ab0] sm:$0xff]
    %v1033 = vld [vmem:[#allocation5 + $0x1ab8] sm:$0xff]
    %v1034 = vld [vmem:[#allocation5 + $0x1ac0] sm:$0xff]
    %v1035 = vld [vmem:[#allocation5 + $0x1ac8] sm:$0xff]
    %v1036 = vld [vmem:[#allocation5 + $0x1ad0] sm:$0xff]
    %v1037 = vld [vmem:[#allocation5 + $0x1ad8] sm:$0xff]
    %v1038 = vld [vmem:[#allocation5 + $0x1ae0] sm:$0xff]
    %v1039 = vld [vmem:[#allocation5 + $0x1ae8] sm:$0xff]
    %v1040 = vld [vmem:[#allocation5 + $0x1af0] sm:$0xff]
    %v1041 = vld [vmem:[#allocation5 + $0x1af8] sm:$0xff]
    %v1042 = vld [vmem:[#allocation5 + $0x1b00] sm:$0xff]
    %v1043 = vld [vmem:[#allocation5 + $0x1b08] sm:$0xff]
    %v1044 = vld [vmem:[#allocation5 + $0x1b10] sm:$0xff]
    %v1045 = vld [vmem:[#allocation5 + $0x1b18] sm:$0xff]
    %v1046 = vld [vmem:[#allocation5 + $0x1b20] sm:$0xff]
    %v1047 = vld [vmem:[#allocation5 + $0x1b28] sm:$0xff]
    %v1048 = vld [vmem:[#allocation5 + $0x1b30] sm:$0xff]
    %v1049 = vld [vmem:[#allocation5 + $0x1b38] sm:$0xff]
    %v1050 = vld [vmem:[#allocation5 + $0x1b40] sm:$0xff]
    %v1051 = vld [vmem:[#allocation5 + $0x1b48] sm:$0xff]
    %v1052 = vld [vmem:[#allocation5 + $0x1b50] sm:$0xff]
    %v1053 = vld [vmem:[#allocation5 + $0x1b58] sm:$0xff]
    %v1054 = vld [vmem:[#allocation5 + $0x1b60] sm:$0xff]
    %v1055 = vld [vmem:[#allocation5 + $0x1b68] sm:$0xff]
    %v1056 = vld [vmem:[#allocation5 + $0x1b70] sm:$0xff]
    %v1057 = vld [vmem:[#allocation5 + $0x1b78] sm:$0xff]
    %v1058 = vld [vmem:[#allocation5 + $0x1b80] sm:$0xff]
    %v1059 = vld [vmem:[#allocation5 + $0x1b88] sm:$0xff]
    %v1060 = vld [vmem:[#allocation5 + $0x1b90] sm:$0xff]
    %v1061 = vld [vmem:[#allocation5 + $0x1b98] sm:$0xff]
    %v1062 = vld [vmem:[#allocation5 + $0x1ba0] sm:$0xff]
    %v1063 = vld [vmem:[#allocation5 + $0x1ba8] sm:$0xff]
    %v1064 = vld [vmem:[#allocation5 + $0x1bb0] sm:$0xff]
    %v1065 = vld [vmem:[#allocation5 + $0x1bb8] sm:$0xff]
    %v1066 = vld [vmem:[#allocation5 + $0x1bc0] sm:$0xff]
    %v1067 = vld [vmem:[#allocation5 + $0x1bc8] sm:$0xff]
    %v1068 = vld [vmem:[#allocation5 + $0x1bd0] sm:$0xff]
    %v1069 = vld [vmem:[#allocation5 + $0x1bd8] sm:$0xff]
    %v1070 = vld [vmem:[#allocation5 + $0x1be0] sm:$0xff]
    %v1071 = vld [vmem:[#allocation5 + $0x1be8] sm:$0xff]
    %v1072 = vld [vmem:[#allocation5 + $0x1bf0] sm:$0xff]
    %v1073 = vld [vmem:[#allocation5 + $0x1bf8] sm:$0xff]
    %v1074 = vld [vmem:[#allocation5 + $0x1c00] sm:$0xff]
    %v1075 = vld [vmem:[#allocation5 + $0x1c08] sm:$0xff]
    %v1076 = vld [vmem:[#allocation5 + $0x1c10] sm:$0xff]
    %v1077 = vld [vmem:[#allocation5 + $0x1c18] sm:$0xff]
    %v1078 = vld [vmem:[#allocation5 + $0x1c20] sm:$0xff]
    %v1079 = vld [vmem:[#allocation5 + $0x1c28] sm:$0xff]
    %v1080 = vld [vmem:[#allocation5 + $0x1c30] sm:$0xff]
    %v1081 = vld [vmem:[#allocation5 + $0x1c38] sm:$0xff]
    %v1082 = vld [vmem:[#allocation5 + $0x1c40] sm:$0xff]
    %v1083 = vld [vmem:[#allocation5 + $0x1c48] sm:$0xff]
    %v1084 = vld [vmem:[#allocation5 + $0x1c50] sm:$0xff]
    %v1085 = vld [vmem:[#allocation5 + $0x1c58] sm:$0xff]
    %v1086 = vld [vmem:[#allocation5 + $0x1c60] sm:$0xff]
    %v1087 = vld [vmem:[#allocation5 + $0x1c68] sm:$0xff]
    %v1088 = vld [vmem:[#allocation5 + $0x1c70] sm:$0xff]
    %v1089 = vld [vmem:[#allocation5 + $0x1c78] sm:$0xff]
    %v1090 = vld [vmem:[#allocation5 + $0x1c80] sm:$0xff]
    %v1091 = vld [vmem:[#allocation5 + $0x1c88] sm:$0xff]
    %v1092 = vld [vmem:[#allocation5 + $0x1c90] sm:$0xff]
    %v1093 = vld [vmem:[#allocation5 + $0x1c98] sm:$0xff]
    %v1094 = vld [vmem:[#allocation5 + $0x1ca0] sm:$0xff]
    %v1095 = vld [vmem:[#allocation5 + $0x1ca8] sm:$0xff]
    %v1096 = vld [vmem:[#allocation5 + $0x1cb0] sm:$0xff]
    %v1097 = vld [vmem:[#allocation5 + $0x1cb8] sm:$0xff]
    %v1098 = vld [vmem:[#allocation5 + $0x1cc0] sm:$0xff]
    %v1099 = vld [vmem:[#allocation5 + $0x1cc8] sm:$0xff]
    %v1100 = vld [vmem:[#allocation5 + $0x1cd0] sm:$0xff]
    %v1101 = vld [vmem:[#allocation5 + $0x1cd8] sm:$0xff]
    %v1102 = vld [vmem:[#allocation5 + $0x1ce0] sm:$0xff]
    %v1103 = vld [vmem:[#allocation5 + $0x1ce8] sm:$0xff]
    %v1104 = vld [vmem:[#allocation5 + $0x1cf0] sm:$0xff]
    %v1105 = vld [vmem:[#allocation5 + $0x1cf8] sm:$0xff]
    %v1106 = vld [vmem:[#allocation7] sm:$0xf]
    %v1108 = vperm.slane %v1106, 0
    %v1109 = vperm.slane %v1106, 1
    %v1110 = vperm.slane %v1106, 2
    %v1111 = vperm.slane %v1106, 3
    %v1131 = vunpack.c.l.b16 %v163
    %v1132 = vunpack.c.h.b16 %v163
    %v1133 = vunpack.c.l.b16 %v164
    %v1134 = vunpack.c.h.b16 %v164
    %v1135 = vunpack.c.l.b16 %v165
    %v1136 = vunpack.c.h.b16 %v165
    %v1137 = vunpack.c.l.b16 %v166
    %v1138 = vunpack.c.h.b16 %v166
    %v1139 = vunpack.c.l.b16 %v167
    %v1140 = vunpack.c.h.b16 %v167
    %v1141 = vunpack.c.l.b16 %v168
    %v1142 = vunpack.c.h.b16 %v168
    %v1143 = vunpack.c.l.b16 %v169
    %v1144 = vunpack.c.h.b16 %v169
    %v1145 = vunpack.c.l.b16 %v170
    %v1146 = vunpack.c.h.b16 %v170
    %v1147 = vunpack.c.l.b16 %v171
    %v1148 = vunpack.c.h.b16 %v171
    %v1149 = vunpack.c.l.b16 %v172
    %v1150 = vunpack.c.h.b16 %v172
    %v1151 = vunpack.c.l.b16 %v173
    %v1152 = vunpack.c.h.b16 %v173
    %v1153 = vunpack.c.l.b16 %v174
    %v1154 = vunpack.c.h.b16 %v174
    %v1155 = vunpack.c.l.b16 %v175
    %v1156 = vunpack.c.h.b16 %v175
    %v1157 = vunpack.c.l.b16 %v176
    %v1158 = vunpack.c.h.b16 %v176
    %v1159 = vunpack.c.l.b16 %v177
    %v1160 = vpack.c.b16 %v1131, %v1131
    %v1161 = vpack.c.b16 %v1132, %v1132
    %v1162 = vpack.c.b16 %v1133, %v1133
    %v1163 = vpack.c.b16 %v1134, %v1134
    %v1164 = vpack.c.b16 %v1135, %v1135
    %v1165 = vpack.c.b16 %v1136, %v1136
    %v1166 = vpack.c.b16 %v1137, %v1137
    %v1167 = vpack.c.b16 %v1138, %v1138
    %v1168 = vpack.c.b16 %v1139, %v1139
    %v1169 = vpack.c.b16 %v1140, %v1140
    %v1170 = vpack.c.b16 %v1141, %v1141
    %v1171 = vpack.c.b16 %v1142, %v1142
    %v1172 = vpack.c.b16 %v1143, %v1143
    %v1173 = vpack.c.b16 %v1144, %v1144
    %v1174 = vpack.c.b16 %v1145, %v1145
    %v1175 = vpack.c.b16 %v1146, %v1146
    %v1176 = vpack.c.b16 %v1147, %v1147
    %v1177 = vpack.c.b16 %v1148, %v1148
    %v1178 = vpack.c.b16 %v1149, %v1149
    %v1179 = vpack.c.b16 %v1150, %v1150
    %v1180 = vpack.c.b16 %v1151, %v1151
    %v1181 = vpack.c.b16 %v1152, %v1152
    %v1182 = vpack.c.b16 %v1153, %v1153
    %v1183 = vpack.c.b16 %v1154, %v1154
    %v1184 = vpack.c.b16 %v1155, %v1155
    %v1185 = vpack.c.b16 %v1156, %v1156
    %v1186 = vpack.c.b16 %v1157, %v1157
    %v1187 = vpack.c.b16 %v1158, %v1158
    %v1188 = vpack.c.b16 %v1159, %v1159
    %v2146 = vunpack.c.l.b16 %v178
    %v2147 = vunpack.c.h.b16 %v178
    %v2148 = vunpack.c.l.b16 %v179
    %v2149 = vunpack.c.h.b16 %v179
    %v2150 = vunpack.c.l.b16 %v180
    %v2151 = vunpack.c.h.b16 %v180
    %v2152 = vunpack.c.l.b16 %v181
    %v2153 = vunpack.c.h.b16 %v181
    %v2154 = vunpack.c.l.b16 %v182
    %v2155 = vunpack.c.h.b16 %v182
    %v2156 = vunpack.c.l.b16 %v183
    %v2157 = vunpack.c.h.b16 %v183
    %v2158 = vunpack.c.l.b16 %v184
    %v2159 = vunpack.c.h.b16 %v184
    %v2160 = vunpack.c.l.b16 %v185
    %v2161 = vunpack.c.h.b16 %v185
    %v2162 = vunpack.c.l.b16 %v186
    %v2163 = vunpack.c.h.b16 %v186
    %v2164 = vunpack.c.l.b16 %v187
    %v2165 = vunpack.c.h.b16 %v187
    %v2166 = vunpack.c.l.b16 %v188
    %v2167 = vunpack.c.h.b16 %v188
    %v2168 = vunpack.c.l.b16 %v189
    %v2169 = vunpack.c.h.b16 %v189
    %v2170 = vunpack.c.l.b16 %v190
    %v2171 = vunpack.c.h.b16 %v190
    %v2172 = vunpack.c.l.b16 %v191
    %v2173 = vunpack.c.h.b16 %v191
    %v2174 = vunpack.c.l.b16 %v192
    %v2175 = vunpack.c.h.b16 %v192
    %v2176 = vunpack.c.l.b16 %v193
    %v2177 = vunpack.c.h.b16 %v193
    %v2178 = vunpack.c.l.b16 %v194
    %v2179 = vunpack.c.h.b16 %v194
    %v2180 = vunpack.c.l.b16 %v195
    %v2181 = vunpack.c.h.b16 %v195
    %v2182 = vunpack.c.l.b16 %v196
    %v2183 = vunpack.c.h.b16 %v196
    %v2184 = vunpack.c.l.b16 %v197
    %v2185 = vunpack.c.h.b16 %v197
    %v2186 = vunpack.c.l.b16 %v198
    %v2187 = vunpack.c.h.b16 %v198
    %v2188 = vunpack.c.l.b16 %v199
    %v2189 = vunpack.c.h.b16 %v199
    %v2190 = vunpack.c.l.b16 %v200
    %v2191 = vunpack.c.h.b16 %v200
    %v2192 = vunpack.c.l.b16 %v201
    %v2193 = vunpack.c.h.b16 %v201
    %v2194 = vunpack.c.l.b16 %v202
    %v2195 = vunpack.c.h.b16 %v202
    %v2196 = vunpack.c.l.b16 %v203
    %v2197 = vunpack.c.h.b16 %v203
    %v2198 = vunpack.c.l.b16 %v204
    %v2199 = vunpack.c.h.b16 %v204
    %v2200 = vunpack.c.l.b16 %v205
    %v2201 = vunpack.c.h.b16 %v205
    %v2202 = vunpack.c.l.b16 %v206
    %v2203 = vunpack.c.h.b16 %v206
    %v2204 = vunpack.c.l.b16 %v207
    %v2205 = vunpack.c.h.b16 %v207
    %v2206 = vunpack.c.l.b16 %v208
    %v2207 = vunpack.c.h.b16 %v208
    %v2208 = vunpack.c.l.b16 %v209
    %v2209 = vunpack.c.h.b16 %v209
    %v2210 = vunpack.c.l.b16 %v210
    %v2211 = vunpack.c.h.b16 %v210
    %v2212 = vunpack.c.l.b16 %v211
    %v2213 = vunpack.c.h.b16 %v211
    %v2214 = vunpack.c.l.b16 %v212
    %v2215 = vunpack.c.h.b16 %v212
    %v2216 = vunpack.c.l.b16 %v213
    %v2217 = vunpack.c.h.b16 %v213
    %v2218 = vunpack.c.l.b16 %v214
    %v2219 = vunpack.c.h.b16 %v214
    %v2220 = vunpack.c.l.b16 %v215
    %v2221 = vunpack.c.h.b16 %v215
    %v2222 = vunpack.c.l.b16 %v216
    %v2223 = vunpack.c.h.b16 %v216
    %v2224 = vunpack.c.l.b16 %v217
    %v2225 = vunpack.c.h.b16 %v217
    %v2226 = vunpack.c.l.b16 %v218
    %v2227 = vunpack.c.h.b16 %v218
    %v2228 = vunpack.c.l.b16 %v219
    %v2229 = vunpack.c.h.b16 %v219
    %v2230 = vunpack.c.l.b16 %v220
    %v2231 = vunpack.c.h.b16 %v220
    %v2232 = vunpack.c.l.b16 %v221
    %v2233 = vunpack.c.h.b16 %v221
    %v2234 = vunpack.c.l.b16 %v222
    %v2235 = vunpack.c.h.b16 %v222
    %v2236 = vunpack.c.l.b16 %v223
    %v2237 = vunpack.c.h.b16 %v223
    %v2238 = vunpack.c.l.b16 %v224
    %v2239 = vunpack.c.h.b16 %v224
    %v2240 = vunpack.c.l.b16 %v225
    %v2241 = vunpack.c.h.b16 %v225
    %v2242 = vunpack.c.l.b16 %v226
    %v2243 = vunpack.c.h.b16 %v226
    %v2244 = vunpack.c.l.b16 %v227
    %v2245 = vunpack.c.h.b16 %v227
    %v2246 = vunpack.c.l.b16 %v228
    %v2247 = vunpack.c.h.b16 %v228
    %v2248 = vunpack.c.l.b16 %v229
    %v2249 = vunpack.c.h.b16 %v229
    %v2250 = vunpack.c.l.b16 %v230
    %v2251 = vunpack.c.h.b16 %v230
    %v2252 = vunpack.c.l.b16 %v231
    %v2253 = vunpack.c.h.b16 %v231
    %v2254 = vunpack.c.l.b16 %v232
    %v2255 = vunpack.c.h.b16 %v232
    %v2256 = vunpack.c.l.b16 %v233
    %v2257 = vunpack.c.h.b16 %v233
    %v2258 = vunpack.c.l.b16 %v234
    %v2259 = vunpack.c.h.b16 %v234
    %v2260 = vunpack.c.l.b16 %v235
    %v2261 = vunpack.c.h.b16 %v235
    %v2262 = vunpack.c.l.b16 %v236
    %v2263 = vunpack.c.h.b16 %v236
    %v2264 = vunpack.c.l.b16 %v237
    %v2265 = vunpack.c.h.b16 %v237
    %v2266 = vunpack.c.l.b16 %v238
    %v2267 = vunpack.c.h.b16 %v238
    %v2268 = vunpack.c.l.b16 %v239
    %v2269 = vunpack.c.h.b16 %v239
    %v2270 = vunpack.c.l.b16 %v240
    %v2271 = vunpack.c.h.b16 %v240
    %v2272 = vunpack.c.l.b16 %v241
    %v2273 = vunpack.c.h.b16 %v241
    %v2274 = vunpack.c.l.b16 %v242
    %v2275 = vunpack.c.h.b16 %v242
    %v2276 = vunpack.c.l.b16 %v243
    %v2277 = vunpack.c.h.b16 %v243
    %v2278 = vunpack.c.l.b16 %v244
    %v2279 = vunpack.c.h.b16 %v244
    %v2280 = vunpack.c.l.b16 %v245
    %v2281 = vunpack.c.h.b16 %v245
    %v2282 = vunpack.c.l.b16 %v246
    %v2283 = vunpack.c.h.b16 %v246
    %v2284 = vunpack.c.l.b16 %v247
    %v2285 = vunpack.c.h.b16 %v247
    %v2286 = vunpack.c.l.b16 %v248
    %v2287 = vunpack.c.h.b16 %v248
    %v2288 = vunpack.c.l.b16 %v249
    %v2289 = vunpack.c.h.b16 %v249
    %v2290 = vunpack.c.l.b16 %v250
    %v2291 = vunpack.c.h.b16 %v250
    %v2292 = vunpack.c.l.b16 %v251
    %v2293 = vunpack.c.h.b16 %v251
    %v2294 = vunpack.c.l.b16 %v252
    %v2295 = vunpack.c.h.b16 %v252
    %v2296 = vunpack.c.l.b16 %v253
    %v2297 = vunpack.c.h.b16 %v253
    %v2298 = vunpack.c.l.b16 %v254
    %v2299 = vunpack.c.h.b16 %v254
    %v2300 = vunpack.c.l.b16 %v255
    %v2301 = vunpack.c.h.b16 %v255
    %v2302 = vunpack.c.l.b16 %v256
    %v2303 = vunpack.c.h.b16 %v256
    %v2304 = vunpack.c.l.b16 %v257
    %v2305 = vunpack.c.h.b16 %v257
    %v2306 = vunpack.c.l.b16 %v258
    %v2307 = vunpack.c.h.b16 %v258
    %v2308 = vunpack.c.l.b16 %v259
    %v2309 = vunpack.c.h.b16 %v259
    %v2310 = vunpack.c.l.b16 %v260
    %v2311 = vunpack.c.h.b16 %v260
    %v2312 = vunpack.c.l.b16 %v261
    %v2313 = vunpack.c.h.b16 %v261
    %v2314 = vunpack.c.l.b16 %v262
    %v2315 = vunpack.c.h.b16 %v262
    %v2316 = vunpack.c.l.b16 %v263
    %v2317 = vunpack.c.h.b16 %v263
    %v2318 = vunpack.c.l.b16 %v264
    %v2319 = vunpack.c.h.b16 %v264
    %v2320 = vunpack.c.l.b16 %v265
    %v2321 = vunpack.c.h.b16 %v265
    %v2322 = vunpack.c.l.b16 %v266
    %v2323 = vunpack.c.h.b16 %v266
    %v2324 = vunpack.c.l.b16 %v267
    %v2325 = vunpack.c.h.b16 %v267
    %v2326 = vunpack.c.l.b16 %v268
    %v2327 = vunpack.c.h.b16 %v268
    %v2328 = vunpack.c.l.b16 %v269
    %v2329 = vunpack.c.h.b16 %v269
    %v2330 = vunpack.c.l.b16 %v270
    %v2331 = vunpack.c.h.b16 %v270
    %v2332 = vunpack.c.l.b16 %v271
    %v2333 = vunpack.c.h.b16 %v271
    %v2334 = vunpack.c.l.b16 %v272
    %v2335 = vunpack.c.h.b16 %v272
    %v2336 = vunpack.c.l.b16 %v273
    %v2337 = vunpack.c.h.b16 %v273
    %v2338 = vunpack.c.l.b16 %v274
    %v2339 = vunpack.c.h.b16 %v274
    %v2340 = vunpack.c.l.b16 %v275
    %v2341 = vunpack.c.h.b16 %v275
    %v2342 = vunpack.c.l.b16 %v276
    %v2343 = vunpack.c.h.b16 %v276
    %v2344 = vunpack.c.l.b16 %v277
    %v2345 = vunpack.c.h.b16 %v277
    %v2346 = vunpack.c.l.b16 %v278
    %v2347 = vunpack.c.h.b16 %v278
    %v2348 = vunpack.c.l.b16 %v279
    %v2349 = vunpack.c.h.b16 %v279
    %v2350 = vunpack.c.l.b16 %v280
    %v2351 = vunpack.c.h.b16 %v280
    %v2352 = vunpack.c.l.b16 %v281
    %v2353 = vunpack.c.h.b16 %v281
    %v2354 = vunpack.c.l.b16 %v282
    %v2355 = vunpack.c.h.b16 %v282
    %v2356 = vunpack.c.l.b16 %v283
    %v2357 = vunpack.c.h.b16 %v283
    %v2358 = vunpack.c.l.b16 %v284
    %v2359 = vunpack.c.h.b16 %v284
    %v2360 = vunpack.c.l.b16 %v285
    %v2361 = vunpack.c.h.b16 %v285
    %v2362 = vunpack.c.l.b16 %v286
    %v2363 = vunpack.c.h.b16 %v286
    %v2364 = vunpack.c.l.b16 %v287
    %v2365 = vunpack.c.h.b16 %v287
    %v2366 = vunpack.c.l.b16 %v288
    %v2367 = vunpack.c.h.b16 %v288
    %v2368 = vunpack.c.l.b16 %v289
    %v2369 = vunpack.c.h.b16 %v289
    %v2370 = vunpack.c.l.b16 %v290
    %v2371 = vunpack.c.h.b16 %v290
    %v2372 = vunpack.c.l.b16 %v291
    %v2373 = vunpack.c.h.b16 %v291
    %v2374 = vunpack.c.l.b16 %v292
    %v2375 = vunpack.c.h.b16 %v292
    %v2376 = vunpack.c.l.b16 %v293
    %v2377 = vunpack.c.h.b16 %v293
    %v2378 = vunpack.c.l.b16 %v294
    %v2379 = vunpack.c.h.b16 %v294
    %v2380 = vunpack.c.l.b16 %v295
    %v2381 = vunpack.c.h.b16 %v295
    %v2382 = vunpack.c.l.b16 %v296
    %v2383 = vunpack.c.h.b16 %v296
    %v2384 = vunpack.c.l.b16 %v297
    %v2385 = vunpack.c.h.b16 %v297
    %v2386 = vunpack.c.l.b16 %v298
    %v2387 = vunpack.c.h.b16 %v298
    %v2388 = vunpack.c.l.b16 %v299
    %v2389 = vunpack.c.h.b16 %v299
    %v2390 = vunpack.c.l.b16 %v300
    %v2391 = vunpack.c.h.b16 %v300
    %v2392 = vunpack.c.l.b16 %v301
    %v2393 = vunpack.c.h.b16 %v301
    %v2394 = vunpack.c.l.b16 %v302
    %v2395 = vunpack.c.h.b16 %v302
    %v2396 = vunpack.c.l.b16 %v303
    %v2397 = vunpack.c.h.b16 %v303
    %v2398 = vunpack.c.l.b16 %v304
    %v2399 = vunpack.c.h.b16 %v304
    %v2400 = vunpack.c.l.b16 %v305
    %v2401 = vunpack.c.h.b16 %v305
    %v2402 = vunpack.c.l.b16 %v306
    %v2403 = vunpack.c.h.b16 %v306
    %v2404 = vunpack.c.l.b16 %v307
    %v2405 = vunpack.c.h.b16 %v307
    %v2406 = vunpack.c.l.b16 %v308
    %v2407 = vunpack.c.h.b16 %v308
    %v2408 = vunpack.c.l.b16 %v309
    %v2409 = vunpack.c.h.b16 %v309
    %v2410 = vunpack.c.l.b16 %v310
    %v2411 = vunpack.c.h.b16 %v310
    %v2412 = vunpack.c.l.b16 %v311
    %v2413 = vunpack.c.h.b16 %v311
    %v2414 = vunpack.c.l.b16 %v312
    %v2415 = vunpack.c.h.b16 %v312
    %v2416 = vunpack.c.l.b16 %v313
    %v2417 = vunpack.c.h.b16 %v313
    %v2418 = vunpack.c.l.b16 %v314
    %v2419 = vunpack.c.h.b16 %v314
    %v2420 = vunpack.c.l.b16 %v315
    %v2421 = vunpack.c.h.b16 %v315
    %v2422 = vunpack.c.l.b16 %v316
    %v2423 = vunpack.c.h.b16 %v316
    %v2424 = vunpack.c.l.b16 %v317
    %v2425 = vunpack.c.h.b16 %v317
    %v2426 = vunpack.c.l.b16 %v318
    %v2427 = vunpack.c.h.b16 %v318
    %v2428 = vunpack.c.l.b16 %v319
    %v2429 = vunpack.c.h.b16 %v319
    %v2430 = vunpack.c.l.b16 %v320
    %v2431 = vunpack.c.h.b16 %v320
    %v2432 = vunpack.c.l.b16 %v321
    %v2433 = vunpack.c.h.b16 %v321
    %v2434 = vunpack.c.l.b16 %v322
    %v2435 = vunpack.c.h.b16 %v322
    %v2436 = vunpack.c.l.b16 %v323
    %v2437 = vunpack.c.h.b16 %v323
    %v2438 = vunpack.c.l.b16 %v324
    %v2439 = vunpack.c.h.b16 %v324
    %v2440 = vunpack.c.l.b16 %v325
    %v2441 = vunpack.c.h.b16 %v325
    %v2442 = vunpack.c.l.b16 %v326
    %v2443 = vunpack.c.h.b16 %v326
    %v2444 = vunpack.c.l.b16 %v327
    %v2445 = vunpack.c.h.b16 %v327
    %v2446 = vunpack.c.l.b16 %v328
    %v2447 = vunpack.c.h.b16 %v328
    %v2448 = vunpack.c.l.b16 %v329
    %v2449 = vunpack.c.h.b16 %v329
    %v2450 = vunpack.c.l.b16 %v330
    %v2451 = vunpack.c.h.b16 %v330
    %v2452 = vunpack.c.l.b16 %v331
    %v2453 = vunpack.c.h.b16 %v331
    %v2454 = vunpack.c.l.b16 %v332
    %v2455 = vunpack.c.h.b16 %v332
    %v2456 = vunpack.c.l.b16 %v333
    %v2457 = vunpack.c.h.b16 %v333
    %v2458 = vunpack.c.l.b16 %v334
    %v2459 = vunpack.c.h.b16 %v334
    %v2460 = vunpack.c.l.b16 %v335
    %v2461 = vunpack.c.h.b16 %v335
    %v2462 = vunpack.c.l.b16 %v336
    %v2463 = vunpack.c.h.b16 %v336
    %v2464 = vunpack.c.l.b16 %v337
    %v2465 = vunpack.c.h.b16 %v337
    %v2466 = vunpack.c.l.b16 %v338
    %v2467 = vunpack.c.h.b16 %v338
    %v2468 = vunpack.c.l.b16 %v339
    %v2469 = vunpack.c.h.b16 %v339
    %v2470 = vunpack.c.l.b16 %v340
    %v2471 = vunpack.c.h.b16 %v340
    %v2472 = vunpack.c.l.b16 %v341
    %v2473 = vunpack.c.h.b16 %v341
    %v2474 = vunpack.c.l.b16 %v342
    %v2475 = vunpack.c.h.b16 %v342
    %v2476 = vunpack.c.l.b16 %v343
    %v2477 = vunpack.c.h.b16 %v343
    %v2478 = vunpack.c.l.b16 %v344
    %v2479 = vunpack.c.h.b16 %v344
    %v2480 = vunpack.c.l.b16 %v345
    %v2481 = vunpack.c.h.b16 %v345
    %v2482 = vunpack.c.l.b16 %v346
    %v2483 = vunpack.c.h.b16 %v346
    %v2484 = vunpack.c.l.b16 %v347
    %v2485 = vunpack.c.h.b16 %v347
    %v2486 = vunpack.c.l.b16 %v348
    %v2487 = vunpack.c.h.b16 %v348
    %v2488 = vunpack.c.l.b16 %v349
    %v2489 = vunpack.c.h.b16 %v349
    %v2490 = vunpack.c.l.b16 %v350
    %v2491 = vunpack.c.h.b16 %v350
    %v2492 = vunpack.c.l.b16 %v351
    %v2493 = vunpack.c.h.b16 %v351
    %v2494 = vunpack.c.l.b16 %v352
    %v2495 = vunpack.c.h.b16 %v352
    %v2496 = vunpack.c.l.b16 %v353
    %v2497 = vunpack.c.h.b16 %v353
    %v2498 = vunpack.c.l.b16 %v354
    %v2499 = vunpack.c.h.b16 %v354
    %v2500 = vunpack.c.l.b16 %v355
    %v2501 = vunpack.c.h.b16 %v355
    %v2502 = vunpack.c.l.b16 %v356
    %v2503 = vunpack.c.h.b16 %v356
    %v2504 = vunpack.c.l.b16 %v357
    %v2505 = vunpack.c.h.b16 %v357
    %v2506 = vunpack.c.l.b16 %v358
    %v2507 = vunpack.c.h.b16 %v358
    %v2508 = vunpack.c.l.b16 %v359
    %v2509 = vunpack.c.h.b16 %v359
    %v2510 = vunpack.c.l.b16 %v360
    %v2511 = vunpack.c.h.b16 %v360
    %v2512 = vunpack.c.l.b16 %v361
    %v2513 = vunpack.c.h.b16 %v361
    %v2514 = vunpack.c.l.b16 %v362
    %v2515 = vunpack.c.h.b16 %v362
    %v2516 = vunpack.c.l.b16 %v363
    %v2517 = vunpack.c.h.b16 %v363
    %v2518 = vunpack.c.l.b16 %v364
    %v2519 = vunpack.c.h.b16 %v364
    %v2520 = vunpack.c.l.b16 %v365
    %v2521 = vunpack.c.h.b16 %v365
    %v2522 = vunpack.c.l.b16 %v366
    %v2523 = vunpack.c.h.b16 %v366
    %v2524 = vunpack.c.l.b16 %v367
    %v2525 = vunpack.c.h.b16 %v367
    %v2526 = vunpack.c.l.b16 %v368
    %v2527 = vunpack.c.h.b16 %v368
    %v2528 = vunpack.c.l.b16 %v369
    %v2529 = vunpack.c.h.b16 %v369
    %v2530 = vunpack.c.l.b16 %v370
    %v2531 = vunpack.c.h.b16 %v370
    %v2532 = vunpack.c.l.b16 %v371
    %v2533 = vunpack.c.h.b16 %v371
    %v2534 = vunpack.c.l.b16 %v372
    %v2535 = vunpack.c.h.b16 %v372
    %v2536 = vunpack.c.l.b16 %v373
    %v2537 = vunpack.c.h.b16 %v373
    %v2538 = vunpack.c.l.b16 %v374
    %v2539 = vunpack.c.h.b16 %v374
    %v2540 = vunpack.c.l.b16 %v375
    %v2541 = vunpack.c.h.b16 %v375
    %v2542 = vunpack.c.l.b16 %v376
    %v2543 = vunpack.c.h.b16 %v376
    %v2544 = vunpack.c.l.b16 %v377
    %v2545 = vunpack.c.h.b16 %v377
    %v2546 = vunpack.c.l.b16 %v378
    %v2547 = vunpack.c.h.b16 %v378
    %v2548 = vunpack.c.l.b16 %v379
    %v2549 = vunpack.c.h.b16 %v379
    %v2550 = vunpack.c.l.b16 %v380
    %v2551 = vunpack.c.h.b16 %v380
    %v2552 = vunpack.c.l.b16 %v381
    %v2553 = vunpack.c.h.b16 %v381
    %v2554 = vunpack.c.l.b16 %v382
    %v2555 = vunpack.c.h.b16 %v382
    %v2556 = vunpack.c.l.b16 %v383
    %v2557 = vunpack.c.h.b16 %v383
    %v2558 = vunpack.c.l.b16 %v384
    %v2559 = vunpack.c.h.b16 %v384
    %v2560 = vunpack.c.l.b16 %v385
    %v2561 = vunpack.c.h.b16 %v385
    %v2562 = vunpack.c.l.b16 %v386
    %v2563 = vunpack.c.h.b16 %v386
    %v2564 = vunpack.c.l.b16 %v387
    %v2565 = vunpack.c.h.b16 %v387
    %v2566 = vunpack.c.l.b16 %v388
    %v2567 = vunpack.c.h.b16 %v388
    %v2568 = vunpack.c.l.b16 %v389
    %v2569 = vunpack.c.h.b16 %v389
    %v2570 = vunpack.c.l.b16 %v390
    %v2571 = vunpack.c.h.b16 %v390
    %v2572 = vunpack.c.l.b16 %v391
    %v2573 = vunpack.c.h.b16 %v391
    %v2574 = vunpack.c.l.b16 %v392
    %v2575 = vunpack.c.h.b16 %v392
    %v2576 = vunpack.c.l.b16 %v393
    %v2577 = vunpack.c.h.b16 %v393
    %v2578 = vunpack.c.l.b16 %v394
    %v2579 = vunpack.c.h.b16 %v394
    %v2580 = vunpack.c.l.b16 %v395
    %v2581 = vunpack.c.h.b16 %v395
    %v2582 = vunpack.c.l.b16 %v396
    %v2583 = vunpack.c.h.b16 %v396
    %v2584 = vunpack.c.l.b16 %v397
    %v2585 = vunpack.c.h.b16 %v397
    %v2586 = vunpack.c.l.b16 %v398
    %v2587 = vunpack.c.h.b16 %v398
    %v2588 = vunpack.c.l.b16 %v399
    %v2589 = vunpack.c.h.b16 %v399
    %v2590 = vunpack.c.l.b16 %v400
    %v2591 = vunpack.c.h.b16 %v400
    %v2592 = vunpack.c.l.b16 %v401
    %v2593 = vunpack.c.h.b16 %v401
    %v2594 = vunpack.c.l.b16 %v402
    %v2595 = vunpack.c.h.b16 %v402
    %v2596 = vunpack.c.l.b16 %v403
    %v2597 = vunpack.c.h.b16 %v403
    %v2598 = vunpack.c.l.b16 %v404
    %v2599 = vunpack.c.h.b16 %v404
    %v2600 = vunpack.c.l.b16 %v405
    %v2601 = vunpack.c.h.b16 %v405
    %v2602 = vunpack.c.l.b16 %v406
    %v2603 = vunpack.c.h.b16 %v406
    %v2604 = vunpack.c.l.b16 %v407
    %v2605 = vunpack.c.h.b16 %v407
    %v2606 = vunpack.c.l.b16 %v408
    %v2607 = vunpack.c.h.b16 %v408
    %v2608 = vunpack.c.l.b16 %v409
    %v2609 = vunpack.c.h.b16 %v409
    %v2610 = vunpack.c.l.b16 %v410
    %v2611 = vunpack.c.h.b16 %v410
    %v2612 = vunpack.c.l.b16 %v411
    %v2613 = vunpack.c.h.b16 %v411
    %v2614 = vunpack.c.l.b16 %v412
    %v2615 = vunpack.c.h.b16 %v412
    %v2616 = vunpack.c.l.b16 %v413
    %v2617 = vunpack.c.h.b16 %v413
    %v2618 = vunpack.c.l.b16 %v414
    %v2619 = vunpack.c.h.b16 %v414
    %v2620 = vunpack.c.l.b16 %v415
    %v2621 = vunpack.c.h.b16 %v415
    %v2622 = vunpack.c.l.b16 %v416
    %v2623 = vunpack.c.h.b16 %v416
    %v2624 = vunpack.c.l.b16 %v417
    %v2625 = vunpack.c.h.b16 %v417
    %v2626 = vunpack.c.l.b16 %v418
    %v2627 = vunpack.c.h.b16 %v418
    %v2628 = vunpack.c.l.b16 %v419
    %v2629 = vunpack.c.h.b16 %v419
    %v2630 = vunpack.c.l.b16 %v420
    %v2631 = vunpack.c.h.b16 %v420
    %v2632 = vunpack.c.l.b16 %v421
    %v2633 = vunpack.c.h.b16 %v421
    %v2634 = vunpack.c.l.b16 %v422
    %v2635 = vunpack.c.h.b16 %v422
    %v2636 = vunpack.c.l.b16 %v423
    %v2637 = vunpack.c.h.b16 %v423
    %v2638 = vunpack.c.l.b16 %v424
    %v2639 = vunpack.c.h.b16 %v424
    %v2640 = vunpack.c.l.b16 %v425
    %v2641 = vunpack.c.h.b16 %v425
    %v2642 = vunpack.c.l.b16 %v426
    %v2643 = vunpack.c.h.b16 %v426
    %v2644 = vunpack.c.l.b16 %v427
    %v2645 = vunpack.c.h.b16 %v427
    %v2646 = vunpack.c.l.b16 %v428
    %v2647 = vunpack.c.h.b16 %v428
    %v2648 = vunpack.c.l.b16 %v429
    %v2649 = vunpack.c.h.b16 %v429
    %v2650 = vunpack.c.l.b16 %v430
    %v2651 = vunpack.c.h.b16 %v430
    %v2652 = vunpack.c.l.b16 %v431
    %v2653 = vunpack.c.h.b16 %v431
    %v2654 = vunpack.c.l.b16 %v432
    %v2655 = vunpack.c.h.b16 %v432
    %v2656 = vunpack.c.l.b16 %v433
    %v2657 = vunpack.c.h.b16 %v433
    %v2658 = vunpack.c.l.b16 %v434
    %v2659 = vunpack.c.h.b16 %v434
    %v2660 = vunpack.c.l.b16 %v435
    %v2661 = vunpack.c.h.b16 %v435
    %v2662 = vunpack.c.l.b16 %v436
    %v2663 = vunpack.c.h.b16 %v436
    %v2664 = vunpack.c.l.b16 %v437
    %v2665 = vunpack.c.h.b16 %v437
    %v2666 = vunpack.c.l.b16 %v438
    %v2667 = vunpack.c.h.b16 %v438
    %v2668 = vunpack.c.l.b16 %v439
    %v2669 = vunpack.c.h.b16 %v439
    %v2670 = vunpack.c.l.b16 %v440
    %v2671 = vunpack.c.h.b16 %v440
    %v2672 = vunpack.c.l.b16 %v441
    %v2673 = vunpack.c.h.b16 %v441
    %v2674 = vunpack.c.l.b16 %v442
    %v2675 = vunpack.c.h.b16 %v442
    %v2676 = vunpack.c.l.b16 %v443
    %v2677 = vunpack.c.h.b16 %v443
    %v2678 = vunpack.c.l.b16 %v444
    %v2679 = vunpack.c.h.b16 %v444
    %v2680 = vunpack.c.l.b16 %v445
    %v2681 = vunpack.c.h.b16 %v445
    %v2682 = vunpack.c.l.b16 %v446
    %v2683 = vunpack.c.h.b16 %v446
    %v2684 = vunpack.c.l.b16 %v447
    %v2685 = vunpack.c.h.b16 %v447
    %v2686 = vunpack.c.l.b16 %v448
    %v2687 = vunpack.c.h.b16 %v448
    %v2688 = vunpack.c.l.b16 %v449
    %v2689 = vunpack.c.h.b16 %v449
    %v2690 = vunpack.c.l.b16 %v450
    %v2691 = vunpack.c.h.b16 %v450
    %v2692 = vunpack.c.l.b16 %v451
    %v2693 = vunpack.c.h.b16 %v451
    %v2694 = vunpack.c.l.b16 %v452
    %v2695 = vunpack.c.h.b16 %v452
    %v2696 = vunpack.c.l.b16 %v453
    %v2697 = vunpack.c.h.b16 %v453
    %v2698 = vunpack.c.l.b16 %v454
    %v2699 = vunpack.c.h.b16 %v454
    %v2700 = vunpack.c.l.b16 %v455
    %v2701 = vunpack.c.h.b16 %v455
    %v2702 = vunpack.c.l.b16 %v456
    %v2703 = vunpack.c.h.b16 %v456
    %v2704 = vunpack.c.l.b16 %v457
    %v2705 = vunpack.c.h.b16 %v457
    %v2706 = vunpack.c.l.b16 %v458
    %v2707 = vunpack.c.h.b16 %v458
    %v2708 = vunpack.c.l.b16 %v459
    %v2709 = vunpack.c.h.b16 %v459
    %v2710 = vunpack.c.l.b16 %v460
    %v2711 = vunpack.c.h.b16 %v460
    %v2712 = vunpack.c.l.b16 %v461
    %v2713 = vunpack.c.h.b16 %v461
    %v2714 = vunpack.c.l.b16 %v462
    %v2715 = vunpack.c.h.b16 %v462
    %v2716 = vunpack.c.l.b16 %v463
    %v2717 = vunpack.c.h.b16 %v463
    %v2718 = vunpack.c.l.b16 %v464
    %v2719 = vunpack.c.h.b16 %v464
    %v2720 = vunpack.c.l.b16 %v465
    %v2721 = vunpack.c.h.b16 %v465
    %v2722 = vunpack.c.l.b16 %v466
    %v2723 = vunpack.c.h.b16 %v466
    %v2724 = vunpack.c.l.b16 %v467
    %v2725 = vunpack.c.h.b16 %v467
    %v2726 = vunpack.c.l.b16 %v468
    %v2727 = vunpack.c.h.b16 %v468
    %v2728 = vunpack.c.l.b16 %v469
    %v2729 = vunpack.c.h.b16 %v469
    %v2730 = vunpack.c.l.b16 %v470
    %v2731 = vunpack.c.h.b16 %v470
    %v2732 = vunpack.c.l.b16 %v471
    %v2733 = vunpack.c.h.b16 %v471
    %v2734 = vunpack.c.l.b16 %v472
    %v2735 = vunpack.c.h.b16 %v472
    %v2736 = vunpack.c.l.b16 %v473
    %v2737 = vunpack.c.h.b16 %v473
    %v2738 = vunpack.c.l.b16 %v474
    %v2739 = vunpack.c.h.b16 %v474
    %v2740 = vunpack.c.l.b16 %v475
    %v2741 = vunpack.c.h.b16 %v475
    %v2742 = vunpack.c.l.b16 %v476
    %v2743 = vunpack.c.h.b16 %v476
    %v2744 = vunpack.c.l.b16 %v477
    %v2745 = vunpack.c.h.b16 %v477
    %v2746 = vunpack.c.l.b16 %v478
    %v2747 = vunpack.c.h.b16 %v478
    %v2748 = vunpack.c.l.b16 %v479
    %v2749 = vunpack.c.h.b16 %v479
    %v2750 = vunpack.c.l.b16 %v480
    %v2751 = vunpack.c.h.b16 %v480
    %v2752 = vunpack.c.l.b16 %v481
    %v2753 = vunpack.c.h.b16 %v481
    %v2754 = vunpack.c.l.b16 %v482
    %v2755 = vunpack.c.h.b16 %v482
    %v2756 = vunpack.c.l.b16 %v483
    %v2757 = vunpack.c.h.b16 %v483
    %v2758 = vunpack.c.l.b16 %v484
    %v2759 = vunpack.c.h.b16 %v484
    %v2760 = vunpack.c.l.b16 %v485
    %v2761 = vunpack.c.h.b16 %v485
    %v2762 = vunpack.c.l.b16 %v486
    %v2763 = vunpack.c.h.b16 %v486
    %v2764 = vunpack.c.l.b16 %v487
    %v2765 = vunpack.c.h.b16 %v487
    %v2766 = vunpack.c.l.b16 %v488
    %v2767 = vunpack.c.h.b16 %v488
    %v2768 = vunpack.c.l.b16 %v489
    %v2769 = vunpack.c.h.b16 %v489
    %v2770 = vunpack.c.l.b16 %v490
    %v2771 = vunpack.c.h.b16 %v490
    %v2772 = vunpack.c.l.b16 %v491
    %v2773 = vunpack.c.h.b16 %v491
    %v2774 = vunpack.c.l.b16 %v492
    %v2775 = vunpack.c.h.b16 %v492
    %v2776 = vunpack.c.l.b16 %v493
    %v2777 = vunpack.c.h.b16 %v493
    %v2778 = vunpack.c.l.b16 %v494
    %v2779 = vunpack.c.h.b16 %v494
    %v2780 = vunpack.c.l.b16 %v495
    %v2781 = vunpack.c.h.b16 %v495
    %v2782 = vunpack.c.l.b16 %v496
    %v2783 = vunpack.c.h.b16 %v496
    %v2784 = vunpack.c.l.b16 %v497
    %v2785 = vunpack.c.h.b16 %v497
    %v2786 = vunpack.c.l.b16 %v498
    %v2787 = vunpack.c.h.b16 %v498
    %v2788 = vunpack.c.l.b16 %v499
    %v2789 = vunpack.c.h.b16 %v499
    %v2790 = vunpack.c.l.b16 %v500
    %v2791 = vunpack.c.h.b16 %v500
    %v2792 = vunpack.c.l.b16 %v501
    %v2793 = vunpack.c.h.b16 %v501
    %v2794 = vunpack.c.l.b16 %v502
    %v2795 = vunpack.c.h.b16 %v502
    %v2796 = vunpack.c.l.b16 %v503
    %v2797 = vunpack.c.h.b16 %v503
    %v2798 = vunpack.c.l.b16 %v504
    %v2799 = vunpack.c.h.b16 %v504
    %v2800 = vunpack.c.l.b16 %v505
    %v2801 = vunpack.c.h.b16 %v505
    %v2802 = vunpack.c.l.b16 %v506
    %v2803 = vunpack.c.h.b16 %v506
    %v2804 = vunpack.c.l.b16 %v507
    %v2805 = vunpack.c.h.b16 %v507
    %v2806 = vunpack.c.l.b16 %v508
    %v2807 = vunpack.c.h.b16 %v508
    %v2808 = vunpack.c.l.b16 %v509
    %v2809 = vunpack.c.h.b16 %v509
    %v2810 = vunpack.c.l.b16 %v510
    %v2811 = vunpack.c.h.b16 %v510
    %v2812 = vunpack.c.l.b16 %v511
    %v2813 = vunpack.c.h.b16 %v511
    %v2814 = vunpack.c.l.b16 %v512
    %v2815 = vunpack.c.h.b16 %v512
    %v2816 = vunpack.c.l.b16 %v513
    %v2817 = vunpack.c.h.b16 %v513
    %v2818 = vunpack.c.l.b16 %v514
    %v2819 = vunpack.c.h.b16 %v514
    %v2820 = vunpack.c.l.b16 %v515
    %v2821 = vunpack.c.h.b16 %v515
    %v2822 = vunpack.c.l.b16 %v516
    %v2823 = vunpack.c.h.b16 %v516
    %v2824 = vunpack.c.l.b16 %v517
    %v2825 = vunpack.c.h.b16 %v517
    %v2826 = vunpack.c.l.b16 %v518
    %v2827 = vunpack.c.h.b16 %v518
    %v2828 = vunpack.c.l.b16 %v519
    %v2829 = vunpack.c.h.b16 %v519
    %v2830 = vunpack.c.l.b16 %v520
    %v2831 = vunpack.c.h.b16 %v520
    %v2832 = vunpack.c.l.b16 %v521
    %v2833 = vunpack.c.h.b16 %v521
    %v2834 = vunpack.c.l.b16 %v522
    %v2835 = vunpack.c.h.b16 %v522
    %v2836 = vunpack.c.l.b16 %v523
    %v2837 = vunpack.c.h.b16 %v523
    %v2838 = vunpack.c.l.b16 %v524
    %v2839 = vunpack.c.h.b16 %v524
    %v2840 = vunpack.c.l.b16 %v525
    %v2841 = vunpack.c.h.b16 %v525
    %v2842 = vunpack.c.l.b16 %v526
    %v2843 = vunpack.c.h.b16 %v526
    %v2844 = vunpack.c.l.b16 %v527
    %v2845 = vunpack.c.h.b16 %v527
    %v2846 = vunpack.c.l.b16 %v528
    %v2847 = vunpack.c.h.b16 %v528
    %v2848 = vunpack.c.l.b16 %v529
    %v2849 = vunpack.c.h.b16 %v529
    %v2850 = vunpack.c.l.b16 %v530
    %v2851 = vunpack.c.h.b16 %v530
    %v2852 = vunpack.c.l.b16 %v531
    %v2853 = vunpack.c.h.b16 %v531
    %v2854 = vunpack.c.l.b16 %v532
    %v2855 = vunpack.c.h.b16 %v532
    %v2856 = vunpack.c.l.b16 %v533
    %v2857 = vunpack.c.h.b16 %v533
    %v2858 = vunpack.c.l.b16 %v534
    %v2859 = vunpack.c.h.b16 %v534
    %v2860 = vunpack.c.l.b16 %v535
    %v2861 = vunpack.c.h.b16 %v535
    %v2862 = vunpack.c.l.b16 %v536
    %v2863 = vunpack.c.h.b16 %v536
    %v2864 = vunpack.c.l.b16 %v537
    %v2865 = vunpack.c.h.b16 %v537
    %v2866 = vunpack.c.l.b16 %v538
    %v2867 = vunpack.c.h.b16 %v538
    %v2868 = vunpack.c.l.b16 %v539
    %v2869 = vunpack.c.h.b16 %v539
    %v2870 = vunpack.c.l.b16 %v540
    %v2871 = vunpack.c.h.b16 %v540
    %v2872 = vunpack.c.l.b16 %v541
    %v2873 = vunpack.c.h.b16 %v541
    %v2874 = vunpack.c.l.b16 %v542
    %v2875 = vunpack.c.h.b16 %v542
    %v2876 = vunpack.c.l.b16 %v543
    %v2877 = vunpack.c.h.b16 %v543
    %v2878 = vunpack.c.l.b16 %v544
    %v2879 = vunpack.c.h.b16 %v544
    %v2880 = vunpack.c.l.b16 %v545
    %v2881 = vunpack.c.h.b16 %v545
    %v2882 = vunpack.c.l.b16 %v546
    %v2883 = vunpack.c.h.b16 %v546
    %v2884 = vunpack.c.l.b16 %v547
    %v2885 = vunpack.c.h.b16 %v547
    %v2886 = vunpack.c.l.b16 %v548
    %v2887 = vunpack.c.h.b16 %v548
    %v2888 = vunpack.c.l.b16 %v549
    %v2889 = vunpack.c.h.b16 %v549
    %v2890 = vunpack.c.l.b16 %v550
    %v2891 = vunpack.c.h.b16 %v550
    %v2892 = vunpack.c.l.b16 %v551
    %v2893 = vunpack.c.h.b16 %v551
    %v2894 = vunpack.c.l.b16 %v552
    %v2895 = vunpack.c.h.b16 %v552
    %v2896 = vunpack.c.l.b16 %v553
    %v2897 = vunpack.c.h.b16 %v553
    %v2898 = vunpack.c.l.b16 %v554
    %v2899 = vunpack.c.h.b16 %v554
    %v2900 = vunpack.c.l.b16 %v555
    %v2901 = vunpack.c.h.b16 %v555
    %v2902 = vunpack.c.l.b16 %v556
    %v2903 = vunpack.c.h.b16 %v556
    %v2904 = vunpack.c.l.b16 %v557
    %v2905 = vunpack.c.h.b16 %v557
    %v2906 = vunpack.c.l.b16 %v558
    %v2907 = vunpack.c.h.b16 %v558
    %v2908 = vunpack.c.l.b16 %v559
    %v2909 = vunpack.c.h.b16 %v559
    %v2910 = vunpack.c.l.b16 %v560
    %v2911 = vunpack.c.h.b16 %v560
    %v2912 = vunpack.c.l.b16 %v561
    %v2913 = vunpack.c.h.b16 %v561
    %v2914 = vunpack.c.l.b16 %v562
    %v2915 = vunpack.c.h.b16 %v562
    %v2916 = vunpack.c.l.b16 %v563
    %v2917 = vunpack.c.h.b16 %v563
    %v2918 = vunpack.c.l.b16 %v564
    %v2919 = vunpack.c.h.b16 %v564
    %v2920 = vunpack.c.l.b16 %v565
    %v2921 = vunpack.c.h.b16 %v565
    %v2922 = vunpack.c.l.b16 %v566
    %v2923 = vunpack.c.h.b16 %v566
    %v2924 = vunpack.c.l.b16 %v567
    %v2925 = vunpack.c.h.b16 %v567
    %v2926 = vunpack.c.l.b16 %v568
    %v2927 = vunpack.c.h.b16 %v568
    %v2928 = vunpack.c.l.b16 %v569
    %v2929 = vunpack.c.h.b16 %v569
    %v2930 = vunpack.c.l.b16 %v570
    %v2931 = vunpack.c.h.b16 %v570
    %v2932 = vunpack.c.l.b16 %v571
    %v2933 = vunpack.c.h.b16 %v571
    %v2934 = vunpack.c.l.b16 %v572
    %v2935 = vunpack.c.h.b16 %v572
    %v2936 = vunpack.c.l.b16 %v573
    %v2937 = vunpack.c.h.b16 %v573
    %v2938 = vunpack.c.l.b16 %v574
    %v2939 = vunpack.c.h.b16 %v574
    %v2940 = vunpack.c.l.b16 %v575
    %v2941 = vunpack.c.h.b16 %v575
    %v2942 = vunpack.c.l.b16 %v576
    %v2943 = vunpack.c.h.b16 %v576
    %v2944 = vunpack.c.l.b16 %v577
    %v2945 = vunpack.c.h.b16 %v577
    %v2946 = vunpack.c.l.b16 %v578
    %v2947 = vunpack.c.h.b16 %v578
    %v2948 = vunpack.c.l.b16 %v579
    %v2949 = vunpack.c.h.b16 %v579
    %v2950 = vunpack.c.l.b16 %v580
    %v2951 = vunpack.c.h.b16 %v580
    %v2952 = vunpack.c.l.b16 %v581
    %v2953 = vunpack.c.h.b16 %v581
    %v2954 = vunpack.c.l.b16 %v582
    %v2955 = vunpack.c.h.b16 %v582
    %v2956 = vunpack.c.l.b16 %v583
    %v2957 = vunpack.c.h.b16 %v583
    %v2958 = vunpack.c.l.b16 %v584
    %v2959 = vunpack.c.h.b16 %v584
    %v2960 = vunpack.c.l.b16 %v585
    %v2961 = vunpack.c.h.b16 %v585
    %v2962 = vunpack.c.l.b16 %v586
    %v2963 = vunpack.c.h.b16 %v586
    %v2964 = vunpack.c.l.b16 %v587
    %v2965 = vunpack.c.h.b16 %v587
    %v2966 = vunpack.c.l.b16 %v588
    %v2967 = vunpack.c.h.b16 %v588
    %v2968 = vunpack.c.l.b16 %v589
    %v2969 = vunpack.c.h.b16 %v589
    %v2970 = vunpack.c.l.b16 %v590
    %v2971 = vunpack.c.h.b16 %v590
    %v2972 = vunpack.c.l.b16 %v591
    %v2973 = vunpack.c.h.b16 %v591
    %v2974 = vunpack.c.l.b16 %v592
    %v2975 = vunpack.c.h.b16 %v592
    %v2976 = vunpack.c.l.b16 %v593
    %v2977 = vunpack.c.h.b16 %v593
    %v2978 = vunpack.c.l.b16 %v594
    %v2979 = vunpack.c.h.b16 %v594
    %v2980 = vunpack.c.l.b16 %v595
    %v2981 = vunpack.c.h.b16 %v595
    %v2982 = vunpack.c.l.b16 %v596
    %v2983 = vunpack.c.h.b16 %v596
    %v2984 = vunpack.c.l.b16 %v597
    %v2985 = vunpack.c.h.b16 %v597
    %v2986 = vunpack.c.l.b16 %v598
    %v2987 = vunpack.c.h.b16 %v598
    %v2988 = vunpack.c.l.b16 %v599
    %v2989 = vunpack.c.h.b16 %v599
    %v2990 = vunpack.c.l.b16 %v600
    %v2991 = vunpack.c.h.b16 %v600
    %v2992 = vunpack.c.l.b16 %v601
    %v2993 = vunpack.c.h.b16 %v601
    %v2994 = vunpack.c.l.b16 %v602
    %v2995 = vunpack.c.h.b16 %v602
    %v2996 = vunpack.c.l.b16 %v603
    %v2997 = vunpack.c.h.b16 %v603
    %v2998 = vunpack.c.l.b16 %v604
    %v2999 = vunpack.c.h.b16 %v604
    %v3000 = vunpack.c.l.b16 %v605
    %v3001 = vunpack.c.h.b16 %v605
    %v3002 = vunpack.c.l.b16 %v606
    %v3003 = vunpack.c.h.b16 %v606
    %v3004 = vunpack.c.l.b16 %v607
    %v3005 = vunpack.c.h.b16 %v607
    %v3006 = vunpack.c.l.b16 %v608
    %v3007 = vunpack.c.h.b16 %v608
    %v3008 = vunpack.c.l.b16 %v609
    %v3009 = vunpack.c.h.b16 %v609
    %v3010 = vunpack.c.l.b16 %v610
    %v3011 = vunpack.c.h.b16 %v610
    %v3012 = vunpack.c.l.b16 %v611
    %v3013 = vunpack.c.h.b16 %v611
    %v3014 = vunpack.c.l.b16 %v612
    %v3015 = vunpack.c.h.b16 %v612
    %v3016 = vunpack.c.l.b16 %v613
    %v3017 = vunpack.c.h.b16 %v613
    %v3018 = vunpack.c.l.b16 %v614
    %v3019 = vunpack.c.h.b16 %v614
    %v3020 = vunpack.c.l.b16 %v615
    %v3021 = vunpack.c.h.b16 %v615
    %v3022 = vunpack.c.l.b16 %v616
    %v3023 = vunpack.c.h.b16 %v616
    %v3024 = vunpack.c.l.b16 %v617
    %v3025 = vunpack.c.h.b16 %v617
    %v3026 = vunpack.c.l.b16 %v618
    %v3027 = vunpack.c.h.b16 %v618
    %v3028 = vunpack.c.l.b16 %v619
    %v3029 = vunpack.c.h.b16 %v619
    %v3030 = vunpack.c.l.b16 %v620
    %v3031 = vunpack.c.h.b16 %v620
    %v3032 = vunpack.c.l.b16 %v621
    %v3033 = vunpack.c.h.b16 %v621
    %v3034 = vunpack.c.l.b16 %v622
    %v3035 = vunpack.c.h.b16 %v622
    %v3036 = vunpack.c.l.b16 %v623
    %v3037 = vunpack.c.h.b16 %v623
    %v3038 = vunpack.c.l.b16 %v624
    %v3039 = vunpack.c.h.b16 %v624
    %v3040 = vunpack.c.l.b16 %v625
    %v3041 = vunpack.c.h.b16 %v625
    %v3042 = vunpack.c.l.b16 %v626
    %v3043 = vunpack.c.h.b16 %v626
    %v3044 = vunpack.c.l.b16 %v627
    %v3045 = vunpack.c.h.b16 %v627
    %v3046 = vunpack.c.l.b16 %v628
    %v3047 = vunpack.c.h.b16 %v628
    %v3048 = vunpack.c.l.b16 %v629
    %v3049 = vunpack.c.h.b16 %v629
    %v3050 = vunpack.c.l.b16 %v630
    %v3051 = vunpack.c.h.b16 %v630
    %v3052 = vunpack.c.l.b16 %v631
    %v3053 = vunpack.c.h.b16 %v631
    %v3054 = vunpack.c.l.b16 %v632
    %v3055 = vunpack.c.h.b16 %v632
    %v3056 = vunpack.c.l.b16 %v633
    %v3057 = vunpack.c.h.b16 %v633
    %v3058 = vunpack.c.l.b16 %v634
    %v3059 = vunpack.c.h.b16 %v634
    %v3060 = vunpack.c.l.b16 %v635
    %v3061 = vunpack.c.h.b16 %v635
    %v3062 = vunpack.c.l.b16 %v636
    %v3063 = vunpack.c.h.b16 %v636
    %v3064 = vunpack.c.l.b16 %v637
    %v3065 = vunpack.c.h.b16 %v637
    %v3066 = vunpack.c.l.b16 %v638
    %v3067 = vunpack.c.h.b16 %v638
    %v3068 = vunpack.c.l.b16 %v639
    %v3069 = vunpack.c.h.b16 %v639
    %v3070 = vunpack.c.l.b16 %v640
    %v3071 = vunpack.c.h.b16 %v640
    %v3072 = vunpack.c.l.b16 %v641
    %v3073 = vunpack.c.h.b16 %v641
    %v3074 = vunpack.c.l.b16 %v642
    %v3075 = vunpack.c.h.b16 %v642
    %v3076 = vunpack.c.l.b16 %v643
    %v3077 = vunpack.c.h.b16 %v643
    %v3078 = vunpack.c.l.b16 %v644
    %v3079 = vunpack.c.h.b16 %v644
    %v3080 = vunpack.c.l.b16 %v645
    %v3081 = vunpack.c.h.b16 %v645
    %v3082 = vunpack.c.l.b16 %v646
    %v3083 = vunpack.c.h.b16 %v646
    %v3084 = vunpack.c.l.b16 %v647
    %v3085 = vunpack.c.h.b16 %v647
    %v3086 = vunpack.c.l.b16 %v648
    %v3087 = vunpack.c.h.b16 %v648
    %v3088 = vunpack.c.l.b16 %v649
    %v3089 = vunpack.c.h.b16 %v649
    %v3090 = vunpack.c.l.b16 %v650
    %v3091 = vunpack.c.h.b16 %v650
    %v3092 = vunpack.c.l.b16 %v651
    %v3093 = vunpack.c.h.b16 %v651
    %v3094 = vunpack.c.l.b16 %v652
    %v3095 = vunpack.c.h.b16 %v652
    %v3096 = vunpack.c.l.b16 %v653
    %v3097 = vunpack.c.h.b16 %v653
    %v3098 = vunpack.c.l.b16 %v654
    %v3099 = vunpack.c.h.b16 %v654
    %v3100 = vunpack.c.l.b16 %v655
    %v3101 = vunpack.c.h.b16 %v655
    %v3102 = vunpack.c.l.b16 %v656
    %v3103 = vunpack.c.h.b16 %v656
    %v3104 = vunpack.c.l.b16 %v657
    %v3105 = vunpack.c.h.b16 %v657
    %v3106 = vunpack.c.l.b16 %v658
    %v3107 = vunpack.c.h.b16 %v658
    %v3108 = vunpack.c.l.b16 %v659
    %v3109 = vunpack.c.h.b16 %v659
    %v3110 = vunpack.c.l.b16 %v660
    %v3111 = vunpack.c.h.b16 %v660
    %v3112 = vunpack.c.l.b16 %v661
    %v3113 = vunpack.c.h.b16 %v661
    %v3114 = vunpack.c.l.b16 %v662
    %v3115 = vunpack.c.h.b16 %v662
    %v3116 = vunpack.c.l.b16 %v663
    %v3117 = vunpack.c.h.b16 %v663
    %v3118 = vunpack.c.l.b16 %v664
    %v3119 = vunpack.c.h.b16 %v664
    %v3120 = vunpack.c.l.b16 %v665
    %v3121 = vunpack.c.h.b16 %v665
    %v3122 = vunpack.c.l.b16 %v666
    %v3123 = vunpack.c.h.b16 %v666
    %v3124 = vunpack.c.l.b16 %v667
    %v3125 = vunpack.c.h.b16 %v667
    %v3126 = vunpack.c.l.b16 %v668
    %v3127 = vunpack.c.h.b16 %v668
    %v3128 = vunpack.c.l.b16 %v669
    %v3129 = vunpack.c.h.b16 %v669
    %v3130 = vunpack.c.l.b16 %v670
    %v3131 = vunpack.c.h.b16 %v670
    %v3132 = vunpack.c.l.b16 %v671
    %v3133 = vunpack.c.h.b16 %v671
    %v3134 = vunpack.c.l.b16 %v672
    %v3135 = vunpack.c.h.b16 %v672
    %v3136 = vunpack.c.l.b16 %v673
    %v3137 = vunpack.c.h.b16 %v673
    %v3138 = vunpack.c.l.b16 %v674
    %v3139 = vunpack.c.h.b16 %v674
    %v3140 = vunpack.c.l.b16 %v675
    %v3141 = vunpack.c.h.b16 %v675
    %v3142 = vunpack.c.l.b16 %v676
    %v3143 = vunpack.c.h.b16 %v676
    %v3144 = vunpack.c.l.b16 %v677
    %v3145 = vunpack.c.h.b16 %v677
    %v3146 = vunpack.c.l.b16 %v678
    %v3147 = vunpack.c.h.b16 %v678
    %v3148 = vunpack.c.l.b16 %v679
    %v3149 = vunpack.c.h.b16 %v679
    %v3150 = vunpack.c.l.b16 %v680
    %v3151 = vunpack.c.h.b16 %v680
    %v3152 = vunpack.c.l.b16 %v681
    %v3153 = vunpack.c.h.b16 %v681
    %v3154 = vunpack.c.l.b16 %v682
    %v3155 = vunpack.c.h.b16 %v682
    %v3156 = vunpack.c.l.b16 %v683
    %v3157 = vunpack.c.h.b16 %v683
    %v3158 = vunpack.c.l.b16 %v684
    %v3159 = vunpack.c.h.b16 %v684
    %v3160 = vunpack.c.l.b16 %v685
    %v3161 = vunpack.c.h.b16 %v685
    %v3162 = vunpack.c.l.b16 %v686
    %v3163 = vunpack.c.h.b16 %v686
    %v3164 = vunpack.c.l.b16 %v687
    %v3165 = vunpack.c.h.b16 %v687
    %v3166 = vunpack.c.l.b16 %v688
    %v3167 = vunpack.c.h.b16 %v688
    %v3168 = vunpack.c.l.b16 %v689
    %v3169 = vunpack.c.h.b16 %v689
    %v3170 = vunpack.c.l.b16 %v690
    %v3171 = vunpack.c.h.b16 %v690
    %v3172 = vunpack.c.l.b16 %v691
    %v3173 = vunpack.c.h.b16 %v691
    %v3174 = vunpack.c.l.b16 %v692
    %v3175 = vunpack.c.h.b16 %v692
    %v3176 = vunpack.c.l.b16 %v693
    %v3177 = vunpack.c.h.b16 %v693
    %v3178 = vunpack.c.l.b16 %v694
    %v3179 = vunpack.c.h.b16 %v694
    %v3180 = vunpack.c.l.b16 %v695
    %v3181 = vunpack.c.h.b16 %v695
    %v3182 = vunpack.c.l.b16 %v696
    %v3183 = vunpack.c.h.b16 %v696
    %v3184 = vunpack.c.l.b16 %v697
    %v3185 = vunpack.c.h.b16 %v697
    %v3186 = vunpack.c.l.b16 %v698
    %v3187 = vunpack.c.h.b16 %v698
    %v3188 = vunpack.c.l.b16 %v699
    %v3189 = vunpack.c.h.b16 %v699
    %v3190 = vunpack.c.l.b16 %v700
    %v3191 = vunpack.c.h.b16 %v700
    %v3192 = vunpack.c.l.b16 %v701
    %v3193 = vunpack.c.h.b16 %v701
    %v3194 = vunpack.c.l.b16 %v702
    %v3195 = vunpack.c.h.b16 %v702
    %v3196 = vunpack.c.l.b16 %v703
    %v3197 = vunpack.c.h.b16 %v703
    %v3198 = vunpack.c.l.b16 %v704
    %v3199 = vunpack.c.h.b16 %v704
    %v3200 = vunpack.c.l.b16 %v705
    %v3201 = vunpack.c.h.b16 %v705
    %v3202 = vunpack.c.l.b16 %v706
    %v3203 = vunpack.c.h.b16 %v706
    %v3204 = vunpack.c.l.b16 %v707
    %v3205 = vunpack.c.h.b16 %v707
    %v3206 = vunpack.c.l.b16 %v708
    %v3207 = vunpack.c.h.b16 %v708
    %v3208 = vunpack.c.l.b16 %v709
    %v3209 = vunpack.c.h.b16 %v709
    %v3210 = vunpack.c.l.b16 %v710
    %v3211 = vunpack.c.h.b16 %v710
    %v3212 = vunpack.c.l.b16 %v711
    %v3213 = vunpack.c.h.b16 %v711
    %v3214 = vunpack.c.l.b16 %v712
    %v3215 = vunpack.c.h.b16 %v712
    %v3216 = vunpack.c.l.b16 %v713
    %v3217 = vunpack.c.h.b16 %v713
    %v3218 = vunpack.c.l.b16 %v714
    %v3219 = vunpack.c.h.b16 %v714
    %v3220 = vunpack.c.l.b16 %v715
    %v3221 = vunpack.c.h.b16 %v715
    %v3222 = vunpack.c.l.b16 %v716
    %v3223 = vunpack.c.h.b16 %v716
    %v3224 = vunpack.c.l.b16 %v717
    %v3225 = vunpack.c.h.b16 %v717
    %v3226 = vunpack.c.l.b16 %v718
    %v3227 = vunpack.c.h.b16 %v718
    %v3228 = vunpack.c.l.b16 %v719
    %v3229 = vunpack.c.h.b16 %v719
    %v3230 = vunpack.c.l.b16 %v720
    %v3231 = vunpack.c.h.b16 %v720
    %v3232 = vunpack.c.l.b16 %v721
    %v3233 = vunpack.c.h.b16 %v721
    %v3234 = vunpack.c.l.b16 %v722
    %v3235 = vunpack.c.h.b16 %v722
    %v3236 = vunpack.c.l.b16 %v723
    %v3237 = vunpack.c.h.b16 %v723
    %v3238 = vunpack.c.l.b16 %v724
    %v3239 = vunpack.c.h.b16 %v724
    %v3240 = vunpack.c.l.b16 %v725
    %v3241 = vunpack.c.h.b16 %v725
    %v3242 = vunpack.c.l.b16 %v726
    %v3243 = vunpack.c.h.b16 %v726
    %v3244 = vunpack.c.l.b16 %v727
    %v3245 = vunpack.c.h.b16 %v727
    %v3246 = vunpack.c.l.b16 %v728
    %v3247 = vunpack.c.h.b16 %v728
    %v3248 = vunpack.c.l.b16 %v729
    %v3249 = vunpack.c.h.b16 %v729
    %v3250 = vunpack.c.l.b16 %v730
    %v3251 = vunpack.c.h.b16 %v730
    %v3252 = vunpack.c.l.b16 %v731
    %v3253 = vunpack.c.h.b16 %v731
    %v3254 = vunpack.c.l.b16 %v732
    %v3255 = vunpack.c.h.b16 %v732
    %v3256 = vunpack.c.l.b16 %v733
    %v3257 = vunpack.c.h.b16 %v733
    %v3258 = vunpack.c.l.b16 %v734
    %v3259 = vunpack.c.h.b16 %v734
    %v3260 = vunpack.c.l.b16 %v735
    %v3261 = vunpack.c.h.b16 %v735
    %v3262 = vunpack.c.l.b16 %v736
    %v3263 = vunpack.c.h.b16 %v736
    %v3264 = vunpack.c.l.b16 %v737
    %v3265 = vunpack.c.h.b16 %v737
    %v3266 = vunpack.c.l.b16 %v738
    %v3267 = vunpack.c.h.b16 %v738
    %v3268 = vunpack.c.l.b16 %v739
    %v3269 = vunpack.c.h.b16 %v739
    %v3270 = vunpack.c.l.b16 %v740
    %v3271 = vunpack.c.h.b16 %v740
    %v3272 = vunpack.c.l.b16 %v741
    %v3273 = vunpack.c.h.b16 %v741
    %v3274 = vunpack.c.l.b16 %v742
    %v3275 = vunpack.c.h.b16 %v742
    %v3276 = vunpack.c.l.b16 %v743
    %v3277 = vunpack.c.h.b16 %v743
    %v3278 = vunpack.c.l.b16 %v744
    %v3279 = vunpack.c.h.b16 %v744
    %v3280 = vunpack.c.l.b16 %v745
    %v3281 = vunpack.c.h.b16 %v745
    %v3282 = vunpack.c.l.b16 %v746
    %v3283 = vunpack.c.h.b16 %v746
    %v3284 = vunpack.c.l.b16 %v747
    %v3285 = vunpack.c.h.b16 %v747
    %v3286 = vunpack.c.l.b16 %v748
    %v3287 = vunpack.c.h.b16 %v748
    %v3288 = vunpack.c.l.b16 %v749
    %v3289 = vunpack.c.h.b16 %v749
    %v3290 = vunpack.c.l.b16 %v750
    %v3291 = vunpack.c.h.b16 %v750
    %v3292 = vunpack.c.l.b16 %v751
    %v3293 = vunpack.c.h.b16 %v751
    %v3294 = vunpack.c.l.b16 %v752
    %v3295 = vunpack.c.h.b16 %v752
    %v3296 = vunpack.c.l.b16 %v753
    %v3297 = vunpack.c.h.b16 %v753
    %v3298 = vunpack.c.l.b16 %v754
    %v3299 = vunpack.c.h.b16 %v754
    %v3300 = vunpack.c.l.b16 %v755
    %v3301 = vunpack.c.h.b16 %v755
    %v3302 = vunpack.c.l.b16 %v756
    %v3303 = vunpack.c.h.b16 %v756
    %v3304 = vunpack.c.l.b16 %v757
    %v3305 = vunpack.c.h.b16 %v757
    %v3306 = vunpack.c.l.b16 %v758
    %v3307 = vunpack.c.h.b16 %v758
    %v3308 = vunpack.c.l.b16 %v759
    %v3309 = vunpack.c.h.b16 %v759
    %v3310 = vunpack.c.l.b16 %v760
    %v3311 = vunpack.c.h.b16 %v760
    %v3312 = vunpack.c.l.b16 %v761
    %v3313 = vunpack.c.h.b16 %v761
    %v3314 = vunpack.c.l.b16 %v762
    %v3315 = vunpack.c.h.b16 %v762
    %v3316 = vunpack.c.l.b16 %v763
    %v3317 = vunpack.c.h.b16 %v763
    %v3318 = vunpack.c.l.b16 %v764
    %v3319 = vunpack.c.h.b16 %v764
    %v3320 = vunpack.c.l.b16 %v765
    %v3321 = vunpack.c.h.b16 %v765
    %v3322 = vunpack.c.l.b16 %v766
    %v3323 = vunpack.c.h.b16 %v766
    %v3324 = vunpack.c.l.b16 %v767
    %v3325 = vunpack.c.h.b16 %v767
    %v3326 = vunpack.c.l.b16 %v768
    %v3327 = vunpack.c.h.b16 %v768
    %v3328 = vunpack.c.l.b16 %v769
    %v3329 = vunpack.c.h.b16 %v769
    %v3330 = vunpack.c.l.b16 %v770
    %v3331 = vunpack.c.h.b16 %v770
    %v3332 = vunpack.c.l.b16 %v771
    %v3333 = vunpack.c.h.b16 %v771
    %v3334 = vunpack.c.l.b16 %v772
    %v3335 = vunpack.c.h.b16 %v772
    %v3336 = vunpack.c.l.b16 %v773
    %v3337 = vunpack.c.h.b16 %v773
    %v3338 = vunpack.c.l.b16 %v774
    %v3339 = vunpack.c.h.b16 %v774
    %v3340 = vunpack.c.l.b16 %v775
    %v3341 = vunpack.c.h.b16 %v775
    %v3342 = vunpack.c.l.b16 %v776
    %v3343 = vunpack.c.h.b16 %v776
    %v3344 = vunpack.c.l.b16 %v777
    %v3345 = vunpack.c.h.b16 %v777
    %v3346 = vunpack.c.l.b16 %v778
    %v3347 = vunpack.c.h.b16 %v778
    %v3348 = vunpack.c.l.b16 %v779
    %v3349 = vunpack.c.h.b16 %v779
    %v3350 = vunpack.c.l.b16 %v780
    %v3351 = vunpack.c.h.b16 %v780
    %v3352 = vunpack.c.l.b16 %v781
    %v3353 = vunpack.c.h.b16 %v781
    %v3354 = vunpack.c.l.b16 %v782
    %v3355 = vunpack.c.h.b16 %v782
    %v3356 = vunpack.c.l.b16 %v783
    %v3357 = vunpack.c.h.b16 %v783
    %v3358 = vunpack.c.l.b16 %v784
    %v3359 = vunpack.c.h.b16 %v784
    %v3360 = vunpack.c.l.b16 %v785
    %v3361 = vunpack.c.h.b16 %v785
    %v3362 = vunpack.c.l.b16 %v786
    %v3363 = vunpack.c.h.b16 %v786
    %v3364 = vunpack.c.l.b16 %v787
    %v3365 = vunpack.c.h.b16 %v787
    %v3366 = vunpack.c.l.b16 %v788
    %v3367 = vunpack.c.h.b16 %v788
    %v3368 = vunpack.c.l.b16 %v789
    %v3369 = vunpack.c.h.b16 %v789
    %v3370 = vunpack.c.l.b16 %v790
    %v3371 = vunpack.c.h.b16 %v790
    %v3372 = vunpack.c.l.b16 %v791
    %v3373 = vunpack.c.h.b16 %v791
    %v3374 = vunpack.c.l.b16 %v792
    %v3375 = vunpack.c.h.b16 %v792
    %v3376 = vunpack.c.l.b16 %v793
    %v3377 = vunpack.c.h.b16 %v793
    %v3378 = vunpack.c.l.b16 %v794
    %v3379 = vunpack.c.h.b16 %v794
    %v3380 = vunpack.c.l.b16 %v795
    %v3381 = vunpack.c.h.b16 %v795
    %v3382 = vunpack.c.l.b16 %v796
    %v3383 = vunpack.c.h.b16 %v796
    %v3384 = vunpack.c.l.b16 %v797
    %v3385 = vunpack.c.h.b16 %v797
    %v3386 = vunpack.c.l.b16 %v798
    %v3387 = vunpack.c.h.b16 %v798
    %v3388 = vunpack.c.l.b16 %v799
    %v3389 = vunpack.c.h.b16 %v799
    %v3390 = vunpack.c.l.b16 %v800
    %v3391 = vunpack.c.h.b16 %v800
    %v3392 = vunpack.c.l.b16 %v801
    %v3393 = vunpack.c.h.b16 %v801
    %v3394 = vunpack.c.l.b16 %v802
    %v3395 = vunpack.c.h.b16 %v802
    %v3396 = vunpack.c.l.b16 %v803
    %v3397 = vunpack.c.h.b16 %v803
    %v3398 = vunpack.c.l.b16 %v804
    %v3399 = vunpack.c.h.b16 %v804
    %v3400 = vunpack.c.l.b16 %v805
    %v3401 = vunpack.c.h.b16 %v805
    %v3402 = vunpack.c.l.b16 %v806
    %v3403 = vunpack.c.h.b16 %v806
    %v3404 = vunpack.c.l.b16 %v807
    %v3405 = vunpack.c.h.b16 %v807
    %v3406 = vunpack.c.l.b16 %v808
    %v3407 = vunpack.c.h.b16 %v808
    %v3408 = vunpack.c.l.b16 %v809
    %v3409 = vunpack.c.h.b16 %v809
    %v3410 = vunpack.c.l.b16 %v810
    %v3411 = vunpack.c.h.b16 %v810
    %v3412 = vunpack.c.l.b16 %v811
    %v3413 = vunpack.c.h.b16 %v811
    %v3414 = vunpack.c.l.b16 %v812
    %v3415 = vunpack.c.h.b16 %v812
    %v3416 = vunpack.c.l.b16 %v813
    %v3417 = vunpack.c.h.b16 %v813
    %v3418 = vunpack.c.l.b16 %v814
    %v3419 = vunpack.c.h.b16 %v814
    %v3420 = vunpack.c.l.b16 %v815
    %v3421 = vunpack.c.h.b16 %v815
    %v3422 = vunpack.c.l.b16 %v816
    %v3423 = vunpack.c.h.b16 %v816
    %v3424 = vunpack.c.l.b16 %v817
    %v3425 = vunpack.c.h.b16 %v817
    %v3426 = vunpack.c.l.b16 %v818
    %v3427 = vunpack.c.h.b16 %v818
    %v3428 = vunpack.c.l.b16 %v819
    %v3429 = vunpack.c.h.b16 %v819
    %v3430 = vunpack.c.l.b16 %v820
    %v3431 = vunpack.c.h.b16 %v820
    %v3432 = vunpack.c.l.b16 %v821
    %v3433 = vunpack.c.h.b16 %v821
    %v3434 = vunpack.c.l.b16 %v822
    %v3435 = vunpack.c.h.b16 %v822
    %v3436 = vunpack.c.l.b16 %v823
    %v3437 = vunpack.c.h.b16 %v823
    %v3438 = vunpack.c.l.b16 %v824
    %v3439 = vunpack.c.h.b16 %v824
    %v3440 = vunpack.c.l.b16 %v825
    %v3441 = vunpack.c.h.b16 %v825
    %v3442 = vunpack.c.l.b16 %v826
    %v3443 = vunpack.c.h.b16 %v826
    %v3444 = vunpack.c.l.b16 %v827
    %v3445 = vunpack.c.h.b16 %v827
    %v3446 = vunpack.c.l.b16 %v828
    %v3447 = vunpack.c.h.b16 %v828
    %v3448 = vunpack.c.l.b16 %v829
    %v3449 = vunpack.c.h.b16 %v829
    %v3450 = vunpack.c.l.b16 %v830
    %v3451 = vunpack.c.h.b16 %v830
    %v3452 = vunpack.c.l.b16 %v831
    %v3453 = vunpack.c.h.b16 %v831
    %v3454 = vunpack.c.l.b16 %v832
    %v3455 = vunpack.c.h.b16 %v832
    %v3456 = vunpack.c.l.b16 %v833
    %v3457 = vunpack.c.h.b16 %v833
    %v3458 = vunpack.c.l.b16 %v834
    %v3459 = vunpack.c.h.b16 %v834
    %v3460 = vunpack.c.l.b16 %v835
    %v3461 = vunpack.c.h.b16 %v835
    %v3462 = vunpack.c.l.b16 %v836
    %v3463 = vunpack.c.h.b16 %v836
    %v3464 = vunpack.c.l.b16 %v837
    %v3465 = vunpack.c.h.b16 %v837
    %v3466 = vunpack.c.l.b16 %v838
    %v3467 = vunpack.c.h.b16 %v838
    %v3468 = vunpack.c.l.b16 %v839
    %v3469 = vunpack.c.h.b16 %v839
    %v3470 = vunpack.c.l.b16 %v840
    %v3471 = vunpack.c.h.b16 %v840
    %v3472 = vunpack.c.l.b16 %v841
    %v3473 = vunpack.c.h.b16 %v841
    %v3474 = vunpack.c.l.b16 %v842
    %v3475 = vunpack.c.h.b16 %v842
    %v3476 = vunpack.c.l.b16 %v843
    %v3477 = vunpack.c.h.b16 %v843
    %v3478 = vunpack.c.l.b16 %v844
    %v3479 = vunpack.c.h.b16 %v844
    %v3480 = vunpack.c.l.b16 %v845
    %v3481 = vunpack.c.h.b16 %v845
    %v3482 = vunpack.c.l.b16 %v846
    %v3483 = vunpack.c.h.b16 %v846
    %v3484 = vunpack.c.l.b16 %v847
    %v3485 = vunpack.c.h.b16 %v847
    %v3486 = vunpack.c.l.b16 %v848
    %v3487 = vunpack.c.h.b16 %v848
    %v3488 = vunpack.c.l.b16 %v849
    %v3489 = vunpack.c.h.b16 %v849
    %v3490 = vunpack.c.l.b16 %v850
    %v3491 = vunpack.c.h.b16 %v850
    %v3492 = vunpack.c.l.b16 %v851
    %v3493 = vunpack.c.h.b16 %v851
    %v3494 = vunpack.c.l.b16 %v852
    %v3495 = vunpack.c.h.b16 %v852
    %v3496 = vunpack.c.l.b16 %v853
    %v3497 = vunpack.c.h.b16 %v853
    %v3498 = vunpack.c.l.b16 %v854
    %v3499 = vunpack.c.h.b16 %v854
    %v3500 = vunpack.c.l.b16 %v855
    %v3501 = vunpack.c.h.b16 %v855
    %v3502 = vunpack.c.l.b16 %v856
    %v3503 = vunpack.c.h.b16 %v856
    %v3504 = vunpack.c.l.b16 %v857
    %v3505 = vunpack.c.h.b16 %v857
    %v3506 = vunpack.c.l.b16 %v858
    %v3507 = vunpack.c.h.b16 %v858
    %v3508 = vunpack.c.l.b16 %v859
    %v3509 = vunpack.c.h.b16 %v859
    %v3510 = vunpack.c.l.b16 %v860
    %v3511 = vunpack.c.h.b16 %v860
    %v3512 = vunpack.c.l.b16 %v861
    %v3513 = vunpack.c.h.b16 %v861
    %v3514 = vunpack.c.l.b16 %v862
    %v3515 = vunpack.c.h.b16 %v862
    %v3516 = vunpack.c.l.b16 %v863
    %v3517 = vunpack.c.h.b16 %v863
    %v3518 = vunpack.c.l.b16 %v864
    %v3519 = vunpack.c.h.b16 %v864
    %v3520 = vunpack.c.l.b16 %v865
    %v3521 = vunpack.c.h.b16 %v865
    %v3522 = vunpack.c.l.b16 %v866
    %v3523 = vunpack.c.h.b16 %v866
    %v3524 = vunpack.c.l.b16 %v867
    %v3525 = vunpack.c.h.b16 %v867
    %v3526 = vunpack.c.l.b16 %v868
    %v3527 = vunpack.c.h.b16 %v868
    %v3528 = vunpack.c.l.b16 %v869
    %v3529 = vunpack.c.h.b16 %v869
    %v3530 = vunpack.c.l.b16 %v870
    %v3531 = vunpack.c.h.b16 %v870
    %v3532 = vunpack.c.l.b16 %v871
    %v3533 = vunpack.c.h.b16 %v871
    %v3534 = vunpack.c.l.b16 %v872
    %v3535 = vunpack.c.h.b16 %v872
    %v3536 = vunpack.c.l.b16 %v873
    %v3537 = vunpack.c.h.b16 %v873
    %v3538 = vunpack.c.l.b16 %v874
    %v3539 = vunpack.c.h.b16 %v874
    %v3540 = vunpack.c.l.b16 %v875
    %v3541 = vunpack.c.h.b16 %v875
    %v3542 = vunpack.c.l.b16 %v876
    %v3543 = vunpack.c.h.b16 %v876
    %v3544 = vunpack.c.l.b16 %v877
    %v3545 = vunpack.c.h.b16 %v877
    %v3546 = vunpack.c.l.b16 %v878
    %v3547 = vunpack.c.h.b16 %v878
    %v3548 = vunpack.c.l.b16 %v879
    %v3549 = vunpack.c.h.b16 %v879
    %v3550 = vunpack.c.l.b16 %v880
    %v3551 = vunpack.c.h.b16 %v880
    %v3552 = vunpack.c.l.b16 %v881
    %v3553 = vunpack.c.h.b16 %v881
    %v3554 = vunpack.c.l.b16 %v882
    %v3555 = vunpack.c.h.b16 %v882
    %v3556 = vunpack.c.l.b16 %v883
    %v3557 = vunpack.c.h.b16 %v883
    %v3558 = vunpack.c.l.b16 %v884
    %v3559 = vunpack.c.h.b16 %v884
    %v3560 = vunpack.c.l.b16 %v885
    %v3561 = vunpack.c.h.b16 %v885
    %v3562 = vunpack.c.l.b16 %v886
    %v3563 = vunpack.c.h.b16 %v886
    %v3564 = vunpack.c.l.b16 %v887
    %v3565 = vunpack.c.h.b16 %v887
    %v3566 = vunpack.c.l.b16 %v888
    %v3567 = vunpack.c.h.b16 %v888
    %v3568 = vunpack.c.l.b16 %v889
    %v3569 = vunpack.c.h.b16 %v889
    %v3570 = vunpack.c.l.b16 %v890
    %v3571 = vunpack.c.h.b16 %v890
    %v3572 = vunpack.c.l.b16 %v891
    %v3573 = vunpack.c.h.b16 %v891
    %v3574 = vunpack.c.l.b16 %v892
    %v3575 = vunpack.c.h.b16 %v892
    %v3576 = vunpack.c.l.b16 %v893
    %v3577 = vunpack.c.h.b16 %v893
    %v3578 = vunpack.c.l.b16 %v894
    %v3579 = vunpack.c.h.b16 %v894
    %v3580 = vunpack.c.l.b16 %v895
    %v3581 = vunpack.c.h.b16 %v895
    %v3582 = vunpack.c.l.b16 %v896
    %v3583 = vunpack.c.h.b16 %v896
    %v3584 = vunpack.c.l.b16 %v897
    %v3585 = vunpack.c.h.b16 %v897
    %v3586 = vunpack.c.l.b16 %v898
    %v3587 = vunpack.c.h.b16 %v898
    %v3588 = vunpack.c.l.b16 %v899
    %v3589 = vunpack.c.h.b16 %v899
    %v3590 = vunpack.c.l.b16 %v900
    %v3591 = vunpack.c.h.b16 %v900
    %v3592 = vunpack.c.l.b16 %v901
    %v3593 = vunpack.c.h.b16 %v901
    %v3594 = vunpack.c.l.b16 %v902
    %v3595 = vunpack.c.h.b16 %v902
    %v3596 = vunpack.c.l.b16 %v903
    %v3597 = vunpack.c.h.b16 %v903
    %v3598 = vunpack.c.l.b16 %v904
    %v3599 = vunpack.c.h.b16 %v904
    %v3600 = vunpack.c.l.b16 %v905
    %v3601 = vunpack.c.h.b16 %v905
    %v3602 = vunpack.c.l.b16 %v906
    %v3603 = vunpack.c.h.b16 %v906
    %v3604 = vunpack.c.l.b16 %v907
    %v3605 = vunpack.c.h.b16 %v907
    %v3606 = vunpack.c.l.b16 %v908
    %v3607 = vunpack.c.h.b16 %v908
    %v3608 = vunpack.c.l.b16 %v909
    %v3609 = vunpack.c.h.b16 %v909
    %v3610 = vunpack.c.l.b16 %v910
    %v3611 = vunpack.c.h.b16 %v910
    %v3612 = vunpack.c.l.b16 %v911
    %v3613 = vunpack.c.h.b16 %v911
    %v3614 = vunpack.c.l.b16 %v912
    %v3615 = vunpack.c.h.b16 %v912
    %v3616 = vunpack.c.l.b16 %v913
    %v3617 = vunpack.c.h.b16 %v913
    %v3618 = vunpack.c.l.b16 %v914
    %v3619 = vunpack.c.h.b16 %v914
    %v3620 = vunpack.c.l.b16 %v915
    %v3621 = vunpack.c.h.b16 %v915
    %v3622 = vunpack.c.l.b16 %v916
    %v3623 = vunpack.c.h.b16 %v916
    %v3624 = vunpack.c.l.b16 %v917
    %v3625 = vunpack.c.h.b16 %v917
    %v3626 = vunpack.c.l.b16 %v918
    %v3627 = vunpack.c.h.b16 %v918
    %v3628 = vunpack.c.l.b16 %v919
    %v3629 = vunpack.c.h.b16 %v919
    %v3630 = vunpack.c.l.b16 %v920
    %v3631 = vunpack.c.h.b16 %v920
    %v3632 = vunpack.c.l.b16 %v921
    %v3633 = vunpack.c.h.b16 %v921
    %v3634 = vunpack.c.l.b16 %v922
    %v3635 = vunpack.c.h.b16 %v922
    %v3636 = vunpack.c.l.b16 %v923
    %v3637 = vunpack.c.h.b16 %v923
    %v3638 = vunpack.c.l.b16 %v924
    %v3639 = vunpack.c.h.b16 %v924
    %v3640 = vunpack.c.l.b16 %v925
    %v3641 = vunpack.c.h.b16 %v925
    %v3642 = vunpack.c.l.b16 %v926
    %v3643 = vunpack.c.h.b16 %v926
    %v3644 = vunpack.c.l.b16 %v927
    %v3645 = vunpack.c.h.b16 %v927
    %v3646 = vunpack.c.l.b16 %v928
    %v3647 = vunpack.c.h.b16 %v928
    %v3648 = vunpack.c.l.b16 %v929
    %v3649 = vunpack.c.h.b16 %v929
    %v3650 = vunpack.c.l.b16 %v930
    %v3651 = vunpack.c.h.b16 %v930
    %v3652 = vunpack.c.l.b16 %v931
    %v3653 = vunpack.c.h.b16 %v931
    %v3654 = vunpack.c.l.b16 %v932
    %v3655 = vunpack.c.h.b16 %v932
    %v3656 = vunpack.c.l.b16 %v933
    %v3657 = vunpack.c.h.b16 %v933
    %v3658 = vunpack.c.l.b16 %v934
    %v3659 = vunpack.c.h.b16 %v934
    %v3660 = vunpack.c.l.b16 %v935
    %v3661 = vunpack.c.h.b16 %v935
    %v3662 = vunpack.c.l.b16 %v936
    %v3663 = vunpack.c.h.b16 %v936
    %v3664 = vunpack.c.l.b16 %v937
    %v3665 = vunpack.c.h.b16 %v937
    %v3666 = vunpack.c.l.b16 %v938
    %v3667 = vunpack.c.h.b16 %v938
    %v3668 = vunpack.c.l.b16 %v939
    %v3669 = vunpack.c.h.b16 %v939
    %v3670 = vunpack.c.l.b16 %v940
    %v3671 = vunpack.c.h.b16 %v940
    %v3672 = vunpack.c.l.b16 %v941
    %v3673 = vunpack.c.h.b16 %v941
    %v3674 = vunpack.c.l.b16 %v942
    %v3675 = vunpack.c.h.b16 %v942
    %v3676 = vunpack.c.l.b16 %v943
    %v3677 = vunpack.c.h.b16 %v943
    %v3678 = vunpack.c.l.b16 %v944
    %v3679 = vunpack.c.h.b16 %v944
    %v3680 = vunpack.c.l.b16 %v945
    %v3681 = vunpack.c.h.b16 %v945
    %v3682 = vunpack.c.l.b16 %v946
    %v3683 = vunpack.c.h.b16 %v946
    %v3684 = vunpack.c.l.b16 %v947
    %v3685 = vunpack.c.h.b16 %v947
    %v3686 = vunpack.c.l.b16 %v948
    %v3687 = vunpack.c.h.b16 %v948
    %v3688 = vunpack.c.l.b16 %v949
    %v3689 = vunpack.c.h.b16 %v949
    %v3690 = vunpack.c.l.b16 %v950
    %v3691 = vunpack.c.h.b16 %v950
    %v3692 = vunpack.c.l.b16 %v951
    %v3693 = vunpack.c.h.b16 %v951
    %v3694 = vunpack.c.l.b16 %v952
    %v3695 = vunpack.c.h.b16 %v952
    %v3696 = vunpack.c.l.b16 %v953
    %v3697 = vunpack.c.h.b16 %v953
    %v3698 = vunpack.c.l.b16 %v954
    %v3699 = vunpack.c.h.b16 %v954
    %v3700 = vunpack.c.l.b16 %v955
    %v3701 = vunpack.c.h.b16 %v955
    %v3702 = vunpack.c.l.b16 %v956
    %v3703 = vunpack.c.h.b16 %v956
    %v3704 = vunpack.c.l.b16 %v957
    %v3705 = vunpack.c.h.b16 %v957
    %v3706 = vunpack.c.l.b16 %v958
    %v3707 = vunpack.c.h.b16 %v958
    %v3708 = vunpack.c.l.b16 %v959
    %v3709 = vunpack.c.h.b16 %v959
    %v3710 = vunpack.c.l.b16 %v960
    %v3711 = vunpack.c.h.b16 %v960
    %v3712 = vunpack.c.l.b16 %v961
    %v3713 = vunpack.c.h.b16 %v961
    %v3714 = vunpack.c.l.b16 %v962
    %v3715 = vunpack.c.h.b16 %v962
    %v3716 = vunpack.c.l.b16 %v963
    %v3717 = vunpack.c.h.b16 %v963
    %v3718 = vunpack.c.l.b16 %v964
    %v3719 = vunpack.c.h.b16 %v964
    %v3720 = vunpack.c.l.b16 %v965
    %v3721 = vunpack.c.h.b16 %v965
    %v3722 = vunpack.c.l.b16 %v966
    %v3723 = vunpack.c.h.b16 %v966
    %v3724 = vunpack.c.l.b16 %v967
    %v3725 = vunpack.c.h.b16 %v967
    %v3726 = vunpack.c.l.b16 %v968
    %v3727 = vunpack.c.h.b16 %v968
    %v3728 = vunpack.c.l.b16 %v969
    %v3729 = vunpack.c.h.b16 %v969
    %v3730 = vunpack.c.l.b16 %v970
    %v3731 = vunpack.c.h.b16 %v970
    %v3732 = vunpack.c.l.b16 %v971
    %v3733 = vunpack.c.h.b16 %v971
    %v3734 = vunpack.c.l.b16 %v972
    %v3735 = vunpack.c.h.b16 %v972
    %v3736 = vunpack.c.l.b16 %v973
    %v3737 = vunpack.c.h.b16 %v973
    %v3738 = vunpack.c.l.b16 %v974
    %v3739 = vunpack.c.h.b16 %v974
    %v3740 = vunpack.c.l.b16 %v975
    %v3741 = vunpack.c.h.b16 %v975
    %v3742 = vunpack.c.l.b16 %v976
    %v3743 = vunpack.c.h.b16 %v976
    %v3744 = vunpack.c.l.b16 %v977
    %v3745 = vunpack.c.h.b16 %v977
    %v3746 = vunpack.c.l.b16 %v978
    %v3747 = vunpack.c.h.b16 %v978
    %v3748 = vunpack.c.l.b16 %v979
    %v3749 = vunpack.c.h.b16 %v979
    %v3750 = vunpack.c.l.b16 %v980
    %v3751 = vunpack.c.h.b16 %v980
    %v3752 = vunpack.c.l.b16 %v981
    %v3753 = vunpack.c.h.b16 %v981
    %v3754 = vunpack.c.l.b16 %v982
    %v3755 = vunpack.c.h.b16 %v982
    %v3756 = vunpack.c.l.b16 %v983
    %v3757 = vunpack.c.h.b16 %v983
    %v3758 = vunpack.c.l.b16 %v984
    %v3759 = vunpack.c.h.b16 %v984
    %v3760 = vunpack.c.l.b16 %v985
    %v3761 = vunpack.c.h.b16 %v985
    %v3762 = vunpack.c.l.b16 %v986
    %v3763 = vunpack.c.h.b16 %v986
    %v3764 = vunpack.c.l.b16 %v987
    %v3765 = vunpack.c.h.b16 %v987
    %v3766 = vunpack.c.l.b16 %v988
    %v3767 = vunpack.c.h.b16 %v988
    %v3768 = vunpack.c.l.b16 %v989
    %v3769 = vunpack.c.h.b16 %v989
    %v3770 = vunpack.c.l.b16 %v990
    %v3771 = vunpack.c.h.b16 %v990
    %v3772 = vunpack.c.l.b16 %v991
    %v3773 = vunpack.c.h.b16 %v991
    %v3774 = vunpack.c.l.b16 %v992
    %v3775 = vunpack.c.h.b16 %v992
    %v3776 = vunpack.c.l.b16 %v993
    %v3777 = vunpack.c.h.b16 %v993
    %v3778 = vunpack.c.l.b16 %v994
    %v3779 = vunpack.c.h.b16 %v994
    %v3780 = vunpack.c.l.b16 %v995
    %v3781 = vunpack.c.h.b16 %v995
    %v3782 = vunpack.c.l.b16 %v996
    %v3783 = vunpack.c.h.b16 %v996
    %v3784 = vunpack.c.l.b16 %v997
    %v3785 = vunpack.c.h.b16 %v997
    %v3786 = vunpack.c.l.b16 %v998
    %v3787 = vunpack.c.h.b16 %v998
    %v3788 = vunpack.c.l.b16 %v999
    %v3789 = vunpack.c.h.b16 %v999
    %v3790 = vunpack.c.l.b16 %v1000
    %v3791 = vunpack.c.h.b16 %v1000
    %v3792 = vunpack.c.l.b16 %v1001
    %v3793 = vunpack.c.h.b16 %v1001
    %v3794 = vunpack.c.l.b16 %v1002
    %v3795 = vunpack.c.h.b16 %v1002
    %v3796 = vunpack.c.l.b16 %v1003
    %v3797 = vunpack.c.h.b16 %v1003
    %v3798 = vunpack.c.l.b16 %v1004
    %v3799 = vunpack.c.h.b16 %v1004
    %v3800 = vunpack.c.l.b16 %v1005
    %v3801 = vunpack.c.h.b16 %v1005
    %v3802 = vunpack.c.l.b16 %v1006
    %v3803 = vunpack.c.h.b16 %v1006
    %v3804 = vunpack.c.l.b16 %v1007
    %v3805 = vunpack.c.h.b16 %v1007
    %v3806 = vunpack.c.l.b16 %v1008
    %v3807 = vunpack.c.h.b16 %v1008
    %v3808 = vunpack.c.l.b16 %v1009
    %v3809 = vunpack.c.h.b16 %v1009
    %v3810 = vunpack.c.l.b16 %v1010
    %v3811 = vunpack.c.h.b16 %v1010
    %v3812 = vunpack.c.l.b16 %v1011
    %v3813 = vunpack.c.h.b16 %v1011
    %v3814 = vunpack.c.l.b16 %v1012
    %v3815 = vunpack.c.h.b16 %v1012
    %v3816 = vunpack.c.l.b16 %v1013
    %v3817 = vunpack.c.h.b16 %v1013
    %v3818 = vunpack.c.l.b16 %v1014
    %v3819 = vunpack.c.h.b16 %v1014
    %v3820 = vunpack.c.l.b16 %v1015
    %v3821 = vunpack.c.h.b16 %v1015
    %v3822 = vunpack.c.l.b16 %v1016
    %v3823 = vunpack.c.h.b16 %v1016
    %v3824 = vunpack.c.l.b16 %v1017
    %v3825 = vunpack.c.h.b16 %v1017
    %v3826 = vunpack.c.l.b16 %v1018
    %v3827 = vunpack.c.h.b16 %v1018
    %v3828 = vunpack.c.l.b16 %v1019
    %v3829 = vunpack.c.h.b16 %v1019
    %v3830 = vunpack.c.l.b16 %v1020
    %v3831 = vunpack.c.h.b16 %v1020
    %v3832 = vunpack.c.l.b16 %v1021
    %v3833 = vunpack.c.h.b16 %v1021
    %v3834 = vunpack.c.l.b16 %v1022
    %v3835 = vunpack.c.h.b16 %v1022
    %v3836 = vunpack.c.l.b16 %v1023
    %v3837 = vunpack.c.h.b16 %v1023
    %v3838 = vunpack.c.l.b16 %v1024
    %v3839 = vunpack.c.h.b16 %v1024
    %v3840 = vunpack.c.l.b16 %v1025
    %v3841 = vunpack.c.h.b16 %v1025
    %v3842 = vunpack.c.l.b16 %v1026
    %v3843 = vunpack.c.h.b16 %v1026
    %v3844 = vunpack.c.l.b16 %v1027
    %v3845 = vunpack.c.h.b16 %v1027
    %v3846 = vunpack.c.l.b16 %v1028
    %v3847 = vunpack.c.h.b16 %v1028
    %v3848 = vunpack.c.l.b16 %v1029
    %v3849 = vunpack.c.h.b16 %v1029
    %v3850 = vunpack.c.l.b16 %v1030
    %v3851 = vunpack.c.h.b16 %v1030
    %v3852 = vunpack.c.l.b16 %v1031
    %v3853 = vunpack.c.h.b16 %v1031
    %v3854 = vunpack.c.l.b16 %v1032
    %v3855 = vunpack.c.h.b16 %v1032
    %v3856 = vunpack.c.l.b16 %v1033
    %v3857 = vunpack.c.h.b16 %v1033
    %v3858 = vunpack.c.l.b16 %v1034
    %v3859 = vunpack.c.h.b16 %v1034
    %v3860 = vunpack.c.l.b16 %v1035
    %v3861 = vunpack.c.h.b16 %v1035
    %v3862 = vunpack.c.l.b16 %v1036
    %v3863 = vunpack.c.h.b16 %v1036
    %v3864 = vunpack.c.l.b16 %v1037
    %v3865 = vunpack.c.h.b16 %v1037
    %v3866 = vunpack.c.l.b16 %v1038
    %v3867 = vunpack.c.h.b16 %v1038
    %v3868 = vunpack.c.l.b16 %v1039
    %v3869 = vunpack.c.h.b16 %v1039
    %v3870 = vunpack.c.l.b16 %v1040
    %v3871 = vunpack.c.h.b16 %v1040
    %v3872 = vunpack.c.l.b16 %v1041
    %v3873 = vunpack.c.h.b16 %v1041
    %v3874 = vunpack.c.l.b16 %v1042
    %v3875 = vunpack.c.h.b16 %v1042
    %v3876 = vunpack.c.l.b16 %v1043
    %v3877 = vunpack.c.h.b16 %v1043
    %v3878 = vunpack.c.l.b16 %v1044
    %v3879 = vunpack.c.h.b16 %v1044
    %v3880 = vunpack.c.l.b16 %v1045
    %v3881 = vunpack.c.h.b16 %v1045
    %v3882 = vunpack.c.l.b16 %v1046
    %v3883 = vunpack.c.h.b16 %v1046
    %v3884 = vunpack.c.l.b16 %v1047
    %v3885 = vunpack.c.h.b16 %v1047
    %v3886 = vunpack.c.l.b16 %v1048
    %v3887 = vunpack.c.h.b16 %v1048
    %v3888 = vunpack.c.l.b16 %v1049
    %v3889 = vunpack.c.h.b16 %v1049
    %v3890 = vunpack.c.l.b16 %v1050
    %v3891 = vunpack.c.h.b16 %v1050
    %v3892 = vunpack.c.l.b16 %v1051
    %v3893 = vunpack.c.h.b16 %v1051
    %v3894 = vunpack.c.l.b16 %v1052
    %v3895 = vunpack.c.h.b16 %v1052
    %v3896 = vunpack.c.l.b16 %v1053
    %v3897 = vunpack.c.h.b16 %v1053
    %v3898 = vunpack.c.l.b16 %v1054
    %v3899 = vunpack.c.h.b16 %v1054
    %v3900 = vunpack.c.l.b16 %v1055
    %v3901 = vunpack.c.h.b16 %v1055
    %v3902 = vunpack.c.l.b16 %v1056
    %v3903 = vunpack.c.h.b16 %v1056
    %v3904 = vunpack.c.l.b16 %v1057
    %v3905 = vunpack.c.h.b16 %v1057
    %v3906 = vunpack.c.l.b16 %v1058
    %v3907 = vunpack.c.h.b16 %v1058
    %v3908 = vunpack.c.l.b16 %v1059
    %v3909 = vunpack.c.h.b16 %v1059
    %v3910 = vunpack.c.l.b16 %v1060
    %v3911 = vunpack.c.h.b16 %v1060
    %v3912 = vunpack.c.l.b16 %v1061
    %v3913 = vunpack.c.h.b16 %v1061
    %v3914 = vunpack.c.l.b16 %v1062
    %v3915 = vunpack.c.h.b16 %v1062
    %v3916 = vunpack.c.l.b16 %v1063
    %v3917 = vunpack.c.h.b16 %v1063
    %v3918 = vunpack.c.l.b16 %v1064
    %v3919 = vunpack.c.h.b16 %v1064
    %v3920 = vunpack.c.l.b16 %v1065
    %v3921 = vunpack.c.h.b16 %v1065
    %v3922 = vunpack.c.l.b16 %v1066
    %v3923 = vunpack.c.h.b16 %v1066
    %v3924 = vunpack.c.l.b16 %v1067
    %v3925 = vunpack.c.h.b16 %v1067
    %v3926 = vunpack.c.l.b16 %v1068
    %v3927 = vunpack.c.h.b16 %v1068
    %v3928 = vunpack.c.l.b16 %v1069
    %v3929 = vunpack.c.h.b16 %v1069
    %v3930 = vunpack.c.l.b16 %v1070
    %v3931 = vunpack.c.h.b16 %v1070
    %v3932 = vunpack.c.l.b16 %v1071
    %v3933 = vunpack.c.h.b16 %v1071
    %v3934 = vunpack.c.l.b16 %v1072
    %v3935 = vunpack.c.h.b16 %v1072
    %v3936 = vunpack.c.l.b16 %v1073
    %v3937 = vunpack.c.h.b16 %v1073
    %v3938 = vunpack.c.l.b16 %v1074
    %v3939 = vunpack.c.h.b16 %v1074
    %v3940 = vunpack.c.l.b16 %v1075
    %v3941 = vunpack.c.h.b16 %v1075
    %v3942 = vunpack.c.l.b16 %v1076
    %v3943 = vunpack.c.h.b16 %v1076
    %v3944 = vunpack.c.l.b16 %v1077
    %v3945 = vunpack.c.h.b16 %v1077
    %v3946 = vunpack.c.l.b16 %v1078
    %v3947 = vunpack.c.h.b16 %v1078
    %v3948 = vunpack.c.l.b16 %v1079
    %v3949 = vunpack.c.h.b16 %v1079
    %v3950 = vunpack.c.l.b16 %v1080
    %v3951 = vunpack.c.h.b16 %v1080
    %v3952 = vunpack.c.l.b16 %v1081
    %v3953 = vunpack.c.h.b16 %v1081
    %v3954 = vunpack.c.l.b16 %v1082
    %v3955 = vunpack.c.h.b16 %v1082
    %v3956 = vunpack.c.l.b16 %v1083
    %v3957 = vunpack.c.h.b16 %v1083
    %v3958 = vunpack.c.l.b16 %v1084
    %v3959 = vunpack.c.h.b16 %v1084
    %v3960 = vunpack.c.l.b16 %v1085
    %v3961 = vunpack.c.h.b16 %v1085
    %v3962 = vunpack.c.l.b16 %v1086
    %v3963 = vunpack.c.h.b16 %v1086
    %v3964 = vunpack.c.l.b16 %v1087
    %v3965 = vunpack.c.h.b16 %v1087
    %v3966 = vunpack.c.l.b16 %v1088
    %v3967 = vunpack.c.h.b16 %v1088
    %v3968 = vunpack.c.l.b16 %v1089
    %v3969 = vunpack.c.h.b16 %v1089
    %v3970 = vunpack.c.l.b16 %v1090
    %v3971 = vunpack.c.h.b16 %v1090
    %v3972 = vunpack.c.l.b16 %v1091
    %v3973 = vunpack.c.h.b16 %v1091
    %v3974 = vunpack.c.l.b16 %v1092
    %v3975 = vunpack.c.h.b16 %v1092
    %v3976 = vunpack.c.l.b16 %v1093
    %v3977 = vunpack.c.h.b16 %v1093
    %v3978 = vunpack.c.l.b16 %v1094
    %v3979 = vunpack.c.h.b16 %v1094
    %v3980 = vunpack.c.l.b16 %v1095
    %v3981 = vunpack.c.h.b16 %v1095
    %v3982 = vunpack.c.l.b16 %v1096
    %v3983 = vunpack.c.h.b16 %v1096
    %v3984 = vunpack.c.l.b16 %v1097
    %v3985 = vunpack.c.h.b16 %v1097
    %v3986 = vunpack.c.l.b16 %v1098
    %v3987 = vunpack.c.h.b16 %v1098
    %v3988 = vunpack.c.l.b16 %v1099
    %v3989 = vunpack.c.h.b16 %v1099
    %v3990 = vunpack.c.l.b16 %v1100
    %v3991 = vunpack.c.h.b16 %v1100
    %v3992 = vunpack.c.l.b16 %v1101
    %v3993 = vunpack.c.h.b16 %v1101
    %v3994 = vunpack.c.l.b16 %v1102
    %v3995 = vunpack.c.h.b16 %v1102
    %v3996 = vunpack.c.l.b16 %v1103
    %v3997 = vunpack.c.h.b16 %v1103
    %v3998 = vunpack.c.l.b16 %v1104
    %v3999 = vunpack.c.h.b16 %v1104
    %v4000 = vunpack.c.l.b16 %v1105
    %v4001 = vunpack.c.h.b16 %v1105
    %v4002 = vpack.c.b16 %v2150, %v2146
    %v4003 = vpack.c.b16 %v2151, %v2147
    %v4004 = vpack.c.b16 %v2152, %v2148
    %v4005 = vpack.c.b16 %v2153, %v2149
    %v4006 = vpack.c.b16 %v2158, %v2154
    %v4007 = vpack.c.b16 %v2159, %v2155
    %v4008 = vpack.c.b16 %v2160, %v2156
    %v4009 = vpack.c.b16 %v2161, %v2157
    %v4010 = vpack.c.b16 %v2166, %v2162
    %v4011 = vpack.c.b16 %v2167, %v2163
    %v4012 = vpack.c.b16 %v2168, %v2164
    %v4013 = vpack.c.b16 %v2169, %v2165
    %v4014 = vpack.c.b16 %v2174, %v2170
    %v4015 = vpack.c.b16 %v2175, %v2171
    %v4016 = vpack.c.b16 %v2176, %v2172
    %v4017 = vpack.c.b16 %v2177, %v2173
    %v4018 = vpack.c.b16 %v2182, %v2178
    %v4019 = vpack.c.b16 %v2183, %v2179
    %v4020 = vpack.c.b16 %v2184, %v2180
    %v4021 = vpack.c.b16 %v2185, %v2181
    %v4022 = vpack.c.b16 %v2190, %v2186
    %v4023 = vpack.c.b16 %v2191, %v2187
    %v4024 = vpack.c.b16 %v2192, %v2188
    %v4025 = vpack.c.b16 %v2193, %v2189
    %v4026 = vpack.c.b16 %v2198, %v2194
    %v4027 = vpack.c.b16 %v2199, %v2195
    %v4028 = vpack.c.b16 %v2200, %v2196
    %v4029 = vpack.c.b16 %v2201, %v2197
    %v4030 = vpack.c.b16 %v2206, %v2202
    %v4031 = vpack.c.b16 %v2207, %v2203
    %v4032 = vpack.c.b16 %v2208, %v2204
    %v4033 = vpack.c.b16 %v2209, %v2205
    %v4034 = vpack.c.b16 %v2214, %v2210
    %v4035 = vpack.c.b16 %v2215, %v2211
    %v4036 = vpack.c.b16 %v2216, %v2212
    %v4037 = vpack.c.b16 %v2217, %v2213
    %v4038 = vpack.c.b16 %v2222, %v2218
    %v4039 = vpack.c.b16 %v2223, %v2219
    %v4040 = vpack.c.b16 %v2224, %v2220
    %v4041 = vpack.c.b16 %v2225, %v2221
    %v4042 = vpack.c.b16 %v2230, %v2226
    %v4043 = vpack.c.b16 %v2231, %v2227
    %v4044 = vpack.c.b16 %v2232, %v2228
    %v4045 = vpack.c.b16 %v2233, %v2229
    %v4046 = vpack.c.b16 %v2238, %v2234
    %v4047 = vpack.c.b16 %v2239, %v2235
    %v4048 = vpack.c.b16 %v2240, %v2236
    %v4049 = vpack.c.b16 %v2241, %v2237
    %v4050 = vpack.c.b16 %v2246, %v2242
    %v4051 = vpack.c.b16 %v2247, %v2243
    %v4052 = vpack.c.b16 %v2248, %v2244
    %v4053 = vpack.c.b16 %v2249, %v2245
    %v4054 = vpack.c.b16 %v2254, %v2250
    %v4055 = vpack.c.b16 %v2255, %v2251
    %v4056 = vpack.c.b16 %v2256, %v2252
    %v4057 = vpack.c.b16 %v2257, %v2253
    %v4058 = vpack.c.b16 %v2262, %v2258
    %v4059 = vpack.c.b16 %v2263, %v2259
    %v4060 = vpack.c.b16 %v2264, %v2260
    %v4061 = vpack.c.b16 %v2265, %v2261
    %v4062 = vpack.c.b16 %v2270, %v2266
    %v4063 = vpack.c.b16 %v2271, %v2267
    %v4064 = vpack.c.b16 %v2272, %v2268
    %v4065 = vpack.c.b16 %v2273, %v2269
    %v4066 = vpack.c.b16 %v2278, %v2274
    %v4067 = vpack.c.b16 %v2279, %v2275
    %v4068 = vpack.c.b16 %v2280, %v2276
    %v4069 = vpack.c.b16 %v2281, %v2277
    %v4070 = vpack.c.b16 %v2286, %v2282
    %v4071 = vpack.c.b16 %v2287, %v2283
    %v4072 = vpack.c.b16 %v2288, %v2284
    %v4073 = vpack.c.b16 %v2289, %v2285
    %v4074 = vpack.c.b16 %v2294, %v2290
    %v4075 = vpack.c.b16 %v2295, %v2291
    %v4076 = vpack.c.b16 %v2296, %v2292
    %v4077 = vpack.c.b16 %v2297, %v2293
    %v4078 = vpack.c.b16 %v2302, %v2298
    %v4079 = vpack.c.b16 %v2303, %v2299
    %v4080 = vpack.c.b16 %v2304, %v2300
    %v4081 = vpack.c.b16 %v2305, %v2301
    %v4082 = vpack.c.b16 %v2310, %v2306
    %v4083 = vpack.c.b16 %v2311, %v2307
    %v4084 = vpack.c.b16 %v2312, %v2308
    %v4085 = vpack.c.b16 %v2313, %v2309
    %v4086 = vpack.c.b16 %v2318, %v2314
    %v4087 = vpack.c.b16 %v2319, %v2315
    %v4088 = vpack.c.b16 %v2320, %v2316
    %v4089 = vpack.c.b16 %v2321, %v2317
    %v4090 = vpack.c.b16 %v2326, %v2322
    %v4091 = vpack.c.b16 %v2327, %v2323
    %v4092 = vpack.c.b16 %v2328, %v2324
    %v4093 = vpack.c.b16 %v2329, %v2325
    %v4094 = vpack.c.b16 %v2334, %v2330
    %v4095 = vpack.c.b16 %v2335, %v2331
    %v4096 = vpack.c.b16 %v2336, %v2332
    %v4097 = vpack.c.b16 %v2337, %v2333
    %v4098 = vpack.c.b16 %v2342, %v2338
    %v4099 = vpack.c.b16 %v2343, %v2339
    %v4100 = vpack.c.b16 %v2344, %v2340
    %v4101 = vpack.c.b16 %v2345, %v2341
    %v4102 = vpack.c.b16 %v2350, %v2346
    %v4103 = vpack.c.b16 %v2351, %v2347
    %v4104 = vpack.c.b16 %v2352, %v2348
    %v4105 = vpack.c.b16 %v2353, %v2349
    %v4106 = vpack.c.b16 %v2358, %v2354
    %v4107 = vpack.c.b16 %v2359, %v2355
    %v4108 = vpack.c.b16 %v2360, %v2356
    %v4109 = vpack.c.b16 %v2361, %v2357
    %v4110 = vpack.c.b16 %v2366, %v2362
    %v4111 = vpack.c.b16 %v2367, %v2363
    %v4112 = vpack.c.b16 %v2368, %v2364
    %v4113 = vpack.c.b16 %v2369, %v2365
    %v4114 = vpack.c.b16 %v2374, %v2370
    %v4115 = vpack.c.b16 %v2375, %v2371
    %v4116 = vpack.c.b16 %v2376, %v2372
    %v4117 = vpack.c.b16 %v2377, %v2373
    %v4118 = vpack.c.b16 %v2382, %v2378
    %v4119 = vpack.c.b16 %v2383, %v2379
    %v4120 = vpack.c.b16 %v2384, %v2380
    %v4121 = vpack.c.b16 %v2385, %v2381
    %v4122 = vpack.c.b16 %v2390, %v2386
    %v4123 = vpack.c.b16 %v2391, %v2387
    %v4124 = vpack.c.b16 %v2392, %v2388
    %v4125 = vpack.c.b16 %v2393, %v2389
    %v4126 = vpack.c.b16 %v2398, %v2394
    %v4127 = vpack.c.b16 %v2399, %v2395
    %v4128 = vpack.c.b16 %v2400, %v2396
    %v4129 = vpack.c.b16 %v2401, %v2397
    %v4130 = vpack.c.b16 %v2406, %v2402
    %v4131 = vpack.c.b16 %v2407, %v2403
    %v4132 = vpack.c.b16 %v2408, %v2404
    %v4133 = vpack.c.b16 %v2409, %v2405
    %v4134 = vpack.c.b16 %v2414, %v2410
    %v4135 = vpack.c.b16 %v2415, %v2411
    %v4136 = vpack.c.b16 %v2416, %v2412
    %v4137 = vpack.c.b16 %v2417, %v2413
    %v4138 = vpack.c.b16 %v2422, %v2418
    %v4139 = vpack.c.b16 %v2423, %v2419
    %v4140 = vpack.c.b16 %v2424, %v2420
    %v4141 = vpack.c.b16 %v2425, %v2421
    %v4142 = vpack.c.b16 %v2430, %v2426
    %v4143 = vpack.c.b16 %v2431, %v2427
    %v4144 = vpack.c.b16 %v2432, %v2428
    %v4145 = vpack.c.b16 %v2433, %v2429
    %v4146 = vpack.c.b16 %v2438, %v2434
    %v4147 = vpack.c.b16 %v2439, %v2435
    %v4148 = vpack.c.b16 %v2440, %v2436
    %v4149 = vpack.c.b16 %v2441, %v2437
    %v4150 = vpack.c.b16 %v2446, %v2442
    %v4151 = vpack.c.b16 %v2447, %v2443
    %v4152 = vpack.c.b16 %v2448, %v2444
    %v4153 = vpack.c.b16 %v2449, %v2445
    %v4154 = vpack.c.b16 %v2454, %v2450
    %v4155 = vpack.c.b16 %v2455, %v2451
    %v4156 = vpack.c.b16 %v2456, %v2452
    %v4157 = vpack.c.b16 %v2457, %v2453
    %v4158 = vpack.c.b16 %v2462, %v2458
    %v4159 = vpack.c.b16 %v2463, %v2459
    %v4160 = vpack.c.b16 %v2464, %v2460
    %v4161 = vpack.c.b16 %v2465, %v2461
    %v4162 = vpack.c.b16 %v2470, %v2466
    %v4163 = vpack.c.b16 %v2471, %v2467
    %v4164 = vpack.c.b16 %v2472, %v2468
    %v4165 = vpack.c.b16 %v2473, %v2469
    %v4166 = vpack.c.b16 %v2478, %v2474
    %v4167 = vpack.c.b16 %v2479, %v2475
    %v4168 = vpack.c.b16 %v2480, %v2476
    %v4169 = vpack.c.b16 %v2481, %v2477
    %v4170 = vpack.c.b16 %v2486, %v2482
    %v4171 = vpack.c.b16 %v2487, %v2483
    %v4172 = vpack.c.b16 %v2488, %v2484
    %v4173 = vpack.c.b16 %v2489, %v2485
    %v4174 = vpack.c.b16 %v2494, %v2490
    %v4175 = vpack.c.b16 %v2495, %v2491
    %v4176 = vpack.c.b16 %v2496, %v2492
    %v4177 = vpack.c.b16 %v2497, %v2493
    %v4178 = vpack.c.b16 %v2502, %v2498
    %v4179 = vpack.c.b16 %v2503, %v2499
    %v4180 = vpack.c.b16 %v2504, %v2500
    %v4181 = vpack.c.b16 %v2505, %v2501
    %v4182 = vpack.c.b16 %v2510, %v2506
    %v4183 = vpack.c.b16 %v2511, %v2507
    %v4184 = vpack.c.b16 %v2512, %v2508
    %v4185 = vpack.c.b16 %v2513, %v2509
    %v4186 = vpack.c.b16 %v2518, %v2514
    %v4187 = vpack.c.b16 %v2519, %v2515
    %v4188 = vpack.c.b16 %v2520, %v2516
    %v4189 = vpack.c.b16 %v2521, %v2517
    %v4190 = vpack.c.b16 %v2526, %v2522
    %v4191 = vpack.c.b16 %v2527, %v2523
    %v4192 = vpack.c.b16 %v2528, %v2524
    %v4193 = vpack.c.b16 %v2529, %v2525
    %v4194 = vpack.c.b16 %v2534, %v2530
    %v4195 = vpack.c.b16 %v2535, %v2531
    %v4196 = vpack.c.b16 %v2536, %v2532
    %v4197 = vpack.c.b16 %v2537, %v2533
    %v4198 = vpack.c.b16 %v2542, %v2538
    %v4199 = vpack.c.b16 %v2543, %v2539
    %v4200 = vpack.c.b16 %v2544, %v2540
    %v4201 = vpack.c.b16 %v2545, %v2541
    %v4202 = vpack.c.b16 %v2550, %v2546
    %v4203 = vpack.c.b16 %v2551, %v2547
    %v4204 = vpack.c.b16 %v2552, %v2548
    %v4205 = vpack.c.b16 %v2553, %v2549
    %v4206 = vpack.c.b16 %v2558, %v2554
    %v4207 = vpack.c.b16 %v2559, %v2555
    %v4208 = vpack.c.b16 %v2560, %v2556
    %v4209 = vpack.c.b16 %v2561, %v2557
    %v4210 = vpack.c.b16 %v2566, %v2562
    %v4211 = vpack.c.b16 %v2567, %v2563
    %v4212 = vpack.c.b16 %v2568, %v2564
    %v4213 = vpack.c.b16 %v2569, %v2565
    %v4214 = vpack.c.b16 %v2574, %v2570
    %v4215 = vpack.c.b16 %v2575, %v2571
    %v4216 = vpack.c.b16 %v2576, %v2572
    %v4217 = vpack.c.b16 %v2577, %v2573
    %v4218 = vpack.c.b16 %v2582, %v2578
    %v4219 = vpack.c.b16 %v2583, %v2579
    %v4220 = vpack.c.b16 %v2584, %v2580
    %v4221 = vpack.c.b16 %v2585, %v2581
    %v4222 = vpack.c.b16 %v2590, %v2586
    %v4223 = vpack.c.b16 %v2591, %v2587
    %v4224 = vpack.c.b16 %v2592, %v2588
    %v4225 = vpack.c.b16 %v2593, %v2589
    %v4226 = vpack.c.b16 %v2598, %v2594
    %v4227 = vpack.c.b16 %v2599, %v2595
    %v4228 = vpack.c.b16 %v2600, %v2596
    %v4229 = vpack.c.b16 %v2601, %v2597
    %v4230 = vpack.c.b16 %v2606, %v2602
    %v4231 = vpack.c.b16 %v2607, %v2603
    %v4232 = vpack.c.b16 %v2608, %v2604
    %v4233 = vpack.c.b16 %v2609, %v2605
    %v4234 = vpack.c.b16 %v2614, %v2610
    %v4235 = vpack.c.b16 %v2615, %v2611
    %v4236 = vpack.c.b16 %v2616, %v2612
    %v4237 = vpack.c.b16 %v2617, %v2613
    %v4238 = vpack.c.b16 %v2622, %v2618
    %v4239 = vpack.c.b16 %v2623, %v2619
    %v4240 = vpack.c.b16 %v2624, %v2620
    %v4241 = vpack.c.b16 %v2625, %v2621
    %v4242 = vpack.c.b16 %v2630, %v2626
    %v4243 = vpack.c.b16 %v2631, %v2627
    %v4244 = vpack.c.b16 %v2632, %v2628
    %v4245 = vpack.c.b16 %v2633, %v2629
    %v4246 = vpack.c.b16 %v2638, %v2634
    %v4247 = vpack.c.b16 %v2639, %v2635
    %v4248 = vpack.c.b16 %v2640, %v2636
    %v4249 = vpack.c.b16 %v2641, %v2637
    %v4250 = vpack.c.b16 %v2646, %v2642
    %v4251 = vpack.c.b16 %v2647, %v2643
    %v4252 = vpack.c.b16 %v2648, %v2644
    %v4253 = vpack.c.b16 %v2649, %v2645
    %v4254 = vpack.c.b16 %v2654, %v2650
    %v4255 = vpack.c.b16 %v2655, %v2651
    %v4256 = vpack.c.b16 %v2656, %v2652
    %v4257 = vpack.c.b16 %v2657, %v2653
    %v4258 = vpack.c.b16 %v2662, %v2658
    %v4259 = vpack.c.b16 %v2663, %v2659
    %v4260 = vpack.c.b16 %v2664, %v2660
    %v4261 = vpack.c.b16 %v2665, %v2661
    %v4262 = vpack.c.b16 %v2670, %v2666
    %v4263 = vpack.c.b16 %v2671, %v2667
    %v4264 = vpack.c.b16 %v2672, %v2668
    %v4265 = vpack.c.b16 %v2673, %v2669
    %v4266 = vpack.c.b16 %v2678, %v2674
    %v4267 = vpack.c.b16 %v2679, %v2675
    %v4268 = vpack.c.b16 %v2680, %v2676
    %v4269 = vpack.c.b16 %v2681, %v2677
    %v4270 = vpack.c.b16 %v2686, %v2682
    %v4271 = vpack.c.b16 %v2687, %v2683
    %v4272 = vpack.c.b16 %v2688, %v2684
    %v4273 = vpack.c.b16 %v2689, %v2685
    %v4274 = vpack.c.b16 %v2694, %v2690
    %v4275 = vpack.c.b16 %v2695, %v2691
    %v4276 = vpack.c.b16 %v2696, %v2692
    %v4277 = vpack.c.b16 %v2697, %v2693
    %v4278 = vpack.c.b16 %v2702, %v2698
    %v4279 = vpack.c.b16 %v2703, %v2699
    %v4280 = vpack.c.b16 %v2704, %v2700
    %v4281 = vpack.c.b16 %v2705, %v2701
    %v4282 = vpack.c.b16 %v2710, %v2706
    %v4283 = vpack.c.b16 %v2711, %v2707
    %v4284 = vpack.c.b16 %v2712, %v2708
    %v4285 = vpack.c.b16 %v2713, %v2709
    %v4286 = vpack.c.b16 %v2718, %v2714
    %v4287 = vpack.c.b16 %v2719, %v2715
    %v4288 = vpack.c.b16 %v2720, %v2716
    %v4289 = vpack.c.b16 %v2721, %v2717
    %v4290 = vpack.c.b16 %v2726, %v2722
    %v4291 = vpack.c.b16 %v2727, %v2723
    %v4292 = vpack.c.b16 %v2728, %v2724
    %v4293 = vpack.c.b16 %v2729, %v2725
    %v4294 = vpack.c.b16 %v2734, %v2730
    %v4295 = vpack.c.b16 %v2735, %v2731
    %v4296 = vpack.c.b16 %v2736, %v2732
    %v4297 = vpack.c.b16 %v2737, %v2733
    %v4298 = vpack.c.b16 %v2742, %v2738
    %v4299 = vpack.c.b16 %v2743, %v2739
    %v4300 = vpack.c.b16 %v2744, %v2740
    %v4301 = vpack.c.b16 %v2745, %v2741
    %v4302 = vpack.c.b16 %v2750, %v2746
    %v4303 = vpack.c.b16 %v2751, %v2747
    %v4304 = vpack.c.b16 %v2752, %v2748
    %v4305 = vpack.c.b16 %v2753, %v2749
    %v4306 = vpack.c.b16 %v2758, %v2754
    %v4307 = vpack.c.b16 %v2759, %v2755
    %v4308 = vpack.c.b16 %v2760, %v2756
    %v4309 = vpack.c.b16 %v2761, %v2757
    %v4310 = vpack.c.b16 %v2766, %v2762
    %v4311 = vpack.c.b16 %v2767, %v2763
    %v4312 = vpack.c.b16 %v2768, %v2764
    %v4313 = vpack.c.b16 %v2769, %v2765
    %v4314 = vpack.c.b16 %v2774, %v2770
    %v4315 = vpack.c.b16 %v2775, %v2771
    %v4316 = vpack.c.b16 %v2776, %v2772
    %v4317 = vpack.c.b16 %v2777, %v2773
    %v4318 = vpack.c.b16 %v2782, %v2778
    %v4319 = vpack.c.b16 %v2783, %v2779
    %v4320 = vpack.c.b16 %v2784, %v2780
    %v4321 = vpack.c.b16 %v2785, %v2781
    %v4322 = vpack.c.b16 %v2790, %v2786
    %v4323 = vpack.c.b16 %v2791, %v2787
    %v4324 = vpack.c.b16 %v2792, %v2788
    %v4325 = vpack.c.b16 %v2793, %v2789
    %v4326 = vpack.c.b16 %v2798, %v2794
    %v4327 = vpack.c.b16 %v2799, %v2795
    %v4328 = vpack.c.b16 %v2800, %v2796
    %v4329 = vpack.c.b16 %v2801, %v2797
    %v4330 = vpack.c.b16 %v2806, %v2802
    %v4331 = vpack.c.b16 %v2807, %v2803
    %v4332 = vpack.c.b16 %v2808, %v2804
    %v4333 = vpack.c.b16 %v2809, %v2805
    %v4334 = vpack.c.b16 %v2814, %v2810
    %v4335 = vpack.c.b16 %v2815, %v2811
    %v4336 = vpack.c.b16 %v2816, %v2812
    %v4337 = vpack.c.b16 %v2817, %v2813
    %v4338 = vpack.c.b16 %v2822, %v2818
    %v4339 = vpack.c.b16 %v2823, %v2819
    %v4340 = vpack.c.b16 %v2824, %v2820
    %v4341 = vpack.c.b16 %v2825, %v2821
    %v4342 = vpack.c.b16 %v2830, %v2826
    %v4343 = vpack.c.b16 %v2831, %v2827
    %v4344 = vpack.c.b16 %v2832, %v2828
    %v4345 = vpack.c.b16 %v2833, %v2829
    %v4346 = vpack.c.b16 %v2838, %v2834
    %v4347 = vpack.c.b16 %v2839, %v2835
    %v4348 = vpack.c.b16 %v2840, %v2836
    %v4349 = vpack.c.b16 %v2841, %v2837
    %v4350 = vpack.c.b16 %v2846, %v2842
    %v4351 = vpack.c.b16 %v2847, %v2843
    %v4352 = vpack.c.b16 %v2848, %v2844
    %v4353 = vpack.c.b16 %v2849, %v2845
    %v4354 = vpack.c.b16 %v2854, %v2850
    %v4355 = vpack.c.b16 %v2855, %v2851
    %v4356 = vpack.c.b16 %v2856, %v2852
    %v4357 = vpack.c.b16 %v2857, %v2853
    %v4358 = vpack.c.b16 %v2862, %v2858
    %v4359 = vpack.c.b16 %v2863, %v2859
    %v4360 = vpack.c.b16 %v2864, %v2860
    %v4361 = vpack.c.b16 %v2865, %v2861
    %v4362 = vpack.c.b16 %v2870, %v2866
    %v4363 = vpack.c.b16 %v2871, %v2867
    %v4364 = vpack.c.b16 %v2872, %v2868
    %v4365 = vpack.c.b16 %v2873, %v2869
    %v4366 = vpack.c.b16 %v2878, %v2874
    %v4367 = vpack.c.b16 %v2879, %v2875
    %v4368 = vpack.c.b16 %v2880, %v2876
    %v4369 = vpack.c.b16 %v2881, %v2877
    %v4370 = vpack.c.b16 %v2886, %v2882
    %v4371 = vpack.c.b16 %v2887, %v2883
    %v4372 = vpack.c.b16 %v2888, %v2884
    %v4373 = vpack.c.b16 %v2889, %v2885
    %v4374 = vpack.c.b16 %v2894, %v2890
    %v4375 = vpack.c.b16 %v2895, %v2891
    %v4376 = vpack.c.b16 %v2896, %v2892
    %v4377 = vpack.c.b16 %v2897, %v2893
    %v4378 = vpack.c.b16 %v2902, %v2898
    %v4379 = vpack.c.b16 %v2903, %v2899
    %v4380 = vpack.c.b16 %v2904, %v2900
    %v4381 = vpack.c.b16 %v2905, %v2901
    %v4382 = vpack.c.b16 %v2910, %v2906
    %v4383 = vpack.c.b16 %v2911, %v2907
    %v4384 = vpack.c.b16 %v2912, %v2908
    %v4385 = vpack.c.b16 %v2913, %v2909
    %v4386 = vpack.c.b16 %v2918, %v2914
    %v4387 = vpack.c.b16 %v2919, %v2915
    %v4388 = vpack.c.b16 %v2920, %v2916
    %v4389 = vpack.c.b16 %v2921, %v2917
    %v4390 = vpack.c.b16 %v2926, %v2922
    %v4391 = vpack.c.b16 %v2927, %v2923
    %v4392 = vpack.c.b16 %v2928, %v2924
    %v4393 = vpack.c.b16 %v2929, %v2925
    %v4394 = vpack.c.b16 %v2934, %v2930
    %v4395 = vpack.c.b16 %v2935, %v2931
    %v4396 = vpack.c.b16 %v2936, %v2932
    %v4397 = vpack.c.b16 %v2937, %v2933
    %v4398 = vpack.c.b16 %v2942, %v2938
    %v4399 = vpack.c.b16 %v2943, %v2939
    %v4400 = vpack.c.b16 %v2944, %v2940
    %v4401 = vpack.c.b16 %v2945, %v2941
    %v4402 = vpack.c.b16 %v2950, %v2946
    %v4403 = vpack.c.b16 %v2951, %v2947
    %v4404 = vpack.c.b16 %v2952, %v2948
    %v4405 = vpack.c.b16 %v2953, %v2949
    %v4406 = vpack.c.b16 %v2958, %v2954
    %v4407 = vpack.c.b16 %v2959, %v2955
    %v4408 = vpack.c.b16 %v2960, %v2956
    %v4409 = vpack.c.b16 %v2961, %v2957
    %v4410 = vpack.c.b16 %v2966, %v2962
    %v4411 = vpack.c.b16 %v2967, %v2963
    %v4412 = vpack.c.b16 %v2968, %v2964
    %v4413 = vpack.c.b16 %v2969, %v2965
    %v4414 = vpack.c.b16 %v2974, %v2970
    %v4415 = vpack.c.b16 %v2975, %v2971
    %v4416 = vpack.c.b16 %v2976, %v2972
    %v4417 = vpack.c.b16 %v2977, %v2973
    %v4418 = vpack.c.b16 %v2982, %v2978
    %v4419 = vpack.c.b16 %v2983, %v2979
    %v4420 = vpack.c.b16 %v2984, %v2980
    %v4421 = vpack.c.b16 %v2985, %v2981
    %v4422 = vpack.c.b16 %v2990, %v2986
    %v4423 = vpack.c.b16 %v2991, %v2987
    %v4424 = vpack.c.b16 %v2992, %v2988
    %v4425 = vpack.c.b16 %v2993, %v2989
    %v4426 = vpack.c.b16 %v2998, %v2994
    %v4427 = vpack.c.b16 %v2999, %v2995
    %v4428 = vpack.c.b16 %v3000, %v2996
    %v4429 = vpack.c.b16 %v3001, %v2997
    %v4430 = vpack.c.b16 %v3006, %v3002
    %v4431 = vpack.c.b16 %v3007, %v3003
    %v4432 = vpack.c.b16 %v3008, %v3004
    %v4433 = vpack.c.b16 %v3009, %v3005
    %v4434 = vpack.c.b16 %v3014, %v3010
    %v4435 = vpack.c.b16 %v3015, %v3011
    %v4436 = vpack.c.b16 %v3016, %v3012
    %v4437 = vpack.c.b16 %v3017, %v3013
    %v4438 = vpack.c.b16 %v3022, %v3018
    %v4439 = vpack.c.b16 %v3023, %v3019
    %v4440 = vpack.c.b16 %v3024, %v3020
    %v4441 = vpack.c.b16 %v3025, %v3021
    %v4442 = vpack.c.b16 %v3030, %v3026
    %v4443 = vpack.c.b16 %v3031, %v3027
    %v4444 = vpack.c.b16 %v3032, %v3028
    %v4445 = vpack.c.b16 %v3033, %v3029
    %v4446 = vpack.c.b16 %v3038, %v3034
    %v4447 = vpack.c.b16 %v3039, %v3035
    %v4448 = vpack.c.b16 %v3040, %v3036
    %v4449 = vpack.c.b16 %v3041, %v3037
    %v4450 = vpack.c.b16 %v3046, %v3042
    %v4451 = vpack.c.b16 %v3047, %v3043
    %v4452 = vpack.c.b16 %v3048, %v3044
    %v4453 = vpack.c.b16 %v3049, %v3045
    %v4454 = vpack.c.b16 %v3054, %v3050
    %v4455 = vpack.c.b16 %v3055, %v3051
    %v4456 = vpack.c.b16 %v3056, %v3052
    %v4457 = vpack.c.b16 %v3057, %v3053
    %v4458 = vpack.c.b16 %v3062, %v3058
    %v4459 = vpack.c.b16 %v3063, %v3059
    %v4460 = vpack.c.b16 %v3064, %v3060
    %v4461 = vpack.c.b16 %v3065, %v3061
    %v4462 = vpack.c.b16 %v3070, %v3066
    %v4463 = vpack.c.b16 %v3071, %v3067
    %v4464 = vpack.c.b16 %v3072, %v3068
    %v4465 = vpack.c.b16 %v3073, %v3069
    %v4466 = vpack.c.b16 %v3078, %v3074
    %v4467 = vpack.c.b16 %v3079, %v3075
    %v4468 = vpack.c.b16 %v3080, %v3076
    %v4469 = vpack.c.b16 %v3081, %v3077
    %v4470 = vpack.c.b16 %v3086, %v3082
    %v4471 = vpack.c.b16 %v3087, %v3083
    %v4472 = vpack.c.b16 %v3088, %v3084
    %v4473 = vpack.c.b16 %v3089, %v3085
    %v4474 = vpack.c.b16 %v3094, %v3090
    %v4475 = vpack.c.b16 %v3095, %v3091
    %v4476 = vpack.c.b16 %v3096, %v3092
    %v4477 = vpack.c.b16 %v3097, %v3093
    %v4478 = vpack.c.b16 %v3102, %v3098
    %v4479 = vpack.c.b16 %v3103, %v3099
    %v4480 = vpack.c.b16 %v3104, %v3100
    %v4481 = vpack.c.b16 %v3105, %v3101
    %v4482 = vpack.c.b16 %v3110, %v3106
    %v4483 = vpack.c.b16 %v3111, %v3107
    %v4484 = vpack.c.b16 %v3112, %v3108
    %v4485 = vpack.c.b16 %v3113, %v3109
    %v4486 = vpack.c.b16 %v3118, %v3114
    %v4487 = vpack.c.b16 %v3119, %v3115
    %v4488 = vpack.c.b16 %v3120, %v3116
    %v4489 = vpack.c.b16 %v3121, %v3117
    %v4490 = vpack.c.b16 %v3126, %v3122
    %v4491 = vpack.c.b16 %v3127, %v3123
    %v4492 = vpack.c.b16 %v3128, %v3124
    %v4493 = vpack.c.b16 %v3129, %v3125
    %v4494 = vpack.c.b16 %v3134, %v3130
    %v4495 = vpack.c.b16 %v3135, %v3131
    %v4496 = vpack.c.b16 %v3136, %v3132
    %v4497 = vpack.c.b16 %v3137, %v3133
    %v4498 = vpack.c.b16 %v3142, %v3138
    %v4499 = vpack.c.b16 %v3143, %v3139
    %v4500 = vpack.c.b16 %v3144, %v3140
    %v4501 = vpack.c.b16 %v3145, %v3141
    %v4502 = vpack.c.b16 %v3150, %v3146
    %v4503 = vpack.c.b16 %v3151, %v3147
    %v4504 = vpack.c.b16 %v3152, %v3148
    %v4505 = vpack.c.b16 %v3153, %v3149
    %v4506 = vpack.c.b16 %v3158, %v3154
    %v4507 = vpack.c.b16 %v3159, %v3155
    %v4508 = vpack.c.b16 %v3160, %v3156
    %v4509 = vpack.c.b16 %v3161, %v3157
    %v4510 = vpack.c.b16 %v3166, %v3162
    %v4511 = vpack.c.b16 %v3167, %v3163
    %v4512 = vpack.c.b16 %v3168, %v3164
    %v4513 = vpack.c.b16 %v3169, %v3165
    %v4514 = vpack.c.b16 %v3174, %v3170
    %v4515 = vpack.c.b16 %v3175, %v3171
    %v4516 = vpack.c.b16 %v3176, %v3172
    %v4517 = vpack.c.b16 %v3177, %v3173
    %v4518 = vpack.c.b16 %v3182, %v3178
    %v4519 = vpack.c.b16 %v3183, %v3179
    %v4520 = vpack.c.b16 %v3184, %v3180
    %v4521 = vpack.c.b16 %v3185, %v3181
    %v4522 = vpack.c.b16 %v3190, %v3186
    %v4523 = vpack.c.b16 %v3191, %v3187
    %v4524 = vpack.c.b16 %v3192, %v3188
    %v4525 = vpack.c.b16 %v3193, %v3189
    %v4526 = vpack.c.b16 %v3198, %v3194
    %v4527 = vpack.c.b16 %v3199, %v3195
    %v4528 = vpack.c.b16 %v3200, %v3196
    %v4529 = vpack.c.b16 %v3201, %v3197
    %v4530 = vpack.c.b16 %v3206, %v3202
    %v4531 = vpack.c.b16 %v3207, %v3203
    %v4532 = vpack.c.b16 %v3208, %v3204
    %v4533 = vpack.c.b16 %v3209, %v3205
    %v4534 = vpack.c.b16 %v3214, %v3210
    %v4535 = vpack.c.b16 %v3215, %v3211
    %v4536 = vpack.c.b16 %v3216, %v3212
    %v4537 = vpack.c.b16 %v3217, %v3213
    %v4538 = vpack.c.b16 %v3222, %v3218
    %v4539 = vpack.c.b16 %v3223, %v3219
    %v4540 = vpack.c.b16 %v3224, %v3220
    %v4541 = vpack.c.b16 %v3225, %v3221
    %v4542 = vpack.c.b16 %v3230, %v3226
    %v4543 = vpack.c.b16 %v3231, %v3227
    %v4544 = vpack.c.b16 %v3232, %v3228
    %v4545 = vpack.c.b16 %v3233, %v3229
    %v4546 = vpack.c.b16 %v3238, %v3234
    %v4547 = vpack.c.b16 %v3239, %v3235
    %v4548 = vpack.c.b16 %v3240, %v3236
    %v4549 = vpack.c.b16 %v3241, %v3237
    %v4550 = vpack.c.b16 %v3246, %v3242
    %v4551 = vpack.c.b16 %v3247, %v3243
    %v4552 = vpack.c.b16 %v3248, %v3244
    %v4553 = vpack.c.b16 %v3249, %v3245
    %v4554 = vpack.c.b16 %v3254, %v3250
    %v4555 = vpack.c.b16 %v3255, %v3251
    %v4556 = vpack.c.b16 %v3256, %v3252
    %v4557 = vpack.c.b16 %v3257, %v3253
    %v4558 = vpack.c.b16 %v3262, %v3258
    %v4559 = vpack.c.b16 %v3263, %v3259
    %v4560 = vpack.c.b16 %v3264, %v3260
    %v4561 = vpack.c.b16 %v3265, %v3261
    %v4562 = vpack.c.b16 %v3270, %v3266
    %v4563 = vpack.c.b16 %v3271, %v3267
    %v4564 = vpack.c.b16 %v3272, %v3268
    %v4565 = vpack.c.b16 %v3273, %v3269
    %v4566 = vpack.c.b16 %v3278, %v3274
    %v4567 = vpack.c.b16 %v3279, %v3275
    %v4568 = vpack.c.b16 %v3280, %v3276
    %v4569 = vpack.c.b16 %v3281, %v3277
    %v4570 = vpack.c.b16 %v3286, %v3282
    %v4571 = vpack.c.b16 %v3287, %v3283
    %v4572 = vpack.c.b16 %v3288, %v3284
    %v4573 = vpack.c.b16 %v3289, %v3285
    %v4574 = vpack.c.b16 %v3294, %v3290
    %v4575 = vpack.c.b16 %v3295, %v3291
    %v4576 = vpack.c.b16 %v3296, %v3292
    %v4577 = vpack.c.b16 %v3297, %v3293
    %v4578 = vpack.c.b16 %v3302, %v3298
    %v4579 = vpack.c.b16 %v3303, %v3299
    %v4580 = vpack.c.b16 %v3304, %v3300
    %v4581 = vpack.c.b16 %v3305, %v3301
    %v4582 = vpack.c.b16 %v3310, %v3306
    %v4583 = vpack.c.b16 %v3311, %v3307
    %v4584 = vpack.c.b16 %v3312, %v3308
    %v4585 = vpack.c.b16 %v3313, %v3309
    %v4586 = vpack.c.b16 %v3318, %v3314
    %v4587 = vpack.c.b16 %v3319, %v3315
    %v4588 = vpack.c.b16 %v3320, %v3316
    %v4589 = vpack.c.b16 %v3321, %v3317
    %v4590 = vpack.c.b16 %v3326, %v3322
    %v4591 = vpack.c.b16 %v3327, %v3323
    %v4592 = vpack.c.b16 %v3328, %v3324
    %v4593 = vpack.c.b16 %v3329, %v3325
    %v4594 = vpack.c.b16 %v3334, %v3330
    %v4595 = vpack.c.b16 %v3335, %v3331
    %v4596 = vpack.c.b16 %v3336, %v3332
    %v4597 = vpack.c.b16 %v3337, %v3333
    %v4598 = vpack.c.b16 %v3342, %v3338
    %v4599 = vpack.c.b16 %v3343, %v3339
    %v4600 = vpack.c.b16 %v3344, %v3340
    %v4601 = vpack.c.b16 %v3345, %v3341
    %v4602 = vpack.c.b16 %v3350, %v3346
    %v4603 = vpack.c.b16 %v3351, %v3347
    %v4604 = vpack.c.b16 %v3352, %v3348
    %v4605 = vpack.c.b16 %v3353, %v3349
    %v4606 = vpack.c.b16 %v3358, %v3354
    %v4607 = vpack.c.b16 %v3359, %v3355
    %v4608 = vpack.c.b16 %v3360, %v3356
    %v4609 = vpack.c.b16 %v3361, %v3357
    %v4610 = vpack.c.b16 %v3366, %v3362
    %v4611 = vpack.c.b16 %v3367, %v3363
    %v4612 = vpack.c.b16 %v3368, %v3364
    %v4613 = vpack.c.b16 %v3369, %v3365
    %v4614 = vpack.c.b16 %v3374, %v3370
    %v4615 = vpack.c.b16 %v3375, %v3371
    %v4616 = vpack.c.b16 %v3376, %v3372
    %v4617 = vpack.c.b16 %v3377, %v3373
    %v4618 = vpack.c.b16 %v3382, %v3378
    %v4619 = vpack.c.b16 %v3383, %v3379
    %v4620 = vpack.c.b16 %v3384, %v3380
    %v4621 = vpack.c.b16 %v3385, %v3381
    %v4622 = vpack.c.b16 %v3390, %v3386
    %v4623 = vpack.c.b16 %v3391, %v3387
    %v4624 = vpack.c.b16 %v3392, %v3388
    %v4625 = vpack.c.b16 %v3393, %v3389
    %v4626 = vpack.c.b16 %v3398, %v3394
    %v4627 = vpack.c.b16 %v3399, %v3395
    %v4628 = vpack.c.b16 %v3400, %v3396
    %v4629 = vpack.c.b16 %v3401, %v3397
    %v4630 = vpack.c.b16 %v3406, %v3402
    %v4631 = vpack.c.b16 %v3407, %v3403
    %v4632 = vpack.c.b16 %v3408, %v3404
    %v4633 = vpack.c.b16 %v3409, %v3405
    %v4634 = vpack.c.b16 %v3414, %v3410
    %v4635 = vpack.c.b16 %v3415, %v3411
    %v4636 = vpack.c.b16 %v3416, %v3412
    %v4637 = vpack.c.b16 %v3417, %v3413
    %v4638 = vpack.c.b16 %v3422, %v3418
    %v4639 = vpack.c.b16 %v3423, %v3419
    %v4640 = vpack.c.b16 %v3424, %v3420
    %v4641 = vpack.c.b16 %v3425, %v3421
    %v4642 = vpack.c.b16 %v3430, %v3426
    %v4643 = vpack.c.b16 %v3431, %v3427
    %v4644 = vpack.c.b16 %v3432, %v3428
    %v4645 = vpack.c.b16 %v3433, %v3429
    %v4646 = vpack.c.b16 %v3438, %v3434
    %v4647 = vpack.c.b16 %v3439, %v3435
    %v4648 = vpack.c.b16 %v3440, %v3436
    %v4649 = vpack.c.b16 %v3441, %v3437
    %v4650 = vpack.c.b16 %v3446, %v3442
    %v4651 = vpack.c.b16 %v3447, %v3443
    %v4652 = vpack.c.b16 %v3448, %v3444
    %v4653 = vpack.c.b16 %v3449, %v3445
    %v4654 = vpack.c.b16 %v3454, %v3450
    %v4655 = vpack.c.b16 %v3455, %v3451
    %v4656 = vpack.c.b16 %v3456, %v3452
    %v4657 = vpack.c.b16 %v3457, %v3453
    %v4658 = vpack.c.b16 %v3462, %v3458
    %v4659 = vpack.c.b16 %v3463, %v3459
    %v4660 = vpack.c.b16 %v3464, %v3460
    %v4661 = vpack.c.b16 %v3465, %v3461
    %v4662 = vpack.c.b16 %v3470, %v3466
    %v4663 = vpack.c.b16 %v3471, %v3467
    %v4664 = vpack.c.b16 %v3472, %v3468
    %v4665 = vpack.c.b16 %v3473, %v3469
    %v4666 = vpack.c.b16 %v3478, %v3474
    %v4667 = vpack.c.b16 %v3479, %v3475
    %v4668 = vpack.c.b16 %v3480, %v3476
    %v4669 = vpack.c.b16 %v3481, %v3477
    %v4670 = vpack.c.b16 %v3486, %v3482
    %v4671 = vpack.c.b16 %v3487, %v3483
    %v4672 = vpack.c.b16 %v3488, %v3484
    %v4673 = vpack.c.b16 %v3489, %v3485
    %v4674 = vpack.c.b16 %v3494, %v3490
    %v4675 = vpack.c.b16 %v3495, %v3491
    %v4676 = vpack.c.b16 %v3496, %v3492
    %v4677 = vpack.c.b16 %v3497, %v3493
    %v4678 = vpack.c.b16 %v3502, %v3498
    %v4679 = vpack.c.b16 %v3503, %v3499
    %v4680 = vpack.c.b16 %v3504, %v3500
    %v4681 = vpack.c.b16 %v3505, %v3501
    %v4682 = vpack.c.b16 %v3510, %v3506
    %v4683 = vpack.c.b16 %v3511, %v3507
    %v4684 = vpack.c.b16 %v3512, %v3508
    %v4685 = vpack.c.b16 %v3513, %v3509
    %v4686 = vpack.c.b16 %v3518, %v3514
    %v4687 = vpack.c.b16 %v3519, %v3515
    %v4688 = vpack.c.b16 %v3520, %v3516
    %v4689 = vpack.c.b16 %v3521, %v3517
    %v4690 = vpack.c.b16 %v3526, %v3522
    %v4691 = vpack.c.b16 %v3527, %v3523
    %v4692 = vpack.c.b16 %v3528, %v3524
    %v4693 = vpack.c.b16 %v3529, %v3525
    %v4694 = vpack.c.b16 %v3534, %v3530
    %v4695 = vpack.c.b16 %v3535, %v3531
    %v4696 = vpack.c.b16 %v3536, %v3532
    %v4697 = vpack.c.b16 %v3537, %v3533
    %v4698 = vpack.c.b16 %v3542, %v3538
    %v4699 = vpack.c.b16 %v3543, %v3539
    %v4700 = vpack.c.b16 %v3544, %v3540
    %v4701 = vpack.c.b16 %v3545, %v3541
    %v4702 = vpack.c.b16 %v3550, %v3546
    %v4703 = vpack.c.b16 %v3551, %v3547
    %v4704 = vpack.c.b16 %v3552, %v3548
    %v4705 = vpack.c.b16 %v3553, %v3549
    %v4706 = vpack.c.b16 %v3558, %v3554
    %v4707 = vpack.c.b16 %v3559, %v3555
    %v4708 = vpack.c.b16 %v3560, %v3556
    %v4709 = vpack.c.b16 %v3561, %v3557
    %v4710 = vpack.c.b16 %v3566, %v3562
    %v4711 = vpack.c.b16 %v3567, %v3563
    %v4712 = vpack.c.b16 %v3568, %v3564
    %v4713 = vpack.c.b16 %v3569, %v3565
    %v4714 = vpack.c.b16 %v3574, %v3570
    %v4715 = vpack.c.b16 %v3575, %v3571
    %v4716 = vpack.c.b16 %v3576, %v3572
    %v4717 = vpack.c.b16 %v3577, %v3573
    %v4718 = vpack.c.b16 %v3582, %v3578
    %v4719 = vpack.c.b16 %v3583, %v3579
    %v4720 = vpack.c.b16 %v3584, %v3580
    %v4721 = vpack.c.b16 %v3585, %v3581
    %v4722 = vpack.c.b16 %v3590, %v3586
    %v4723 = vpack.c.b16 %v3591, %v3587
    %v4724 = vpack.c.b16 %v3592, %v3588
    %v4725 = vpack.c.b16 %v3593, %v3589
    %v4726 = vpack.c.b16 %v3598, %v3594
    %v4727 = vpack.c.b16 %v3599, %v3595
    %v4728 = vpack.c.b16 %v3600, %v3596
    %v4729 = vpack.c.b16 %v3601, %v3597
    %v4730 = vpack.c.b16 %v3606, %v3602
    %v4731 = vpack.c.b16 %v3607, %v3603
    %v4732 = vpack.c.b16 %v3608, %v3604
    %v4733 = vpack.c.b16 %v3609, %v3605
    %v4734 = vpack.c.b16 %v3614, %v3610
    %v4735 = vpack.c.b16 %v3615, %v3611
    %v4736 = vpack.c.b16 %v3616, %v3612
    %v4737 = vpack.c.b16 %v3617, %v3613
    %v4738 = vpack.c.b16 %v3622, %v3618
    %v4739 = vpack.c.b16 %v3623, %v3619
    %v4740 = vpack.c.b16 %v3624, %v3620
    %v4741 = vpack.c.b16 %v3625, %v3621
    %v4742 = vpack.c.b16 %v3630, %v3626
    %v4743 = vpack.c.b16 %v3631, %v3627
    %v4744 = vpack.c.b16 %v3632, %v3628
    %v4745 = vpack.c.b16 %v3633, %v3629
    %v4746 = vpack.c.b16 %v3638, %v3634
    %v4747 = vpack.c.b16 %v3639, %v3635
    %v4748 = vpack.c.b16 %v3640, %v3636
    %v4749 = vpack.c.b16 %v3641, %v3637
    %v4750 = vpack.c.b16 %v3646, %v3642
    %v4751 = vpack.c.b16 %v3647, %v3643
    %v4752 = vpack.c.b16 %v3648, %v3644
    %v4753 = vpack.c.b16 %v3649, %v3645
    %v4754 = vpack.c.b16 %v3654, %v3650
    %v4755 = vpack.c.b16 %v3655, %v3651
    %v4756 = vpack.c.b16 %v3656, %v3652
    %v4757 = vpack.c.b16 %v3657, %v3653
    %v4758 = vpack.c.b16 %v3662, %v3658
    %v4759 = vpack.c.b16 %v3663, %v3659
    %v4760 = vpack.c.b16 %v3664, %v3660
    %v4761 = vpack.c.b16 %v3665, %v3661
    %v4762 = vpack.c.b16 %v3670, %v3666
    %v4763 = vpack.c.b16 %v3671, %v3667
    %v4764 = vpack.c.b16 %v3672, %v3668
    %v4765 = vpack.c.b16 %v3673, %v3669
    %v4766 = vpack.c.b16 %v3678, %v3674
    %v4767 = vpack.c.b16 %v3679, %v3675
    %v4768 = vpack.c.b16 %v3680, %v3676
    %v4769 = vpack.c.b16 %v3681, %v3677
    %v4770 = vpack.c.b16 %v3686, %v3682
    %v4771 = vpack.c.b16 %v3687, %v3683
    %v4772 = vpack.c.b16 %v3688, %v3684
    %v4773 = vpack.c.b16 %v3689, %v3685
    %v4774 = vpack.c.b16 %v3694, %v3690
    %v4775 = vpack.c.b16 %v3695, %v3691
    %v4776 = vpack.c.b16 %v3696, %v3692
    %v4777 = vpack.c.b16 %v3697, %v3693
    %v4778 = vpack.c.b16 %v3702, %v3698
    %v4779 = vpack.c.b16 %v3703, %v3699
    %v4780 = vpack.c.b16 %v3704, %v3700
    %v4781 = vpack.c.b16 %v3705, %v3701
    %v4782 = vpack.c.b16 %v3710, %v3706
    %v4783 = vpack.c.b16 %v3711, %v3707
    %v4784 = vpack.c.b16 %v3712, %v3708
    %v4785 = vpack.c.b16 %v3713, %v3709
    %v4786 = vpack.c.b16 %v3718, %v3714
    %v4787 = vpack.c.b16 %v3719, %v3715
    %v4788 = vpack.c.b16 %v3720, %v3716
    %v4789 = vpack.c.b16 %v3721, %v3717
    %v4790 = vpack.c.b16 %v3726, %v3722
    %v4791 = vpack.c.b16 %v3727, %v3723
    %v4792 = vpack.c.b16 %v3728, %v3724
    %v4793 = vpack.c.b16 %v3729, %v3725
    %v4794 = vpack.c.b16 %v3734, %v3730
    %v4795 = vpack.c.b16 %v3735, %v3731
    %v4796 = vpack.c.b16 %v3736, %v3732
    %v4797 = vpack.c.b16 %v3737, %v3733
    %v4798 = vpack.c.b16 %v3742, %v3738
    %v4799 = vpack.c.b16 %v3743, %v3739
    %v4800 = vpack.c.b16 %v3744, %v3740
    %v4801 = vpack.c.b16 %v3745, %v3741
    %v4802 = vpack.c.b16 %v3750, %v3746
    %v4803 = vpack.c.b16 %v3751, %v3747
    %v4804 = vpack.c.b16 %v3752, %v3748
    %v4805 = vpack.c.b16 %v3753, %v3749
    %v4806 = vpack.c.b16 %v3758, %v3754
    %v4807 = vpack.c.b16 %v3759, %v3755
    %v4808 = vpack.c.b16 %v3760, %v3756
    %v4809 = vpack.c.b16 %v3761, %v3757
    %v4810 = vpack.c.b16 %v3766, %v3762
    %v4811 = vpack.c.b16 %v3767, %v3763
    %v4812 = vpack.c.b16 %v3768, %v3764
    %v4813 = vpack.c.b16 %v3769, %v3765
    %v4814 = vpack.c.b16 %v3774, %v3770
    %v4815 = vpack.c.b16 %v3775, %v3771
    %v4816 = vpack.c.b16 %v3776, %v3772
    %v4817 = vpack.c.b16 %v3777, %v3773
    %v4818 = vpack.c.b16 %v3782, %v3778
    %v4819 = vpack.c.b16 %v3783, %v3779
    %v4820 = vpack.c.b16 %v3784, %v3780
    %v4821 = vpack.c.b16 %v3785, %v3781
    %v4822 = vpack.c.b16 %v3790, %v3786
    %v4823 = vpack.c.b16 %v3791, %v3787
    %v4824 = vpack.c.b16 %v3792, %v3788
    %v4825 = vpack.c.b16 %v3793, %v3789
    %v4826 = vpack.c.b16 %v3798, %v3794
    %v4827 = vpack.c.b16 %v3799, %v3795
    %v4828 = vpack.c.b16 %v3800, %v3796
    %v4829 = vpack.c.b16 %v3801, %v3797
    %v4830 = vpack.c.b16 %v3806, %v3802
    %v4831 = vpack.c.b16 %v3807, %v3803
    %v4832 = vpack.c.b16 %v3808, %v3804
    %v4833 = vpack.c.b16 %v3809, %v3805
    %v4834 = vpack.c.b16 %v3814, %v3810
    %v4835 = vpack.c.b16 %v3815, %v3811
    %v4836 = vpack.c.b16 %v3816, %v3812
    %v4837 = vpack.c.b16 %v3817, %v3813
    %v4838 = vpack.c.b16 %v3822, %v3818
    %v4839 = vpack.c.b16 %v3823, %v3819
    %v4840 = vpack.c.b16 %v3824, %v3820
    %v4841 = vpack.c.b16 %v3825, %v3821
    %v4842 = vpack.c.b16 %v3830, %v3826
    %v4843 = vpack.c.b16 %v3831, %v3827
    %v4844 = vpack.c.b16 %v3832, %v3828
    %v4845 = vpack.c.b16 %v3833, %v3829
    %v4846 = vpack.c.b16 %v3838, %v3834
    %v4847 = vpack.c.b16 %v3839, %v3835
    %v4848 = vpack.c.b16 %v3840, %v3836
    %v4849 = vpack.c.b16 %v3841, %v3837
    %v4850 = vpack.c.b16 %v3846, %v3842
    %v4851 = vpack.c.b16 %v3847, %v3843
    %v4852 = vpack.c.b16 %v3848, %v3844
    %v4853 = vpack.c.b16 %v3849, %v3845
    %v4854 = vpack.c.b16 %v3854, %v3850
    %v4855 = vpack.c.b16 %v3855, %v3851
    %v4856 = vpack.c.b16 %v3856, %v3852
    %v4857 = vpack.c.b16 %v3857, %v3853
    %v4858 = vpack.c.b16 %v3862, %v3858
    %v4859 = vpack.c.b16 %v3863, %v3859
    %v4860 = vpack.c.b16 %v3864, %v3860
    %v4861 = vpack.c.b16 %v3865, %v3861
    %v4862 = vpack.c.b16 %v3870, %v3866
    %v4863 = vpack.c.b16 %v3871, %v3867
    %v4864 = vpack.c.b16 %v3872, %v3868
    %v4865 = vpack.c.b16 %v3873, %v3869
    %v4866 = vpack.c.b16 %v3878, %v3874
    %v4867 = vpack.c.b16 %v3879, %v3875
    %v4868 = vpack.c.b16 %v3880, %v3876
    %v4869 = vpack.c.b16 %v3881, %v3877
    %v4870 = vpack.c.b16 %v3886, %v3882
    %v4871 = vpack.c.b16 %v3887, %v3883
    %v4872 = vpack.c.b16 %v3888, %v3884
    %v4873 = vpack.c.b16 %v3889, %v3885
    %v4874 = vpack.c.b16 %v3894, %v3890
    %v4875 = vpack.c.b16 %v3895, %v3891
    %v4876 = vpack.c.b16 %v3896, %v3892
    %v4877 = vpack.c.b16 %v3897, %v3893
    %v4878 = vpack.c.b16 %v3902, %v3898
    %v4879 = vpack.c.b16 %v3903, %v3899
    %v4880 = vpack.c.b16 %v3904, %v3900
    %v4881 = vpack.c.b16 %v3905, %v3901
    %v4882 = vpack.c.b16 %v3910, %v3906
    %v4883 = vpack.c.b16 %v3911, %v3907
    %v4884 = vpack.c.b16 %v3912, %v3908
    %v4885 = vpack.c.b16 %v3913, %v3909
    %v4886 = vpack.c.b16 %v3918, %v3914
    %v4887 = vpack.c.b16 %v3919, %v3915
    %v4888 = vpack.c.b16 %v3920, %v3916
    %v4889 = vpack.c.b16 %v3921, %v3917
    %v4890 = vpack.c.b16 %v3926, %v3922
    %v4891 = vpack.c.b16 %v3927, %v3923
    %v4892 = vpack.c.b16 %v3928, %v3924
    %v4893 = vpack.c.b16 %v3929, %v3925
    %v4894 = vpack.c.b16 %v3934, %v3930
    %v4895 = vpack.c.b16 %v3935, %v3931
    %v4896 = vpack.c.b16 %v3936, %v3932
    %v4897 = vpack.c.b16 %v3937, %v3933
    %v4898 = vpack.c.b16 %v3942, %v3938
    %v4899 = vpack.c.b16 %v3943, %v3939
    %v4900 = vpack.c.b16 %v3944, %v3940
    %v4901 = vpack.c.b16 %v3945, %v3941
    %v4902 = vpack.c.b16 %v3950, %v3946
    %v4903 = vpack.c.b16 %v3951, %v3947
    %v4904 = vpack.c.b16 %v3952, %v3948
    %v4905 = vpack.c.b16 %v3953, %v3949
    %v4906 = vpack.c.b16 %v3958, %v3954
    %v4907 = vpack.c.b16 %v3959, %v3955
    %v4908 = vpack.c.b16 %v3960, %v3956
    %v4909 = vpack.c.b16 %v3961, %v3957
    %v4910 = vpack.c.b16 %v3966, %v3962
    %v4911 = vpack.c.b16 %v3967, %v3963
    %v4912 = vpack.c.b16 %v3968, %v3964
    %v4913 = vpack.c.b16 %v3969, %v3965
    %v4914 = vpack.c.b16 %v3974, %v3970
    %v4915 = vpack.c.b16 %v3975, %v3971
    %v4916 = vpack.c.b16 %v3976, %v3972
    %v4917 = vpack.c.b16 %v3977, %v3973
    %v4918 = vpack.c.b16 %v3982, %v3978
    %v4919 = vpack.c.b16 %v3983, %v3979
    %v4920 = vpack.c.b16 %v3984, %v3980
    %v4921 = vpack.c.b16 %v3985, %v3981
    %v4922 = vpack.c.b16 %v3990, %v3986
    %v4923 = vpack.c.b16 %v3991, %v3987
    %v4924 = vpack.c.b16 %v3992, %v3988
    %v4925 = vpack.c.b16 %v3993, %v3989
    %v4926 = vpack.c.b16 %v3998, %v3994
    %v4927 = vpack.c.b16 %v3999, %v3995
    %v4928 = vpack.c.b16 %v4000, %v3996
    %v4929 = vpack.c.b16 %v4001, %v3997
    %5858 = vmatpush.bf16.msra.mxu0 %v4030
    %5859 = vmatpush.bf16.msra.mxu0 %v4026
    %5860 = vmatpush.bf16.msra.mxu0 %v4022
    %5861 = vmatpush.bf16.msra.mxu0 %v4018
    %5862 = vmatpush.bf16.msra.mxu0 %v4014
    %5863 = vmatpush.bf16.msra.mxu0 %v4010
    %5864 = vmatpush.bf16.msra.mxu0 %v4006
    %5865 = vmatpush.bf16.msra.mxu0 %v4002
    %5866 = vmatmul.bf16.gmra.mxu0 %v1160
    %v5867 = vpop.f32.mrf.mxu0
    %v5868 = vadd.f32 %v1108, %v5867
    %v5869 = vpop.f32.mrf.mxu0
    %5870 = vdwg.mxu0
    %5871 = vmatpush.bf16.msra.mxu0 %v4062
    %5872 = vmatpush.bf16.msra.mxu0 %v4058
    %5873 = vmatpush.bf16.msra.mxu0 %v4054
    %5874 = vmatpush.bf16.msra.mxu0 %v4050
    %5875 = vmatpush.bf16.msra.mxu0 %v4046
    %5876 = vmatpush.bf16.msra.mxu0 %v4042
    %5877 = vmatpush.bf16.msra.mxu0 %v4038
    %5878 = vmatpush.bf16.msra.mxu0 %v4034
    %5879 = vmatmul.bf16.gmra.mxu0 %v1161
    %v5880 = vpop.f32.mrf.mxu0
    %v5881 = vadd.f32 %v5868, %v5880
    %v5882 = vpop.f32.mrf.mxu0
    %5883 = vdwg.mxu0
    %5884 = vmatpush.bf16.msra.mxu0 %v4094
    %5885 = vmatpush.bf16.msra.mxu0 %v4090
    %5886 = vmatpush.bf16.msra.mxu0 %v4086
    %5887 = vmatpush.bf16.msra.mxu0 %v4082
    %5888 = vmatpush.bf16.msra.mxu0 %v4078
    %5889 = vmatpush.bf16.msra.mxu0 %v4074
    %5890 = vmatpush.bf16.msra.mxu0 %v4070
    %5891 = vmatpush.bf16.msra.mxu0 %v4066
    %5892 = vmatmul.bf16.gmra.mxu0 %v1162
    %v5893 = vpop.f32.mrf.mxu0
    %v5894 = vadd.f32 %v5881, %v5893
    %v5895 = vpop.f32.mrf.mxu0
    %5896 = vdwg.mxu0
    %5897 = vmatpush.bf16.msra.mxu0 %v4126
    %5898 = vmatpush.bf16.msra.mxu0 %v4122
    %5899 = vmatpush.bf16.msra.mxu0 %v4118
    %5900 = vmatpush.bf16.msra.mxu0 %v4114
    %5901 = vmatpush.bf16.msra.mxu0 %v4110
    %5902 = vmatpush.bf16.msra.mxu0 %v4106
    %5903 = vmatpush.bf16.msra.mxu0 %v4102
    %5904 = vmatpush.bf16.msra.mxu0 %v4098
    %5905 = vmatmul.bf16.gmra.mxu0 %v1163
    %v5906 = vpop.f32.mrf.mxu0
    %v5907 = vadd.f32 %v5894, %v5906
    %v5908 = vpop.f32.mrf.mxu0
    %5909 = vdwg.mxu0
    %5910 = vmatpush.bf16.msra.mxu0 %v4158
    %5911 = vmatpush.bf16.msra.mxu0 %v4154
    %5912 = vmatpush.bf16.msra.mxu0 %v4150
    %5913 = vmatpush.bf16.msra.mxu0 %v4146
    %5914 = vmatpush.bf16.msra.mxu0 %v4142
    %5915 = vmatpush.bf16.msra.mxu0 %v4138
    %5916 = vmatpush.bf16.msra.mxu0 %v4134
    %5917 = vmatpush.bf16.msra.mxu0 %v4130
    %5918 = vmatmul.bf16.gmra.mxu0 %v1164
    %v5919 = vpop.f32.mrf.mxu0
    %v5920 = vadd.f32 %v5907, %v5919
    %v5921 = vpop.f32.mrf.mxu0
    %5922 = vdwg.mxu0
    %5923 = vmatpush.bf16.msra.mxu0 %v4190
    %5924 = vmatpush.bf16.msra.mxu0 %v4186
    %5925 = vmatpush.bf16.msra.mxu0 %v4182
    %5926 = vmatpush.bf16.msra.mxu0 %v4178
    %5927 = vmatpush.bf16.msra.mxu0 %v4174
    %5928 = vmatpush.bf16.msra.mxu0 %v4170
    %5929 = vmatpush.bf16.msra.mxu0 %v4166
    %5930 = vmatpush.bf16.msra.mxu0 %v4162
    %5931 = vmatmul.bf16.gmra.mxu0 %v1165
    %v5932 = vpop.f32.mrf.mxu0
    %v5933 = vadd.f32 %v5920, %v5932
    %v5934 = vpop.f32.mrf.mxu0
    %5935 = vdwg.mxu0
    %5936 = vmatpush.bf16.msra.mxu0 %v4222
    %5937 = vmatpush.bf16.msra.mxu0 %v4218
    %5938 = vmatpush.bf16.msra.mxu0 %v4214
    %5939 = vmatpush.bf16.msra.mxu0 %v4210
    %5940 = vmatpush.bf16.msra.mxu0 %v4206
    %5941 = vmatpush.bf16.msra.mxu0 %v4202
    %5942 = vmatpush.bf16.msra.mxu0 %v4198
    %5943 = vmatpush.bf16.msra.mxu0 %v4194
    %5944 = vmatmul.bf16.gmra.mxu0 %v1166
    %v5945 = vpop.f32.mrf.mxu0
    %v5946 = vadd.f32 %v5933, %v5945
    %v5947 = vpop.f32.mrf.mxu0
    %5948 = vdwg.mxu0
    %5949 = vmatpush.bf16.msra.mxu0 %v4254
    %5950 = vmatpush.bf16.msra.mxu0 %v4250
    %5951 = vmatpush.bf16.msra.mxu0 %v4246
    %5952 = vmatpush.bf16.msra.mxu0 %v4242
    %5953 = vmatpush.bf16.msra.mxu0 %v4238
    %5954 = vmatpush.bf16.msra.mxu0 %v4234
    %5955 = vmatpush.bf16.msra.mxu0 %v4230
    %5956 = vmatpush.bf16.msra.mxu0 %v4226
    %5957 = vmatmul.bf16.gmra.mxu0 %v1167
    %v5958 = vpop.f32.mrf.mxu0
    %v5959 = vadd.f32 %v5946, %v5958
    %v5960 = vpop.f32.mrf.mxu0
    %5961 = vdwg.mxu0
    %5962 = vmatpush.bf16.msra.mxu0 %v4286
    %5963 = vmatpush.bf16.msra.mxu0 %v4282
    %5964 = vmatpush.bf16.msra.mxu0 %v4278
    %5965 = vmatpush.bf16.msra.mxu0 %v4274
    %5966 = vmatpush.bf16.msra.mxu0 %v4270
    %5967 = vmatpush.bf16.msra.mxu0 %v4266
    %5968 = vmatpush.bf16.msra.mxu0 %v4262
    %5969 = vmatpush.bf16.msra.mxu0 %v4258
    %5970 = vmatmul.bf16.gmra.mxu0 %v1168
    %v5971 = vpop.f32.mrf.mxu0
    %v5972 = vadd.f32 %v5959, %v5971
    %v5973 = vpop.f32.mrf.mxu0
    %5974 = vdwg.mxu0
    %5975 = vmatpush.bf16.msra.mxu0 %v4318
    %5976 = vmatpush.bf16.msra.mxu0 %v4314
    %5977 = vmatpush.bf16.msra.mxu0 %v4310
    %5978 = vmatpush.bf16.msra.mxu0 %v4306
    %5979 = vmatpush.bf16.msra.mxu0 %v4302
    %5980 = vmatpush.bf16.msra.mxu0 %v4298
    %5981 = vmatpush.bf16.msra.mxu0 %v4294
    %5982 = vmatpush.bf16.msra.mxu0 %v4290
    %5983 = vmatmul.bf16.gmra.mxu0 %v1169
    %v5984 = vpop.f32.mrf.mxu0
    %v5985 = vadd.f32 %v5972, %v5984
    %v5986 = vpop.f32.mrf.mxu0
    %5987 = vdwg.mxu0
    %5988 = vmatpush.bf16.msra.mxu0 %v4350
    %5989 = vmatpush.bf16.msra.mxu0 %v4346
    %5990 = vmatpush.bf16.msra.mxu0 %v4342
    %5991 = vmatpush.bf16.msra.mxu0 %v4338
    %5992 = vmatpush.bf16.msra.mxu0 %v4334
    %5993 = vmatpush.bf16.msra.mxu0 %v4330
    %5994 = vmatpush.bf16.msra.mxu0 %v4326
    %5995 = vmatpush.bf16.msra.mxu0 %v4322
    %5996 = vmatmul.bf16.gmra.mxu0 %v1170
    %v5997 = vpop.f32.mrf.mxu0
    %v5998 = vadd.f32 %v5985, %v5997
    %v5999 = vpop.f32.mrf.mxu0
    %6000 = vdwg.mxu0
    %6001 = vmatpush.bf16.msra.mxu0 %v4382
    %6002 = vmatpush.bf16.msra.mxu0 %v4378
    %6003 = vmatpush.bf16.msra.mxu0 %v4374
    %6004 = vmatpush.bf16.msra.mxu0 %v4370
    %6005 = vmatpush.bf16.msra.mxu0 %v4366
    %6006 = vmatpush.bf16.msra.mxu0 %v4362
    %6007 = vmatpush.bf16.msra.mxu0 %v4358
    %6008 = vmatpush.bf16.msra.mxu0 %v4354
    %6009 = vmatmul.bf16.gmra.mxu0 %v1171
    %v6010 = vpop.f32.mrf.mxu0
    %v6011 = vadd.f32 %v5998, %v6010
    %v6012 = vpop.f32.mrf.mxu0
    %6013 = vdwg.mxu0
    %6014 = vmatpush.bf16.msra.mxu0 %v4414
    %6015 = vmatpush.bf16.msra.mxu0 %v4410
    %6016 = vmatpush.bf16.msra.mxu0 %v4406
    %6017 = vmatpush.bf16.msra.mxu0 %v4402
    %6018 = vmatpush.bf16.msra.mxu0 %v4398
    %6019 = vmatpush.bf16.msra.mxu0 %v4394
    %6020 = vmatpush.bf16.msra.mxu0 %v4390
    %6021 = vmatpush.bf16.msra.mxu0 %v4386
    %6022 = vmatmul.bf16.gmra.mxu0 %v1172
    %v6023 = vpop.f32.mrf.mxu0
    %v6024 = vadd.f32 %v6011, %v6023
    %v6025 = vpop.f32.mrf.mxu0
    %6026 = vdwg.mxu0
    %6027 = vmatpush.bf16.msra.mxu0 %v4446
    %6028 = vmatpush.bf16.msra.mxu0 %v4442
    %6029 = vmatpush.bf16.msra.mxu0 %v4438
    %6030 = vmatpush.bf16.msra.mxu0 %v4434
    %6031 = vmatpush.bf16.msra.mxu0 %v4430
    %6032 = vmatpush.bf16.msra.mxu0 %v4426
    %6033 = vmatpush.bf16.msra.mxu0 %v4422
    %6034 = vmatpush.bf16.msra.mxu0 %v4418
    %6035 = vmatmul.bf16.gmra.mxu0 %v1173
    %v6036 = vpop.f32.mrf.mxu0
    %v6037 = vadd.f32 %v6024, %v6036
    %v6038 = vpop.f32.mrf.mxu0
    %6039 = vdwg.mxu0
    %6040 = vmatpush.bf16.msra.mxu0 %v4478
    %6041 = vmatpush.bf16.msra.mxu0 %v4474
    %6042 = vmatpush.bf16.msra.mxu0 %v4470
    %6043 = vmatpush.bf16.msra.mxu0 %v4466
    %6044 = vmatpush.bf16.msra.mxu0 %v4462
    %6045 = vmatpush.bf16.msra.mxu0 %v4458
    %6046 = vmatpush.bf16.msra.mxu0 %v4454
    %6047 = vmatpush.bf16.msra.mxu0 %v4450
    %6048 = vmatmul.bf16.gmra.mxu0 %v1174
    %v6049 = vpop.f32.mrf.mxu0
    %v6050 = vadd.f32 %v6037, %v6049
    %v6051 = vpop.f32.mrf.mxu0
    %6052 = vdwg.mxu0
    %6053 = vmatpush.bf16.msra.mxu0 %v4510
    %6054 = vmatpush.bf16.msra.mxu0 %v4506
    %6055 = vmatpush.bf16.msra.mxu0 %v4502
    %6056 = vmatpush.bf16.msra.mxu0 %v4498
    %6057 = vmatpush.bf16.msra.mxu0 %v4494
    %6058 = vmatpush.bf16.msra.mxu0 %v4490
    %6059 = vmatpush.bf16.msra.mxu0 %v4486
    %6060 = vmatpush.bf16.msra.mxu0 %v4482
    %6061 = vmatmul.bf16.gmra.mxu0 %v1175
    %v6062 = vpop.f32.mrf.mxu0
    %v6063 = vadd.f32 %v6050, %v6062
    %v6064 = vpop.f32.mrf.mxu0
    %6065 = vdwg.mxu0
    %6066 = vmatpush.bf16.msra.mxu0 %v4542
    %6067 = vmatpush.bf16.msra.mxu0 %v4538
    %6068 = vmatpush.bf16.msra.mxu0 %v4534
    %6069 = vmatpush.bf16.msra.mxu0 %v4530
    %6070 = vmatpush.bf16.msra.mxu0 %v4526
    %6071 = vmatpush.bf16.msra.mxu0 %v4522
    %6072 = vmatpush.bf16.msra.mxu0 %v4518
    %6073 = vmatpush.bf16.msra.mxu0 %v4514
    %6074 = vmatmul.bf16.gmra.mxu0 %v1176
    %v6075 = vpop.f32.mrf.mxu0
    %v6076 = vadd.f32 %v6063, %v6075
    %v6077 = vpop.f32.mrf.mxu0
    %6078 = vdwg.mxu0
    %6079 = vmatpush.bf16.msra.mxu0 %v4574
    %6080 = vmatpush.bf16.msra.mxu0 %v4570
    %6081 = vmatpush.bf16.msra.mxu0 %v4566
    %6082 = vmatpush.bf16.msra.mxu0 %v4562
    %6083 = vmatpush.bf16.msra.mxu0 %v4558
    %6084 = vmatpush.bf16.msra.mxu0 %v4554
    %6085 = vmatpush.bf16.msra.mxu0 %v4550
    %6086 = vmatpush.bf16.msra.mxu0 %v4546
    %6087 = vmatmul.bf16.gmra.mxu0 %v1177
    %v6088 = vpop.f32.mrf.mxu0
    %v6089 = vadd.f32 %v6076, %v6088
    %v6090 = vpop.f32.mrf.mxu0
    %6091 = vdwg.mxu0
    %6092 = vmatpush.bf16.msra.mxu0 %v4606
    %6093 = vmatpush.bf16.msra.mxu0 %v4602
    %6094 = vmatpush.bf16.msra.mxu0 %v4598
    %6095 = vmatpush.bf16.msra.mxu0 %v4594
    %6096 = vmatpush.bf16.msra.mxu0 %v4590
    %6097 = vmatpush.bf16.msra.mxu0 %v4586
    %6098 = vmatpush.bf16.msra.mxu0 %v4582
    %6099 = vmatpush.bf16.msra.mxu0 %v4578
    %6100 = vmatmul.bf16.gmra.mxu0 %v1178
    %v6101 = vpop.f32.mrf.mxu0
    %v6102 = vadd.f32 %v6089, %v6101
    %v6103 = vpop.f32.mrf.mxu0
    %6104 = vdwg.mxu0
    %6105 = vmatpush.bf16.msra.mxu0 %v4638
    %6106 = vmatpush.bf16.msra.mxu0 %v4634
    %6107 = vmatpush.bf16.msra.mxu0 %v4630
    %6108 = vmatpush.bf16.msra.mxu0 %v4626
    %6109 = vmatpush.bf16.msra.mxu0 %v4622
    %6110 = vmatpush.bf16.msra.mxu0 %v4618
    %6111 = vmatpush.bf16.msra.mxu0 %v4614
    %6112 = vmatpush.bf16.msra.mxu0 %v4610
    %6113 = vmatmul.bf16.gmra.mxu0 %v1179
    %v6114 = vpop.f32.mrf.mxu0
    %v6115 = vadd.f32 %v6102, %v6114
    %v6116 = vpop.f32.mrf.mxu0
    %6117 = vdwg.mxu0
    %6118 = vmatpush.bf16.msra.mxu0 %v4670
    %6119 = vmatpush.bf16.msra.mxu0 %v4666
    %6120 = vmatpush.bf16.msra.mxu0 %v4662
    %6121 = vmatpush.bf16.msra.mxu0 %v4658
    %6122 = vmatpush.bf16.msra.mxu0 %v4654
    %6123 = vmatpush.bf16.msra.mxu0 %v4650
    %6124 = vmatpush.bf16.msra.mxu0 %v4646
    %6125 = vmatpush.bf16.msra.mxu0 %v4642
    %6126 = vmatmul.bf16.gmra.mxu0 %v1180
    %v6127 = vpop.f32.mrf.mxu0
    %v6128 = vadd.f32 %v6115, %v6127
    %v6129 = vpop.f32.mrf.mxu0
    %6130 = vdwg.mxu0
    %6131 = vmatpush.bf16.msra.mxu0 %v4702
    %6132 = vmatpush.bf16.msra.mxu0 %v4698
    %6133 = vmatpush.bf16.msra.mxu0 %v4694
    %6134 = vmatpush.bf16.msra.mxu0 %v4690
    %6135 = vmatpush.bf16.msra.mxu0 %v4686
    %6136 = vmatpush.bf16.msra.mxu0 %v4682
    %6137 = vmatpush.bf16.msra.mxu0 %v4678
    %6138 = vmatpush.bf16.msra.mxu0 %v4674
    %6139 = vmatmul.bf16.gmra.mxu0 %v1181
    %v6140 = vpop.f32.mrf.mxu0
    %v6141 = vadd.f32 %v6128, %v6140
    %v6142 = vpop.f32.mrf.mxu0
    %6143 = vdwg.mxu0
    %6144 = vmatpush.bf16.msra.mxu0 %v4734
    %6145 = vmatpush.bf16.msra.mxu0 %v4730
    %6146 = vmatpush.bf16.msra.mxu0 %v4726
    %6147 = vmatpush.bf16.msra.mxu0 %v4722
    %6148 = vmatpush.bf16.msra.mxu0 %v4718
    %6149 = vmatpush.bf16.msra.mxu0 %v4714
    %6150 = vmatpush.bf16.msra.mxu0 %v4710
    %6151 = vmatpush.bf16.msra.mxu0 %v4706
    %6152 = vmatmul.bf16.gmra.mxu0 %v1182
    %v6153 = vpop.f32.mrf.mxu0
    %v6154 = vadd.f32 %v6141, %v6153
    %v6155 = vpop.f32.mrf.mxu0
    %6156 = vdwg.mxu0
    %6157 = vmatpush.bf16.msra.mxu0 %v4766
    %6158 = vmatpush.bf16.msra.mxu0 %v4762
    %6159 = vmatpush.bf16.msra.mxu0 %v4758
    %6160 = vmatpush.bf16.msra.mxu0 %v4754
    %6161 = vmatpush.bf16.msra.mxu0 %v4750
    %6162 = vmatpush.bf16.msra.mxu0 %v4746
    %6163 = vmatpush.bf16.msra.mxu0 %v4742
    %6164 = vmatpush.bf16.msra.mxu0 %v4738
    %6165 = vmatmul.bf16.gmra.mxu0 %v1183
    %v6166 = vpop.f32.mrf.mxu0
    %v6167 = vadd.f32 %v6154, %v6166
    %v6168 = vpop.f32.mrf.mxu0
    %6169 = vdwg.mxu0
    %6170 = vmatpush.bf16.msra.mxu0 %v4798
    %6171 = vmatpush.bf16.msra.mxu0 %v4794
    %6172 = vmatpush.bf16.msra.mxu0 %v4790
    %6173 = vmatpush.bf16.msra.mxu0 %v4786
    %6174 = vmatpush.bf16.msra.mxu0 %v4782
    %6175 = vmatpush.bf16.msra.mxu0 %v4778
    %6176 = vmatpush.bf16.msra.mxu0 %v4774
    %6177 = vmatpush.bf16.msra.mxu0 %v4770
    %6178 = vmatmul.bf16.gmra.mxu0 %v1184
    %v6179 = vpop.f32.mrf.mxu0
    %v6180 = vadd.f32 %v6167, %v6179
    %v6181 = vpop.f32.mrf.mxu0
    %6182 = vdwg.mxu0
    %6183 = vmatpush.bf16.msra.mxu0 %v4830
    %6184 = vmatpush.bf16.msra.mxu0 %v4826
    %6185 = vmatpush.bf16.msra.mxu0 %v4822
    %6186 = vmatpush.bf16.msra.mxu0 %v4818
    %6187 = vmatpush.bf16.msra.mxu0 %v4814
    %6188 = vmatpush.bf16.msra.mxu0 %v4810
    %6189 = vmatpush.bf16.msra.mxu0 %v4806
    %6190 = vmatpush.bf16.msra.mxu0 %v4802
    %6191 = vmatmul.bf16.gmra.mxu0 %v1185
    %v6192 = vpop.f32.mrf.mxu0
    %v6193 = vadd.f32 %v6180, %v6192
    %v6194 = vpop.f32.mrf.mxu0
    %6195 = vdwg.mxu0
    %6196 = vmatpush.bf16.msra.mxu0 %v4862
    %6197 = vmatpush.bf16.msra.mxu0 %v4858
    %6198 = vmatpush.bf16.msra.mxu0 %v4854
    %6199 = vmatpush.bf16.msra.mxu0 %v4850
    %6200 = vmatpush.bf16.msra.mxu0 %v4846
    %6201 = vmatpush.bf16.msra.mxu0 %v4842
    %6202 = vmatpush.bf16.msra.mxu0 %v4838
    %6203 = vmatpush.bf16.msra.mxu0 %v4834
    %6204 = vmatmul.bf16.gmra.mxu0 %v1186
    %v6205 = vpop.f32.mrf.mxu0
    %v6206 = vadd.f32 %v6193, %v6205
    %v6207 = vpop.f32.mrf.mxu0
    %6208 = vdwg.mxu0
    %6209 = vmatpush.bf16.msra.mxu0 %v4894
    %6210 = vmatpush.bf16.msra.mxu0 %v4890
    %6211 = vmatpush.bf16.msra.mxu0 %v4886
    %6212 = vmatpush.bf16.msra.mxu0 %v4882
    %6213 = vmatpush.bf16.msra.mxu0 %v4878
    %6214 = vmatpush.bf16.msra.mxu0 %v4874
    %6215 = vmatpush.bf16.msra.mxu0 %v4870
    %6216 = vmatpush.bf16.msra.mxu0 %v4866
    %6217 = vmatmul.bf16.gmra.mxu0 %v1187
    %v6218 = vpop.f32.mrf.mxu0
    %v6219 = vadd.f32 %v6206, %v6218
    %v6220 = vpop.f32.mrf.mxu0
    %6221 = vdwg.mxu0
    %6222 = vmatpush.bf16.msra.mxu0 %v4926
    %6223 = vmatpush.bf16.msra.mxu0 %v4922
    %6224 = vmatpush.bf16.msra.mxu0 %v4918
    %6225 = vmatpush.bf16.msra.mxu0 %v4914
    %6226 = vmatpush.bf16.msra.mxu0 %v4910
    %6227 = vmatpush.bf16.msra.mxu0 %v4906
    %6228 = vmatpush.bf16.msra.mxu0 %v4902
    %6229 = vmatpush.bf16.msra.mxu0 %v4898
    %6230 = vmatmul.bf16.gmra.mxu0 %v1188
    %v6231 = vpop.f32.mrf.mxu0
    %v6232 = vadd.f32 %v6219, %v6231
    %v6233 = vpop.f32.mrf.mxu0
    %6234 = vdwg.mxu0
    %6235 = vmatpush.bf16.msra.mxu0 %v4031
    %6236 = vmatpush.bf16.msra.mxu0 %v4027
    %6237 = vmatpush.bf16.msra.mxu0 %v4023
    %6238 = vmatpush.bf16.msra.mxu0 %v4019
    %6239 = vmatpush.bf16.msra.mxu0 %v4015
    %6240 = vmatpush.bf16.msra.mxu0 %v4011
    %6241 = vmatpush.bf16.msra.mxu0 %v4007
    %6242 = vmatpush.bf16.msra.mxu0 %v4003
    %6243 = vmatmul.bf16.gmra.mxu0 %v1160
    %v6244 = vpop.f32.mrf.mxu0
    %v6245 = vadd.f32 %v1109, %v6244
    %v6246 = vpop.f32.mrf.mxu0
    %6247 = vdwg.mxu0
    %6248 = vmatpush.bf16.msra.mxu0 %v4063
    %6249 = vmatpush.bf16.msra.mxu0 %v4059
    %6250 = vmatpush.bf16.msra.mxu0 %v4055
    %6251 = vmatpush.bf16.msra.mxu0 %v4051
    %6252 = vmatpush.bf16.msra.mxu0 %v4047
    %6253 = vmatpush.bf16.msra.mxu0 %v4043
    %6254 = vmatpush.bf16.msra.mxu0 %v4039
    %6255 = vmatpush.bf16.msra.mxu0 %v4035
    %6256 = vmatmul.bf16.gmra.mxu0 %v1161
    %v6257 = vpop.f32.mrf.mxu0
    %v6258 = vadd.f32 %v6245, %v6257
    %v6259 = vpop.f32.mrf.mxu0
    %6260 = vdwg.mxu0
    %6261 = vmatpush.bf16.msra.mxu0 %v4095
    %6262 = vmatpush.bf16.msra.mxu0 %v4091
    %6263 = vmatpush.bf16.msra.mxu0 %v4087
    %6264 = vmatpush.bf16.msra.mxu0 %v4083
    %6265 = vmatpush.bf16.msra.mxu0 %v4079
    %6266 = vmatpush.bf16.msra.mxu0 %v4075
    %6267 = vmatpush.bf16.msra.mxu0 %v4071
    %6268 = vmatpush.bf16.msra.mxu0 %v4067
    %6269 = vmatmul.bf16.gmra.mxu0 %v1162
    %v6270 = vpop.f32.mrf.mxu0
    %v6271 = vadd.f32 %v6258, %v6270
    %v6272 = vpop.f32.mrf.mxu0
    %6273 = vdwg.mxu0
    %6274 = vmatpush.bf16.msra.mxu0 %v4127
    %6275 = vmatpush.bf16.msra.mxu0 %v4123
    %6276 = vmatpush.bf16.msra.mxu0 %v4119
    %6277 = vmatpush.bf16.msra.mxu0 %v4115
    %6278 = vmatpush.bf16.msra.mxu0 %v4111
    %6279 = vmatpush.bf16.msra.mxu0 %v4107
    %6280 = vmatpush.bf16.msra.mxu0 %v4103
    %6281 = vmatpush.bf16.msra.mxu0 %v4099
    %6282 = vmatmul.bf16.gmra.mxu0 %v1163
    %v6283 = vpop.f32.mrf.mxu0
    %v6284 = vadd.f32 %v6271, %v6283
    %v6285 = vpop.f32.mrf.mxu0
    %6286 = vdwg.mxu0
    %6287 = vmatpush.bf16.msra.mxu0 %v4159
    %6288 = vmatpush.bf16.msra.mxu0 %v4155
    %6289 = vmatpush.bf16.msra.mxu0 %v4151
    %6290 = vmatpush.bf16.msra.mxu0 %v4147
    %6291 = vmatpush.bf16.msra.mxu0 %v4143
    %6292 = vmatpush.bf16.msra.mxu0 %v4139
    %6293 = vmatpush.bf16.msra.mxu0 %v4135
    %6294 = vmatpush.bf16.msra.mxu0 %v4131
    %6295 = vmatmul.bf16.gmra.mxu0 %v1164
    %v6296 = vpop.f32.mrf.mxu0
    %v6297 = vadd.f32 %v6284, %v6296
    %v6298 = vpop.f32.mrf.mxu0
    %6299 = vdwg.mxu0
    %6300 = vmatpush.bf16.msra.mxu0 %v4191
    %6301 = vmatpush.bf16.msra.mxu0 %v4187
    %6302 = vmatpush.bf16.msra.mxu0 %v4183
    %6303 = vmatpush.bf16.msra.mxu0 %v4179
    %6304 = vmatpush.bf16.msra.mxu0 %v4175
    %6305 = vmatpush.bf16.msra.mxu0 %v4171
    %6306 = vmatpush.bf16.msra.mxu0 %v4167
    %6307 = vmatpush.bf16.msra.mxu0 %v4163
    %6308 = vmatmul.bf16.gmra.mxu0 %v1165
    %v6309 = vpop.f32.mrf.mxu0
    %v6310 = vadd.f32 %v6297, %v6309
    %v6311 = vpop.f32.mrf.mxu0
    %6312 = vdwg.mxu0
    %6313 = vmatpush.bf16.msra.mxu0 %v4223
    %6314 = vmatpush.bf16.msra.mxu0 %v4219
    %6315 = vmatpush.bf16.msra.mxu0 %v4215
    %6316 = vmatpush.bf16.msra.mxu0 %v4211
    %6317 = vmatpush.bf16.msra.mxu0 %v4207
    %6318 = vmatpush.bf16.msra.mxu0 %v4203
    %6319 = vmatpush.bf16.msra.mxu0 %v4199
    %6320 = vmatpush.bf16.msra.mxu0 %v4195
    %6321 = vmatmul.bf16.gmra.mxu0 %v1166
    %v6322 = vpop.f32.mrf.mxu0
    %v6323 = vadd.f32 %v6310, %v6322
    %v6324 = vpop.f32.mrf.mxu0
    %6325 = vdwg.mxu0
    %6326 = vmatpush.bf16.msra.mxu0 %v4255
    %6327 = vmatpush.bf16.msra.mxu0 %v4251
    %6328 = vmatpush.bf16.msra.mxu0 %v4247
    %6329 = vmatpush.bf16.msra.mxu0 %v4243
    %6330 = vmatpush.bf16.msra.mxu0 %v4239
    %6331 = vmatpush.bf16.msra.mxu0 %v4235
    %6332 = vmatpush.bf16.msra.mxu0 %v4231
    %6333 = vmatpush.bf16.msra.mxu0 %v4227
    %6334 = vmatmul.bf16.gmra.mxu0 %v1167
    %v6335 = vpop.f32.mrf.mxu0
    %v6336 = vadd.f32 %v6323, %v6335
    %v6337 = vpop.f32.mrf.mxu0
    %6338 = vdwg.mxu0
    %6339 = vmatpush.bf16.msra.mxu0 %v4287
    %6340 = vmatpush.bf16.msra.mxu0 %v4283
    %6341 = vmatpush.bf16.msra.mxu0 %v4279
    %6342 = vmatpush.bf16.msra.mxu0 %v4275
    %6343 = vmatpush.bf16.msra.mxu0 %v4271
    %6344 = vmatpush.bf16.msra.mxu0 %v4267
    %6345 = vmatpush.bf16.msra.mxu0 %v4263
    %6346 = vmatpush.bf16.msra.mxu0 %v4259
    %6347 = vmatmul.bf16.gmra.mxu0 %v1168
    %v6348 = vpop.f32.mrf.mxu0
    %v6349 = vadd.f32 %v6336, %v6348
    %v6350 = vpop.f32.mrf.mxu0
    %6351 = vdwg.mxu0
    %6352 = vmatpush.bf16.msra.mxu0 %v4319
    %6353 = vmatpush.bf16.msra.mxu0 %v4315
    %6354 = vmatpush.bf16.msra.mxu0 %v4311
    %6355 = vmatpush.bf16.msra.mxu0 %v4307
    %6356 = vmatpush.bf16.msra.mxu0 %v4303
    %6357 = vmatpush.bf16.msra.mxu0 %v4299
    %6358 = vmatpush.bf16.msra.mxu0 %v4295
    %6359 = vmatpush.bf16.msra.mxu0 %v4291
    %6360 = vmatmul.bf16.gmra.mxu0 %v1169
    %v6361 = vpop.f32.mrf.mxu0
    %v6362 = vadd.f32 %v6349, %v6361
    %v6363 = vpop.f32.mrf.mxu0
    %6364 = vdwg.mxu0
    %6365 = vmatpush.bf16.msra.mxu0 %v4351
    %6366 = vmatpush.bf16.msra.mxu0 %v4347
    %6367 = vmatpush.bf16.msra.mxu0 %v4343
    %6368 = vmatpush.bf16.msra.mxu0 %v4339
    %6369 = vmatpush.bf16.msra.mxu0 %v4335
    %6370 = vmatpush.bf16.msra.mxu0 %v4331
    %6371 = vmatpush.bf16.msra.mxu0 %v4327
    %6372 = vmatpush.bf16.msra.mxu0 %v4323
    %6373 = vmatmul.bf16.gmra.mxu0 %v1170
    %v6374 = vpop.f32.mrf.mxu0
    %v6375 = vadd.f32 %v6362, %v6374
    %v6376 = vpop.f32.mrf.mxu0
    %6377 = vdwg.mxu0
    %6378 = vmatpush.bf16.msra.mxu0 %v4383
    %6379 = vmatpush.bf16.msra.mxu0 %v4379
    %6380 = vmatpush.bf16.msra.mxu0 %v4375
    %6381 = vmatpush.bf16.msra.mxu0 %v4371
    %6382 = vmatpush.bf16.msra.mxu0 %v4367
    %6383 = vmatpush.bf16.msra.mxu0 %v4363
    %6384 = vmatpush.bf16.msra.mxu0 %v4359
    %6385 = vmatpush.bf16.msra.mxu0 %v4355
    %6386 = vmatmul.bf16.gmra.mxu0 %v1171
    %v6387 = vpop.f32.mrf.mxu0
    %v6388 = vadd.f32 %v6375, %v6387
    %v6389 = vpop.f32.mrf.mxu0
    %6390 = vdwg.mxu0
    %6391 = vmatpush.bf16.msra.mxu0 %v4415
    %6392 = vmatpush.bf16.msra.mxu0 %v4411
    %6393 = vmatpush.bf16.msra.mxu0 %v4407
    %6394 = vmatpush.bf16.msra.mxu0 %v4403
    %6395 = vmatpush.bf16.msra.mxu0 %v4399
    %6396 = vmatpush.bf16.msra.mxu0 %v4395
    %6397 = vmatpush.bf16.msra.mxu0 %v4391
    %6398 = vmatpush.bf16.msra.mxu0 %v4387
    %6399 = vmatmul.bf16.gmra.mxu0 %v1172
    %v6400 = vpop.f32.mrf.mxu0
    %v6401 = vadd.f32 %v6388, %v6400
    %v6402 = vpop.f32.mrf.mxu0
    %6403 = vdwg.mxu0
    %6404 = vmatpush.bf16.msra.mxu0 %v4447
    %6405 = vmatpush.bf16.msra.mxu0 %v4443
    %6406 = vmatpush.bf16.msra.mxu0 %v4439
    %6407 = vmatpush.bf16.msra.mxu0 %v4435
    %6408 = vmatpush.bf16.msra.mxu0 %v4431
    %6409 = vmatpush.bf16.msra.mxu0 %v4427
    %6410 = vmatpush.bf16.msra.mxu0 %v4423
    %6411 = vmatpush.bf16.msra.mxu0 %v4419
    %6412 = vmatmul.bf16.gmra.mxu0 %v1173
    %v6413 = vpop.f32.mrf.mxu0
    %v6414 = vadd.f32 %v6401, %v6413
    %v6415 = vpop.f32.mrf.mxu0
    %6416 = vdwg.mxu0
    %6417 = vmatpush.bf16.msra.mxu0 %v4479
    %6418 = vmatpush.bf16.msra.mxu0 %v4475
    %6419 = vmatpush.bf16.msra.mxu0 %v4471
    %6420 = vmatpush.bf16.msra.mxu0 %v4467
    %6421 = vmatpush.bf16.msra.mxu0 %v4463
    %6422 = vmatpush.bf16.msra.mxu0 %v4459
    %6423 = vmatpush.bf16.msra.mxu0 %v4455
    %6424 = vmatpush.bf16.msra.mxu0 %v4451
    %6425 = vmatmul.bf16.gmra.mxu0 %v1174
    %v6426 = vpop.f32.mrf.mxu0
    %v6427 = vadd.f32 %v6414, %v6426
    %v6428 = vpop.f32.mrf.mxu0
    %6429 = vdwg.mxu0
    %6430 = vmatpush.bf16.msra.mxu0 %v4511
    %6431 = vmatpush.bf16.msra.mxu0 %v4507
    %6432 = vmatpush.bf16.msra.mxu0 %v4503
    %6433 = vmatpush.bf16.msra.mxu0 %v4499
    %6434 = vmatpush.bf16.msra.mxu0 %v4495
    %6435 = vmatpush.bf16.msra.mxu0 %v4491
    %6436 = vmatpush.bf16.msra.mxu0 %v4487
    %6437 = vmatpush.bf16.msra.mxu0 %v4483
    %6438 = vmatmul.bf16.gmra.mxu0 %v1175
    %v6439 = vpop.f32.mrf.mxu0
    %v6440 = vadd.f32 %v6427, %v6439
    %v6441 = vpop.f32.mrf.mxu0
    %6442 = vdwg.mxu0
    %6443 = vmatpush.bf16.msra.mxu0 %v4543
    %6444 = vmatpush.bf16.msra.mxu0 %v4539
    %6445 = vmatpush.bf16.msra.mxu0 %v4535
    %6446 = vmatpush.bf16.msra.mxu0 %v4531
    %6447 = vmatpush.bf16.msra.mxu0 %v4527
    %6448 = vmatpush.bf16.msra.mxu0 %v4523
    %6449 = vmatpush.bf16.msra.mxu0 %v4519
    %6450 = vmatpush.bf16.msra.mxu0 %v4515
    %6451 = vmatmul.bf16.gmra.mxu0 %v1176
    %v6452 = vpop.f32.mrf.mxu0
    %v6453 = vadd.f32 %v6440, %v6452
    %v6454 = vpop.f32.mrf.mxu0
    %6455 = vdwg.mxu0
    %6456 = vmatpush.bf16.msra.mxu0 %v4575
    %6457 = vmatpush.bf16.msra.mxu0 %v4571
    %6458 = vmatpush.bf16.msra.mxu0 %v4567
    %6459 = vmatpush.bf16.msra.mxu0 %v4563
    %6460 = vmatpush.bf16.msra.mxu0 %v4559
    %6461 = vmatpush.bf16.msra.mxu0 %v4555
    %6462 = vmatpush.bf16.msra.mxu0 %v4551
    %6463 = vmatpush.bf16.msra.mxu0 %v4547
    %6464 = vmatmul.bf16.gmra.mxu0 %v1177
    %v6465 = vpop.f32.mrf.mxu0
    %v6466 = vadd.f32 %v6453, %v6465
    %v6467 = vpop.f32.mrf.mxu0
    %6468 = vdwg.mxu0
    %6469 = vmatpush.bf16.msra.mxu0 %v4607
    %6470 = vmatpush.bf16.msra.mxu0 %v4603
    %6471 = vmatpush.bf16.msra.mxu0 %v4599
    %6472 = vmatpush.bf16.msra.mxu0 %v4595
    %6473 = vmatpush.bf16.msra.mxu0 %v4591
    %6474 = vmatpush.bf16.msra.mxu0 %v4587
    %6475 = vmatpush.bf16.msra.mxu0 %v4583
    %6476 = vmatpush.bf16.msra.mxu0 %v4579
    %6477 = vmatmul.bf16.gmra.mxu0 %v1178
    %v6478 = vpop.f32.mrf.mxu0
    %v6479 = vadd.f32 %v6466, %v6478
    %v6480 = vpop.f32.mrf.mxu0
    %6481 = vdwg.mxu0
    %6482 = vmatpush.bf16.msra.mxu0 %v4639
    %6483 = vmatpush.bf16.msra.mxu0 %v4635
    %6484 = vmatpush.bf16.msra.mxu0 %v4631
    %6485 = vmatpush.bf16.msra.mxu0 %v4627
    %6486 = vmatpush.bf16.msra.mxu0 %v4623
    %6487 = vmatpush.bf16.msra.mxu0 %v4619
    %6488 = vmatpush.bf16.msra.mxu0 %v4615
    %6489 = vmatpush.bf16.msra.mxu0 %v4611
    %6490 = vmatmul.bf16.gmra.mxu0 %v1179
    %v6491 = vpop.f32.mrf.mxu0
    %v6492 = vadd.f32 %v6479, %v6491
    %v6493 = vpop.f32.mrf.mxu0
    %6494 = vdwg.mxu0
    %6495 = vmatpush.bf16.msra.mxu0 %v4671
    %6496 = vmatpush.bf16.msra.mxu0 %v4667
    %6497 = vmatpush.bf16.msra.mxu0 %v4663
    %6498 = vmatpush.bf16.msra.mxu0 %v4659
    %6499 = vmatpush.bf16.msra.mxu0 %v4655
    %6500 = vmatpush.bf16.msra.mxu0 %v4651
    %6501 = vmatpush.bf16.msra.mxu0 %v4647
    %6502 = vmatpush.bf16.msra.mxu0 %v4643
    %6503 = vmatmul.bf16.gmra.mxu0 %v1180
    %v6504 = vpop.f32.mrf.mxu0
    %v6505 = vadd.f32 %v6492, %v6504
    %v6506 = vpop.f32.mrf.mxu0
    %6507 = vdwg.mxu0
    %6508 = vmatpush.bf16.msra.mxu0 %v4703
    %6509 = vmatpush.bf16.msra.mxu0 %v4699
    %6510 = vmatpush.bf16.msra.mxu0 %v4695
    %6511 = vmatpush.bf16.msra.mxu0 %v4691
    %6512 = vmatpush.bf16.msra.mxu0 %v4687
    %6513 = vmatpush.bf16.msra.mxu0 %v4683
    %6514 = vmatpush.bf16.msra.mxu0 %v4679
    %6515 = vmatpush.bf16.msra.mxu0 %v4675
    %6516 = vmatmul.bf16.gmra.mxu0 %v1181
    %v6517 = vpop.f32.mrf.mxu0
    %v6518 = vadd.f32 %v6505, %v6517
    %v6519 = vpop.f32.mrf.mxu0
    %6520 = vdwg.mxu0
    %6521 = vmatpush.bf16.msra.mxu0 %v4735
    %6522 = vmatpush.bf16.msra.mxu0 %v4731
    %6523 = vmatpush.bf16.msra.mxu0 %v4727
    %6524 = vmatpush.bf16.msra.mxu0 %v4723
    %6525 = vmatpush.bf16.msra.mxu0 %v4719
    %6526 = vmatpush.bf16.msra.mxu0 %v4715
    %6527 = vmatpush.bf16.msra.mxu0 %v4711
    %6528 = vmatpush.bf16.msra.mxu0 %v4707
    %6529 = vmatmul.bf16.gmra.mxu0 %v1182
    %v6530 = vpop.f32.mrf.mxu0
    %v6531 = vadd.f32 %v6518, %v6530
    %v6532 = vpop.f32.mrf.mxu0
    %6533 = vdwg.mxu0
    %6534 = vmatpush.bf16.msra.mxu0 %v4767
    %6535 = vmatpush.bf16.msra.mxu0 %v4763
    %6536 = vmatpush.bf16.msra.mxu0 %v4759
    %6537 = vmatpush.bf16.msra.mxu0 %v4755
    %6538 = vmatpush.bf16.msra.mxu0 %v4751
    %6539 = vmatpush.bf16.msra.mxu0 %v4747
    %6540 = vmatpush.bf16.msra.mxu0 %v4743
    %6541 = vmatpush.bf16.msra.mxu0 %v4739
    %6542 = vmatmul.bf16.gmra.mxu0 %v1183
    %v6543 = vpop.f32.mrf.mxu0
    %v6544 = vadd.f32 %v6531, %v6543
    %v6545 = vpop.f32.mrf.mxu0
    %6546 = vdwg.mxu0
    %6547 = vmatpush.bf16.msra.mxu0 %v4799
    %6548 = vmatpush.bf16.msra.mxu0 %v4795
    %6549 = vmatpush.bf16.msra.mxu0 %v4791
    %6550 = vmatpush.bf16.msra.mxu0 %v4787
    %6551 = vmatpush.bf16.msra.mxu0 %v4783
    %6552 = vmatpush.bf16.msra.mxu0 %v4779
    %6553 = vmatpush.bf16.msra.mxu0 %v4775
    %6554 = vmatpush.bf16.msra.mxu0 %v4771
    %6555 = vmatmul.bf16.gmra.mxu0 %v1184
    %v6556 = vpop.f32.mrf.mxu0
    %v6557 = vadd.f32 %v6544, %v6556
    %v6558 = vpop.f32.mrf.mxu0
    %6559 = vdwg.mxu0
    %6560 = vmatpush.bf16.msra.mxu0 %v4831
    %6561 = vmatpush.bf16.msra.mxu0 %v4827
    %6562 = vmatpush.bf16.msra.mxu0 %v4823
    %6563 = vmatpush.bf16.msra.mxu0 %v4819
    %6564 = vmatpush.bf16.msra.mxu0 %v4815
    %6565 = vmatpush.bf16.msra.mxu0 %v4811
    %6566 = vmatpush.bf16.msra.mxu0 %v4807
    %6567 = vmatpush.bf16.msra.mxu0 %v4803
    %6568 = vmatmul.bf16.gmra.mxu0 %v1185
    %v6569 = vpop.f32.mrf.mxu0
    %v6570 = vadd.f32 %v6557, %v6569
    %v6571 = vpop.f32.mrf.mxu0
    %6572 = vdwg.mxu0
    %6573 = vmatpush.bf16.msra.mxu0 %v4863
    %6574 = vmatpush.bf16.msra.mxu0 %v4859
    %6575 = vmatpush.bf16.msra.mxu0 %v4855
    %6576 = vmatpush.bf16.msra.mxu0 %v4851
    %6577 = vmatpush.bf16.msra.mxu0 %v4847
    %6578 = vmatpush.bf16.msra.mxu0 %v4843
    %6579 = vmatpush.bf16.msra.mxu0 %v4839
    %6580 = vmatpush.bf16.msra.mxu0 %v4835
    %6581 = vmatmul.bf16.gmra.mxu0 %v1186
    %v6582 = vpop.f32.mrf.mxu0
    %v6583 = vadd.f32 %v6570, %v6582
    %v6584 = vpop.f32.mrf.mxu0
    %6585 = vdwg.mxu0
    %6586 = vmatpush.bf16.msra.mxu0 %v4895
    %6587 = vmatpush.bf16.msra.mxu0 %v4891
    %6588 = vmatpush.bf16.msra.mxu0 %v4887
    %6589 = vmatpush.bf16.msra.mxu0 %v4883
    %6590 = vmatpush.bf16.msra.mxu0 %v4879
    %6591 = vmatpush.bf16.msra.mxu0 %v4875
    %6592 = vmatpush.bf16.msra.mxu0 %v4871
    %6593 = vmatpush.bf16.msra.mxu0 %v4867
    %6594 = vmatmul.bf16.gmra.mxu0 %v1187
    %v6595 = vpop.f32.mrf.mxu0
    %v6596 = vadd.f32 %v6583, %v6595
    %v6597 = vpop.f32.mrf.mxu0
    %6598 = vdwg.mxu0
    %6599 = vmatpush.bf16.msra.mxu0 %v4927
    %6600 = vmatpush.bf16.msra.mxu0 %v4923
    %6601 = vmatpush.bf16.msra.mxu0 %v4919
    %6602 = vmatpush.bf16.msra.mxu0 %v4915
    %6603 = vmatpush.bf16.msra.mxu0 %v4911
    %6604 = vmatpush.bf16.msra.mxu0 %v4907
    %6605 = vmatpush.bf16.msra.mxu0 %v4903
    %6606 = vmatpush.bf16.msra.mxu0 %v4899
    %6607 = vmatmul.bf16.gmra.mxu0 %v1188
    %v6608 = vpop.f32.mrf.mxu0
    %v6609 = vadd.f32 %v6596, %v6608
    %v6610 = vpop.f32.mrf.mxu0
    %6611 = vdwg.mxu0
    %6612 = vmatpush.bf16.msra.mxu0 %v4032
    %6613 = vmatpush.bf16.msra.mxu0 %v4028
    %6614 = vmatpush.bf16.msra.mxu0 %v4024
    %6615 = vmatpush.bf16.msra.mxu0 %v4020
    %6616 = vmatpush.bf16.msra.mxu0 %v4016
    %6617 = vmatpush.bf16.msra.mxu0 %v4012
    %6618 = vmatpush.bf16.msra.mxu0 %v4008
    %6619 = vmatpush.bf16.msra.mxu0 %v4004
    %6620 = vmatmul.bf16.gmra.mxu0 %v1160
    %v6621 = vpop.f32.mrf.mxu0
    %v6622 = vadd.f32 %v1110, %v6621
    %v6623 = vpop.f32.mrf.mxu0
    %6624 = vdwg.mxu0
    %6625 = vmatpush.bf16.msra.mxu0 %v4064
    %6626 = vmatpush.bf16.msra.mxu0 %v4060
    %6627 = vmatpush.bf16.msra.mxu0 %v4056
    %6628 = vmatpush.bf16.msra.mxu0 %v4052
    %6629 = vmatpush.bf16.msra.mxu0 %v4048
    %6630 = vmatpush.bf16.msra.mxu0 %v4044
    %6631 = vmatpush.bf16.msra.mxu0 %v4040
    %6632 = vmatpush.bf16.msra.mxu0 %v4036
    %6633 = vmatmul.bf16.gmra.mxu0 %v1161
    %v6634 = vpop.f32.mrf.mxu0
    %v6635 = vadd.f32 %v6622, %v6634
    %v6636 = vpop.f32.mrf.mxu0
    %6637 = vdwg.mxu0
    %6638 = vmatpush.bf16.msra.mxu0 %v4096
    %6639 = vmatpush.bf16.msra.mxu0 %v4092
    %6640 = vmatpush.bf16.msra.mxu0 %v4088
    %6641 = vmatpush.bf16.msra.mxu0 %v4084
    %6642 = vmatpush.bf16.msra.mxu0 %v4080
    %6643 = vmatpush.bf16.msra.mxu0 %v4076
    %6644 = vmatpush.bf16.msra.mxu0 %v4072
    %6645 = vmatpush.bf16.msra.mxu0 %v4068
    %6646 = vmatmul.bf16.gmra.mxu0 %v1162
    %v6647 = vpop.f32.mrf.mxu0
    %v6648 = vadd.f32 %v6635, %v6647
    %v6649 = vpop.f32.mrf.mxu0
    %6650 = vdwg.mxu0
    %6651 = vmatpush.bf16.msra.mxu0 %v4128
    %6652 = vmatpush.bf16.msra.mxu0 %v4124
    %6653 = vmatpush.bf16.msra.mxu0 %v4120
    %6654 = vmatpush.bf16.msra.mxu0 %v4116
    %6655 = vmatpush.bf16.msra.mxu0 %v4112
    %6656 = vmatpush.bf16.msra.mxu0 %v4108
    %6657 = vmatpush.bf16.msra.mxu0 %v4104
    %6658 = vmatpush.bf16.msra.mxu0 %v4100
    %6659 = vmatmul.bf16.gmra.mxu0 %v1163
    %v6660 = vpop.f32.mrf.mxu0
    %v6661 = vadd.f32 %v6648, %v6660
    %v6662 = vpop.f32.mrf.mxu0
    %6663 = vdwg.mxu0
    %6664 = vmatpush.bf16.msra.mxu0 %v4160
    %6665 = vmatpush.bf16.msra.mxu0 %v4156
    %6666 = vmatpush.bf16.msra.mxu0 %v4152
    %6667 = vmatpush.bf16.msra.mxu0 %v4148
    %6668 = vmatpush.bf16.msra.mxu0 %v4144
    %6669 = vmatpush.bf16.msra.mxu0 %v4140
    %6670 = vmatpush.bf16.msra.mxu0 %v4136
    %6671 = vmatpush.bf16.msra.mxu0 %v4132
    %6672 = vmatmul.bf16.gmra.mxu0 %v1164
    %v6673 = vpop.f32.mrf.mxu0
    %v6674 = vadd.f32 %v6661, %v6673
    %v6675 = vpop.f32.mrf.mxu0
    %6676 = vdwg.mxu0
    %6677 = vmatpush.bf16.msra.mxu0 %v4192
    %6678 = vmatpush.bf16.msra.mxu0 %v4188
    %6679 = vmatpush.bf16.msra.mxu0 %v4184
    %6680 = vmatpush.bf16.msra.mxu0 %v4180
    %6681 = vmatpush.bf16.msra.mxu0 %v4176
    %6682 = vmatpush.bf16.msra.mxu0 %v4172
    %6683 = vmatpush.bf16.msra.mxu0 %v4168
    %6684 = vmatpush.bf16.msra.mxu0 %v4164
    %6685 = vmatmul.bf16.gmra.mxu0 %v1165
    %v6686 = vpop.f32.mrf.mxu0
    %v6687 = vadd.f32 %v6674, %v6686
    %v6688 = vpop.f32.mrf.mxu0
    %6689 = vdwg.mxu0
    %6690 = vmatpush.bf16.msra.mxu0 %v4224
    %6691 = vmatpush.bf16.msra.mxu0 %v4220
    %6692 = vmatpush.bf16.msra.mxu0 %v4216
    %6693 = vmatpush.bf16.msra.mxu0 %v4212
    %6694 = vmatpush.bf16.msra.mxu0 %v4208
    %6695 = vmatpush.bf16.msra.mxu0 %v4204
    %6696 = vmatpush.bf16.msra.mxu0 %v4200
    %6697 = vmatpush.bf16.msra.mxu0 %v4196
    %6698 = vmatmul.bf16.gmra.mxu0 %v1166
    %v6699 = vpop.f32.mrf.mxu0
    %v6700 = vadd.f32 %v6687, %v6699
    %v6701 = vpop.f32.mrf.mxu0
    %6702 = vdwg.mxu0
    %6703 = vmatpush.bf16.msra.mxu0 %v4256
    %6704 = vmatpush.bf16.msra.mxu0 %v4252
    %6705 = vmatpush.bf16.msra.mxu0 %v4248
    %6706 = vmatpush.bf16.msra.mxu0 %v4244
    %6707 = vmatpush.bf16.msra.mxu0 %v4240
    %6708 = vmatpush.bf16.msra.mxu0 %v4236
    %6709 = vmatpush.bf16.msra.mxu0 %v4232
    %6710 = vmatpush.bf16.msra.mxu0 %v4228
    %6711 = vmatmul.bf16.gmra.mxu0 %v1167
    %v6712 = vpop.f32.mrf.mxu0
    %v6713 = vadd.f32 %v6700, %v6712
    %v6714 = vpop.f32.mrf.mxu0
    %6715 = vdwg.mxu0
    %6716 = vmatpush.bf16.msra.mxu0 %v4288
    %6717 = vmatpush.bf16.msra.mxu0 %v4284
    %6718 = vmatpush.bf16.msra.mxu0 %v4280
    %6719 = vmatpush.bf16.msra.mxu0 %v4276
    %6720 = vmatpush.bf16.msra.mxu0 %v4272
    %6721 = vmatpush.bf16.msra.mxu0 %v4268
    %6722 = vmatpush.bf16.msra.mxu0 %v4264
    %6723 = vmatpush.bf16.msra.mxu0 %v4260
    %6724 = vmatmul.bf16.gmra.mxu0 %v1168
    %v6725 = vpop.f32.mrf.mxu0
    %v6726 = vadd.f32 %v6713, %v6725
    %v6727 = vpop.f32.mrf.mxu0
    %6728 = vdwg.mxu0
    %6729 = vmatpush.bf16.msra.mxu0 %v4320
    %6730 = vmatpush.bf16.msra.mxu0 %v4316
    %6731 = vmatpush.bf16.msra.mxu0 %v4312
    %6732 = vmatpush.bf16.msra.mxu0 %v4308
    %6733 = vmatpush.bf16.msra.mxu0 %v4304
    %6734 = vmatpush.bf16.msra.mxu0 %v4300
    %6735 = vmatpush.bf16.msra.mxu0 %v4296
    %6736 = vmatpush.bf16.msra.mxu0 %v4292
    %6737 = vmatmul.bf16.gmra.mxu0 %v1169
    %v6738 = vpop.f32.mrf.mxu0
    %v6739 = vadd.f32 %v6726, %v6738
    %v6740 = vpop.f32.mrf.mxu0
    %6741 = vdwg.mxu0
    %6742 = vmatpush.bf16.msra.mxu0 %v4352
    %6743 = vmatpush.bf16.msra.mxu0 %v4348
    %6744 = vmatpush.bf16.msra.mxu0 %v4344
    %6745 = vmatpush.bf16.msra.mxu0 %v4340
    %6746 = vmatpush.bf16.msra.mxu0 %v4336
    %6747 = vmatpush.bf16.msra.mxu0 %v4332
    %6748 = vmatpush.bf16.msra.mxu0 %v4328
    %6749 = vmatpush.bf16.msra.mxu0 %v4324
    %6750 = vmatmul.bf16.gmra.mxu0 %v1170
    %v6751 = vpop.f32.mrf.mxu0
    %v6752 = vadd.f32 %v6739, %v6751
    %v6753 = vpop.f32.mrf.mxu0
    %6754 = vdwg.mxu0
    %6755 = vmatpush.bf16.msra.mxu0 %v4384
    %6756 = vmatpush.bf16.msra.mxu0 %v4380
    %6757 = vmatpush.bf16.msra.mxu0 %v4376
    %6758 = vmatpush.bf16.msra.mxu0 %v4372
    %6759 = vmatpush.bf16.msra.mxu0 %v4368
    %6760 = vmatpush.bf16.msra.mxu0 %v4364
    %6761 = vmatpush.bf16.msra.mxu0 %v4360
    %6762 = vmatpush.bf16.msra.mxu0 %v4356
    %6763 = vmatmul.bf16.gmra.mxu0 %v1171
    %v6764 = vpop.f32.mrf.mxu0
    %v6765 = vadd.f32 %v6752, %v6764
    %v6766 = vpop.f32.mrf.mxu0
    %6767 = vdwg.mxu0
    %6768 = vmatpush.bf16.msra.mxu0 %v4416
    %6769 = vmatpush.bf16.msra.mxu0 %v4412
    %6770 = vmatpush.bf16.msra.mxu0 %v4408
    %6771 = vmatpush.bf16.msra.mxu0 %v4404
    %6772 = vmatpush.bf16.msra.mxu0 %v4400
    %6773 = vmatpush.bf16.msra.mxu0 %v4396
    %6774 = vmatpush.bf16.msra.mxu0 %v4392
    %6775 = vmatpush.bf16.msra.mxu0 %v4388
    %6776 = vmatmul.bf16.gmra.mxu0 %v1172
    %v6777 = vpop.f32.mrf.mxu0
    %v6778 = vadd.f32 %v6765, %v6777
    %v6779 = vpop.f32.mrf.mxu0
    %6780 = vdwg.mxu0
    %6781 = vmatpush.bf16.msra.mxu0 %v4448
    %6782 = vmatpush.bf16.msra.mxu0 %v4444
    %6783 = vmatpush.bf16.msra.mxu0 %v4440
    %6784 = vmatpush.bf16.msra.mxu0 %v4436
    %6785 = vmatpush.bf16.msra.mxu0 %v4432
    %6786 = vmatpush.bf16.msra.mxu0 %v4428
    %6787 = vmatpush.bf16.msra.mxu0 %v4424
    %6788 = vmatpush.bf16.msra.mxu0 %v4420
    %6789 = vmatmul.bf16.gmra.mxu0 %v1173
    %v6790 = vpop.f32.mrf.mxu0
    %v6791 = vadd.f32 %v6778, %v6790
    %v6792 = vpop.f32.mrf.mxu0
    %6793 = vdwg.mxu0
    %6794 = vmatpush.bf16.msra.mxu0 %v4480
    %6795 = vmatpush.bf16.msra.mxu0 %v4476
    %6796 = vmatpush.bf16.msra.mxu0 %v4472
    %6797 = vmatpush.bf16.msra.mxu0 %v4468
    %6798 = vmatpush.bf16.msra.mxu0 %v4464
    %6799 = vmatpush.bf16.msra.mxu0 %v4460
    %6800 = vmatpush.bf16.msra.mxu0 %v4456
    %6801 = vmatpush.bf16.msra.mxu0 %v4452
    %6802 = vmatmul.bf16.gmra.mxu0 %v1174
    %v6803 = vpop.f32.mrf.mxu0
    %v6804 = vadd.f32 %v6791, %v6803
    %v6805 = vpop.f32.mrf.mxu0
    %6806 = vdwg.mxu0
    %6807 = vmatpush.bf16.msra.mxu0 %v4512
    %6808 = vmatpush.bf16.msra.mxu0 %v4508
    %6809 = vmatpush.bf16.msra.mxu0 %v4504
    %6810 = vmatpush.bf16.msra.mxu0 %v4500
    %6811 = vmatpush.bf16.msra.mxu0 %v4496
    %6812 = vmatpush.bf16.msra.mxu0 %v4492
    %6813 = vmatpush.bf16.msra.mxu0 %v4488
    %6814 = vmatpush.bf16.msra.mxu0 %v4484
    %6815 = vmatmul.bf16.gmra.mxu0 %v1175
    %v6816 = vpop.f32.mrf.mxu0
    %v6817 = vadd.f32 %v6804, %v6816
    %v6818 = vpop.f32.mrf.mxu0
    %6819 = vdwg.mxu0
    %6820 = vmatpush.bf16.msra.mxu0 %v4544
    %6821 = vmatpush.bf16.msra.mxu0 %v4540
    %6822 = vmatpush.bf16.msra.mxu0 %v4536
    %6823 = vmatpush.bf16.msra.mxu0 %v4532
    %6824 = vmatpush.bf16.msra.mxu0 %v4528
    %6825 = vmatpush.bf16.msra.mxu0 %v4524
    %6826 = vmatpush.bf16.msra.mxu0 %v4520
    %6827 = vmatpush.bf16.msra.mxu0 %v4516
    %6828 = vmatmul.bf16.gmra.mxu0 %v1176
    %v6829 = vpop.f32.mrf.mxu0
    %v6830 = vadd.f32 %v6817, %v6829
    %v6831 = vpop.f32.mrf.mxu0
    %6832 = vdwg.mxu0
    %6833 = vmatpush.bf16.msra.mxu0 %v4576
    %6834 = vmatpush.bf16.msra.mxu0 %v4572
    %6835 = vmatpush.bf16.msra.mxu0 %v4568
    %6836 = vmatpush.bf16.msra.mxu0 %v4564
    %6837 = vmatpush.bf16.msra.mxu0 %v4560
    %6838 = vmatpush.bf16.msra.mxu0 %v4556
    %6839 = vmatpush.bf16.msra.mxu0 %v4552
    %6840 = vmatpush.bf16.msra.mxu0 %v4548
    %6841 = vmatmul.bf16.gmra.mxu0 %v1177
    %v6842 = vpop.f32.mrf.mxu0
    %v6843 = vadd.f32 %v6830, %v6842
    %v6844 = vpop.f32.mrf.mxu0
    %6845 = vdwg.mxu0
    %6846 = vmatpush.bf16.msra.mxu0 %v4608
    %6847 = vmatpush.bf16.msra.mxu0 %v4604
    %6848 = vmatpush.bf16.msra.mxu0 %v4600
    %6849 = vmatpush.bf16.msra.mxu0 %v4596
    %6850 = vmatpush.bf16.msra.mxu0 %v4592
    %6851 = vmatpush.bf16.msra.mxu0 %v4588
    %6852 = vmatpush.bf16.msra.mxu0 %v4584
    %6853 = vmatpush.bf16.msra.mxu0 %v4580
    %6854 = vmatmul.bf16.gmra.mxu0 %v1178
    %v6855 = vpop.f32.mrf.mxu0
    %v6856 = vadd.f32 %v6843, %v6855
    %v6857 = vpop.f32.mrf.mxu0
    %6858 = vdwg.mxu0
    %6859 = vmatpush.bf16.msra.mxu0 %v4640
    %6860 = vmatpush.bf16.msra.mxu0 %v4636
    %6861 = vmatpush.bf16.msra.mxu0 %v4632
    %6862 = vmatpush.bf16.msra.mxu0 %v4628
    %6863 = vmatpush.bf16.msra.mxu0 %v4624
    %6864 = vmatpush.bf16.msra.mxu0 %v4620
    %6865 = vmatpush.bf16.msra.mxu0 %v4616
    %6866 = vmatpush.bf16.msra.mxu0 %v4612
    %6867 = vmatmul.bf16.gmra.mxu0 %v1179
    %v6868 = vpop.f32.mrf.mxu0
    %v6869 = vadd.f32 %v6856, %v6868
    %v6870 = vpop.f32.mrf.mxu0
    %6871 = vdwg.mxu0
    %6872 = vmatpush.bf16.msra.mxu0 %v4672
    %6873 = vmatpush.bf16.msra.mxu0 %v4668
    %6874 = vmatpush.bf16.msra.mxu0 %v4664
    %6875 = vmatpush.bf16.msra.mxu0 %v4660
    %6876 = vmatpush.bf16.msra.mxu0 %v4656
    %6877 = vmatpush.bf16.msra.mxu0 %v4652
    %6878 = vmatpush.bf16.msra.mxu0 %v4648
    %6879 = vmatpush.bf16.msra.mxu0 %v4644
    %6880 = vmatmul.bf16.gmra.mxu0 %v1180
    %v6881 = vpop.f32.mrf.mxu0
    %v6882 = vadd.f32 %v6869, %v6881
    %v6883 = vpop.f32.mrf.mxu0
    %6884 = vdwg.mxu0
    %6885 = vmatpush.bf16.msra.mxu0 %v4704
    %6886 = vmatpush.bf16.msra.mxu0 %v4700
    %6887 = vmatpush.bf16.msra.mxu0 %v4696
    %6888 = vmatpush.bf16.msra.mxu0 %v4692
    %6889 = vmatpush.bf16.msra.mxu0 %v4688
    %6890 = vmatpush.bf16.msra.mxu0 %v4684
    %6891 = vmatpush.bf16.msra.mxu0 %v4680
    %6892 = vmatpush.bf16.msra.mxu0 %v4676
    %6893 = vmatmul.bf16.gmra.mxu0 %v1181
    %v6894 = vpop.f32.mrf.mxu0
    %v6895 = vadd.f32 %v6882, %v6894
    %v6896 = vpop.f32.mrf.mxu0
    %6897 = vdwg.mxu0
    %6898 = vmatpush.bf16.msra.mxu0 %v4736
    %6899 = vmatpush.bf16.msra.mxu0 %v4732
    %6900 = vmatpush.bf16.msra.mxu0 %v4728
    %6901 = vmatpush.bf16.msra.mxu0 %v4724
    %6902 = vmatpush.bf16.msra.mxu0 %v4720
    %6903 = vmatpush.bf16.msra.mxu0 %v4716
    %6904 = vmatpush.bf16.msra.mxu0 %v4712
    %6905 = vmatpush.bf16.msra.mxu0 %v4708
    %6906 = vmatmul.bf16.gmra.mxu0 %v1182
    %v6907 = vpop.f32.mrf.mxu0
    %v6908 = vadd.f32 %v6895, %v6907
    %v6909 = vpop.f32.mrf.mxu0
    %6910 = vdwg.mxu0
    %6911 = vmatpush.bf16.msra.mxu0 %v4768
    %6912 = vmatpush.bf16.msra.mxu0 %v4764
    %6913 = vmatpush.bf16.msra.mxu0 %v4760
    %6914 = vmatpush.bf16.msra.mxu0 %v4756
    %6915 = vmatpush.bf16.msra.mxu0 %v4752
    %6916 = vmatpush.bf16.msra.mxu0 %v4748
    %6917 = vmatpush.bf16.msra.mxu0 %v4744
    %6918 = vmatpush.bf16.msra.mxu0 %v4740
    %6919 = vmatmul.bf16.gmra.mxu0 %v1183
    %v6920 = vpop.f32.mrf.mxu0
    %v6921 = vadd.f32 %v6908, %v6920
    %v6922 = vpop.f32.mrf.mxu0
    %6923 = vdwg.mxu0
    %6924 = vmatpush.bf16.msra.mxu0 %v4800
    %6925 = vmatpush.bf16.msra.mxu0 %v4796
    %6926 = vmatpush.bf16.msra.mxu0 %v4792
    %6927 = vmatpush.bf16.msra.mxu0 %v4788
    %6928 = vmatpush.bf16.msra.mxu0 %v4784
    %6929 = vmatpush.bf16.msra.mxu0 %v4780
    %6930 = vmatpush.bf16.msra.mxu0 %v4776
    %6931 = vmatpush.bf16.msra.mxu0 %v4772
    %6932 = vmatmul.bf16.gmra.mxu0 %v1184
    %v6933 = vpop.f32.mrf.mxu0
    %v6934 = vadd.f32 %v6921, %v6933
    %v6935 = vpop.f32.mrf.mxu0
    %6936 = vdwg.mxu0
    %6937 = vmatpush.bf16.msra.mxu0 %v4832
    %6938 = vmatpush.bf16.msra.mxu0 %v4828
    %6939 = vmatpush.bf16.msra.mxu0 %v4824
    %6940 = vmatpush.bf16.msra.mxu0 %v4820
    %6941 = vmatpush.bf16.msra.mxu0 %v4816
    %6942 = vmatpush.bf16.msra.mxu0 %v4812
    %6943 = vmatpush.bf16.msra.mxu0 %v4808
    %6944 = vmatpush.bf16.msra.mxu0 %v4804
    %6945 = vmatmul.bf16.gmra.mxu0 %v1185
    %v6946 = vpop.f32.mrf.mxu0
    %v6947 = vadd.f32 %v6934, %v6946
    %v6948 = vpop.f32.mrf.mxu0
    %6949 = vdwg.mxu0
    %6950 = vmatpush.bf16.msra.mxu0 %v4864
    %6951 = vmatpush.bf16.msra.mxu0 %v4860
    %6952 = vmatpush.bf16.msra.mxu0 %v4856
    %6953 = vmatpush.bf16.msra.mxu0 %v4852
    %6954 = vmatpush.bf16.msra.mxu0 %v4848
    %6955 = vmatpush.bf16.msra.mxu0 %v4844
    %6956 = vmatpush.bf16.msra.mxu0 %v4840
    %6957 = vmatpush.bf16.msra.mxu0 %v4836
    %6958 = vmatmul.bf16.gmra.mxu0 %v1186
    %v6959 = vpop.f32.mrf.mxu0
    %v6960 = vadd.f32 %v6947, %v6959
    %v6961 = vpop.f32.mrf.mxu0
    %6962 = vdwg.mxu0
    %6963 = vmatpush.bf16.msra.mxu0 %v4896
    %6964 = vmatpush.bf16.msra.mxu0 %v4892
    %6965 = vmatpush.bf16.msra.mxu0 %v4888
    %6966 = vmatpush.bf16.msra.mxu0 %v4884
    %6967 = vmatpush.bf16.msra.mxu0 %v4880
    %6968 = vmatpush.bf16.msra.mxu0 %v4876
    %6969 = vmatpush.bf16.msra.mxu0 %v4872
    %6970 = vmatpush.bf16.msra.mxu0 %v4868
    %6971 = vmatmul.bf16.gmra.mxu0 %v1187
    %v6972 = vpop.f32.mrf.mxu0
    %v6973 = vadd.f32 %v6960, %v6972
    %v6974 = vpop.f32.mrf.mxu0
    %6975 = vdwg.mxu0
    %6976 = vmatpush.bf16.msra.mxu0 %v4928
    %6977 = vmatpush.bf16.msra.mxu0 %v4924
    %6978 = vmatpush.bf16.msra.mxu0 %v4920
    %6979 = vmatpush.bf16.msra.mxu0 %v4916
    %6980 = vmatpush.bf16.msra.mxu0 %v4912
    %6981 = vmatpush.bf16.msra.mxu0 %v4908
    %6982 = vmatpush.bf16.msra.mxu0 %v4904
    %6983 = vmatpush.bf16.msra.mxu0 %v4900
    %6984 = vmatmul.bf16.gmra.mxu0 %v1188
    %v6985 = vpop.f32.mrf.mxu0
    %v6986 = vadd.f32 %v6973, %v6985
    %v6987 = vpop.f32.mrf.mxu0
    %6988 = vdwg.mxu0
    %6989 = vmatpush.bf16.msra.mxu0 %v4033
    %6990 = vmatpush.bf16.msra.mxu0 %v4029
    %6991 = vmatpush.bf16.msra.mxu0 %v4025
    %6992 = vmatpush.bf16.msra.mxu0 %v4021
    %6993 = vmatpush.bf16.msra.mxu0 %v4017
    %6994 = vmatpush.bf16.msra.mxu0 %v4013
    %6995 = vmatpush.bf16.msra.mxu0 %v4009
    %6996 = vmatpush.bf16.msra.mxu0 %v4005
    %6997 = vmatmul.bf16.gmra.mxu0 %v1160
    %v6998 = vpop.f32.mrf.mxu0
    %v6999 = vadd.f32 %v1111, %v6998
    %v7000 = vpop.f32.mrf.mxu0
    %7001 = vdwg.mxu0
    %7002 = vmatpush.bf16.msra.mxu0 %v4065
    %7003 = vmatpush.bf16.msra.mxu0 %v4061
    %7004 = vmatpush.bf16.msra.mxu0 %v4057
    %7005 = vmatpush.bf16.msra.mxu0 %v4053
    %7006 = vmatpush.bf16.msra.mxu0 %v4049
    %7007 = vmatpush.bf16.msra.mxu0 %v4045
    %7008 = vmatpush.bf16.msra.mxu0 %v4041
    %7009 = vmatpush.bf16.msra.mxu0 %v4037
    %7010 = vmatmul.bf16.gmra.mxu0 %v1161
    %v7011 = vpop.f32.mrf.mxu0
    %v7012 = vadd.f32 %v6999, %v7011
    %v7013 = vpop.f32.mrf.mxu0
    %7014 = vdwg.mxu0
    %7015 = vmatpush.bf16.msra.mxu0 %v4097
    %7016 = vmatpush.bf16.msra.mxu0 %v4093
    %7017 = vmatpush.bf16.msra.mxu0 %v4089
    %7018 = vmatpush.bf16.msra.mxu0 %v4085
    %7019 = vmatpush.bf16.msra.mxu0 %v4081
    %7020 = vmatpush.bf16.msra.mxu0 %v4077
    %7021 = vmatpush.bf16.msra.mxu0 %v4073
    %7022 = vmatpush.bf16.msra.mxu0 %v4069
    %7023 = vmatmul.bf16.gmra.mxu0 %v1162
    %v7024 = vpop.f32.mrf.mxu0
    %v7025 = vadd.f32 %v7012, %v7024
    %v7026 = vpop.f32.mrf.mxu0
    %7027 = vdwg.mxu0
    %7028 = vmatpush.bf16.msra.mxu0 %v4129
    %7029 = vmatpush.bf16.msra.mxu0 %v4125
    %7030 = vmatpush.bf16.msra.mxu0 %v4121
    %7031 = vmatpush.bf16.msra.mxu0 %v4117
    %7032 = vmatpush.bf16.msra.mxu0 %v4113
    %7033 = vmatpush.bf16.msra.mxu0 %v4109
    %7034 = vmatpush.bf16.msra.mxu0 %v4105
    %7035 = vmatpush.bf16.msra.mxu0 %v4101
    %7036 = vmatmul.bf16.gmra.mxu0 %v1163
    %v7037 = vpop.f32.mrf.mxu0
    %v7038 = vadd.f32 %v7025, %v7037
    %v7039 = vpop.f32.mrf.mxu0
    %7040 = vdwg.mxu0
    %7041 = vmatpush.bf16.msra.mxu0 %v4161
    %7042 = vmatpush.bf16.msra.mxu0 %v4157
    %7043 = vmatpush.bf16.msra.mxu0 %v4153
    %7044 = vmatpush.bf16.msra.mxu0 %v4149
    %7045 = vmatpush.bf16.msra.mxu0 %v4145
    %7046 = vmatpush.bf16.msra.mxu0 %v4141
    %7047 = vmatpush.bf16.msra.mxu0 %v4137
    %7048 = vmatpush.bf16.msra.mxu0 %v4133
    %7049 = vmatmul.bf16.gmra.mxu0 %v1164
    %v7050 = vpop.f32.mrf.mxu0
    %v7051 = vadd.f32 %v7038, %v7050
    %v7052 = vpop.f32.mrf.mxu0
    %7053 = vdwg.mxu0
    %7054 = vmatpush.bf16.msra.mxu0 %v4193
    %7055 = vmatpush.bf16.msra.mxu0 %v4189
    %7056 = vmatpush.bf16.msra.mxu0 %v4185
    %7057 = vmatpush.bf16.msra.mxu0 %v4181
    %7058 = vmatpush.bf16.msra.mxu0 %v4177
    %7059 = vmatpush.bf16.msra.mxu0 %v4173
    %7060 = vmatpush.bf16.msra.mxu0 %v4169
    %7061 = vmatpush.bf16.msra.mxu0 %v4165
    %7062 = vmatmul.bf16.gmra.mxu0 %v1165
    %v7063 = vpop.f32.mrf.mxu0
    %v7064 = vadd.f32 %v7051, %v7063
    %v7065 = vpop.f32.mrf.mxu0
    %7066 = vdwg.mxu0
    %7067 = vmatpush.bf16.msra.mxu0 %v4225
    %7068 = vmatpush.bf16.msra.mxu0 %v4221
    %7069 = vmatpush.bf16.msra.mxu0 %v4217
    %7070 = vmatpush.bf16.msra.mxu0 %v4213
    %7071 = vmatpush.bf16.msra.mxu0 %v4209
    %7072 = vmatpush.bf16.msra.mxu0 %v4205
    %7073 = vmatpush.bf16.msra.mxu0 %v4201
    %7074 = vmatpush.bf16.msra.mxu0 %v4197
    %7075 = vmatmul.bf16.gmra.mxu0 %v1166
    %v7076 = vpop.f32.mrf.mxu0
    %v7077 = vadd.f32 %v7064, %v7076
    %v7078 = vpop.f32.mrf.mxu0
    %7079 = vdwg.mxu0
    %7080 = vmatpush.bf16.msra.mxu0 %v4257
    %7081 = vmatpush.bf16.msra.mxu0 %v4253
    %7082 = vmatpush.bf16.msra.mxu0 %v4249
    %7083 = vmatpush.bf16.msra.mxu0 %v4245
    %7084 = vmatpush.bf16.msra.mxu0 %v4241
    %7085 = vmatpush.bf16.msra.mxu0 %v4237
    %7086 = vmatpush.bf16.msra.mxu0 %v4233
    %7087 = vmatpush.bf16.msra.mxu0 %v4229
    %7088 = vmatmul.bf16.gmra.mxu0 %v1167
    %v7089 = vpop.f32.mrf.mxu0
    %v7090 = vadd.f32 %v7077, %v7089
    %v7091 = vpop.f32.mrf.mxu0
    %7092 = vdwg.mxu0
    %7093 = vmatpush.bf16.msra.mxu0 %v4289
    %7094 = vmatpush.bf16.msra.mxu0 %v4285
    %7095 = vmatpush.bf16.msra.mxu0 %v4281
    %7096 = vmatpush.bf16.msra.mxu0 %v4277
    %7097 = vmatpush.bf16.msra.mxu0 %v4273
    %7098 = vmatpush.bf16.msra.mxu0 %v4269
    %7099 = vmatpush.bf16.msra.mxu0 %v4265
    %7100 = vmatpush.bf16.msra.mxu0 %v4261
    %7101 = vmatmul.bf16.gmra.mxu0 %v1168
    %v7102 = vpop.f32.mrf.mxu0
    %v7103 = vadd.f32 %v7090, %v7102
    %v7104 = vpop.f32.mrf.mxu0
    %7105 = vdwg.mxu0
    %7106 = vmatpush.bf16.msra.mxu0 %v4321
    %7107 = vmatpush.bf16.msra.mxu0 %v4317
    %7108 = vmatpush.bf16.msra.mxu0 %v4313
    %7109 = vmatpush.bf16.msra.mxu0 %v4309
    %7110 = vmatpush.bf16.msra.mxu0 %v4305
    %7111 = vmatpush.bf16.msra.mxu0 %v4301
    %7112 = vmatpush.bf16.msra.mxu0 %v4297
    %7113 = vmatpush.bf16.msra.mxu0 %v4293
    %7114 = vmatmul.bf16.gmra.mxu0 %v1169
    %v7115 = vpop.f32.mrf.mxu0
    %v7116 = vadd.f32 %v7103, %v7115
    %v7117 = vpop.f32.mrf.mxu0
    %7118 = vdwg.mxu0
    %7119 = vmatpush.bf16.msra.mxu0 %v4353
    %7120 = vmatpush.bf16.msra.mxu0 %v4349
    %7121 = vmatpush.bf16.msra.mxu0 %v4345
    %7122 = vmatpush.bf16.msra.mxu0 %v4341
    %7123 = vmatpush.bf16.msra.mxu0 %v4337
    %7124 = vmatpush.bf16.msra.mxu0 %v4333
    %7125 = vmatpush.bf16.msra.mxu0 %v4329
    %7126 = vmatpush.bf16.msra.mxu0 %v4325
    %7127 = vmatmul.bf16.gmra.mxu0 %v1170
    %v7128 = vpop.f32.mrf.mxu0
    %v7129 = vadd.f32 %v7116, %v7128
    %v7130 = vpop.f32.mrf.mxu0
    %7131 = vdwg.mxu0
    %7132 = vmatpush.bf16.msra.mxu0 %v4385
    %7133 = vmatpush.bf16.msra.mxu0 %v4381
    %7134 = vmatpush.bf16.msra.mxu0 %v4377
    %7135 = vmatpush.bf16.msra.mxu0 %v4373
    %7136 = vmatpush.bf16.msra.mxu0 %v4369
    %7137 = vmatpush.bf16.msra.mxu0 %v4365
    %7138 = vmatpush.bf16.msra.mxu0 %v4361
    %7139 = vmatpush.bf16.msra.mxu0 %v4357
    %7140 = vmatmul.bf16.gmra.mxu0 %v1171
    %v7141 = vpop.f32.mrf.mxu0
    %v7142 = vadd.f32 %v7129, %v7141
    %v7143 = vpop.f32.mrf.mxu0
    %7144 = vdwg.mxu0
    %7145 = vmatpush.bf16.msra.mxu0 %v4417
    %7146 = vmatpush.bf16.msra.mxu0 %v4413
    %7147 = vmatpush.bf16.msra.mxu0 %v4409
    %7148 = vmatpush.bf16.msra.mxu0 %v4405
    %7149 = vmatpush.bf16.msra.mxu0 %v4401
    %7150 = vmatpush.bf16.msra.mxu0 %v4397
    %7151 = vmatpush.bf16.msra.mxu0 %v4393
    %7152 = vmatpush.bf16.msra.mxu0 %v4389
    %7153 = vmatmul.bf16.gmra.mxu0 %v1172
    %v7154 = vpop.f32.mrf.mxu0
    %v7155 = vadd.f32 %v7142, %v7154
    %v7156 = vpop.f32.mrf.mxu0
    %7157 = vdwg.mxu0
    %7158 = vmatpush.bf16.msra.mxu0 %v4449
    %7159 = vmatpush.bf16.msra.mxu0 %v4445
    %7160 = vmatpush.bf16.msra.mxu0 %v4441
    %7161 = vmatpush.bf16.msra.mxu0 %v4437
    %7162 = vmatpush.bf16.msra.mxu0 %v4433
    %7163 = vmatpush.bf16.msra.mxu0 %v4429
    %7164 = vmatpush.bf16.msra.mxu0 %v4425
    %7165 = vmatpush.bf16.msra.mxu0 %v4421
    %7166 = vmatmul.bf16.gmra.mxu0 %v1173
    %v7167 = vpop.f32.mrf.mxu0
    %v7168 = vadd.f32 %v7155, %v7167
    %v7169 = vpop.f32.mrf.mxu0
    %7170 = vdwg.mxu0
    %7171 = vmatpush.bf16.msra.mxu0 %v4481
    %7172 = vmatpush.bf16.msra.mxu0 %v4477
    %7173 = vmatpush.bf16.msra.mxu0 %v4473
    %7174 = vmatpush.bf16.msra.mxu0 %v4469
    %7175 = vmatpush.bf16.msra.mxu0 %v4465
    %7176 = vmatpush.bf16.msra.mxu0 %v4461
    %7177 = vmatpush.bf16.msra.mxu0 %v4457
    %7178 = vmatpush.bf16.msra.mxu0 %v4453
    %7179 = vmatmul.bf16.gmra.mxu0 %v1174
    %v7180 = vpop.f32.mrf.mxu0
    %v7181 = vadd.f32 %v7168, %v7180
    %v7182 = vpop.f32.mrf.mxu0
    %7183 = vdwg.mxu0
    %7184 = vmatpush.bf16.msra.mxu0 %v4513
    %7185 = vmatpush.bf16.msra.mxu0 %v4509
    %7186 = vmatpush.bf16.msra.mxu0 %v4505
    %7187 = vmatpush.bf16.msra.mxu0 %v4501
    %7188 = vmatpush.bf16.msra.mxu0 %v4497
    %7189 = vmatpush.bf16.msra.mxu0 %v4493
    %7190 = vmatpush.bf16.msra.mxu0 %v4489
    %7191 = vmatpush.bf16.msra.mxu0 %v4485
    %7192 = vmatmul.bf16.gmra.mxu0 %v1175
    %v7193 = vpop.f32.mrf.mxu0
    %v7194 = vadd.f32 %v7181, %v7193
    %v7195 = vpop.f32.mrf.mxu0
    %7196 = vdwg.mxu0
    %7197 = vmatpush.bf16.msra.mxu0 %v4545
    %7198 = vmatpush.bf16.msra.mxu0 %v4541
    %7199 = vmatpush.bf16.msra.mxu0 %v4537
    %7200 = vmatpush.bf16.msra.mxu0 %v4533
    %7201 = vmatpush.bf16.msra.mxu0 %v4529
    %7202 = vmatpush.bf16.msra.mxu0 %v4525
    %7203 = vmatpush.bf16.msra.mxu0 %v4521
    %7204 = vmatpush.bf16.msra.mxu0 %v4517
    %7205 = vmatmul.bf16.gmra.mxu0 %v1176
    %v7206 = vpop.f32.mrf.mxu0
    %v7207 = vadd.f32 %v7194, %v7206
    %v7208 = vpop.f32.mrf.mxu0
    %7209 = vdwg.mxu0
    %7210 = vmatpush.bf16.msra.mxu0 %v4577
    %7211 = vmatpush.bf16.msra.mxu0 %v4573
    %7212 = vmatpush.bf16.msra.mxu0 %v4569
    %7213 = vmatpush.bf16.msra.mxu0 %v4565
    %7214 = vmatpush.bf16.msra.mxu0 %v4561
    %7215 = vmatpush.bf16.msra.mxu0 %v4557
    %7216 = vmatpush.bf16.msra.mxu0 %v4553
    %7217 = vmatpush.bf16.msra.mxu0 %v4549
    %7218 = vmatmul.bf16.gmra.mxu0 %v1177
    %v7219 = vpop.f32.mrf.mxu0
    %v7220 = vadd.f32 %v7207, %v7219
    %v7221 = vpop.f32.mrf.mxu0
    %7222 = vdwg.mxu0
    %7223 = vmatpush.bf16.msra.mxu0 %v4609
    %7224 = vmatpush.bf16.msra.mxu0 %v4605
    %7225 = vmatpush.bf16.msra.mxu0 %v4601
    %7226 = vmatpush.bf16.msra.mxu0 %v4597
    %7227 = vmatpush.bf16.msra.mxu0 %v4593
    %7228 = vmatpush.bf16.msra.mxu0 %v4589
    %7229 = vmatpush.bf16.msra.mxu0 %v4585
    %7230 = vmatpush.bf16.msra.mxu0 %v4581
    %7231 = vmatmul.bf16.gmra.mxu0 %v1178
    %v7232 = vpop.f32.mrf.mxu0
    %v7233 = vadd.f32 %v7220, %v7232
    %v7234 = vpop.f32.mrf.mxu0
    %7235 = vdwg.mxu0
    %7236 = vmatpush.bf16.msra.mxu0 %v4641
    %7237 = vmatpush.bf16.msra.mxu0 %v4637
    %7238 = vmatpush.bf16.msra.mxu0 %v4633
    %7239 = vmatpush.bf16.msra.mxu0 %v4629
    %7240 = vmatpush.bf16.msra.mxu0 %v4625
    %7241 = vmatpush.bf16.msra.mxu0 %v4621
    %7242 = vmatpush.bf16.msra.mxu0 %v4617
    %7243 = vmatpush.bf16.msra.mxu0 %v4613
    %7244 = vmatmul.bf16.gmra.mxu0 %v1179
    %v7245 = vpop.f32.mrf.mxu0
    %v7246 = vadd.f32 %v7233, %v7245
    %v7247 = vpop.f32.mrf.mxu0
    %7248 = vdwg.mxu0
    %7249 = vmatpush.bf16.msra.mxu0 %v4673
    %7250 = vmatpush.bf16.msra.mxu0 %v4669
    %7251 = vmatpush.bf16.msra.mxu0 %v4665
    %7252 = vmatpush.bf16.msra.mxu0 %v4661
    %7253 = vmatpush.bf16.msra.mxu0 %v4657
    %7254 = vmatpush.bf16.msra.mxu0 %v4653
    %7255 = vmatpush.bf16.msra.mxu0 %v4649
    %7256 = vmatpush.bf16.msra.mxu0 %v4645
    %7257 = vmatmul.bf16.gmra.mxu0 %v1180
    %v7258 = vpop.f32.mrf.mxu0
    %v7259 = vadd.f32 %v7246, %v7258
    %v7260 = vpop.f32.mrf.mxu0
    %7261 = vdwg.mxu0
    %7262 = vmatpush.bf16.msra.mxu0 %v4705
    %7263 = vmatpush.bf16.msra.mxu0 %v4701
    %7264 = vmatpush.bf16.msra.mxu0 %v4697
    %7265 = vmatpush.bf16.msra.mxu0 %v4693
    %7266 = vmatpush.bf16.msra.mxu0 %v4689
    %7267 = vmatpush.bf16.msra.mxu0 %v4685
    %7268 = vmatpush.bf16.msra.mxu0 %v4681
    %7269 = vmatpush.bf16.msra.mxu0 %v4677
    %7270 = vmatmul.bf16.gmra.mxu0 %v1181
    %v7271 = vpop.f32.mrf.mxu0
    %v7272 = vadd.f32 %v7259, %v7271
    %v7273 = vpop.f32.mrf.mxu0
    %7274 = vdwg.mxu0
    %7275 = vmatpush.bf16.msra.mxu0 %v4737
    %7276 = vmatpush.bf16.msra.mxu0 %v4733
    %7277 = vmatpush.bf16.msra.mxu0 %v4729
    %7278 = vmatpush.bf16.msra.mxu0 %v4725
    %7279 = vmatpush.bf16.msra.mxu0 %v4721
    %7280 = vmatpush.bf16.msra.mxu0 %v4717
    %7281 = vmatpush.bf16.msra.mxu0 %v4713
    %7282 = vmatpush.bf16.msra.mxu0 %v4709
    %7283 = vmatmul.bf16.gmra.mxu0 %v1182
    %v7284 = vpop.f32.mrf.mxu0
    %v7285 = vadd.f32 %v7272, %v7284
    %v7286 = vpop.f32.mrf.mxu0
    %7287 = vdwg.mxu0
    %7288 = vmatpush.bf16.msra.mxu0 %v4769
    %7289 = vmatpush.bf16.msra.mxu0 %v4765
    %7290 = vmatpush.bf16.msra.mxu0 %v4761
    %7291 = vmatpush.bf16.msra.mxu0 %v4757
    %7292 = vmatpush.bf16.msra.mxu0 %v4753
    %7293 = vmatpush.bf16.msra.mxu0 %v4749
    %7294 = vmatpush.bf16.msra.mxu0 %v4745
    %7295 = vmatpush.bf16.msra.mxu0 %v4741
    %7296 = vmatmul.bf16.gmra.mxu0 %v1183
    %v7297 = vpop.f32.mrf.mxu0
    %v7298 = vadd.f32 %v7285, %v7297
    %v7299 = vpop.f32.mrf.mxu0
    %7300 = vdwg.mxu0
    %7301 = vmatpush.bf16.msra.mxu0 %v4801
    %7302 = vmatpush.bf16.msra.mxu0 %v4797
    %7303 = vmatpush.bf16.msra.mxu0 %v4793
    %7304 = vmatpush.bf16.msra.mxu0 %v4789
    %7305 = vmatpush.bf16.msra.mxu0 %v4785
    %7306 = vmatpush.bf16.msra.mxu0 %v4781
    %7307 = vmatpush.bf16.msra.mxu0 %v4777
    %7308 = vmatpush.bf16.msra.mxu0 %v4773
    %7309 = vmatmul.bf16.gmra.mxu0 %v1184
    %v7310 = vpop.f32.mrf.mxu0
    %v7311 = vadd.f32 %v7298, %v7310
    %v7312 = vpop.f32.mrf.mxu0
    %7313 = vdwg.mxu0
    %7314 = vmatpush.bf16.msra.mxu0 %v4833
    %7315 = vmatpush.bf16.msra.mxu0 %v4829
    %7316 = vmatpush.bf16.msra.mxu0 %v4825
    %7317 = vmatpush.bf16.msra.mxu0 %v4821
    %7318 = vmatpush.bf16.msra.mxu0 %v4817
    %7319 = vmatpush.bf16.msra.mxu0 %v4813
    %7320 = vmatpush.bf16.msra.mxu0 %v4809
    %7321 = vmatpush.bf16.msra.mxu0 %v4805
    %7322 = vmatmul.bf16.gmra.mxu0 %v1185
    %v7323 = vpop.f32.mrf.mxu0
    %v7324 = vadd.f32 %v7311, %v7323
    %v7325 = vpop.f32.mrf.mxu0
    %7326 = vdwg.mxu0
    %7327 = vmatpush.bf16.msra.mxu0 %v4865
    %7328 = vmatpush.bf16.msra.mxu0 %v4861
    %7329 = vmatpush.bf16.msra.mxu0 %v4857
    %7330 = vmatpush.bf16.msra.mxu0 %v4853
    %7331 = vmatpush.bf16.msra.mxu0 %v4849
    %7332 = vmatpush.bf16.msra.mxu0 %v4845
    %7333 = vmatpush.bf16.msra.mxu0 %v4841
    %7334 = vmatpush.bf16.msra.mxu0 %v4837
    %7335 = vmatmul.bf16.gmra.mxu0 %v1186
    %v7336 = vpop.f32.mrf.mxu0
    %v7337 = vadd.f32 %v7324, %v7336
    %v7338 = vpop.f32.mrf.mxu0
    %7339 = vdwg.mxu0
    %7340 = vmatpush.bf16.msra.mxu0 %v4897
    %7341 = vmatpush.bf16.msra.mxu0 %v4893
    %7342 = vmatpush.bf16.msra.mxu0 %v4889
    %7343 = vmatpush.bf16.msra.mxu0 %v4885
    %7344 = vmatpush.bf16.msra.mxu0 %v4881
    %7345 = vmatpush.bf16.msra.mxu0 %v4877
    %7346 = vmatpush.bf16.msra.mxu0 %v4873
    %7347 = vmatpush.bf16.msra.mxu0 %v4869
    %7348 = vmatmul.bf16.gmra.mxu0 %v1187
    %v7349 = vpop.f32.mrf.mxu0
    %v7350 = vadd.f32 %v7337, %v7349
    %v7351 = vpop.f32.mrf.mxu0
    %7352 = vdwg.mxu0
    %7353 = vmatpush.bf16.msra.mxu0 %v4929
    %7354 = vmatpush.bf16.msra.mxu0 %v4925
    %7355 = vmatpush.bf16.msra.mxu0 %v4921
    %7356 = vmatpush.bf16.msra.mxu0 %v4917
    %7357 = vmatpush.bf16.msra.mxu0 %v4913
    %7358 = vmatpush.bf16.msra.mxu0 %v4909
    %7359 = vmatpush.bf16.msra.mxu0 %v4905
    %7360 = vmatpush.bf16.msra.mxu0 %v4901
    %7361 = vmatmul.bf16.gmra.mxu0 %v1188
    %v7362 = vpop.f32.mrf.mxu0
    %v7363 = vadd.f32 %v7350, %v7362
    %v7364 = vpop.f32.mrf.mxu0
    %7365 = vdwg.mxu0
    %v7366 = vmax.f32 %v6232, 0.0
    %v7367 = vmax.f32 %v6609, 0.0
    %v7368 = vmax.f32 %v6986, 0.0
    %v7369 = vmax.f32 %v7363, 0.0
    %v7370 = vpack.c.bf16 %v7366, %v7366
    %v7371 = vpack.c.bf16 %v7367, %v7367
    %v7372 = vpack.c.bf16 %v7368, %v7368
    %v7373 = vpack.c.bf16 %v7369, %v7369
    %v7374 = vld [vmem:[#allocation8] sm:$0xff]
    %v7375 = vld [vmem:[#allocation8 + $0x8] sm:$0xff]
    %v7376 = vld [vmem:[#allocation8 + $0x10] sm:$0xff]
    %v7377 = vld [vmem:[#allocation8 + $0x18] sm:$0xff]
    %v7378 = vld [vmem:[#allocation8 + $0x20] sm:$0xff]
    %v7379 = vld [vmem:[#allocation8 + $0x28] sm:$0xff]
    %v7380 = vld [vmem:[#allocation8 + $0x30] sm:$0xff]
    %v7381 = vld [vmem:[#allocation8 + $0x38] sm:$0xff]
    %v7382 = vld [vmem:[#allocation8 + $0x40] sm:$0xff]
    %v7383 = vld [vmem:[#allocation8 + $0x48] sm:$0xff]
    %v7384 = vld [vmem:[#allocation8 + $0x50] sm:$0xff]
    %v7385 = vld [vmem:[#allocation8 + $0x58] sm:$0xff]
    %v7386 = vld [vmem:[#allocation8 + $0x60] sm:$0xff]
    %v7387 = vld [vmem:[#allocation8 + $0x68] sm:$0xff]
    %v7388 = vld [vmem:[#allocation8 + $0x70] sm:$0xff]
    %v7389 = vld [vmem:[#allocation8 + $0x78] sm:$0xff]
    %v7390 = vld [vmem:[#allocation8 + $0x80] sm:$0xff]
    %v7391 = vld [vmem:[#allocation8 + $0x88] sm:$0xff]
    %v7392 = vld [vmem:[#allocation8 + $0x90] sm:$0xff]
    %v7393 = vld [vmem:[#allocation8 + $0x98] sm:$0xff]
    %v7394 = vld [vmem:[#allocation8 + $0xa0] sm:$0xff]
    %v7395 = vld [vmem:[#allocation8 + $0xa8] sm:$0xff]
    %v7396 = vld [vmem:[#allocation8 + $0xb0] sm:$0xff]
    %v7397 = vld [vmem:[#allocation8 + $0xb8] sm:$0xff]
    %v7398 = vld [vmem:[#allocation8 + $0xc0] sm:$0xff]
    %v7399 = vld [vmem:[#allocation8 + $0xc8] sm:$0xff]
    %v7400 = vld [vmem:[#allocation8 + $0xd0] sm:$0xff]
    %v7401 = vld [vmem:[#allocation8 + $0xd8] sm:$0xff]
    %v7402 = vld [vmem:[#allocation8 + $0xe0] sm:$0xff]
    %v7403 = vld [vmem:[#allocation8 + $0xe8] sm:$0xff]
    %v7404 = vld [vmem:[#allocation8 + $0xf0] sm:$0xff]
    %v7405 = vld [vmem:[#allocation8 + $0xf8] sm:$0xff]
    %v7406 = vld [vmem:[#allocation8 + $0x100] sm:$0xff]
    %v7407 = vld [vmem:[#allocation8 + $0x108] sm:$0xff]
    %v7408 = vld [vmem:[#allocation8 + $0x110] sm:$0xff]
    %v7409 = vld [vmem:[#allocation8 + $0x118] sm:$0xff]
    %v7410 = vld [vmem:[#allocation8 + $0x120] sm:$0xff]
    %v7411 = vld [vmem:[#allocation8 + $0x128] sm:$0xff]
    %v7412 = vld [vmem:[#allocation8 + $0x130] sm:$0xff]
    %v7413 = vld [vmem:[#allocation8 + $0x138] sm:$0xff]
    %v7414 = vld [vmem:[#allocation8 + $0x140] sm:$0xff]
    %v7415 = vld [vmem:[#allocation8 + $0x148] sm:$0xff]
    %v7416 = vld [vmem:[#allocation8 + $0x150] sm:$0xff]
    %v7417 = vld [vmem:[#allocation8 + $0x158] sm:$0xff]
    %v7418 = vld [vmem:[#allocation8 + $0x160] sm:$0xff]
    %v7419 = vld [vmem:[#allocation8 + $0x168] sm:$0xff]
    %v7420 = vld [vmem:[#allocation8 + $0x170] sm:$0xff]
    %v7421 = vld [vmem:[#allocation8 + $0x178] sm:$0xff]
    %v7422 = vld [vmem:[#allocation8 + $0x180] sm:$0xff]
    %v7423 = vld [vmem:[#allocation8 + $0x188] sm:$0xff]
    %v7424 = vld [vmem:[#allocation8 + $0x190] sm:$0xff]
    %v7425 = vld [vmem:[#allocation8 + $0x198] sm:$0xff]
    %v7426 = vld [vmem:[#allocation8 + $0x1a0] sm:$0xff]
    %v7427 = vld [vmem:[#allocation8 + $0x1a8] sm:$0xff]
    %v7428 = vld [vmem:[#allocation8 + $0x1b0] sm:$0xff]
    %v7429 = vld [vmem:[#allocation8 + $0x1b8] sm:$0xff]
    %v7430 = vld [vmem:[#allocation8 + $0x1c0] sm:$0xff]
    %v7431 = vld [vmem:[#allocation8 + $0x1c8] sm:$0xff]
    %v7432 = vld [vmem:[#allocation8 + $0x1d0] sm:$0xff]
    %v7433 = vld [vmem:[#allocation8 + $0x1d8] sm:$0xff]
    %v7434 = vld [vmem:[#allocation8 + $0x1e0] sm:$0xff]
    %v7435 = vld [vmem:[#allocation8 + $0x1e8] sm:$0xff]
    %v7436 = vld [vmem:[#allocation8 + $0x1f0] sm:$0xff]
    %v7437 = vld [vmem:[#allocation8 + $0x1f8] sm:$0xff]
    %v7438 = vld [vmem:[#allocation8 + $0x200] sm:$0xff]
    %v7439 = vld [vmem:[#allocation8 + $0x208] sm:$0xff]
    %v7440 = vld [vmem:[#allocation8 + $0x210] sm:$0xff]
    %v7441 = vld [vmem:[#allocation8 + $0x218] sm:$0xff]
    %v7442 = vld [vmem:[#allocation8 + $0x220] sm:$0xff]
    %v7443 = vld [vmem:[#allocation8 + $0x228] sm:$0xff]
    %v7444 = vld [vmem:[#allocation8 + $0x230] sm:$0xff]
    %v7445 = vld [vmem:[#allocation8 + $0x238] sm:$0xff]
    %v7446 = vld [vmem:[#allocation8 + $0x240] sm:$0xff]
    %v7447 = vld [vmem:[#allocation8 + $0x248] sm:$0xff]
    %v7448 = vld [vmem:[#allocation8 + $0x250] sm:$0xff]
    %v7449 = vld [vmem:[#allocation8 + $0x258] sm:$0xff]
    %v7450 = vld [vmem:[#allocation8 + $0x260] sm:$0xff]
    %v7451 = vld [vmem:[#allocation8 + $0x268] sm:$0xff]
    %v7452 = vld [vmem:[#allocation8 + $0x270] sm:$0xff]
    %v7453 = vld [vmem:[#allocation8 + $0x278] sm:$0xff]
    %v7454 = vld [vmem:[#allocation8 + $0x280] sm:$0xff]
    %v7455 = vld [vmem:[#allocation8 + $0x288] sm:$0xff]
    %v7456 = vld [vmem:[#allocation8 + $0x290] sm:$0xff]
    %v7457 = vld [vmem:[#allocation8 + $0x298] sm:$0xff]
    %v7458 = vld [vmem:[#allocation8 + $0x2a0] sm:$0xff]
    %v7459 = vld [vmem:[#allocation8 + $0x2a8] sm:$0xff]
    %v7460 = vld [vmem:[#allocation8 + $0x2b0] sm:$0xff]
    %v7461 = vld [vmem:[#allocation8 + $0x2b8] sm:$0xff]
    %v7462 = vld [vmem:[#allocation8 + $0x2c0] sm:$0xff]
    %v7463 = vld [vmem:[#allocation8 + $0x2c8] sm:$0xff]
    %v7464 = vld [vmem:[#allocation8 + $0x2d0] sm:$0xff]
    %v7465 = vld [vmem:[#allocation8 + $0x2d8] sm:$0xff]
    %v7466 = vld [vmem:[#allocation8 + $0x2e0] sm:$0xff]
    %v7467 = vld [vmem:[#allocation8 + $0x2e8] sm:$0xff]
    %v7468 = vld [vmem:[#allocation8 + $0x2f0] sm:$0xff]
    %v7469 = vld [vmem:[#allocation8 + $0x2f8] sm:$0xff]
    %v7470 = vld [vmem:[#allocation8 + $0x300] sm:$0xff]
    %v7471 = vld [vmem:[#allocation8 + $0x308] sm:$0xff]
    %v7472 = vld [vmem:[#allocation8 + $0x310] sm:$0xff]
    %v7473 = vld [vmem:[#allocation8 + $0x318] sm:$0xff]
    %v7474 = vld [vmem:[#allocation8 + $0x320] sm:$0xff]
    %v7475 = vld [vmem:[#allocation8 + $0x328] sm:$0xff]
    %v7476 = vld [vmem:[#allocation8 + $0x330] sm:$0xff]
    %v7477 = vld [vmem:[#allocation8 + $0x338] sm:$0xff]
    %v7478 = vld [vmem:[#allocation8 + $0x340] sm:$0xff]
    %v7479 = vld [vmem:[#allocation8 + $0x348] sm:$0xff]
    %v7480 = vld [vmem:[#allocation8 + $0x350] sm:$0xff]
    %v7481 = vld [vmem:[#allocation8 + $0x358] sm:$0xff]
    %v7482 = vld [vmem:[#allocation8 + $0x360] sm:$0xff]
    %v7483 = vld [vmem:[#allocation8 + $0x368] sm:$0xff]
    %v7484 = vld [vmem:[#allocation8 + $0x370] sm:$0xff]
    %v7485 = vld [vmem:[#allocation8 + $0x378] sm:$0xff]
    %v7486 = vld [vmem:[#allocation8 + $0x380] sm:$0xff]
    %v7487 = vld [vmem:[#allocation8 + $0x388] sm:$0xff]
    %v7488 = vld [vmem:[#allocation8 + $0x390] sm:$0xff]
    %v7489 = vld [vmem:[#allocation8 + $0x398] sm:$0xff]
    %v7490 = vld [vmem:[#allocation8 + $0x3a0] sm:$0xff]
    %v7491 = vld [vmem:[#allocation8 + $0x3a8] sm:$0xff]
    %v7492 = vld [vmem:[#allocation8 + $0x3b0] sm:$0xff]
    %v7493 = vld [vmem:[#allocation8 + $0x3b8] sm:$0xff]
    %v7494 = vld [vmem:[#allocation8 + $0x3c0] sm:$0xff]
    %v7495 = vld [vmem:[#allocation8 + $0x3c8] sm:$0xff]
    %v7496 = vld [vmem:[#allocation8 + $0x3d0] sm:$0xff]
    %v7497 = vld [vmem:[#allocation8 + $0x3d8] sm:$0xff]
    %v7498 = vld [vmem:[#allocation8 + $0x3e0] sm:$0xff]
    %v7499 = vld [vmem:[#allocation8 + $0x3e8] sm:$0xff]
    %v7500 = vld [vmem:[#allocation8 + $0x3f0] sm:$0xff]
    %v7501 = vld [vmem:[#allocation8 + $0x3f8] sm:$0xff]
    %v7502 = vld [vmem:[#allocation10] sm:$0xf]
    %v7504 = vperm.slane %v7502, 0
    %v7505 = vperm.slane %v7502, 1
    %v7506 = vperm.slane %v7502, 2
    %v7507 = vperm.slane %v7502, 3
    %v7640 = vunpack.c.l.b16 %v7374
    %v7641 = vunpack.c.h.b16 %v7374
    %v7642 = vunpack.c.l.b16 %v7375
    %v7643 = vunpack.c.h.b16 %v7375
    %v7644 = vunpack.c.l.b16 %v7376
    %v7645 = vunpack.c.h.b16 %v7376
    %v7646 = vunpack.c.l.b16 %v7377
    %v7647 = vunpack.c.h.b16 %v7377
    %v7648 = vunpack.c.l.b16 %v7378
    %v7649 = vunpack.c.h.b16 %v7378
    %v7650 = vunpack.c.l.b16 %v7379
    %v7651 = vunpack.c.h.b16 %v7379
    %v7652 = vunpack.c.l.b16 %v7380
    %v7653 = vunpack.c.h.b16 %v7380
    %v7654 = vunpack.c.l.b16 %v7381
    %v7655 = vunpack.c.h.b16 %v7381
    %v7656 = vunpack.c.l.b16 %v7382
    %v7657 = vunpack.c.h.b16 %v7382
    %v7658 = vunpack.c.l.b16 %v7383
    %v7659 = vunpack.c.h.b16 %v7383
    %v7660 = vunpack.c.l.b16 %v7384
    %v7661 = vunpack.c.h.b16 %v7384
    %v7662 = vunpack.c.l.b16 %v7385
    %v7663 = vunpack.c.h.b16 %v7385
    %v7664 = vunpack.c.l.b16 %v7386
    %v7665 = vunpack.c.h.b16 %v7386
    %v7666 = vunpack.c.l.b16 %v7387
    %v7667 = vunpack.c.h.b16 %v7387
    %v7668 = vunpack.c.l.b16 %v7388
    %v7669 = vunpack.c.h.b16 %v7388
    %v7670 = vunpack.c.l.b16 %v7389
    %v7671 = vunpack.c.h.b16 %v7389
    %v7672 = vunpack.c.l.b16 %v7390
    %v7673 = vunpack.c.h.b16 %v7390
    %v7674 = vunpack.c.l.b16 %v7391
    %v7675 = vunpack.c.h.b16 %v7391
    %v7676 = vunpack.c.l.b16 %v7392
    %v7677 = vunpack.c.h.b16 %v7392
    %v7678 = vunpack.c.l.b16 %v7393
    %v7679 = vunpack.c.h.b16 %v7393
    %v7680 = vunpack.c.l.b16 %v7394
    %v7681 = vunpack.c.h.b16 %v7394
    %v7682 = vunpack.c.l.b16 %v7395
    %v7683 = vunpack.c.h.b16 %v7395
    %v7684 = vunpack.c.l.b16 %v7396
    %v7685 = vunpack.c.h.b16 %v7396
    %v7686 = vunpack.c.l.b16 %v7397
    %v7687 = vunpack.c.h.b16 %v7397
    %v7688 = vunpack.c.l.b16 %v7398
    %v7689 = vunpack.c.h.b16 %v7398
    %v7690 = vunpack.c.l.b16 %v7399
    %v7691 = vunpack.c.h.b16 %v7399
    %v7692 = vunpack.c.l.b16 %v7400
    %v7693 = vunpack.c.h.b16 %v7400
    %v7694 = vunpack.c.l.b16 %v7401
    %v7695 = vunpack.c.h.b16 %v7401
    %v7696 = vunpack.c.l.b16 %v7402
    %v7697 = vunpack.c.h.b16 %v7402
    %v7698 = vunpack.c.l.b16 %v7403
    %v7699 = vunpack.c.h.b16 %v7403
    %v7700 = vunpack.c.l.b16 %v7404
    %v7701 = vunpack.c.h.b16 %v7404
    %v7702 = vunpack.c.l.b16 %v7405
    %v7703 = vunpack.c.h.b16 %v7405
    %v7704 = vunpack.c.l.b16 %v7406
    %v7705 = vunpack.c.h.b16 %v7406
    %v7706 = vunpack.c.l.b16 %v7407
    %v7707 = vunpack.c.h.b16 %v7407
    %v7708 = vunpack.c.l.b16 %v7408
    %v7709 = vunpack.c.h.b16 %v7408
    %v7710 = vunpack.c.l.b16 %v7409
    %v7711 = vunpack.c.h.b16 %v7409
    %v7712 = vunpack.c.l.b16 %v7410
    %v7713 = vunpack.c.h.b16 %v7410
    %v7714 = vunpack.c.l.b16 %v7411
    %v7715 = vunpack.c.h.b16 %v7411
    %v7716 = vunpack.c.l.b16 %v7412
    %v7717 = vunpack.c.h.b16 %v7412
    %v7718 = vunpack.c.l.b16 %v7413
    %v7719 = vunpack.c.h.b16 %v7413
    %v7720 = vunpack.c.l.b16 %v7414
    %v7721 = vunpack.c.h.b16 %v7414
    %v7722 = vunpack.c.l.b16 %v7415
    %v7723 = vunpack.c.h.b16 %v7415
    %v7724 = vunpack.c.l.b16 %v7416
    %v7725 = vunpack.c.h.b16 %v7416
    %v7726 = vunpack.c.l.b16 %v7417
    %v7727 = vunpack.c.h.b16 %v7417
    %v7728 = vunpack.c.l.b16 %v7418
    %v7729 = vunpack.c.h.b16 %v7418
    %v7730 = vunpack.c.l.b16 %v7419
    %v7731 = vunpack.c.h.b16 %v7419
    %v7732 = vunpack.c.l.b16 %v7420
    %v7733 = vunpack.c.h.b16 %v7420
    %v7734 = vunpack.c.l.b16 %v7421
    %v7735 = vunpack.c.h.b16 %v7421
    %v7736 = vunpack.c.l.b16 %v7422
    %v7737 = vunpack.c.h.b16 %v7422
    %v7738 = vunpack.c.l.b16 %v7423
    %v7739 = vunpack.c.h.b16 %v7423
    %v7740 = vunpack.c.l.b16 %v7424
    %v7741 = vunpack.c.h.b16 %v7424
    %v7742 = vunpack.c.l.b16 %v7425
    %v7743 = vunpack.c.h.b16 %v7425
    %v7744 = vunpack.c.l.b16 %v7426
    %v7745 = vunpack.c.h.b16 %v7426
    %v7746 = vunpack.c.l.b16 %v7427
    %v7747 = vunpack.c.h.b16 %v7427
    %v7748 = vunpack.c.l.b16 %v7428
    %v7749 = vunpack.c.h.b16 %v7428
    %v7750 = vunpack.c.l.b16 %v7429
    %v7751 = vunpack.c.h.b16 %v7429
    %v7752 = vunpack.c.l.b16 %v7430
    %v7753 = vunpack.c.h.b16 %v7430
    %v7754 = vunpack.c.l.b16 %v7431
    %v7755 = vunpack.c.h.b16 %v7431
    %v7756 = vunpack.c.l.b16 %v7432
    %v7757 = vunpack.c.h.b16 %v7432
    %v7758 = vunpack.c.l.b16 %v7433
    %v7759 = vunpack.c.h.b16 %v7433
    %v7760 = vunpack.c.l.b16 %v7434
    %v7761 = vunpack.c.h.b16 %v7434
    %v7762 = vunpack.c.l.b16 %v7435
    %v7763 = vunpack.c.h.b16 %v7435
    %v7764 = vunpack.c.l.b16 %v7436
    %v7765 = vunpack.c.h.b16 %v7436
    %v7766 = vunpack.c.l.b16 %v7437
    %v7767 = vunpack.c.h.b16 %v7437
    %v7768 = vunpack.c.l.b16 %v7438
    %v7769 = vunpack.c.h.b16 %v7438
    %v7770 = vunpack.c.l.b16 %v7439
    %v7771 = vunpack.c.h.b16 %v7439
    %v7772 = vunpack.c.l.b16 %v7440
    %v7773 = vunpack.c.h.b16 %v7440
    %v7774 = vunpack.c.l.b16 %v7441
    %v7775 = vunpack.c.h.b16 %v7441
    %v7776 = vunpack.c.l.b16 %v7442
    %v7777 = vunpack.c.h.b16 %v7442
    %v7778 = vunpack.c.l.b16 %v7443
    %v7779 = vunpack.c.h.b16 %v7443
    %v7780 = vunpack.c.l.b16 %v7444
    %v7781 = vunpack.c.h.b16 %v7444
    %v7782 = vunpack.c.l.b16 %v7445
    %v7783 = vunpack.c.h.b16 %v7445
    %v7784 = vunpack.c.l.b16 %v7446
    %v7785 = vunpack.c.h.b16 %v7446
    %v7786 = vunpack.c.l.b16 %v7447
    %v7787 = vunpack.c.h.b16 %v7447
    %v7788 = vunpack.c.l.b16 %v7448
    %v7789 = vunpack.c.h.b16 %v7448
    %v7790 = vunpack.c.l.b16 %v7449
    %v7791 = vunpack.c.h.b16 %v7449
    %v7792 = vunpack.c.l.b16 %v7450
    %v7793 = vunpack.c.h.b16 %v7450
    %v7794 = vunpack.c.l.b16 %v7451
    %v7795 = vunpack.c.h.b16 %v7451
    %v7796 = vunpack.c.l.b16 %v7452
    %v7797 = vunpack.c.h.b16 %v7452
    %v7798 = vunpack.c.l.b16 %v7453
    %v7799 = vunpack.c.h.b16 %v7453
    %v7800 = vunpack.c.l.b16 %v7454
    %v7801 = vunpack.c.h.b16 %v7454
    %v7802 = vunpack.c.l.b16 %v7455
    %v7803 = vunpack.c.h.b16 %v7455
    %v7804 = vunpack.c.l.b16 %v7456
    %v7805 = vunpack.c.h.b16 %v7456
    %v7806 = vunpack.c.l.b16 %v7457
    %v7807 = vunpack.c.h.b16 %v7457
    %v7808 = vunpack.c.l.b16 %v7458
    %v7809 = vunpack.c.h.b16 %v7458
    %v7810 = vunpack.c.l.b16 %v7459
    %v7811 = vunpack.c.h.b16 %v7459
    %v7812 = vunpack.c.l.b16 %v7460
    %v7813 = vunpack.c.h.b16 %v7460
    %v7814 = vunpack.c.l.b16 %v7461
    %v7815 = vunpack.c.h.b16 %v7461
    %v7816 = vunpack.c.l.b16 %v7462
    %v7817 = vunpack.c.h.b16 %v7462
    %v7818 = vunpack.c.l.b16 %v7463
    %v7819 = vunpack.c.h.b16 %v7463
    %v7820 = vunpack.c.l.b16 %v7464
    %v7821 = vunpack.c.h.b16 %v7464
    %v7822 = vunpack.c.l.b16 %v7465
    %v7823 = vunpack.c.h.b16 %v7465
    %v7824 = vunpack.c.l.b16 %v7466
    %v7825 = vunpack.c.h.b16 %v7466
    %v7826 = vunpack.c.l.b16 %v7467
    %v7827 = vunpack.c.h.b16 %v7467
    %v7828 = vunpack.c.l.b16 %v7468
    %v7829 = vunpack.c.h.b16 %v7468
    %v7830 = vunpack.c.l.b16 %v7469
    %v7831 = vunpack.c.h.b16 %v7469
    %v7832 = vunpack.c.l.b16 %v7470
    %v7833 = vunpack.c.h.b16 %v7470
    %v7834 = vunpack.c.l.b16 %v7471
    %v7835 = vunpack.c.h.b16 %v7471
    %v7836 = vunpack.c.l.b16 %v7472
    %v7837 = vunpack.c.h.b16 %v7472
    %v7838 = vunpack.c.l.b16 %v7473
    %v7839 = vunpack.c.h.b16 %v7473
    %v7840 = vunpack.c.l.b16 %v7474
    %v7841 = vunpack.c.h.b16 %v7474
    %v7842 = vunpack.c.l.b16 %v7475
    %v7843 = vunpack.c.h.b16 %v7475
    %v7844 = vunpack.c.l.b16 %v7476
    %v7845 = vunpack.c.h.b16 %v7476
    %v7846 = vunpack.c.l.b16 %v7477
    %v7847 = vunpack.c.h.b16 %v7477
    %v7848 = vunpack.c.l.b16 %v7478
    %v7849 = vunpack.c.h.b16 %v7478
    %v7850 = vunpack.c.l.b16 %v7479
    %v7851 = vunpack.c.h.b16 %v7479
    %v7852 = vunpack.c.l.b16 %v7480
    %v7853 = vunpack.c.h.b16 %v7480
    %v7854 = vunpack.c.l.b16 %v7481
    %v7855 = vunpack.c.h.b16 %v7481
    %v7856 = vunpack.c.l.b16 %v7482
    %v7857 = vunpack.c.h.b16 %v7482
    %v7858 = vunpack.c.l.b16 %v7483
    %v7859 = vunpack.c.h.b16 %v7483
    %v7860 = vunpack.c.l.b16 %v7484
    %v7861 = vunpack.c.h.b16 %v7484
    %v7862 = vunpack.c.l.b16 %v7485
    %v7863 = vunpack.c.h.b16 %v7485
    %v7864 = vunpack.c.l.b16 %v7486
    %v7865 = vunpack.c.h.b16 %v7486
    %v7866 = vunpack.c.l.b16 %v7487
    %v7867 = vunpack.c.h.b16 %v7487
    %v7868 = vunpack.c.l.b16 %v7488
    %v7869 = vunpack.c.h.b16 %v7488
    %v7870 = vunpack.c.l.b16 %v7489
    %v7871 = vunpack.c.h.b16 %v7489
    %v7872 = vunpack.c.l.b16 %v7490
    %v7873 = vunpack.c.h.b16 %v7490
    %v7874 = vunpack.c.l.b16 %v7491
    %v7875 = vunpack.c.h.b16 %v7491
    %v7876 = vunpack.c.l.b16 %v7492
    %v7877 = vunpack.c.h.b16 %v7492
    %v7878 = vunpack.c.l.b16 %v7493
    %v7879 = vunpack.c.h.b16 %v7493
    %v7880 = vunpack.c.l.b16 %v7494
    %v7881 = vunpack.c.h.b16 %v7494
    %v7882 = vunpack.c.l.b16 %v7495
    %v7883 = vunpack.c.h.b16 %v7495
    %v7884 = vunpack.c.l.b16 %v7496
    %v7885 = vunpack.c.h.b16 %v7496
    %v7886 = vunpack.c.l.b16 %v7497
    %v7887 = vunpack.c.h.b16 %v7497
    %v7888 = vunpack.c.l.b16 %v7498
    %v7889 = vunpack.c.h.b16 %v7498
    %v7890 = vunpack.c.l.b16 %v7499
    %v7891 = vunpack.c.h.b16 %v7499
    %v7892 = vunpack.c.l.b16 %v7500
    %v7893 = vunpack.c.h.b16 %v7500
    %v7894 = vunpack.c.l.b16 %v7501
    %v7895 = vunpack.c.h.b16 %v7501
    %v7896 = vpack.c.b16 %v7644, %v7640
    %v7897 = vpack.c.b16 %v7645, %v7641
    %v7898 = vpack.c.b16 %v7646, %v7642
    %v7899 = vpack.c.b16 %v7647, %v7643
    %v7900 = vpack.c.b16 %v7652, %v7648
    %v7901 = vpack.c.b16 %v7653, %v7649
    %v7902 = vpack.c.b16 %v7654, %v7650
    %v7903 = vpack.c.b16 %v7655, %v7651
    %v7904 = vpack.c.b16 %v7660, %v7656
    %v7905 = vpack.c.b16 %v7661, %v7657
    %v7906 = vpack.c.b16 %v7662, %v7658
    %v7907 = vpack.c.b16 %v7663, %v7659
    %v7908 = vpack.c.b16 %v7668, %v7664
    %v7909 = vpack.c.b16 %v7669, %v7665
    %v7910 = vpack.c.b16 %v7670, %v7666
    %v7911 = vpack.c.b16 %v7671, %v7667
    %v7912 = vpack.c.b16 %v7676, %v7672
    %v7913 = vpack.c.b16 %v7677, %v7673
    %v7914 = vpack.c.b16 %v7678, %v7674
    %v7915 = vpack.c.b16 %v7679, %v7675
    %v7916 = vpack.c.b16 %v7684, %v7680
    %v7917 = vpack.c.b16 %v7685, %v7681
    %v7918 = vpack.c.b16 %v7686, %v7682
    %v7919 = vpack.c.b16 %v7687, %v7683
    %v7920 = vpack.c.b16 %v7692, %v7688
    %v7921 = vpack.c.b16 %v7693, %v7689
    %v7922 = vpack.c.b16 %v7694, %v7690
    %v7923 = vpack.c.b16 %v7695, %v7691
    %v7924 = vpack.c.b16 %v7700, %v7696
    %v7925 = vpack.c.b16 %v7701, %v7697
    %v7926 = vpack.c.b16 %v7702, %v7698
    %v7927 = vpack.c.b16 %v7703, %v7699
    %v7928 = vpack.c.b16 %v7708, %v7704
    %v7929 = vpack.c.b16 %v7709, %v7705
    %v7930 = vpack.c.b16 %v7710, %v7706
    %v7931 = vpack.c.b16 %v7711, %v7707
    %v7932 = vpack.c.b16 %v7716, %v7712
    %v7933 = vpack.c.b16 %v7717, %v7713
    %v7934 = vpack.c.b16 %v7718, %v7714
    %v7935 = vpack.c.b16 %v7719, %v7715
    %v7936 = vpack.c.b16 %v7724, %v7720
    %v7937 = vpack.c.b16 %v7725, %v7721
    %v7938 = vpack.c.b16 %v7726, %v7722
    %v7939 = vpack.c.b16 %v7727, %v7723
    %v7940 = vpack.c.b16 %v7732, %v7728
    %v7941 = vpack.c.b16 %v7733, %v7729
    %v7942 = vpack.c.b16 %v7734, %v7730
    %v7943 = vpack.c.b16 %v7735, %v7731
    %v7944 = vpack.c.b16 %v7740, %v7736
    %v7945 = vpack.c.b16 %v7741, %v7737
    %v7946 = vpack.c.b16 %v7742, %v7738
    %v7947 = vpack.c.b16 %v7743, %v7739
    %v7948 = vpack.c.b16 %v7748, %v7744
    %v7949 = vpack.c.b16 %v7749, %v7745
    %v7950 = vpack.c.b16 %v7750, %v7746
    %v7951 = vpack.c.b16 %v7751, %v7747
    %v7952 = vpack.c.b16 %v7756, %v7752
    %v7953 = vpack.c.b16 %v7757, %v7753
    %v7954 = vpack.c.b16 %v7758, %v7754
    %v7955 = vpack.c.b16 %v7759, %v7755
    %v7956 = vpack.c.b16 %v7764, %v7760
    %v7957 = vpack.c.b16 %v7765, %v7761
    %v7958 = vpack.c.b16 %v7766, %v7762
    %v7959 = vpack.c.b16 %v7767, %v7763
    %v7960 = vpack.c.b16 %v7772, %v7768
    %v7961 = vpack.c.b16 %v7773, %v7769
    %v7962 = vpack.c.b16 %v7774, %v7770
    %v7963 = vpack.c.b16 %v7775, %v7771
    %v7964 = vpack.c.b16 %v7780, %v7776
    %v7965 = vpack.c.b16 %v7781, %v7777
    %v7966 = vpack.c.b16 %v7782, %v7778
    %v7967 = vpack.c.b16 %v7783, %v7779
    %v7968 = vpack.c.b16 %v7788, %v7784
    %v7969 = vpack.c.b16 %v7789, %v7785
    %v7970 = vpack.c.b16 %v7790, %v7786
    %v7971 = vpack.c.b16 %v7791, %v7787
    %v7972 = vpack.c.b16 %v7796, %v7792
    %v7973 = vpack.c.b16 %v7797, %v7793
    %v7974 = vpack.c.b16 %v7798, %v7794
    %v7975 = vpack.c.b16 %v7799, %v7795
    %v7976 = vpack.c.b16 %v7804, %v7800
    %v7977 = vpack.c.b16 %v7805, %v7801
    %v7978 = vpack.c.b16 %v7806, %v7802
    %v7979 = vpack.c.b16 %v7807, %v7803
    %v7980 = vpack.c.b16 %v7812, %v7808
    %v7981 = vpack.c.b16 %v7813, %v7809
    %v7982 = vpack.c.b16 %v7814, %v7810
    %v7983 = vpack.c.b16 %v7815, %v7811
    %v7984 = vpack.c.b16 %v7820, %v7816
    %v7985 = vpack.c.b16 %v7821, %v7817
    %v7986 = vpack.c.b16 %v7822, %v7818
    %v7987 = vpack.c.b16 %v7823, %v7819
    %v7988 = vpack.c.b16 %v7828, %v7824
    %v7989 = vpack.c.b16 %v7829, %v7825
    %v7990 = vpack.c.b16 %v7830, %v7826
    %v7991 = vpack.c.b16 %v7831, %v7827
    %v7992 = vpack.c.b16 %v7836, %v7832
    %v7993 = vpack.c.b16 %v7837, %v7833
    %v7994 = vpack.c.b16 %v7838, %v7834
    %v7995 = vpack.c.b16 %v7839, %v7835
    %v7996 = vpack.c.b16 %v7844, %v7840
    %v7997 = vpack.c.b16 %v7845, %v7841
    %v7998 = vpack.c.b16 %v7846, %v7842
    %v7999 = vpack.c.b16 %v7847, %v7843
    %v8000 = vpack.c.b16 %v7852, %v7848
    %v8001 = vpack.c.b16 %v7853, %v7849
    %v8002 = vpack.c.b16 %v7854, %v7850
    %v8003 = vpack.c.b16 %v7855, %v7851
    %v8004 = vpack.c.b16 %v7860, %v7856
    %v8005 = vpack.c.b16 %v7861, %v7857
    %v8006 = vpack.c.b16 %v7862, %v7858
    %v8007 = vpack.c.b16 %v7863, %v7859
    %v8008 = vpack.c.b16 %v7868, %v7864
    %v8009 = vpack.c.b16 %v7869, %v7865
    %v8010 = vpack.c.b16 %v7870, %v7866
    %v8011 = vpack.c.b16 %v7871, %v7867
    %v8012 = vpack.c.b16 %v7876, %v7872
    %v8013 = vpack.c.b16 %v7877, %v7873
    %v8014 = vpack.c.b16 %v7878, %v7874
    %v8015 = vpack.c.b16 %v7879, %v7875
    %v8016 = vpack.c.b16 %v7884, %v7880
    %v8017 = vpack.c.b16 %v7885, %v7881
    %v8018 = vpack.c.b16 %v7886, %v7882
    %v8019 = vpack.c.b16 %v7887, %v7883
    %v8020 = vpack.c.b16 %v7892, %v7888
    %v8021 = vpack.c.b16 %v7893, %v7889
    %v8022 = vpack.c.b16 %v7894, %v7890
    %v8023 = vpack.c.b16 %v7895, %v7891
    %8152 = vmatpush.bf16.msra.mxu0 %v7924
    %8153 = vmatpush.bf16.msra.mxu0 %v7920
    %8154 = vmatpush.bf16.msra.mxu0 %v7916
    %8155 = vmatpush.bf16.msra.mxu0 %v7912
    %8156 = vmatpush.bf16.msra.mxu0 %v7908
    %8157 = vmatpush.bf16.msra.mxu0 %v7904
    %8158 = vmatpush.bf16.msra.mxu0 %v7900
    %8159 = vmatpush.bf16.msra.mxu0 %v7896
    %8160 = vmatmul.bf16.gmra.mxu0 %v7370
    %v8161 = vpop.f32.mrf.mxu0
    %v8162 = vadd.f32 %v7504, %v8161
    %v8163 = vpop.f32.mrf.mxu0
    %8164 = vdwg.mxu0
    %8165 = vmatpush.bf16.msra.mxu0 %v7956
    %8166 = vmatpush.bf16.msra.mxu0 %v7952
    %8167 = vmatpush.bf16.msra.mxu0 %v7948
    %8168 = vmatpush.bf16.msra.mxu0 %v7944
    %8169 = vmatpush.bf16.msra.mxu0 %v7940
    %8170 = vmatpush.bf16.msra.mxu0 %v7936
    %8171 = vmatpush.bf16.msra.mxu0 %v7932
    %8172 = vmatpush.bf16.msra.mxu0 %v7928
    %8173 = vmatmul.bf16.gmra.mxu0 %v7371
    %v8174 = vpop.f32.mrf.mxu0
    %v8175 = vadd.f32 %v8162, %v8174
    %v8176 = vpop.f32.mrf.mxu0
    %8177 = vdwg.mxu0
    %8178 = vmatpush.bf16.msra.mxu0 %v7988
    %8179 = vmatpush.bf16.msra.mxu0 %v7984
    %8180 = vmatpush.bf16.msra.mxu0 %v7980
    %8181 = vmatpush.bf16.msra.mxu0 %v7976
    %8182 = vmatpush.bf16.msra.mxu0 %v7972
    %8183 = vmatpush.bf16.msra.mxu0 %v7968
    %8184 = vmatpush.bf16.msra.mxu0 %v7964
    %8185 = vmatpush.bf16.msra.mxu0 %v7960
    %8186 = vmatmul.bf16.gmra.mxu0 %v7372
    %v8187 = vpop.f32.mrf.mxu0
    %v8188 = vadd.f32 %v8175, %v8187
    %v8189 = vpop.f32.mrf.mxu0
    %8190 = vdwg.mxu0
    %8191 = vmatpush.bf16.msra.mxu0 %v8020
    %8192 = vmatpush.bf16.msra.mxu0 %v8016
    %8193 = vmatpush.bf16.msra.mxu0 %v8012
    %8194 = vmatpush.bf16.msra.mxu0 %v8008
    %8195 = vmatpush.bf16.msra.mxu0 %v8004
    %8196 = vmatpush.bf16.msra.mxu0 %v8000
    %8197 = vmatpush.bf16.msra.mxu0 %v7996
    %8198 = vmatpush.bf16.msra.mxu0 %v7992
    %8199 = vmatmul.bf16.gmra.mxu0 %v7373
    %v8200 = vpop.f32.mrf.mxu0
    %v8201 = vadd.f32 %v8188, %v8200
    %v8202 = vpop.f32.mrf.mxu0
    %8203 = vdwg.mxu0
    %8204 = vmatpush.bf16.msra.mxu0 %v7925
    %8205 = vmatpush.bf16.msra.mxu0 %v7921
    %8206 = vmatpush.bf16.msra.mxu0 %v7917
    %8207 = vmatpush.bf16.msra.mxu0 %v7913
    %8208 = vmatpush.bf16.msra.mxu0 %v7909
    %8209 = vmatpush.bf16.msra.mxu0 %v7905
    %8210 = vmatpush.bf16.msra.mxu0 %v7901
    %8211 = vmatpush.bf16.msra.mxu0 %v7897
    %8212 = vmatmul.bf16.gmra.mxu0 %v7370
    %v8213 = vpop.f32.mrf.mxu0
    %v8214 = vadd.f32 %v7505, %v8213
    %v8215 = vpop.f32.mrf.mxu0
    %8216 = vdwg.mxu0
    %8217 = vmatpush.bf16.msra.mxu0 %v7957
    %8218 = vmatpush.bf16.msra.mxu0 %v7953
    %8219 = vmatpush.bf16.msra.mxu0 %v7949
    %8220 = vmatpush.bf16.msra.mxu0 %v7945
    %8221 = vmatpush.bf16.msra.mxu0 %v7941
    %8222 = vmatpush.bf16.msra.mxu0 %v7937
    %8223 = vmatpush.bf16.msra.mxu0 %v7933
    %8224 = vmatpush.bf16.msra.mxu0 %v7929
    %8225 = vmatmul.bf16.gmra.mxu0 %v7371
    %v8226 = vpop.f32.mrf.mxu0
    %v8227 = vadd.f32 %v8214, %v8226
    %v8228 = vpop.f32.mrf.mxu0
    %8229 = vdwg.mxu0
    %8230 = vmatpush.bf16.msra.mxu0 %v7989
    %8231 = vmatpush.bf16.msra.mxu0 %v7985
    %8232 = vmatpush.bf16.msra.mxu0 %v7981
    %8233 = vmatpush.bf16.msra.mxu0 %v7977
    %8234 = vmatpush.bf16.msra.mxu0 %v7973
    %8235 = vmatpush.bf16.msra.mxu0 %v7969
    %8236 = vmatpush.bf16.msra.mxu0 %v7965
    %8237 = vmatpush.bf16.msra.mxu0 %v7961
    %8238 = vmatmul.bf16.gmra.mxu0 %v7372
    %v8239 = vpop.f32.mrf.mxu0
    %v8240 = vadd.f32 %v8227, %v8239
    %v8241 = vpop.f32.mrf.mxu0
    %8242 = vdwg.mxu0
    %8243 = vmatpush.bf16.msra.mxu0 %v8021
    %8244 = vmatpush.bf16.msra.mxu0 %v8017
    %8245 = vmatpush.bf16.msra.mxu0 %v8013
    %8246 = vmatpush.bf16.msra.mxu0 %v8009
    %8247 = vmatpush.bf16.msra.mxu0 %v8005
    %8248 = vmatpush.bf16.msra.mxu0 %v8001
    %8249 = vmatpush.bf16.msra.mxu0 %v7997
    %8250 = vmatpush.bf16.msra.mxu0 %v7993
    %8251 = vmatmul.bf16.gmra.mxu0 %v7373
    %v8252 = vpop.f32.mrf.mxu0
    %v8253 = vadd.f32 %v8240, %v8252
    %v8254 = vpop.f32.mrf.mxu0
    %8255 = vdwg.mxu0
    %8256 = vmatpush.bf16.msra.mxu0 %v7926
    %8257 = vmatpush.bf16.msra.mxu0 %v7922
    %8258 = vmatpush.bf16.msra.mxu0 %v7918
    %8259 = vmatpush.bf16.msra.mxu0 %v7914
    %8260 = vmatpush.bf16.msra.mxu0 %v7910
    %8261 = vmatpush.bf16.msra.mxu0 %v7906
    %8262 = vmatpush.bf16.msra.mxu0 %v7902
    %8263 = vmatpush.bf16.msra.mxu0 %v7898
    %8264 = vmatmul.bf16.gmra.mxu0 %v7370
    %v8265 = vpop.f32.mrf.mxu0
    %v8266 = vadd.f32 %v7506, %v8265
    %v8267 = vpop.f32.mrf.mxu0
    %8268 = vdwg.mxu0
    %8269 = vmatpush.bf16.msra.mxu0 %v7958
    %8270 = vmatpush.bf16.msra.mxu0 %v7954
    %8271 = vmatpush.bf16.msra.mxu0 %v7950
    %8272 = vmatpush.bf16.msra.mxu0 %v7946
    %8273 = vmatpush.bf16.msra.mxu0 %v7942
    %8274 = vmatpush.bf16.msra.mxu0 %v7938
    %8275 = vmatpush.bf16.msra.mxu0 %v7934
    %8276 = vmatpush.bf16.msra.mxu0 %v7930
    %8277 = vmatmul.bf16.gmra.mxu0 %v7371
    %v8278 = vpop.f32.mrf.mxu0
    %v8279 = vadd.f32 %v8266, %v8278
    %v8280 = vpop.f32.mrf.mxu0
    %8281 = vdwg.mxu0
    %8282 = vmatpush.bf16.msra.mxu0 %v7990
    %8283 = vmatpush.bf16.msra.mxu0 %v7986
    %8284 = vmatpush.bf16.msra.mxu0 %v7982
    %8285 = vmatpush.bf16.msra.mxu0 %v7978
    %8286 = vmatpush.bf16.msra.mxu0 %v7974
    %8287 = vmatpush.bf16.msra.mxu0 %v7970
    %8288 = vmatpush.bf16.msra.mxu0 %v7966
    %8289 = vmatpush.bf16.msra.mxu0 %v7962
    %8290 = vmatmul.bf16.gmra.mxu0 %v7372
    %v8291 = vpop.f32.mrf.mxu0
    %v8292 = vadd.f32 %v8279, %v8291
    %v8293 = vpop.f32.mrf.mxu0
    %8294 = vdwg.mxu0
    %8295 = vmatpush.bf16.msra.mxu0 %v8022
    %8296 = vmatpush.bf16.msra.mxu0 %v8018
    %8297 = vmatpush.bf16.msra.mxu0 %v8014
    %8298 = vmatpush.bf16.msra.mxu0 %v8010
    %8299 = vmatpush.bf16.msra.mxu0 %v8006
    %8300 = vmatpush.bf16.msra.mxu0 %v8002
    %8301 = vmatpush.bf16.msra.mxu0 %v7998
    %8302 = vmatpush.bf16.msra.mxu0 %v7994
    %8303 = vmatmul.bf16.gmra.mxu0 %v7373
    %v8304 = vpop.f32.mrf.mxu0
    %v8305 = vadd.f32 %v8292, %v8304
    %v8306 = vpop.f32.mrf.mxu0
    %8307 = vdwg.mxu0
    %8308 = vmatpush.bf16.msra.mxu0 %v7927
    %8309 = vmatpush.bf16.msra.mxu0 %v7923
    %8310 = vmatpush.bf16.msra.mxu0 %v7919
    %8311 = vmatpush.bf16.msra.mxu0 %v7915
    %8312 = vmatpush.bf16.msra.mxu0 %v7911
    %8313 = vmatpush.bf16.msra.mxu0 %v7907
    %8314 = vmatpush.bf16.msra.mxu0 %v7903
    %8315 = vmatpush.bf16.msra.mxu0 %v7899
    %8316 = vmatmul.bf16.gmra.mxu0 %v7370
    %v8317 = vpop.f32.mrf.mxu0
    %v8318 = vadd.f32 %v7507, %v8317
    %v8319 = vpop.f32.mrf.mxu0
    %8320 = vdwg.mxu0
    %8321 = vmatpush.bf16.msra.mxu0 %v7959
    %8322 = vmatpush.bf16.msra.mxu0 %v7955
    %8323 = vmatpush.bf16.msra.mxu0 %v7951
    %8324 = vmatpush.bf16.msra.mxu0 %v7947
    %8325 = vmatpush.bf16.msra.mxu0 %v7943
    %8326 = vmatpush.bf16.msra.mxu0 %v7939
    %8327 = vmatpush.bf16.msra.mxu0 %v7935
    %8328 = vmatpush.bf16.msra.mxu0 %v7931
    %8329 = vmatmul.bf16.gmra.mxu0 %v7371
    %v8330 = vpop.f32.mrf.mxu0
    %v8331 = vadd.f32 %v8318, %v8330
    %v8332 = vpop.f32.mrf.mxu0
    %8333 = vdwg.mxu0
    %8334 = vmatpush.bf16.msra.mxu0 %v7991
    %8335 = vmatpush.bf16.msra.mxu0 %v7987
    %8336 = vmatpush.bf16.msra.mxu0 %v7983
    %8337 = vmatpush.bf16.msra.mxu0 %v7979
    %8338 = vmatpush.bf16.msra.mxu0 %v7975
    %8339 = vmatpush.bf16.msra.mxu0 %v7971
    %8340 = vmatpush.bf16.msra.mxu0 %v7967
    %8341 = vmatpush.bf16.msra.mxu0 %v7963
    %8342 = vmatmul.bf16.gmra.mxu0 %v7372
    %v8343 = vpop.f32.mrf.mxu0
    %v8344 = vadd.f32 %v8331, %v8343
    %v8345 = vpop.f32.mrf.mxu0
    %8346 = vdwg.mxu0
    %8347 = vmatpush.bf16.msra.mxu0 %v8023
    %8348 = vmatpush.bf16.msra.mxu0 %v8019
    %8349 = vmatpush.bf16.msra.mxu0 %v8015
    %8350 = vmatpush.bf16.msra.mxu0 %v8011
    %8351 = vmatpush.bf16.msra.mxu0 %v8007
    %8352 = vmatpush.bf16.msra.mxu0 %v8003
    %8353 = vmatpush.bf16.msra.mxu0 %v7999
    %8354 = vmatpush.bf16.msra.mxu0 %v7995
    %8355 = vmatmul.bf16.gmra.mxu0 %v7373
    %v8356 = vpop.f32.mrf.mxu0
    %v8357 = vadd.f32 %v8344, %v8356
    %v8358 = vpop.f32.mrf.mxu0
    %8359 = vdwg.mxu0
    %v8360 = vmax.f32 %v8201, 0.0
    %v8361 = vmax.f32 %v8253, 0.0
    %v8362 = vmax.f32 %v8305, 0.0
    %v8363 = vmax.f32 %v8357, 0.0
    %v8364 = vpack.c.bf16 %v8360, %v8360
    %v8365 = vpack.c.bf16 %v8361, %v8361
    %v8366 = vpack.c.bf16 %v8362, %v8362
    %v8367 = vpack.c.bf16 %v8363, %v8363
    %v8368 = vld [vmem:[#allocation11] sm:$0xf]
    %v8369 = vld [vmem:[#allocation11 + $0x4] sm:$0xf]
    %v8370 = vld [vmem:[#allocation11 + $0x8] sm:$0xf]
    %v8371 = vld [vmem:[#allocation11 + $0xc] sm:$0xf]
    %v8372 = vld [vmem:[#allocation11 + $0x10] sm:$0xf]
    %v8373 = vld [vmem:[#allocation11 + $0x14] sm:$0xf]
    %v8374 = vld [vmem:[#allocation11 + $0x18] sm:$0xf]
    %v8375 = vld [vmem:[#allocation11 + $0x1c] sm:$0xf]
    %v8376 = vld [vmem:[#allocation11 + $0x20] sm:$0xf]
    %v8377 = vld [vmem:[#allocation11 + $0x24] sm:$0xf]
    %v8378 = vld [vmem:[#allocation11 + $0x28] sm:$0xf]
    %v8379 = vld [vmem:[#allocation11 + $0x2c] sm:$0xf]
    %v8380 = vld [vmem:[#allocation11 + $0x30] sm:$0xf]
    %v8381 = vld [vmem:[#allocation11 + $0x34] sm:$0xf]
    %v8382 = vld [vmem:[#allocation11 + $0x38] sm:$0xf]
    %v8383 = vld [vmem:[#allocation11 + $0x3c] sm:$0xf]
    %v8384 = vld [vmem:[#allocation11 + $0x40] sm:$0xf]
    %v8385 = vld [vmem:[#allocation11 + $0x44] sm:$0xf]
    %v8386 = vld [vmem:[#allocation11 + $0x48] sm:$0xf]
    %v8387 = vld [vmem:[#allocation11 + $0x4c] sm:$0xf]
    %v8388 = vld [vmem:[#allocation11 + $0x50] sm:$0xf]
    %v8389 = vld [vmem:[#allocation11 + $0x54] sm:$0xf]
    %v8390 = vld [vmem:[#allocation11 + $0x58] sm:$0xf]
    %v8391 = vld [vmem:[#allocation11 + $0x5c] sm:$0xf]
    %v8392 = vld [vmem:[#allocation11 + $0x60] sm:$0xf]
    %v8393 = vld [vmem:[#allocation11 + $0x64] sm:$0xf]
    %v8394 = vld [vmem:[#allocation11 + $0x68] sm:$0xf]
    %v8395 = vld [vmem:[#allocation11 + $0x6c] sm:$0xf]
    %v8396 = vld [vmem:[#allocation11 + $0x70] sm:$0xf]
    %v8397 = vld [vmem:[#allocation11 + $0x74] sm:$0xf]
    %v8398 = vld [vmem:[#allocation11 + $0x78] sm:$0xf]
    %v8399 = vld [vmem:[#allocation11 + $0x7c] sm:$0xf]
    %v8400 = vld [vmem:[#allocation11 + $0x80] sm:$0xf]
    %v8401 = vld [vmem:[#allocation11 + $0x84] sm:$0xf]
    %v8402 = vld [vmem:[#allocation11 + $0x88] sm:$0xf]
    %v8403 = vld [vmem:[#allocation11 + $0x8c] sm:$0xf]
    %v8404 = vld [vmem:[#allocation11 + $0x90] sm:$0xf]
    %v8405 = vld [vmem:[#allocation11 + $0x94] sm:$0xf]
    %v8406 = vld [vmem:[#allocation11 + $0x98] sm:$0xf]
    %v8407 = vld [vmem:[#allocation11 + $0x9c] sm:$0xf]
    %v8408 = vld [vmem:[#allocation11 + $0xa0] sm:$0xf]
    %v8409 = vld [vmem:[#allocation11 + $0xa4] sm:$0xf]
    %v8410 = vld [vmem:[#allocation11 + $0xa8] sm:$0xf]
    %v8411 = vld [vmem:[#allocation11 + $0xac] sm:$0xf]
    %v8412 = vld [vmem:[#allocation11 + $0xb0] sm:$0xf]
    %v8413 = vld [vmem:[#allocation11 + $0xb4] sm:$0xf]
    %v8414 = vld [vmem:[#allocation11 + $0xb8] sm:$0xf]
    %v8415 = vld [vmem:[#allocation11 + $0xbc] sm:$0xf]
    %v8416 = vld [vmem:[#allocation11 + $0xc0] sm:$0xf]
    %v8417 = vld [vmem:[#allocation11 + $0xc4] sm:$0xf]
    %v8418 = vld [vmem:[#allocation11 + $0xc8] sm:$0xf]
    %v8419 = vld [vmem:[#allocation11 + $0xcc] sm:$0xf]
    %v8420 = vld [vmem:[#allocation11 + $0xd0] sm:$0xf]
    %v8421 = vld [vmem:[#allocation11 + $0xd4] sm:$0xf]
    %v8422 = vld [vmem:[#allocation11 + $0xd8] sm:$0xf]
    %v8423 = vld [vmem:[#allocation11 + $0xdc] sm:$0xf]
    %v8424 = vld [vmem:[#allocation11 + $0xe0] sm:$0xf]
    %v8425 = vld [vmem:[#allocation11 + $0xe4] sm:$0xf]
    %v8426 = vld [vmem:[#allocation11 + $0xe8] sm:$0xf]
    %v8427 = vld [vmem:[#allocation11 + $0xec] sm:$0xf]
    %v8428 = vld [vmem:[#allocation11 + $0xf0] sm:$0xf]
    %v8429 = vld [vmem:[#allocation11 + $0xf4] sm:$0xf]
    %v8430 = vld [vmem:[#allocation11 + $0xf8] sm:$0xf]
    %v8431 = vld [vmem:[#allocation11 + $0xfc] sm:$0xf]
    %v8432 = vld [vmem:[#allocation13] sm:$0x1]
    %v8434 = vperm.slane %v8432, 0
    %v8500 = vunpack.c.l.b16 %v8368
    %v8501 = vunpack.c.l.b16 %v8369
    %v8502 = vunpack.c.l.b16 %v8370
    %v8503 = vunpack.c.l.b16 %v8371
    %v8504 = vunpack.c.l.b16 %v8372
    %v8505 = vunpack.c.l.b16 %v8373
    %v8506 = vunpack.c.l.b16 %v8374
    %v8507 = vunpack.c.l.b16 %v8375
    %v8508 = vunpack.c.l.b16 %v8376
    %v8509 = vunpack.c.l.b16 %v8377
    %v8510 = vunpack.c.l.b16 %v8378
    %v8511 = vunpack.c.l.b16 %v8379
    %v8512 = vunpack.c.l.b16 %v8380
    %v8513 = vunpack.c.l.b16 %v8381
    %v8514 = vunpack.c.l.b16 %v8382
    %v8515 = vunpack.c.l.b16 %v8383
    %v8516 = vunpack.c.l.b16 %v8384
    %v8517 = vunpack.c.l.b16 %v8385
    %v8518 = vunpack.c.l.b16 %v8386
    %v8519 = vunpack.c.l.b16 %v8387
    %v8520 = vunpack.c.l.b16 %v8388
    %v8521 = vunpack.c.l.b16 %v8389
    %v8522 = vunpack.c.l.b16 %v8390
    %v8523 = vunpack.c.l.b16 %v8391
    %v8524 = vunpack.c.l.b16 %v8392
    %v8525 = vunpack.c.l.b16 %v8393
    %v8526 = vunpack.c.l.b16 %v8394
    %v8527 = vunpack.c.l.b16 %v8395
    %v8528 = vunpack.c.l.b16 %v8396
    %v8529 = vunpack.c.l.b16 %v8397
    %v8530 = vunpack.c.l.b16 %v8398
    %v8531 = vunpack.c.l.b16 %v8399
    %v8532 = vunpack.c.l.b16 %v8400
    %v8533 = vunpack.c.l.b16 %v8401
    %v8534 = vunpack.c.l.b16 %v8402
    %v8535 = vunpack.c.l.b16 %v8403
    %v8536 = vunpack.c.l.b16 %v8404
    %v8537 = vunpack.c.l.b16 %v8405
    %v8538 = vunpack.c.l.b16 %v8406
    %v8539 = vunpack.c.l.b16 %v8407
    %v8540 = vunpack.c.l.b16 %v8408
    %v8541 = vunpack.c.l.b16 %v8409
    %v8542 = vunpack.c.l.b16 %v8410
    %v8543 = vunpack.c.l.b16 %v8411
    %v8544 = vunpack.c.l.b16 %v8412
    %v8545 = vunpack.c.l.b16 %v8413
    %v8546 = vunpack.c.l.b16 %v8414
    %v8547 = vunpack.c.l.b16 %v8415
    %v8548 = vunpack.c.l.b16 %v8416
    %v8549 = vunpack.c.l.b16 %v8417
    %v8550 = vunpack.c.l.b16 %v8418
    %v8551 = vunpack.c.l.b16 %v8419
    %v8552 = vunpack.c.l.b16 %v8420
    %v8553 = vunpack.c.l.b16 %v8421
    %v8554 = vunpack.c.l.b16 %v8422
    %v8555 = vunpack.c.l.b16 %v8423
    %v8556 = vunpack.c.l.b16 %v8424
    %v8557 = vunpack.c.l.b16 %v8425
    %v8558 = vunpack.c.l.b16 %v8426
    %v8559 = vunpack.c.l.b16 %v8427
    %v8560 = vunpack.c.l.b16 %v8428
    %v8561 = vunpack.c.l.b16 %v8429
    %v8562 = vunpack.c.l.b16 %v8430
    %v8563 = vunpack.c.l.b16 %v8431
    %v8564 = vpack.c.b16 %v8501, %v8500
    %v8565 = vpack.c.b16 %v8503, %v8502
    %v8566 = vpack.c.b16 %v8505, %v8504
    %v8567 = vpack.c.b16 %v8507, %v8506
    %v8568 = vpack.c.b16 %v8509, %v8508
    %v8569 = vpack.c.b16 %v8511, %v8510
    %v8570 = vpack.c.b16 %v8513, %v8512
    %v8571 = vpack.c.b16 %v8515, %v8514
    %v8572 = vpack.c.b16 %v8517, %v8516
    %v8573 = vpack.c.b16 %v8519, %v8518
    %v8574 = vpack.c.b16 %v8521, %v8520
    %v8575 = vpack.c.b16 %v8523, %v8522
    %v8576 = vpack.c.b16 %v8525, %v8524
    %v8577 = vpack.c.b16 %v8527, %v8526
    %v8578 = vpack.c.b16 %v8529, %v8528
    %v8579 = vpack.c.b16 %v8531, %v8530
    %v8580 = vpack.c.b16 %v8533, %v8532
    %v8581 = vpack.c.b16 %v8535, %v8534
    %v8582 = vpack.c.b16 %v8537, %v8536
    %v8583 = vpack.c.b16 %v8539, %v8538
    %v8584 = vpack.c.b16 %v8541, %v8540
    %v8585 = vpack.c.b16 %v8543, %v8542
    %v8586 = vpack.c.b16 %v8545, %v8544
    %v8587 = vpack.c.b16 %v8547, %v8546
    %v8588 = vpack.c.b16 %v8549, %v8548
    %v8589 = vpack.c.b16 %v8551, %v8550
    %v8590 = vpack.c.b16 %v8553, %v8552
    %v8591 = vpack.c.b16 %v8555, %v8554
    %v8592 = vpack.c.b16 %v8557, %v8556
    %v8593 = vpack.c.b16 %v8559, %v8558
    %v8594 = vpack.c.b16 %v8561, %v8560
    %v8595 = vpack.c.b16 %v8563, %v8562
    %8628 = vmatpush.bf16.msra.mxu0 %v8571
    %8629 = vmatpush.bf16.msra.mxu0 %v8570
    %8630 = vmatpush.bf16.msra.mxu0 %v8569
    %8631 = vmatpush.bf16.msra.mxu0 %v8568
    %8632 = vmatpush.bf16.msra.mxu0 %v8567
    %8633 = vmatpush.bf16.msra.mxu0 %v8566
    %8634 = vmatpush.bf16.msra.mxu0 %v8565
    %8635 = vmatpush.bf16.msra.mxu0 %v8564
    %8636 = vmatmul.bf16.gmra.mxu0 %v8364
    %v8637 = vpop.f32.mrf.mxu0
    %v8638 = vadd.f32 %v8434, %v8637
    %v8639 = vpop.f32.mrf.mxu0
    %8640 = vdwg.mxu0
    %8641 = vmatpush.bf16.msra.mxu0 %v8579
    %8642 = vmatpush.bf16.msra.mxu0 %v8578
    %8643 = vmatpush.bf16.msra.mxu0 %v8577
    %8644 = vmatpush.bf16.msra.mxu0 %v8576
    %8645 = vmatpush.bf16.msra.mxu0 %v8575
    %8646 = vmatpush.bf16.msra.mxu0 %v8574
    %8647 = vmatpush.bf16.msra.mxu0 %v8573
    %8648 = vmatpush.bf16.msra.mxu0 %v8572
    %8649 = vmatmul.bf16.gmra.mxu0 %v8365
    %v8650 = vpop.f32.mrf.mxu0
    %v8651 = vadd.f32 %v8638, %v8650
    %v8652 = vpop.f32.mrf.mxu0
    %8653 = vdwg.mxu0
    %8654 = vmatpush.bf16.msra.mxu0 %v8587
    %8655 = vmatpush.bf16.msra.mxu0 %v8586
    %8656 = vmatpush.bf16.msra.mxu0 %v8585
    %8657 = vmatpush.bf16.msra.mxu0 %v8584
    %8658 = vmatpush.bf16.msra.mxu0 %v8583
    %8659 = vmatpush.bf16.msra.mxu0 %v8582
    %8660 = vmatpush.bf16.msra.mxu0 %v8581
    %8661 = vmatpush.bf16.msra.mxu0 %v8580
    %8662 = vmatmul.bf16.gmra.mxu0 %v8366
    %v8663 = vpop.f32.mrf.mxu0
    %v8664 = vadd.f32 %v8651, %v8663
    %v8665 = vpop.f32.mrf.mxu0
    %8666 = vdwg.mxu0
    %8667 = vmatpush.bf16.msra.mxu0 %v8595
    %8668 = vmatpush.bf16.msra.mxu0 %v8594
    %8669 = vmatpush.bf16.msra.mxu0 %v8593
    %8670 = vmatpush.bf16.msra.mxu0 %v8592
    %8671 = vmatpush.bf16.msra.mxu0 %v8591
    %8672 = vmatpush.bf16.msra.mxu0 %v8590
    %8673 = vmatpush.bf16.msra.mxu0 %v8589
    %8674 = vmatpush.bf16.msra.mxu0 %v8588
    %8675 = vmatmul.bf16.gmra.mxu0 %v8367
    %v8676 = vpop.f32.mrf.mxu0
    %v8677 = vadd.f32 %v8664, %v8676
    %v8678 = vpop.f32.mrf.mxu0
    %8679 = vdwg.mxu0
    %v8680 = vmax.f32 %v8677, 0.0
    %v8681 = vpack.c.bf16 %v8680, %v8680
    %v8682 = vld [vmem:[#allocation14] sm:$0xf]
    %v8683 = vld [vmem:[#allocation14 + $0x4] sm:$0xf]
    %v8684 = vld [vmem:[#allocation14 + $0x8] sm:$0xf]
    %v8685 = vld [vmem:[#allocation14 + $0xc] sm:$0xf]
    %v8686 = vld [vmem:[#allocation14 + $0x10] sm:$0xf]
    %v8687 = vld [vmem:[#allocation14 + $0x14] sm:$0xf]
    %v8688 = vld [vmem:[#allocation14 + $0x18] sm:$0xf]
    %v8689 = vld [vmem:[#allocation14 + $0x1c] sm:$0xf]
    %v8690 = vld [vmem:[#allocation14 + $0x20] sm:$0xf]
    %v8691 = vld [vmem:[#allocation14 + $0x24] sm:$0xf]
    %v8692 = vld [vmem:[#allocation14 + $0x28] sm:$0xf]
    %v8693 = vld [vmem:[#allocation14 + $0x2c] sm:$0xf]
    %v8694 = vld [vmem:[#allocation14 + $0x30] sm:$0xf]
    %v8695 = vld [vmem:[#allocation14 + $0x34] sm:$0xf]
    %v8696 = vld [vmem:[#allocation14 + $0x38] sm:$0xf]
    %v8697 = vld [vmem:[#allocation14 + $0x3c] sm:$0xf]
    %v8698 = vld [vmem:[#allocation16] sm:$0x1]
    %v8700 = vperm.slane %v8698, 0
    %v8718 = vunpack.c.l.b16 %v8682
    %v8719 = vunpack.c.l.b16 %v8683
    %v8720 = vunpack.c.l.b16 %v8684
    %v8721 = vunpack.c.l.b16 %v8685
    %v8722 = vunpack.c.l.b16 %v8686
    %v8723 = vunpack.c.l.b16 %v8687
    %v8724 = vunpack.c.l.b16 %v8688
    %v8725 = vunpack.c.l.b16 %v8689
    %v8726 = vunpack.c.l.b16 %v8690
    %v8727 = vunpack.c.l.b16 %v8691
    %v8728 = vunpack.c.l.b16 %v8692
    %v8729 = vunpack.c.l.b16 %v8693
    %v8730 = vunpack.c.l.b16 %v8694
    %v8731 = vunpack.c.l.b16 %v8695
    %v8732 = vunpack.c.l.b16 %v8696
    %v8733 = vunpack.c.l.b16 %v8697
    %v8734 = vpack.c.b16 %v8719, %v8718
    %v8735 = vpack.c.b16 %v8721, %v8720
    %v8736 = vpack.c.b16 %v8723, %v8722
    %v8737 = vpack.c.b16 %v8725, %v8724
    %v8738 = vpack.c.b16 %v8727, %v8726
    %v8739 = vpack.c.b16 %v8729, %v8728
    %v8740 = vpack.c.b16 %v8731, %v8730
    %v8741 = vpack.c.b16 %v8733, %v8732
    %8750 = vmatpush.bf16.msra.mxu0 %v8741
    %8751 = vmatpush.bf16.msra.mxu0 %v8740
    %8752 = vmatpush.bf16.msra.mxu0 %v8739
    %8753 = vmatpush.bf16.msra.mxu0 %v8738
    %8754 = vmatpush.bf16.msra.mxu0 %v8737
    %8755 = vmatpush.bf16.msra.mxu0 %v8736
    %8756 = vmatpush.bf16.msra.mxu0 %v8735
    %8757 = vmatpush.bf16.msra.mxu0 %v8734
    %8758 = vmatmul.bf16.gmra.mxu0 %v8681
    %v8759 = vpop.f32.mrf.mxu0
    %v8760 = vadd.f32 %v8700, %v8759
    %v8761 = vpop.f32.mrf.mxu0
    %8762 = vdwg.mxu0
    %vm8763 = vcmp.gt.f32.partialorder %v8760, 0.0
    %v8764 = vsel %vm8763, 1, 0
    %v8765 = vcvt.s32.f32 %v8764
    %8766 = vst [vmem:[#allocation17] sm:$0xff] %v8765
    // Predicated region
    $region74: #{tpu_custom_call.1} parent=1 // pred_check
      _
    $region75: #{tpu_custom_call.1} parent=1 // pred_check_branch
      %8768 = sbr.rel (0) target = $region77
    $region76: #{tpu_custom_call.1} parent=1 // pred_region
      %8770 = vsyncadd [#allocation4], 0
      %s8772 = sshll.u32 [#allocation17], 4
      %s8773 = int_to_ptr.vmem [resolvable:$true] %s8772
      %s8774 = sshll.u32 %s9, 4
      %s8775 = int_to_ptr.hbm [resolvable:$true] %s8774
      %8777 = dma.vmem_to_hbm [thread:$0]  %s8773, 128, %s8775, [#allocation4]
    $region77: #{tpu_custom_call.1} parent=1 // pred_fallthru
      _
    // Predicated region
    $region78: #{tpu_custom_call.1} parent=1 // pred_check
      _
    $region79: #{tpu_custom_call.1} parent=1 // pred_check_branch
      %8779 = sbr.rel (0) target = $region81
    $region80: #{tpu_custom_call.1} parent=1 // pred_region
      %8781 = dma.done [#allocation4], 128
    $region81: #{tpu_custom_call.1} parent=1 // pred_fallthru
      _
    %8782 = vsyncpa [#allocation3], 1
    %8783 = vsyncpa [#allocation6], 1
    %8784 = vsyncpa [#allocation9], 1
    %8785 = vsyncpa [#allocation12], 1
    %8786 = vsyncpa [#allocation15], 1
    %8787 = vsyncpa [#allocation4], 1

</llo_original>
